<compile_context>
chip_gen: v7x
topology: tpu7x:2x2x1
jax: 0.10.0
libtpu: 0.0.40
codegen_flags: <defaults>
</compile_context>

<pallas_src>
import jax
import jax.numpy as jnp
from jax.experimental import pallas as pl
from jax.experimental.pallas import tpu as pltpu


def _cdiv(a, b):
    return -(-a // b)


def _round_up(a, b):
    return _cdiv(a, b) * b


_SLAB = 8  # sublanes folded into lanes for the lane-dense (M//8, 128) output


# ---------------------------------------------------------------------------
# Pallas kernel: fused matmul (BN scale pre-folded into W) + bias + ReLU
# ---------------------------------------------------------------------------
def _matmul_bias_relu_kernel(a_ref, w_ref, b_ref, o_ref):
    acc = jnp.dot(a_ref[...], w_ref[...], preferred_element_type=jnp.float32)
    o_ref[...] = jnp.maximum(acc + b_ref[...], 0.0)


def fused_matmul_bias_relu(patch_slab, w_slab, bias_slab, *, target_rows=512):
    """relu(patch_slab @ w_slab + bias_slab).

    patch_slab: (M8, 8*Kd) bf16, w_slab: (8*Kd, 128) bf16, bias_slab: (1, 128) f32.
    Returns (M8, 128) f32 — the lane-dense slab view of the (8*M8, 16) result.
    """
    M8, Kd8 = patch_slab.shape
    lanes = w_slab.shape[1]
    # >= 2 blocks so the "parallel" axis can shard across v7x's two TensorCores;
    # blocks as large as practical so v5e/v6e (serial grid) see only a few
    # ~0.35us pipeline steps.  Ragged tail handled by Pallas boundary clipping.
    nblocks = max(2, _cdiv(M8, target_rows))
    tm = _round_up(_cdiv(M8, nblocks), 16)   # multiple of 16 sublanes (bf16 tile)
    grid = _cdiv(M8, tm)

    return pl.pallas_call(
        _matmul_bias_relu_kernel,
        out_shape=jax.ShapeDtypeStruct((M8, lanes), jnp.float32),
        grid_spec=pltpu.PrefetchScalarGridSpec(
            num_scalar_prefetch=0,
            grid=(grid,),
            in_specs=[
                pl.BlockSpec((tm, Kd8), lambda i: (i, 0)),     # patch-row tile
                pl.BlockSpec((Kd8, lanes), lambda i: (0, 0)),  # folded weight (whole)
                pl.BlockSpec((1, lanes), lambda i: (0, 0)),    # folded bias
            ],
            out_specs=pl.BlockSpec((tm, lanes), lambda i: (i, 0)),
        ),
        compiler_params=pltpu.CompilerParams(
            dimension_semantics=("parallel",)),
    )(patch_slab, w_slab, bias_slab)


# ---------------------------------------------------------------------------
# Glue: im2col for 3x3 stride-2 valid conv (NHWC)
# ---------------------------------------------------------------------------
def im2col(x_nhwc, k=3, stride=2):
    N, H, W, C = x_nhwc.shape
    Ho = (H - k) // stride + 1
    Wo = (W - k) // stride + 1
    cols = []
    for kh in range(k):
        for kw in range(k):
            cols.append(
                x_nhwc[:, kh:kh + stride * (Ho - 1) + 1:stride,
                          kw:kw + stride * (Wo - 1) + 1:stride, :])
    # last dim ordered (kh, kw, c) -> matches weight reshape (KH, KW, Cin, Cout)
    patches = jnp.concatenate(cols, axis=-1)
    return patches.reshape(N * Ho * Wo, k * k * C), (N, Ho, Wo)


def conv_bn_relu(x_nhwc, p, eps=1e-5):
    """One Conv2d(3x3, stride 2, valid) + BatchNorm2d(eval) + ReLU block."""
    w_oihw = p["w"]                                    # (Cout, Cin, 3, 3)
    Cout, Cin, KH, KW = w_oihw.shape
    patches, (N, Ho, Wo) = im2col(x_nhwc, KH, 2)
    M, Kd = patches.shape
    assert M % _SLAB == 0                              # N=16 => always true here

    s = p["gamma"] / jnp.sqrt(p["var"] + eps)          # BN scale
    w2d = jnp.transpose(w_oihw, (2, 3, 1, 0)).reshape(Kd, Cout)
    w2d = (w2d * s[None, :]).astype(jnp.bfloat16)      # scale folded into weights
    b = ((p["b"] - p["mean"]) * s + p["beta"]).astype(jnp.float32)

    # Lane-dense slab formulation: slab[r, 16*j + c] == out[8*r + j, c].
    patch_slab = patches.astype(jnp.bfloat16).reshape(M // _SLAB, _SLAB * Kd)
    w_slab = jnp.kron(jnp.eye(_SLAB, dtype=jnp.bfloat16), w2d)   # (8*Kd, 8*Cout)
    bias_slab = jnp.tile(b.reshape(1, Cout), (1, _SLAB))         # (1, 8*Cout)

    out_slab = fused_matmul_bias_relu(patch_slab, w_slab, bias_slab)
    return out_slab.reshape(N, Ho, Wo, Cout)           # free bitcast reshape


# ---------------------------------------------------------------------------
# Full module forward
# ---------------------------------------------------------------------------
@jax.jit
def conv_module_forward(x_nchw, params):
    x = jnp.transpose(x_nchw, (0, 2, 3, 1))            # NCHW -> NHWC
    for p in params:
        x = conv_bn_relu(x, p)
    x = jnp.transpose(x, (0, 3, 1, 2))                 # NHWC -> NCHW (N, 16, 4, 4)
    # PyTorch: x.view(-1, 16, 16*4*4) on contiguous NCHW
    return x.reshape(-1, 16, 16 * 4 * 4)


def init_params(key):
    layers = []
    cins = [1, 16, 16, 16]
    for i, cin in enumerate(cins):
        k = jax.random.fold_in(key, i)
        kw, kb, kg, kbe, km, kv = jax.random.split(k, 6)
        fan_in = float(cin * 3 * 3)
        bound = 1.0 / (fan_in ** 0.5)
        layers.append(dict(
            w=jax.random.uniform(kw, (16, cin, 3, 3), jnp.float32, -bound, bound),
            b=jax.random.uniform(kb, (16,), jnp.float32, -bound, bound),
            gamma=1.0 + 0.05 * jax.random.normal(kg, (16,), jnp.float32),
            beta=0.05 * jax.random.normal(kbe, (16,), jnp.float32),
            mean=0.05 * jax.random.normal(km, (16,), jnp.float32),
            var=1.0 + 0.1 * jax.random.uniform(kv, (16,), jnp.float32),
        ))
    return layers


if __name__ == "__main__":
    key = jax.random.PRNGKey(0)
    kx, kp = jax.random.split(key)
    # 16 input frames of 80x80 -> spatial 39 -> 19 -> 9 -> 4, so the final
    # view(-1, 16, 256) yields shape (1, 16, 256) exactly as in PyTorch.
    x = jax.random.normal(kx, (16, 1, 80, 80), jnp.float32)   # NCHW like PyTorch
    params = init_params(kp)

    y = conv_module_forward(x, params)
    y = jax.block_until_ready(y)

    assert y.shape == (1, 16, 16 * 4 * 4), y.shape
    assert bool(jnp.all(jnp.isfinite(y)))
    assert bool(jnp.all(y >= 0.0))  # final ReLU
    print("KERNEL_OK")
</pallas_src>

<mosaic_0001>
module attributes {stable_mosaic.version = 11 : i64} {
  func.func @_matmul_bias_relu_kernel(%arg0: i32, %arg1: memref<512x72xbf16, #tpu.memory_space<vmem>>, %arg2: memref<72x128xbf16, #tpu.memory_space<vmem>>, %arg3: memref<1x128xf32, #tpu.memory_space<vmem>>, %arg4: memref<512x128xf32, #tpu.memory_space<vmem>>) attributes {dimension_semantics = [#tpu.dimension_semantics<parallel>], iteration_bounds = array<i64: 6>, scalar_prefetch = 0 : i64, scratch_operands = 0 : i64, tpu.core_type = #tpu.core_type<tc>, window_params = [{transform_indices = @transform_0, window_bounds = array<i64: 512, 72>}, {pipeline_mode = #tpu.pipeline_mode<synchronous>, transform_indices = @transform_1, window_bounds = array<i64: 72, 128>}, {pipeline_mode = #tpu.pipeline_mode<synchronous>, transform_indices = @transform_2, window_bounds = array<i64: 1, 128>}, {transform_indices = @transform_3, window_bounds = array<i64: 512, 128>}]} {
    %c0 = arith.constant 0 : index
    %c0_0 = arith.constant 0 : index
    %0 = vector.load %arg1[%c0, %c0_0] : memref<512x72xbf16, #tpu.memory_space<vmem>>, vector<512x72xbf16>
    %c0_1 = arith.constant 0 : index
    %c0_2 = arith.constant 0 : index
    %1 = vector.load %arg2[%c0_1, %c0_2] : memref<72x128xbf16, #tpu.memory_space<vmem>>, vector<72x128xbf16>
    %cst = arith.constant dense<0.000000e+00> : vector<512x128xf32>
    %2 = tpu.matmul %0, %1, %cst {dimension_numbers = #tpu.dot_dimension_numbers<[1], [0], [0], [1], [0, 0, 1, 1], [], []>} : vector<512x72xbf16>, vector<72x128xbf16>, vector<512x128xf32> -> vector<512x128xf32>
    %c0_3 = arith.constant 0 : index
    %c0_4 = arith.constant 0 : index
    %3 = vector.load %arg3[%c0_3, %c0_4] : memref<1x128xf32, #tpu.memory_space<vmem>>, vector<1x128xf32>
    %4 = vector.broadcast %3 : vector<1x128xf32> to vector<512x128xf32>
    %5 = arith.addf %2, %4 : vector<512x128xf32>
    %cst_5 = arith.constant 0.000000e+00 : f32
    %6 = vector.broadcast %cst_5 : f32 to vector<512x128xf32>
    %7 = arith.maximumf %5, %6 : vector<512x128xf32>
    %c0_6 = arith.constant 0 : index
    %c0_7 = arith.constant 0 : index
    %8 = vector.load %arg4[%c0_6, %c0_7] : memref<512x128xf32, #tpu.memory_space<vmem>>, vector<512x128xf32>
    tpu.vector_store %arg4[%c0_6, %c0_7], %7 {strides = array<i32>} : memref<512x128xf32, #tpu.memory_space<vmem>>, vector<512x128xf32>,
    return
  }
  func.func @transform_0(%arg0: i32) -> (i32, i32) {
    %c0_i32 = arith.constant 0 : i32
    %c0_i32_0 = arith.constant 0 : i32
    return %arg0, %c0_i32 : i32, i32
  }
  func.func @transform_1(%arg0: i32) -> (i32, i32) {
    %c0_i32 = arith.constant 0 : i32
    %c0_i32_0 = arith.constant 0 : i32
    %c0_i32_1 = arith.constant 0 : i32
    return %c0_i32, %c0_i32_0 : i32, i32
  }
  func.func @transform_2(%arg0: i32) -> (i32, i32) {
    %c0_i32 = arith.constant 0 : i32
    %c0_i32_0 = arith.constant 0 : i32
    %c0_i32_1 = arith.constant 0 : i32
    return %c0_i32, %c0_i32_0 : i32, i32
  }
  func.func @transform_3(%arg0: i32) -> (i32, i32) {
    %c0_i32 = arith.constant 0 : i32
    %c0_i32_0 = arith.constant 0 : i32
    return %arg0, %c0_i32 : i32, i32
  }
}

module attributes {stable_mosaic.version = 11 : i64} {
  func.func @_matmul_bias_relu_kernel(%arg0: i32, %arg1: memref<368x1152xbf16, #tpu.memory_space<vmem>>, %arg2: memref<1152x128xbf16, #tpu.memory_space<vmem>>, %arg3: memref<1x128xf32, #tpu.memory_space<vmem>>, %arg4: memref<368x128xf32, #tpu.memory_space<vmem>>) attributes {dimension_semantics = [#tpu.dimension_semantics<parallel>], iteration_bounds = array<i64: 2>, scalar_prefetch = 0 : i64, scratch_operands = 0 : i64, tpu.core_type = #tpu.core_type<tc>, window_params = [{transform_indices = @transform_0, window_bounds = array<i64: 368, 1152>}, {pipeline_mode = #tpu.pipeline_mode<synchronous>, transform_indices = @transform_1, window_bounds = array<i64: 1152, 128>}, {pipeline_mode = #tpu.pipeline_mode<synchronous>, transform_indices = @transform_2, window_bounds = array<i64: 1, 128>}, {transform_indices = @transform_3, window_bounds = array<i64: 368, 128>}]} {
    %c0 = arith.constant 0 : index
    %c0_0 = arith.constant 0 : index
    %0 = vector.load %arg1[%c0, %c0_0] : memref<368x1152xbf16, #tpu.memory_space<vmem>>, vector<368x1152xbf16>
    %c0_1 = arith.constant 0 : index
    %c0_2 = arith.constant 0 : index
    %1 = vector.load %arg2[%c0_1, %c0_2] : memref<1152x128xbf16, #tpu.memory_space<vmem>>, vector<1152x128xbf16>
    %cst = arith.constant dense<0.000000e+00> : vector<368x128xf32>
    %2 = tpu.matmul %0, %1, %cst {dimension_numbers = #tpu.dot_dimension_numbers<[1], [0], [0], [1], [0, 0, 1, 1], [], []>} : vector<368x1152xbf16>, vector<1152x128xbf16>, vector<368x128xf32> -> vector<368x128xf32>
    %c0_3 = arith.constant 0 : index
    %c0_4 = arith.constant 0 : index
    %3 = vector.load %arg3[%c0_3, %c0_4] : memref<1x128xf32, #tpu.memory_space<vmem>>, vector<1x128xf32>
    %4 = vector.broadcast %3 : vector<1x128xf32> to vector<368x128xf32>
    %5 = arith.addf %2, %4 : vector<368x128xf32>
    %cst_5 = arith.constant 0.000000e+00 : f32
    %6 = vector.broadcast %cst_5 : f32 to vector<368x128xf32>
    %7 = arith.maximumf %5, %6 : vector<368x128xf32>
    %c0_6 = arith.constant 0 : index
    %c0_7 = arith.constant 0 : index
    %8 = vector.load %arg4[%c0_6, %c0_7] : memref<368x128xf32, #tpu.memory_space<vmem>>, vector<368x128xf32>
    tpu.vector_store %arg4[%c0_6, %c0_7], %7 {strides = array<i32>} : memref<368x128xf32, #tpu.memory_space<vmem>>, vector<368x128xf32>,
    return
  }
  func.func @transform_0(%arg0: i32) -> (i32, i32) {
    %c0_i32 = arith.constant 0 : i32
    %c0_i32_0 = arith.constant 0 : i32
    return %arg0, %c0_i32 : i32, i32
  }
  func.func @transform_1(%arg0: i32) -> (i32, i32) {
    %c0_i32 = arith.constant 0 : i32
    %c0_i32_0 = arith.constant 0 : i32
    %c0_i32_1 = arith.constant 0 : i32
    return %c0_i32, %c0_i32_0 : i32, i32
  }
  func.func @transform_2(%arg0: i32) -> (i32, i32) {
    %c0_i32 = arith.constant 0 : i32
    %c0_i32_0 = arith.constant 0 : i32
    %c0_i32_1 = arith.constant 0 : i32
    return %c0_i32, %c0_i32_0 : i32, i32
  }
  func.func @transform_3(%arg0: i32) -> (i32, i32) {
    %c0_i32 = arith.constant 0 : i32
    %c0_i32_0 = arith.constant 0 : i32
    return %arg0, %c0_i32 : i32, i32
  }
}

module attributes {stable_mosaic.version = 11 : i64} {
  func.func @_matmul_bias_relu_kernel(%arg0: i32, %arg1: memref<96x1152xbf16, #tpu.memory_space<vmem>>, %arg2: memref<1152x128xbf16, #tpu.memory_space<vmem>>, %arg3: memref<1x128xf32, #tpu.memory_space<vmem>>, %arg4: memref<96x128xf32, #tpu.memory_space<vmem>>) attributes {dimension_semantics = [#tpu.dimension_semantics<parallel>], iteration_bounds = array<i64: 2>, scalar_prefetch = 0 : i64, scratch_operands = 0 : i64, tpu.core_type = #tpu.core_type<tc>, window_params = [{transform_indices = @transform_0, window_bounds = array<i64: 96, 1152>}, {pipeline_mode = #tpu.pipeline_mode<synchronous>, transform_indices = @transform_1, window_bounds = array<i64: 1152, 128>}, {pipeline_mode = #tpu.pipeline_mode<synchronous>, transform_indices = @transform_2, window_bounds = array<i64: 1, 128>}, {transform_indices = @transform_3, window_bounds = array<i64: 96, 128>}]} {
    %c0 = arith.constant 0 : index
    %c0_0 = arith.constant 0 : index
    %0 = vector.load %arg1[%c0, %c0_0] : memref<96x1152xbf16, #tpu.memory_space<vmem>>, vector<96x1152xbf16>
    %c0_1 = arith.constant 0 : index
    %c0_2 = arith.constant 0 : index
    %1 = vector.load %arg2[%c0_1, %c0_2] : memref<1152x128xbf16, #tpu.memory_space<vmem>>, vector<1152x128xbf16>
    %cst = arith.constant dense<0.000000e+00> : vector<96x128xf32>
    %2 = tpu.matmul %0, %1, %cst {dimension_numbers = #tpu.dot_dimension_numbers<[1], [0], [0], [1], [0, 0, 1, 1], [], []>} : vector<96x1152xbf16>, vector<1152x128xbf16>, vector<96x128xf32> -> vector<96x128xf32>
    %c0_3 = arith.constant 0 : index
    %c0_4 = arith.constant 0 : index
    %3 = vector.load %arg3[%c0_3, %c0_4] : memref<1x128xf32, #tpu.memory_space<vmem>>, vector<1x128xf32>
    %4 = vector.broadcast %3 : vector<1x128xf32> to vector<96x128xf32>
    %5 = arith.addf %2, %4 : vector<96x128xf32>
    %cst_5 = arith.constant 0.000000e+00 : f32
    %6 = vector.broadcast %cst_5 : f32 to vector<96x128xf32>
    %7 = arith.maximumf %5, %6 : vector<96x128xf32>
    %c0_6 = arith.constant 0 : index
    %c0_7 = arith.constant 0 : index
    %8 = vector.load %arg4[%c0_6, %c0_7] : memref<96x128xf32, #tpu.memory_space<vmem>>, vector<96x128xf32>
    tpu.vector_store %arg4[%c0_6, %c0_7], %7 {strides = array<i32>} : memref<96x128xf32, #tpu.memory_space<vmem>>, vector<96x128xf32>,
    return
  }
  func.func @transform_0(%arg0: i32) -> (i32, i32) {
    %c0_i32 = arith.constant 0 : i32
    %c0_i32_0 = arith.constant 0 : i32
    return %arg0, %c0_i32 : i32, i32
  }
  func.func @transform_1(%arg0: i32) -> (i32, i32) {
    %c0_i32 = arith.constant 0 : i32
    %c0_i32_0 = arith.constant 0 : i32
    %c0_i32_1 = arith.constant 0 : i32
    return %c0_i32, %c0_i32_0 : i32, i32
  }
  func.func @transform_2(%arg0: i32) -> (i32, i32) {
    %c0_i32 = arith.constant 0 : i32
    %c0_i32_0 = arith.constant 0 : i32
    %c0_i32_1 = arith.constant 0 : i32
    return %c0_i32, %c0_i32_0 : i32, i32
  }
  func.func @transform_3(%arg0: i32) -> (i32, i32) {
    %c0_i32 = arith.constant 0 : i32
    %c0_i32_0 = arith.constant 0 : i32
    return %arg0, %c0_i32 : i32, i32
  }
}

module attributes {stable_mosaic.version = 11 : i64} {
  func.func @_matmul_bias_relu_kernel(%arg0: i32, %arg1: memref<16x1152xbf16, #tpu.memory_space<vmem>>, %arg2: memref<1152x128xbf16, #tpu.memory_space<vmem>>, %arg3: memref<1x128xf32, #tpu.memory_space<vmem>>, %arg4: memref<16x128xf32, #tpu.memory_space<vmem>>) attributes {dimension_semantics = [#tpu.dimension_semantics<parallel>], iteration_bounds = array<i64: 2>, scalar_prefetch = 0 : i64, scratch_operands = 0 : i64, tpu.core_type = #tpu.core_type<tc>, window_params = [{transform_indices = @transform_0, window_bounds = array<i64: 16, 1152>}, {pipeline_mode = #tpu.pipeline_mode<synchronous>, transform_indices = @transform_1, window_bounds = array<i64: 1152, 128>}, {pipeline_mode = #tpu.pipeline_mode<synchronous>, transform_indices = @transform_2, window_bounds = array<i64: 1, 128>}, {transform_indices = @transform_3, window_bounds = array<i64: 16, 128>}]} {
    %c0 = arith.constant 0 : index
    %c0_0 = arith.constant 0 : index
    %0 = vector.load %arg1[%c0, %c0_0] : memref<16x1152xbf16, #tpu.memory_space<vmem>>, vector<16x1152xbf16>
    %c0_1 = arith.constant 0 : index
    %c0_2 = arith.constant 0 : index
    %1 = vector.load %arg2[%c0_1, %c0_2] : memref<1152x128xbf16, #tpu.memory_space<vmem>>, vector<1152x128xbf16>
    %cst = arith.constant dense<0.000000e+00> : vector<16x128xf32>
    %2 = tpu.matmul %0, %1, %cst {dimension_numbers = #tpu.dot_dimension_numbers<[1], [0], [0], [1], [0, 0, 1, 1], [], []>} : vector<16x1152xbf16>, vector<1152x128xbf16>, vector<16x128xf32> -> vector<16x128xf32>
    %c0_3 = arith.constant 0 : index
    %c0_4 = arith.constant 0 : index
    %3 = vector.load %arg3[%c0_3, %c0_4] : memref<1x128xf32, #tpu.memory_space<vmem>>, vector<1x128xf32>
    %4 = vector.broadcast %3 : vector<1x128xf32> to vector<16x128xf32>
    %5 = arith.addf %2, %4 : vector<16x128xf32>
    %cst_5 = arith.constant 0.000000e+00 : f32
    %6 = vector.broadcast %cst_5 : f32 to vector<16x128xf32>
    %7 = arith.maximumf %5, %6 : vector<16x128xf32>
    %c0_6 = arith.constant 0 : index
    %c0_7 = arith.constant 0 : index
    %8 = vector.load %arg4[%c0_6, %c0_7] : memref<16x128xf32, #tpu.memory_space<vmem>>, vector<16x128xf32>
    tpu.vector_store %arg4[%c0_6, %c0_7], %7 {strides = array<i32>} : memref<16x128xf32, #tpu.memory_space<vmem>>, vector<16x128xf32>,
    return
  }
  func.func @transform_0(%arg0: i32) -> (i32, i32) {
    %c0_i32 = arith.constant 0 : i32
    %c0_i32_0 = arith.constant 0 : i32
    return %arg0, %c0_i32 : i32, i32
  }
  func.func @transform_1(%arg0: i32) -> (i32, i32) {
    %c0_i32 = arith.constant 0 : i32
    %c0_i32_0 = arith.constant 0 : i32
    %c0_i32_1 = arith.constant 0 : i32
    return %c0_i32, %c0_i32_0 : i32, i32
  }
  func.func @transform_2(%arg0: i32) -> (i32, i32) {
    %c0_i32 = arith.constant 0 : i32
    %c0_i32_0 = arith.constant 0 : i32
    %c0_i32_1 = arith.constant 0 : i32
    return %c0_i32, %c0_i32_0 : i32, i32
  }
  func.func @transform_3(%arg0: i32) -> (i32, i32) {
    %c0_i32 = arith.constant 0 : i32
    %c0_i32_0 = arith.constant 0 : i32
    return %arg0, %c0_i32 : i32, i32
  }
}

</mosaic_0001>

<llo_original>
// kernel: conv_module_forward.4
$region0: #{conv_module_forward.4}
  #allocation0 [shape = 'u32[]', space=smem, size = 0x4, offset = 0x4, fixed_abs, tag = 'smem constant byte address 0x4 - core index']
  #allocation1 [shape = 'u32[144,128]{1,0:T(1,128)}', space=vmem, size = 0x12000, scoped, tag = 'internal scratch']
  %s0 = inlined_call_operand.vmem [shape: bf16[3042,72], index: 0, kind: input, shape index: {}]
  %s1 = inlined_call_operand.vmem [shape: bf16[72,128], index: 1, kind: input, shape index: {}]
  %s2 = inlined_call_operand.vmem [shape: f32[1,128], index: 2, kind: input, shape index: {}]
  %s3 = inlined_call_operand.vmem [shape: f32[3042,128], index: 3, kind: output, shape index: {}]
  %s4 = sld [smem:[#allocation0]]
  $region93: #{conv_module_forward.4} parent=0
    _
  %s6 = ssub.s32 1, %s4
  %s7 = scalar_select 0, %s6, %s4
  $region1: #{conv_module_forward.4} parent=0
    #allocation2 [shape = 'u8[524288]{0}', space=vmem, size = 0x80000, scoped, tag = 'output window, operand 0']
    loop: start=0, step=1, limit=8
    $region2: #{conv_module_forward.4} parent=1 // loop_pre_header
      _
    $region3: #{conv_module_forward.4} parent=1 // loop_header
      %s9 = sphi 0, %s13
      %p10 = scmp.ge.s32.totalorder %s9, 8
      %s19 = sphi 0, %s21
      %s22 = sphi 0, %s19
      %s23 = sphi 0, %s22
      %s39 = sphi 0, %s23
      %s43 = sphi 0, %s43
      %s45 = sphi 0, %s43
      %s46 = sphi 0, %s45
      %s60 = sphi 0, %s46
      %s64 = sphi 0, %s64
      %s66 = sphi 0, %s64
      %s67 = sphi 0, %s66
      %s81 = sphi 0, %s67
      %s87 = sphi 0, %s89
      %s90 = sphi 0, %s87
      %s91 = sphi 0, %s90
      %s107 = sphi 0, %s91
    $region4: #{conv_module_forward.4} parent=1 // loop_header_branch
      %12 = sbr.rel (%p10) target = $region8
    $region5: #{conv_module_forward.4} parent=1 // loop_body
      %s14 = ssub.s32 %s9, 1
      %s15 = ssub.s32 %s9, 2
      %s16 = sadd.s32 %s9, 1
      %s17 = ssub.s32 %s9, %s16
      %p18 = scmp.eq.s32.totalorder %s17, 0
      %s20 = sadd.s32 %s19, 1
      %s21 = scalar_select %p18, %s19, %s20
      %p24 = pneg %p18
      %p25 = scmp.eq.s32.totalorder %s9, 5
      %p26 = por %p24, %p25
      %p27 = scmp.ne.s32.totalorder %s19, %s22
      %p28 = scmp.eq.s32.totalorder %s9, 0
      %p29 = por %p27, %p28
      %p30 = scmp.ne.s32.totalorder %s19, %s22
      %p31 = scmp.eq.s32.totalorder %s14, 5
      %p32 = por %p30, %p31
      %p33 = scmp.ne.s32.totalorder %s22, %s23
      %p34 = scmp.eq.s32.totalorder %s14, 0
      %p35 = por %p33, %p34
      %p36 = scmp.ne.s32.totalorder %s22, %s23
      %p37 = scmp.eq.s32.totalorder %s15, 5
      %p38 = por %p36, %p37
      %p40 = scmp.ne.s32.totalorder %s23, %s39
      %p41 = scmp.eq.s32.totalorder %s15, 0
      %p42 = por %p40, %p41
      %s44 = sadd.s32 %s43, 1
      %p47 = scmp.eq.s32.totalorder %s9, 5
      %p48 = scmp.ne.s32.totalorder %s43, %s45
      %p49 = scmp.eq.s32.totalorder %s9, 0
      %p50 = por %p48, %p49
      %p51 = scmp.ne.s32.totalorder %s43, %s45
      %p52 = scmp.eq.s32.totalorder %s14, 5
      %p53 = por %p51, %p52
      %p54 = scmp.ne.s32.totalorder %s45, %s46
      %p55 = scmp.eq.s32.totalorder %s14, 0
      %p56 = por %p54, %p55
      %p57 = scmp.ne.s32.totalorder %s45, %s46
      %p58 = scmp.eq.s32.totalorder %s15, 5
      %p59 = por %p57, %p58
      %p61 = scmp.ne.s32.totalorder %s46, %s60
      %p62 = scmp.eq.s32.totalorder %s15, 0
      %p63 = por %p61, %p62
      %s65 = sadd.s32 %s64, 1
      %p68 = scmp.eq.s32.totalorder %s9, 5
      %p69 = scmp.ne.s32.totalorder %s64, %s66
      %p70 = scmp.eq.s32.totalorder %s9, 0
      %p71 = por %p69, %p70
      %p72 = scmp.ne.s32.totalorder %s64, %s66
      %p73 = scmp.eq.s32.totalorder %s14, 5
      %p74 = por %p72, %p73
      %p75 = scmp.ne.s32.totalorder %s66, %s67
      %p76 = scmp.eq.s32.totalorder %s14, 0
      %p77 = por %p75, %p76
      %p78 = scmp.ne.s32.totalorder %s66, %s67
      %p79 = scmp.eq.s32.totalorder %s15, 5
      %p80 = por %p78, %p79
      %p82 = scmp.ne.s32.totalorder %s67, %s81
      %p83 = scmp.eq.s32.totalorder %s15, 0
      %p84 = por %p82, %p83
      %s85 = ssub.s32 %s9, %s16
      %p86 = scmp.eq.s32.totalorder %s85, 0
      %s88 = sadd.s32 %s87, 1
      %s89 = scalar_select %p86, %s87, %s88
      %p92 = pneg %p86
      %p93 = scmp.eq.s32.totalorder %s9, 5
      %p94 = por %p92, %p93
      %p95 = scmp.ne.s32.totalorder %s87, %s90
      %p96 = scmp.eq.s32.totalorder %s9, 0
      %p97 = por %p95, %p96
      %p98 = scmp.ne.s32.totalorder %s87, %s90
      %p99 = scmp.eq.s32.totalorder %s14, 5
      %p100 = por %p98, %p99
      %p101 = scmp.ne.s32.totalorder %s90, %s91
      %p102 = scmp.eq.s32.totalorder %s14, 0
      %p103 = por %p101, %p102
      %p104 = scmp.ne.s32.totalorder %s90, %s91
      %p105 = scmp.eq.s32.totalorder %s15, 5
      %p106 = por %p104, %p105
      %p108 = scmp.ne.s32.totalorder %s91, %s107
      %p109 = scmp.eq.s32.totalorder %s15, 0
      %p110 = por %p108, %p109
      %p111 = scmp.le.s32.totalorder 1, %s9
      %p112 = scmp.lt.s32.totalorder %s9, 7
      %p113 = pnand %p111, %p112
      %p114 = pneg %p113
      // Predicated region
      $region9: #{conv_module_forward.4} parent=5 // pred_check
        _
      $region10: #{conv_module_forward.4} parent=5 // pred_check_branch
        %116 = sbr.rel (%p113) target = $region12
      $region11: #{conv_module_forward.4} parent=5 // pred_region
        %s117 = ssub.s32 %s9, 1
        // Predicated region
        $region13: #{conv_module_forward.4} parent=11 // pred_check
          %p118 = pneg %p56
        $region14: #{conv_module_forward.4} parent=11 // pred_check_branch
          %120 = sbr.rel (%p118) target = $region16
        $region15: #{conv_module_forward.4} parent=11 // pred_region
          _
        $region16: #{conv_module_forward.4} parent=11 // pred_fallthru
          _
        // Predicated region
        $region17: #{conv_module_forward.4} parent=11 // pred_check
          %p121 = pneg %p77
        $region18: #{conv_module_forward.4} parent=11 // pred_check_branch
          %123 = sbr.rel (%p121) target = $region20
        $region19: #{conv_module_forward.4} parent=11 // pred_region
          _
        $region20: #{conv_module_forward.4} parent=11 // pred_fallthru
          _
      $region12: #{conv_module_forward.4} parent=5 // pred_fallthru
        _
      %p124 = scmp.lt.s32.totalorder %s9, 6
      // Predicated region
      $region21: #{conv_module_forward.4} parent=5 // pred_check
        %p125 = pneg %p124
      $region22: #{conv_module_forward.4} parent=5 // pred_check_branch
        %127 = sbr.rel (%p125) target = $region24
      $region23: #{conv_module_forward.4} parent=5 // pred_region
        // Predicated region
        $region25: #{conv_module_forward.4} parent=23 // pred_check
          %p128 = pneg %p29
        $region26: #{conv_module_forward.4} parent=23 // pred_check_branch
          %130 = sbr.rel (%p128) target = $region28
        $region27: #{conv_module_forward.4} parent=23 // pred_region
          %s131 = smul.u32 64, %s9
          %s132 = ssub.s32 381, %s131
          %p133 = scmp.lt.s32.totalorder %s132, 64
          %s134 = scalar_select %p133, %s132, 64
          %s135 = smul.u32 64, %s134
          %p136 = scmp.lt.s32.totalorder %s131, 380
          %s137 = scalar_select %p136, %s131, 380
          %s138 = smul.addr %s137, 4
          %s139 = scalar_lea.vmem %s0, %s138
          %s140 = smul.u32 64, %s9
          %s141 = ssub.s32 381, %s140
          %p142 = scmp.lt.s32.totalorder %s141, 64
          %s143 = scalar_select %p142, %s141, 64
          %s144 = smul.u32 64, %s143
        $region28: #{conv_module_forward.4} parent=23 // pred_fallthru
          _
      $region24: #{conv_module_forward.4} parent=5 // pred_fallthru
        _
      %p145 = scmp.le.s32.totalorder 1, %s9
      %p146 = scmp.lt.s32.totalorder %s9, 7
      %p147 = pnand %p145, %p146
      %p148 = pneg %p147
      // Predicated region
      $region29: #{conv_module_forward.4} parent=5 // pred_check
        _
      $region30: #{conv_module_forward.4} parent=5 // pred_check_branch
        %150 = sbr.rel (%p147) target = $region32
      $region31: #{conv_module_forward.4} parent=5 // pred_region
        %s151 = ssub.s32 %s9, 1
        %s152 = smul.u32 64, %s14
        %s153 = ssub.s32 381, %s152
        %p154 = scmp.lt.s32.totalorder %s153, 64
        %s155 = scalar_select %p154, %s153, 64
        %s156 = smul.u32 64, %s155
        %p157 = scmp.lt.s32.totalorder %s152, 380
        %s158 = scalar_select %p157, %s152, 380
        %s159 = smul.addr %s158, 4
        %s160 = scalar_lea.vmem %s0, %s159
        %p161 = pneg %p35
        %p162 = pneg %p32
        %p163 = pneg %p56
        %p164 = pneg %p53
        %p165 = pneg %p77
        %p166 = pneg %p74
        %p167 = pneg %p103
        %p168 = pneg %p100
        %s169 = sand.u32 %s90, 1
        %s170 = sand.u32 %s90, 1
        %s171 = smul.addr %s170, 512
        %s172 = scalar_lea.vmem [#allocation2], %s171
        %s173 = smul.u32 64, %s14
        %s174 = ssub.s32 381, %s173
        %p175 = scmp.lt.s32.totalorder %s174, 64
        %s176 = scalar_select %p175, %s174, 64
        %s177 = smul.u32 64, %s176
        %p178 = scmp.lt.s32.totalorder %s173, 380
        %s179 = scalar_select %p178, %s173, 380
        %s180 = smul.addr %s179, 4
        %s181 = scalar_lea.vmem %s0, %s180
        %s182 = smul.u32 64, %s14
        %s183 = ssub.s32 381, %s182
        %p184 = scmp.lt.s32.totalorder %s183, 64
        %s185 = scalar_select %p184, %s183, 64
        %s186 = smul.u32 64, %s185
        %s187 = smul.u32 64, %s14
        %s188 = ssub.s32 381, %s187
        %p189 = scmp.lt.s32.totalorder %s188, 64
        %s190 = scalar_select %p189, %s188, 64
        %s191 = smul.u32 128, %s190
        %v193 = vld [vmem:[%s181] sm:$0xf]
        %v194 = vld [vmem:[%s181 + $0x4] sm:$0xf]
        %v195 = vld [vmem:[%s181 + $0x8] sm:$0xf]
        %v196 = vld [vmem:[%s181 + $0xc] sm:$0xf]
        %v197 = vld [vmem:[%s181 + $0x10] sm:$0xf]
        %v198 = vld [vmem:[%s181 + $0x14] sm:$0xf]
        %v199 = vld [vmem:[%s181 + $0x18] sm:$0xf]
        %v200 = vld [vmem:[%s181 + $0x1c] sm:$0xf]
        %v201 = vld [vmem:[%s181 + $0x20] sm:$0xf]
        %v202 = vld [vmem:[%s181 + $0x24] sm:$0xf]
        %v203 = vld [vmem:[%s181 + $0x28] sm:$0xf]
        %v204 = vld [vmem:[%s181 + $0x2c] sm:$0xf]
        %v205 = vld [vmem:[%s181 + $0x30] sm:$0xf]
        %v206 = vld [vmem:[%s181 + $0x34] sm:$0xf]
        %v207 = vld [vmem:[%s181 + $0x38] sm:$0xf]
        %v208 = vld [vmem:[%s181 + $0x3c] sm:$0xf]
        %v209 = vld [vmem:[%s181 + $0x40] sm:$0xf]
        %v210 = vld [vmem:[%s181 + $0x44] sm:$0xf]
        %v211 = vld [vmem:[%s181 + $0x48] sm:$0xf]
        %v212 = vld [vmem:[%s181 + $0x4c] sm:$0xf]
        %v213 = vld [vmem:[%s181 + $0x50] sm:$0xf]
        %v214 = vld [vmem:[%s181 + $0x54] sm:$0xf]
        %v215 = vld [vmem:[%s181 + $0x58] sm:$0xf]
        %v216 = vld [vmem:[%s181 + $0x5c] sm:$0xf]
        %v217 = vld [vmem:[%s181 + $0x60] sm:$0xf]
        %v218 = vld [vmem:[%s181 + $0x64] sm:$0xf]
        %v219 = vld [vmem:[%s181 + $0x68] sm:$0xf]
        %v220 = vld [vmem:[%s181 + $0x6c] sm:$0xf]
        %v221 = vld [vmem:[%s181 + $0x70] sm:$0xf]
        %v222 = vld [vmem:[%s181 + $0x74] sm:$0xf]
        %v223 = vld [vmem:[%s181 + $0x78] sm:$0xf]
        %v224 = vld [vmem:[%s181 + $0x7c] sm:$0xf]
        %v225 = vld [vmem:[%s181 + $0x80] sm:$0xf]
        %v226 = vld [vmem:[%s181 + $0x84] sm:$0xf]
        %v227 = vld [vmem:[%s181 + $0x88] sm:$0xf]
        %v228 = vld [vmem:[%s181 + $0x8c] sm:$0xf]
        %v229 = vld [vmem:[%s181 + $0x90] sm:$0xf]
        %v230 = vld [vmem:[%s181 + $0x94] sm:$0xf]
        %v231 = vld [vmem:[%s181 + $0x98] sm:$0xf]
        %v232 = vld [vmem:[%s181 + $0x9c] sm:$0xf]
        %v233 = vld [vmem:[%s181 + $0xa0] sm:$0xf]
        %v234 = vld [vmem:[%s181 + $0xa4] sm:$0xf]
        %v235 = vld [vmem:[%s181 + $0xa8] sm:$0xf]
        %v236 = vld [vmem:[%s181 + $0xac] sm:$0xf]
        %v237 = vld [vmem:[%s181 + $0xb0] sm:$0xf]
        %v238 = vld [vmem:[%s181 + $0xb4] sm:$0xf]
        %v239 = vld [vmem:[%s181 + $0xb8] sm:$0xf]
        %v240 = vld [vmem:[%s181 + $0xbc] sm:$0xf]
        %v241 = vld [vmem:[%s181 + $0xc0] sm:$0xf]
        %v242 = vld [vmem:[%s181 + $0xc4] sm:$0xf]
        %v243 = vld [vmem:[%s181 + $0xc8] sm:$0xf]
        %v244 = vld [vmem:[%s181 + $0xcc] sm:$0xf]
        %v245 = vld [vmem:[%s181 + $0xd0] sm:$0xf]
        %v246 = vld [vmem:[%s181 + $0xd4] sm:$0xf]
        %v247 = vld [vmem:[%s181 + $0xd8] sm:$0xf]
        %v248 = vld [vmem:[%s181 + $0xdc] sm:$0xf]
        %v249 = vld [vmem:[%s181 + $0xe0] sm:$0xf]
        %v250 = vld [vmem:[%s181 + $0xe4] sm:$0xf]
        %v251 = vld [vmem:[%s181 + $0xe8] sm:$0xf]
        %v252 = vld [vmem:[%s181 + $0xec] sm:$0xf]
        %v253 = vld [vmem:[%s181 + $0xf0] sm:$0xf]
        %v254 = vld [vmem:[%s181 + $0xf4] sm:$0xf]
        %v255 = vld [vmem:[%s181 + $0xf8] sm:$0xf]
        %v256 = vld [vmem:[%s181 + $0xfc] sm:$0xf]
        %v257 = vld [vmem:[%s1] sm:$0xf]
        %v258 = vld [vmem:[%s1 + $0x4] sm:$0xf]
        %v259 = vld [vmem:[%s1 + $0x8] sm:$0xf]
        %v260 = vld [vmem:[%s1 + $0xc] sm:$0xf]
        %v261 = vld [vmem:[%s1 + $0x10] sm:$0xf]
        %v262 = vld [vmem:[%s1 + $0x14] sm:$0xf]
        %v263 = vld [vmem:[%s1 + $0x18] sm:$0xf]
        %v264 = vld [vmem:[%s1 + $0x1c] sm:$0xf]
        %v265 = vld [vmem:[%s1 + $0x20] sm:$0xf]
        %v266 = vld [vmem:[%s2] sm:$0x1]
        %v268 = vlaneseq
        %v269 = vshrl.u32 %v268, 7
        %v270 = vsub.s32 0, %v269
        %v271 = vrot.slane %v266, %v270
        %v337 = vunpack.c.l.b16 %v193
        %v338 = vunpack.c.l.b16 %v194
        %v339 = vunpack.c.l.b16 %v195
        %v340 = vunpack.c.l.b16 %v196
        %v341 = vunpack.c.l.b16 %v197
        %v342 = vunpack.c.l.b16 %v198
        %v343 = vunpack.c.l.b16 %v199
        %v344 = vunpack.c.l.b16 %v200
        %v345 = vunpack.c.l.b16 %v201
        %v346 = vunpack.c.l.b16 %v202
        %v347 = vunpack.c.l.b16 %v203
        %v348 = vunpack.c.l.b16 %v204
        %v349 = vunpack.c.l.b16 %v205
        %v350 = vunpack.c.l.b16 %v206
        %v351 = vunpack.c.l.b16 %v207
        %v352 = vunpack.c.l.b16 %v208
        %v353 = vunpack.c.l.b16 %v209
        %v354 = vunpack.c.l.b16 %v210
        %v355 = vunpack.c.l.b16 %v211
        %v356 = vunpack.c.l.b16 %v212
        %v357 = vunpack.c.l.b16 %v213
        %v358 = vunpack.c.l.b16 %v214
        %v359 = vunpack.c.l.b16 %v215
        %v360 = vunpack.c.l.b16 %v216
        %v361 = vunpack.c.l.b16 %v217
        %v362 = vunpack.c.l.b16 %v218
        %v363 = vunpack.c.l.b16 %v219
        %v364 = vunpack.c.l.b16 %v220
        %v365 = vunpack.c.l.b16 %v221
        %v366 = vunpack.c.l.b16 %v222
        %v367 = vunpack.c.l.b16 %v223
        %v368 = vunpack.c.l.b16 %v224
        %v369 = vunpack.c.l.b16 %v225
        %v370 = vunpack.c.l.b16 %v226
        %v371 = vunpack.c.l.b16 %v227
        %v372 = vunpack.c.l.b16 %v228
        %v373 = vunpack.c.l.b16 %v229
        %v374 = vunpack.c.l.b16 %v230
        %v375 = vunpack.c.l.b16 %v231
        %v376 = vunpack.c.l.b16 %v232
        %v377 = vunpack.c.l.b16 %v233
        %v378 = vunpack.c.l.b16 %v234
        %v379 = vunpack.c.l.b16 %v235
        %v380 = vunpack.c.l.b16 %v236
        %v381 = vunpack.c.l.b16 %v237
        %v382 = vunpack.c.l.b16 %v238
        %v383 = vunpack.c.l.b16 %v239
        %v384 = vunpack.c.l.b16 %v240
        %v385 = vunpack.c.l.b16 %v241
        %v386 = vunpack.c.l.b16 %v242
        %v387 = vunpack.c.l.b16 %v243
        %v388 = vunpack.c.l.b16 %v244
        %v389 = vunpack.c.l.b16 %v245
        %v390 = vunpack.c.l.b16 %v246
        %v391 = vunpack.c.l.b16 %v247
        %v392 = vunpack.c.l.b16 %v248
        %v393 = vunpack.c.l.b16 %v249
        %v394 = vunpack.c.l.b16 %v250
        %v395 = vunpack.c.l.b16 %v251
        %v396 = vunpack.c.l.b16 %v252
        %v397 = vunpack.c.l.b16 %v253
        %v398 = vunpack.c.l.b16 %v254
        %v399 = vunpack.c.l.b16 %v255
        %v400 = vunpack.c.l.b16 %v256
        %v401 = vpack.c.b16 %v338, %v337
        %v402 = vpack.c.b16 %v340, %v339
        %v403 = vpack.c.b16 %v342, %v341
        %v404 = vpack.c.b16 %v344, %v343
        %v405 = vpack.c.b16 %v346, %v345
        %v406 = vpack.c.b16 %v348, %v347
        %v407 = vpack.c.b16 %v350, %v349
        %v408 = vpack.c.b16 %v352, %v351
        %v409 = vpack.c.b16 %v354, %v353
        %v410 = vpack.c.b16 %v356, %v355
        %v411 = vpack.c.b16 %v358, %v357
        %v412 = vpack.c.b16 %v360, %v359
        %v413 = vpack.c.b16 %v362, %v361
        %v414 = vpack.c.b16 %v364, %v363
        %v415 = vpack.c.b16 %v366, %v365
        %v416 = vpack.c.b16 %v368, %v367
        %v417 = vpack.c.b16 %v370, %v369
        %v418 = vpack.c.b16 %v372, %v371
        %v419 = vpack.c.b16 %v374, %v373
        %v420 = vpack.c.b16 %v376, %v375
        %v421 = vpack.c.b16 %v378, %v377
        %v422 = vpack.c.b16 %v380, %v379
        %v423 = vpack.c.b16 %v382, %v381
        %v424 = vpack.c.b16 %v384, %v383
        %v425 = vpack.c.b16 %v386, %v385
        %v426 = vpack.c.b16 %v388, %v387
        %v427 = vpack.c.b16 %v390, %v389
        %v428 = vpack.c.b16 %v392, %v391
        %v429 = vpack.c.b16 %v394, %v393
        %v430 = vpack.c.b16 %v396, %v395
        %v431 = vpack.c.b16 %v398, %v397
        %v432 = vpack.c.b16 %v400, %v399
        %v442 = vunpack.c.l.b16 %v257
        %v443 = vunpack.c.l.b16 %v258
        %v444 = vunpack.c.l.b16 %v259
        %v445 = vunpack.c.l.b16 %v260
        %v446 = vunpack.c.l.b16 %v261
        %v447 = vunpack.c.l.b16 %v262
        %v448 = vunpack.c.l.b16 %v263
        %v449 = vunpack.c.l.b16 %v264
        %v450 = vunpack.c.l.b16 %v265
        %v451 = vpack.c.b16 %v443, %v442
        %v452 = vpack.c.b16 %v445, %v444
        %v453 = vpack.c.b16 %v447, %v446
        %v454 = vpack.c.b16 %v449, %v448
        %v455 = vpack.c.b16 %v450, %v450
        %vm460 = vcmask 588800
        %v462 = vsel %vm460, %v401, 0
        %v465 = vsel %vm460, %v402, 0
        %v468 = vsel %vm460, %v403, 0
        %v471 = vsel %vm460, %v404, 0
        %v474 = vsel %vm460, %v405, 0
        %v477 = vsel %vm460, %v406, 0
        %v480 = vsel %vm460, %v407, 0
        %v483 = vsel %vm460, %v408, 0
        %v486 = vsel %vm460, %v409, 0
        %v489 = vsel %vm460, %v410, 0
        %v492 = vsel %vm460, %v411, 0
        %v495 = vsel %vm460, %v412, 0
        %v498 = vsel %vm460, %v413, 0
        %v501 = vsel %vm460, %v414, 0
        %v504 = vsel %vm460, %v415, 0
        %v507 = vsel %vm460, %v416, 0
        %v510 = vsel %vm460, %v417, 0
        %v513 = vsel %vm460, %v418, 0
        %v516 = vsel %vm460, %v419, 0
        %v519 = vsel %vm460, %v420, 0
        %v522 = vsel %vm460, %v421, 0
        %v525 = vsel %vm460, %v422, 0
        %v528 = vsel %vm460, %v423, 0
        %v531 = vsel %vm460, %v424, 0
        %v534 = vsel %vm460, %v425, 0
        %v537 = vsel %vm460, %v426, 0
        %v540 = vsel %vm460, %v427, 0
        %v543 = vsel %vm460, %v428, 0
        %v546 = vsel %vm460, %v429, 0
        %v549 = vsel %vm460, %v430, 0
        %v552 = vsel %vm460, %v431, 0
        %v555 = vsel %vm460, %v432, 0
        %vm557 = vcmask 1043456
        %v559 = vsel %vm557, %v455, 0
        %561 = vmatprep.subr.bf16.mxu0 0
        %562 = vmatpush1.bf16.msra.mxu0 %v451
        %563 = vmatprep.subr.bf16.mxu0 0
        %564 = vmatpush1.bf16.msra.mxu0 %v452
        %565 = vmatprep.subr.bf16.mxu0 0
        %566 = vmatpush1.bf16.msra.mxu0 %v453
        %567 = vmatprep.subr.bf16.mxu0 0
        %568 = vmatpush1.bf16.msra.mxu0 %v454
        %569 = vmatprep.subr.bf16.mxu0 0
        %570 = vmatpush1.bf16.msra.mxu0 %v559
        %571 = vmatprep.subr.bf16.mxu0 0
        %572 = vmatpush1.bf16.msra.mxu0 0
        %573 = vmatprep.subr.bf16.mxu0 0
        %574 = vmatpush1.bf16.msra.mxu0 0
        %575 = vmatprep.subr.bf16.mxu0 0
        %576 = vmatpush1.bf16.msra.mxu0 0
        %577 = vmatprep.subr.bf16.mxu0 0
        %578 = vmatpush1.bf16.msra.mxu0 0
        %579 = vmatprep.subr.bf16.mxu0 0
        %580 = vmatpush1.bf16.msra.mxu0 0
        %581 = vmatprep.subr.bf16.mxu0 0
        %582 = vmatpush1.bf16.msra.mxu0 0
        %583 = vmatprep.subr.bf16.mxu0 0
        %584 = vmatpush1.bf16.msra.mxu0 0
        %585 = vmatprep.subr.bf16.mxu0 0
        %586 = vmatpush1.bf16.msra.mxu0 0
        %587 = vmatprep.subr.bf16.mxu0 0
        %588 = vmatpush1.bf16.msra.mxu0 0
        %589 = vmatprep.subr.bf16.mxu0 0
        %590 = vmatpush1.bf16.msra.mxu0 0
        %591 = vmatprep.subr.bf16.mxu0 0
        %592 = vmatpush1.bf16.msra.mxu0 0
        %593 = vmatprep.mubr.bf16.mxu0 0
        %594 = vmatmul.mubr.bf16.gmra.mrb[0].mxu0 %v462
        %v595 = vpop.f32.mrb[0].mxu0
        %v596 = vadd.f32 %v271, %v595
        %v597 = vpop.f32.mrb[0].mxu0
        %v598 = vpop.f32.mrb[0].mxu0
        %v599 = vadd.f32 %v271, %v598
        %v600 = vpop.f32.mrb[0].mxu0
        %601 = vmatprep.mubr.bf16.mxu0 0
        %602 = vmatmul.mubr.bf16.gmra.mrb[0].mxu0 %v465
        %v603 = vpop.f32.mrb[0].mxu0
        %v604 = vadd.f32 %v271, %v603
        %v605 = vpop.f32.mrb[0].mxu0
        %v606 = vpop.f32.mrb[0].mxu0
        %v607 = vadd.f32 %v271, %v606
        %v608 = vpop.f32.mrb[0].mxu0
        %609 = vmatprep.mubr.bf16.mxu0 0
        %610 = vmatmul.mubr.bf16.gmra.mrb[0].mxu0 %v468
        %v611 = vpop.f32.mrb[0].mxu0
        %v612 = vadd.f32 %v271, %v611
        %v613 = vpop.f32.mrb[0].mxu0
        %v614 = vpop.f32.mrb[0].mxu0
        %v615 = vadd.f32 %v271, %v614
        %v616 = vpop.f32.mrb[0].mxu0
        %617 = vmatprep.mubr.bf16.mxu0 0
        %618 = vmatmul.mubr.bf16.gmra.mrb[0].mxu0 %v471
        %v619 = vpop.f32.mrb[0].mxu0
        %v620 = vadd.f32 %v271, %v619
        %v621 = vpop.f32.mrb[0].mxu0
        %v622 = vpop.f32.mrb[0].mxu0
        %v623 = vadd.f32 %v271, %v622
        %v624 = vpop.f32.mrb[0].mxu0
        %625 = vmatprep.mubr.bf16.mxu0 0
        %626 = vmatmul.mubr.bf16.gmra.mrb[0].mxu0 %v474
        %v627 = vpop.f32.mrb[0].mxu0
        %v628 = vadd.f32 %v271, %v627
        %v629 = vpop.f32.mrb[0].mxu0
        %v630 = vpop.f32.mrb[0].mxu0
        %v631 = vadd.f32 %v271, %v630
        %v632 = vpop.f32.mrb[0].mxu0
        %633 = vmatprep.mubr.bf16.mxu0 0
        %634 = vmatmul.mubr.bf16.gmra.mrb[0].mxu0 %v477
        %v635 = vpop.f32.mrb[0].mxu0
        %v636 = vadd.f32 %v271, %v635
        %v637 = vpop.f32.mrb[0].mxu0
        %v638 = vpop.f32.mrb[0].mxu0
        %v639 = vadd.f32 %v271, %v638
        %v640 = vpop.f32.mrb[0].mxu0
        %641 = vmatprep.mubr.bf16.mxu0 0
        %642 = vmatmul.mubr.bf16.gmra.mrb[0].mxu0 %v480
        %v643 = vpop.f32.mrb[0].mxu0
        %v644 = vadd.f32 %v271, %v643
        %v645 = vpop.f32.mrb[0].mxu0
        %v646 = vpop.f32.mrb[0].mxu0
        %v647 = vadd.f32 %v271, %v646
        %v648 = vpop.f32.mrb[0].mxu0
        %649 = vmatprep.mubr.bf16.mxu0 0
        %650 = vmatmul.mubr.bf16.gmra.mrb[0].mxu0 %v483
        %v651 = vpop.f32.mrb[0].mxu0
        %v652 = vadd.f32 %v271, %v651
        %v653 = vpop.f32.mrb[0].mxu0
        %v654 = vpop.f32.mrb[0].mxu0
        %v655 = vadd.f32 %v271, %v654
        %v656 = vpop.f32.mrb[0].mxu0
        %657 = vmatprep.mubr.bf16.mxu0 0
        %658 = vmatmul.mubr.bf16.gmra.mrb[0].mxu0 %v486
        %v659 = vpop.f32.mrb[0].mxu0
        %v660 = vadd.f32 %v271, %v659
        %v661 = vpop.f32.mrb[0].mxu0
        %v662 = vpop.f32.mrb[0].mxu0
        %v663 = vadd.f32 %v271, %v662
        %v664 = vpop.f32.mrb[0].mxu0
        %665 = vmatprep.mubr.bf16.mxu0 0
        %666 = vmatmul.mubr.bf16.gmra.mrb[0].mxu0 %v489
        %v667 = vpop.f32.mrb[0].mxu0
        %v668 = vadd.f32 %v271, %v667
        %v669 = vpop.f32.mrb[0].mxu0
        %v670 = vpop.f32.mrb[0].mxu0
        %v671 = vadd.f32 %v271, %v670
        %v672 = vpop.f32.mrb[0].mxu0
        %673 = vmatprep.mubr.bf16.mxu0 0
        %674 = vmatmul.mubr.bf16.gmra.mrb[0].mxu0 %v492
        %v675 = vpop.f32.mrb[0].mxu0
        %v676 = vadd.f32 %v271, %v675
        %v677 = vpop.f32.mrb[0].mxu0
        %v678 = vpop.f32.mrb[0].mxu0
        %v679 = vadd.f32 %v271, %v678
        %v680 = vpop.f32.mrb[0].mxu0
        %681 = vmatprep.mubr.bf16.mxu0 0
        %682 = vmatmul.mubr.bf16.gmra.mrb[0].mxu0 %v495
        %v683 = vpop.f32.mrb[0].mxu0
        %v684 = vadd.f32 %v271, %v683
        %v685 = vpop.f32.mrb[0].mxu0
        %v686 = vpop.f32.mrb[0].mxu0
        %v687 = vadd.f32 %v271, %v686
        %v688 = vpop.f32.mrb[0].mxu0
        %689 = vmatprep.mubr.bf16.mxu0 0
        %690 = vmatmul.mubr.bf16.gmra.mrb[0].mxu0 %v498
        %v691 = vpop.f32.mrb[0].mxu0
        %v692 = vadd.f32 %v271, %v691
        %v693 = vpop.f32.mrb[0].mxu0
        %v694 = vpop.f32.mrb[0].mxu0
        %v695 = vadd.f32 %v271, %v694
        %v696 = vpop.f32.mrb[0].mxu0
        %697 = vmatprep.mubr.bf16.mxu0 0
        %698 = vmatmul.mubr.bf16.gmra.mrb[0].mxu0 %v501
        %v699 = vpop.f32.mrb[0].mxu0
        %v700 = vadd.f32 %v271, %v699
        %v701 = vpop.f32.mrb[0].mxu0
        %v702 = vpop.f32.mrb[0].mxu0
        %v703 = vadd.f32 %v271, %v702
        %v704 = vpop.f32.mrb[0].mxu0
        %705 = vmatprep.mubr.bf16.mxu0 0
        %706 = vmatmul.mubr.bf16.gmra.mrb[0].mxu0 %v504
        %v707 = vpop.f32.mrb[0].mxu0
        %v708 = vadd.f32 %v271, %v707
        %v709 = vpop.f32.mrb[0].mxu0
        %v710 = vpop.f32.mrb[0].mxu0
        %v711 = vadd.f32 %v271, %v710
        %v712 = vpop.f32.mrb[0].mxu0
        %713 = vmatprep.mubr.bf16.mxu0 0
        %714 = vmatmul.mubr.bf16.gmra.mrb[0].mxu0 %v507
        %v715 = vpop.f32.mrb[0].mxu0
        %v716 = vadd.f32 %v271, %v715
        %v717 = vpop.f32.mrb[0].mxu0
        %v718 = vpop.f32.mrb[0].mxu0
        %v719 = vadd.f32 %v271, %v718
        %v720 = vpop.f32.mrb[0].mxu0
        %721 = vmatprep.mubr.bf16.mxu0 0
        %722 = vmatmul.mubr.bf16.gmra.mrb[0].mxu0 %v510
        %v723 = vpop.f32.mrb[0].mxu0
        %v724 = vadd.f32 %v271, %v723
        %v725 = vpop.f32.mrb[0].mxu0
        %v726 = vpop.f32.mrb[0].mxu0
        %v727 = vadd.f32 %v271, %v726
        %v728 = vpop.f32.mrb[0].mxu0
        %729 = vmatprep.mubr.bf16.mxu0 0
        %730 = vmatmul.mubr.bf16.gmra.mrb[0].mxu0 %v513
        %v731 = vpop.f32.mrb[0].mxu0
        %v732 = vadd.f32 %v271, %v731
        %v733 = vpop.f32.mrb[0].mxu0
        %v734 = vpop.f32.mrb[0].mxu0
        %v735 = vadd.f32 %v271, %v734
        %v736 = vpop.f32.mrb[0].mxu0
        %737 = vmatprep.mubr.bf16.mxu0 0
        %738 = vmatmul.mubr.bf16.gmra.mrb[0].mxu0 %v516
        %v739 = vpop.f32.mrb[0].mxu0
        %v740 = vadd.f32 %v271, %v739
        %v741 = vpop.f32.mrb[0].mxu0
        %v742 = vpop.f32.mrb[0].mxu0
        %v743 = vadd.f32 %v271, %v742
        %v744 = vpop.f32.mrb[0].mxu0
        %745 = vmatprep.mubr.bf16.mxu0 0
        %746 = vmatmul.mubr.bf16.gmra.mrb[0].mxu0 %v519
        %v747 = vpop.f32.mrb[0].mxu0
        %v748 = vadd.f32 %v271, %v747
        %v749 = vpop.f32.mrb[0].mxu0
        %v750 = vpop.f32.mrb[0].mxu0
        %v751 = vadd.f32 %v271, %v750
        %v752 = vpop.f32.mrb[0].mxu0
        %753 = vmatprep.mubr.bf16.mxu0 0
        %754 = vmatmul.mubr.bf16.gmra.mrb[0].mxu0 %v522
        %v755 = vpop.f32.mrb[0].mxu0
        %v756 = vadd.f32 %v271, %v755
        %v757 = vpop.f32.mrb[0].mxu0
        %v758 = vpop.f32.mrb[0].mxu0
        %v759 = vadd.f32 %v271, %v758
        %v760 = vpop.f32.mrb[0].mxu0
        %761 = vmatprep.mubr.bf16.mxu0 0
        %762 = vmatmul.mubr.bf16.gmra.mrb[0].mxu0 %v525
        %v763 = vpop.f32.mrb[0].mxu0
        %v764 = vadd.f32 %v271, %v763
        %v765 = vpop.f32.mrb[0].mxu0
        %v766 = vpop.f32.mrb[0].mxu0
        %v767 = vadd.f32 %v271, %v766
        %v768 = vpop.f32.mrb[0].mxu0
        %769 = vmatprep.mubr.bf16.mxu0 0
        %770 = vmatmul.mubr.bf16.gmra.mrb[0].mxu0 %v528
        %v771 = vpop.f32.mrb[0].mxu0
        %v772 = vadd.f32 %v271, %v771
        %v773 = vpop.f32.mrb[0].mxu0
        %v774 = vpop.f32.mrb[0].mxu0
        %v775 = vadd.f32 %v271, %v774
        %v776 = vpop.f32.mrb[0].mxu0
        %777 = vmatprep.mubr.bf16.mxu0 0
        %778 = vmatmul.mubr.bf16.gmra.mrb[0].mxu0 %v531
        %v779 = vpop.f32.mrb[0].mxu0
        %v780 = vadd.f32 %v271, %v779
        %v781 = vpop.f32.mrb[0].mxu0
        %v782 = vpop.f32.mrb[0].mxu0
        %v783 = vadd.f32 %v271, %v782
        %v784 = vpop.f32.mrb[0].mxu0
        %785 = vmatprep.mubr.bf16.mxu0 0
        %786 = vmatmul.mubr.bf16.gmra.mrb[0].mxu0 %v534
        %v787 = vpop.f32.mrb[0].mxu0
        %v788 = vadd.f32 %v271, %v787
        %v789 = vpop.f32.mrb[0].mxu0
        %v790 = vpop.f32.mrb[0].mxu0
        %v791 = vadd.f32 %v271, %v790
        %v792 = vpop.f32.mrb[0].mxu0
        %793 = vmatprep.mubr.bf16.mxu0 0
        %794 = vmatmul.mubr.bf16.gmra.mrb[0].mxu0 %v537
        %v795 = vpop.f32.mrb[0].mxu0
        %v796 = vadd.f32 %v271, %v795
        %v797 = vpop.f32.mrb[0].mxu0
        %v798 = vpop.f32.mrb[0].mxu0
        %v799 = vadd.f32 %v271, %v798
        %v800 = vpop.f32.mrb[0].mxu0
        %801 = vmatprep.mubr.bf16.mxu0 0
        %802 = vmatmul.mubr.bf16.gmra.mrb[0].mxu0 %v540
        %v803 = vpop.f32.mrb[0].mxu0
        %v804 = vadd.f32 %v271, %v803
        %v805 = vpop.f32.mrb[0].mxu0
        %v806 = vpop.f32.mrb[0].mxu0
        %v807 = vadd.f32 %v271, %v806
        %v808 = vpop.f32.mrb[0].mxu0
        %809 = vmatprep.mubr.bf16.mxu0 0
        %810 = vmatmul.mubr.bf16.gmra.mrb[0].mxu0 %v543
        %v811 = vpop.f32.mrb[0].mxu0
        %v812 = vadd.f32 %v271, %v811
        %v813 = vpop.f32.mrb[0].mxu0
        %v814 = vpop.f32.mrb[0].mxu0
        %v815 = vadd.f32 %v271, %v814
        %v816 = vpop.f32.mrb[0].mxu0
        %817 = vmatprep.mubr.bf16.mxu0 0
        %818 = vmatmul.mubr.bf16.gmra.mrb[0].mxu0 %v546
        %v819 = vpop.f32.mrb[0].mxu0
        %v820 = vadd.f32 %v271, %v819
        %v821 = vpop.f32.mrb[0].mxu0
        %v822 = vpop.f32.mrb[0].mxu0
        %v823 = vadd.f32 %v271, %v822
        %v824 = vpop.f32.mrb[0].mxu0
        %825 = vmatprep.mubr.bf16.mxu0 0
        %826 = vmatmul.mubr.bf16.gmra.mrb[0].mxu0 %v549
        %v827 = vpop.f32.mrb[0].mxu0
        %v828 = vadd.f32 %v271, %v827
        %v829 = vpop.f32.mrb[0].mxu0
        %v830 = vpop.f32.mrb[0].mxu0
        %v831 = vadd.f32 %v271, %v830
        %v832 = vpop.f32.mrb[0].mxu0
        %833 = vmatprep.mubr.bf16.mxu0 0
        %834 = vmatmul.mubr.bf16.gmra.mrb[0].mxu0 %v552
        %v835 = vpop.f32.mrb[0].mxu0
        %v836 = vadd.f32 %v271, %v835
        %v837 = vpop.f32.mrb[0].mxu0
        %v838 = vpop.f32.mrb[0].mxu0
        %v839 = vadd.f32 %v271, %v838
        %v840 = vpop.f32.mrb[0].mxu0
        %841 = vmatprep.mubr.bf16.mxu0 0
        %842 = vmatmul.mubr.bf16.gmra.mrb[0].mxu0 %v555
        %v843 = vpop.f32.mrb[0].mxu0
        %v844 = vadd.f32 %v271, %v843
        %v845 = vpop.f32.mrb[0].mxu0
        %v846 = vpop.f32.mrb[0].mxu0
        %v847 = vadd.f32 %v271, %v846
        %v848 = vpop.f32.mrb[0].mxu0
        %849 = vdwg.mxu0
        %v850 = vmax.f32 %v596, 0.0
        %v851 = vmax.f32 %v599, 0.0
        %v852 = vmax.f32 %v604, 0.0
        %v853 = vmax.f32 %v607, 0.0
        %v854 = vmax.f32 %v612, 0.0
        %v855 = vmax.f32 %v615, 0.0
        %v856 = vmax.f32 %v620, 0.0
        %v857 = vmax.f32 %v623, 0.0
        %v858 = vmax.f32 %v628, 0.0
        %v859 = vmax.f32 %v631, 0.0
        %v860 = vmax.f32 %v636, 0.0
        %v861 = vmax.f32 %v639, 0.0
        %v862 = vmax.f32 %v644, 0.0
        %v863 = vmax.f32 %v647, 0.0
        %v864 = vmax.f32 %v652, 0.0
        %v865 = vmax.f32 %v655, 0.0
        %v866 = vmax.f32 %v660, 0.0
        %v867 = vmax.f32 %v663, 0.0
        %v868 = vmax.f32 %v668, 0.0
        %v869 = vmax.f32 %v671, 0.0
        %v870 = vmax.f32 %v676, 0.0
        %v871 = vmax.f32 %v679, 0.0
        %v872 = vmax.f32 %v684, 0.0
        %v873 = vmax.f32 %v687, 0.0
        %v874 = vmax.f32 %v692, 0.0
        %v875 = vmax.f32 %v695, 0.0
        %v876 = vmax.f32 %v700, 0.0
        %v877 = vmax.f32 %v703, 0.0
        %v878 = vmax.f32 %v708, 0.0
        %v879 = vmax.f32 %v711, 0.0
        %v880 = vmax.f32 %v716, 0.0
        %v881 = vmax.f32 %v719, 0.0
        %v882 = vmax.f32 %v724, 0.0
        %v883 = vmax.f32 %v727, 0.0
        %v884 = vmax.f32 %v732, 0.0
        %v885 = vmax.f32 %v735, 0.0
        %v886 = vmax.f32 %v740, 0.0
        %v887 = vmax.f32 %v743, 0.0
        %v888 = vmax.f32 %v748, 0.0
        %v889 = vmax.f32 %v751, 0.0
        %v890 = vmax.f32 %v756, 0.0
        %v891 = vmax.f32 %v759, 0.0
        %v892 = vmax.f32 %v764, 0.0
        %v893 = vmax.f32 %v767, 0.0
        %v894 = vmax.f32 %v772, 0.0
        %v895 = vmax.f32 %v775, 0.0
        %v896 = vmax.f32 %v780, 0.0
        %v897 = vmax.f32 %v783, 0.0
        %v898 = vmax.f32 %v788, 0.0
        %v899 = vmax.f32 %v791, 0.0
        %v900 = vmax.f32 %v796, 0.0
        %v901 = vmax.f32 %v799, 0.0
        %v902 = vmax.f32 %v804, 0.0
        %v903 = vmax.f32 %v807, 0.0
        %v904 = vmax.f32 %v812, 0.0
        %v905 = vmax.f32 %v815, 0.0
        %v906 = vmax.f32 %v820, 0.0
        %v907 = vmax.f32 %v823, 0.0
        %v908 = vmax.f32 %v828, 0.0
        %v909 = vmax.f32 %v831, 0.0
        %v910 = vmax.f32 %v836, 0.0
        %v911 = vmax.f32 %v839, 0.0
        %v912 = vmax.f32 %v844, 0.0
        %v913 = vmax.f32 %v847, 0.0
        %914 = vst [vmem:[%s172] sm:$0xff] %v850
        %915 = vst [vmem:[%s172 + $0x8] sm:$0xff] %v851
        %916 = vst [vmem:[%s172 + $0x10] sm:$0xff] %v852
        %917 = vst [vmem:[%s172 + $0x18] sm:$0xff] %v853
        %918 = vst [vmem:[%s172 + $0x20] sm:$0xff] %v854
        %919 = vst [vmem:[%s172 + $0x28] sm:$0xff] %v855
        %920 = vst [vmem:[%s172 + $0x30] sm:$0xff] %v856
        %921 = vst [vmem:[%s172 + $0x38] sm:$0xff] %v857
        %922 = vst [vmem:[%s172 + $0x40] sm:$0xff] %v858
        %923 = vst [vmem:[%s172 + $0x48] sm:$0xff] %v859
        %924 = vst [vmem:[%s172 + $0x50] sm:$0xff] %v860
        %925 = vst [vmem:[%s172 + $0x58] sm:$0xff] %v861
        %926 = vst [vmem:[%s172 + $0x60] sm:$0xff] %v862
        %927 = vst [vmem:[%s172 + $0x68] sm:$0xff] %v863
        %928 = vst [vmem:[%s172 + $0x70] sm:$0xff] %v864
        %929 = vst [vmem:[%s172 + $0x78] sm:$0xff] %v865
        %930 = vst [vmem:[%s172 + $0x80] sm:$0xff] %v866
        %931 = vst [vmem:[%s172 + $0x88] sm:$0xff] %v867
        %932 = vst [vmem:[%s172 + $0x90] sm:$0xff] %v868
        %933 = vst [vmem:[%s172 + $0x98] sm:$0xff] %v869
        %934 = vst [vmem:[%s172 + $0xa0] sm:$0xff] %v870
        %935 = vst [vmem:[%s172 + $0xa8] sm:$0xff] %v871
        %936 = vst [vmem:[%s172 + $0xb0] sm:$0xff] %v872
        %937 = vst [vmem:[%s172 + $0xb8] sm:$0xff] %v873
        %938 = vst [vmem:[%s172 + $0xc0] sm:$0xff] %v874
        %939 = vst [vmem:[%s172 + $0xc8] sm:$0xff] %v875
        %940 = vst [vmem:[%s172 + $0xd0] sm:$0xff] %v876
        %941 = vst [vmem:[%s172 + $0xd8] sm:$0xff] %v877
        %942 = vst [vmem:[%s172 + $0xe0] sm:$0xff] %v878
        %943 = vst [vmem:[%s172 + $0xe8] sm:$0xff] %v879
        %944 = vst [vmem:[%s172 + $0xf0] sm:$0xff] %v880
        %945 = vst [vmem:[%s172 + $0xf8] sm:$0xff] %v881
        %946 = vst [vmem:[%s172 + $0x100] sm:$0xff] %v882
        %947 = vst [vmem:[%s172 + $0x108] sm:$0xff] %v883
        %948 = vst [vmem:[%s172 + $0x110] sm:$0xff] %v884
        %949 = vst [vmem:[%s172 + $0x118] sm:$0xff] %v885
        %950 = vst [vmem:[%s172 + $0x120] sm:$0xff] %v886
        %951 = vst [vmem:[%s172 + $0x128] sm:$0xff] %v887
        %952 = vst [vmem:[%s172 + $0x130] sm:$0xff] %v888
        %953 = vst [vmem:[%s172 + $0x138] sm:$0xff] %v889
        %954 = vst [vmem:[%s172 + $0x140] sm:$0xff] %v890
        %955 = vst [vmem:[%s172 + $0x148] sm:$0xff] %v891
        %956 = vst [vmem:[%s172 + $0x150] sm:$0xff] %v892
        %957 = vst [vmem:[%s172 + $0x158] sm:$0xff] %v893
        %958 = vst [vmem:[%s172 + $0x160] sm:$0xff] %v894
        %959 = vst [vmem:[%s172 + $0x168] sm:$0xff] %v895
        %960 = vst [vmem:[%s172 + $0x170] sm:$0xff] %v896
        %961 = vst [vmem:[%s172 + $0x178] sm:$0xff] %v897
        %962 = vst [vmem:[%s172 + $0x180] sm:$0xff] %v898
        %963 = vst [vmem:[%s172 + $0x188] sm:$0xff] %v899
        %964 = vst [vmem:[%s172 + $0x190] sm:$0xff] %v900
        %965 = vst [vmem:[%s172 + $0x198] sm:$0xff] %v901
        %966 = vst [vmem:[%s172 + $0x1a0] sm:$0xff] %v902
        %967 = vst [vmem:[%s172 + $0x1a8] sm:$0xff] %v903
        %968 = vst [vmem:[%s172 + $0x1b0] sm:$0xff] %v904
        %969 = vst [vmem:[%s172 + $0x1b8] sm:$0xff] %v905
        %970 = vst [vmem:[%s172 + $0x1c0] sm:$0xff] %v906
        %971 = vst [vmem:[%s172 + $0x1c8] sm:$0xff] %v907
        %972 = vst [vmem:[%s172 + $0x1d0] sm:$0xff] %v908
        %973 = vst [vmem:[%s172 + $0x1d8] sm:$0xff] %v909
        %974 = vst [vmem:[%s172 + $0x1e0] sm:$0xff] %v910
        %975 = vst [vmem:[%s172 + $0x1e8] sm:$0xff] %v911
        %976 = vst [vmem:[%s172 + $0x1f0] sm:$0xff] %v912
        %977 = vst [vmem:[%s172 + $0x1f8] sm:$0xff] %v913
        %s978 = sand.u32 %s90, 1
        %s979 = sand.u32 %s90, 1
        %s980 = smul.addr %s979, 512
        %s981 = scalar_lea.vmem [#allocation2], %s980
        // Predicated region
        $region33: #{conv_module_forward.4} parent=31 // pred_check
          %p982 = pneg %p100
        $region34: #{conv_module_forward.4} parent=31 // pred_check_branch
          %984 = sbr.rel (%p982) target = $region36
        $region35: #{conv_module_forward.4} parent=31 // pred_region
          %s985 = smul.u32 64, %s14
          %s986 = ssub.s32 381, %s985
          %p987 = scmp.lt.s32.totalorder %s986, 64
          %s988 = scalar_select %p987, %s986, 64
          %s989 = smul.u32 128, %s988
          %p990 = scmp.ne.s32.totalorder 0, %s989
          %s991 = smul.addr %s985, 8
          %s992 = scalar_lea.vmem %s3, %s991
          // Predicated region
          $region37: #{conv_module_forward.4} parent=35 // pred_check
            %p993 = pneg %p990
          $region38: #{conv_module_forward.4} parent=35 // pred_check_branch
            %995 = sbr.rel (%p993) target = $region40
          $region39: #{conv_module_forward.4} parent=35 // pred_region
            // Predicated region
            $region41: #{conv_module_forward.4} parent=39 // pred_check
              _
            $region42: #{conv_module_forward.4} parent=39 // pred_check_branch
              %997 = sbr.rel (0) target = $region44
            $region43: #{conv_module_forward.4} parent=39 // pred_region
              // Predicated region
              $region63: #{conv_module_forward.4} parent=43 // pred_check
                _
              $region64: #{conv_module_forward.4} parent=43 // pred_check_branch
                %1172 = sbr.rel (0) target = $region66
              $region65: #{conv_module_forward.4} parent=43 // pred_region
                %s1173 = sshrl.u32 %s988, 6
                // While loop
                $region67: #{conv_module_forward.4} parent=65 // loop_pre_header
                  _
                $region68: #{conv_module_forward.4} parent=65 // loop_header
                  %s1175 = sphi 0, %s1177
                  %p1176 = scmp.ge.s32.totalorder %s1175, %s1173
                  %s1180 = sphi 0, %s1313
                  %s1181 = sphi %s981, %s1316
                  %s1182 = sphi %s992, %s1317
                $region69: #{conv_module_forward.4} parent=65 // loop_header_branch
                  %1179 = sbr.rel (%p1176) target = $region73
                $region70: #{conv_module_forward.4} parent=65 // loop_body
                  %v1183 = vld [vmem:[%s1181] sm:$0xff]
                  %1184 = vst [vmem:[%s1182] sm:$0xff] %v1183
                  %v1185 = vld [vmem:[%s1181 + $0x8] sm:$0xff]
                  %1186 = vst [vmem:[%s1182 + $0x8] sm:$0xff] %v1185
                  %v1187 = vld [vmem:[%s1181 + $0x10] sm:$0xff]
                  %1188 = vst [vmem:[%s1182 + $0x10] sm:$0xff] %v1187
                  %v1189 = vld [vmem:[%s1181 + $0x18] sm:$0xff]
                  %1190 = vst [vmem:[%s1182 + $0x18] sm:$0xff] %v1189
                  %v1191 = vld [vmem:[%s1181 + $0x20] sm:$0xff]
                  %1192 = vst [vmem:[%s1182 + $0x20] sm:$0xff] %v1191
                  %v1193 = vld [vmem:[%s1181 + $0x28] sm:$0xff]
                  %1194 = vst [vmem:[%s1182 + $0x28] sm:$0xff] %v1193
                  %v1195 = vld [vmem:[%s1181 + $0x30] sm:$0xff]
                  %1196 = vst [vmem:[%s1182 + $0x30] sm:$0xff] %v1195
                  %v1197 = vld [vmem:[%s1181 + $0x38] sm:$0xff]
                  %1198 = vst [vmem:[%s1182 + $0x38] sm:$0xff] %v1197
                  %v1199 = vld [vmem:[%s1181 + $0x40] sm:$0xff]
                  %1200 = vst [vmem:[%s1182 + $0x40] sm:$0xff] %v1199
                  %v1201 = vld [vmem:[%s1181 + $0x48] sm:$0xff]
                  %1202 = vst [vmem:[%s1182 + $0x48] sm:$0xff] %v1201
                  %v1203 = vld [vmem:[%s1181 + $0x50] sm:$0xff]
                  %1204 = vst [vmem:[%s1182 + $0x50] sm:$0xff] %v1203
                  %v1205 = vld [vmem:[%s1181 + $0x58] sm:$0xff]
                  %1206 = vst [vmem:[%s1182 + $0x58] sm:$0xff] %v1205
                  %v1207 = vld [vmem:[%s1181 + $0x60] sm:$0xff]
                  %1208 = vst [vmem:[%s1182 + $0x60] sm:$0xff] %v1207
                  %v1209 = vld [vmem:[%s1181 + $0x68] sm:$0xff]
                  %1210 = vst [vmem:[%s1182 + $0x68] sm:$0xff] %v1209
                  %v1211 = vld [vmem:[%s1181 + $0x70] sm:$0xff]
                  %1212 = vst [vmem:[%s1182 + $0x70] sm:$0xff] %v1211
                  %v1213 = vld [vmem:[%s1181 + $0x78] sm:$0xff]
                  %1214 = vst [vmem:[%s1182 + $0x78] sm:$0xff] %v1213
                  %v1215 = vld [vmem:[%s1181 + $0x80] sm:$0xff]
                  %1216 = vst [vmem:[%s1182 + $0x80] sm:$0xff] %v1215
                  %v1217 = vld [vmem:[%s1181 + $0x88] sm:$0xff]
                  %1218 = vst [vmem:[%s1182 + $0x88] sm:$0xff] %v1217
                  %v1219 = vld [vmem:[%s1181 + $0x90] sm:$0xff]
                  %1220 = vst [vmem:[%s1182 + $0x90] sm:$0xff] %v1219
                  %v1221 = vld [vmem:[%s1181 + $0x98] sm:$0xff]
                  %1222 = vst [vmem:[%s1182 + $0x98] sm:$0xff] %v1221
                  %v1223 = vld [vmem:[%s1181 + $0xa0] sm:$0xff]
                  %1224 = vst [vmem:[%s1182 + $0xa0] sm:$0xff] %v1223
                  %v1225 = vld [vmem:[%s1181 + $0xa8] sm:$0xff]
                  %1226 = vst [vmem:[%s1182 + $0xa8] sm:$0xff] %v1225
                  %v1227 = vld [vmem:[%s1181 + $0xb0] sm:$0xff]
                  %1228 = vst [vmem:[%s1182 + $0xb0] sm:$0xff] %v1227
                  %v1229 = vld [vmem:[%s1181 + $0xb8] sm:$0xff]
                  %1230 = vst [vmem:[%s1182 + $0xb8] sm:$0xff] %v1229
                  %v1231 = vld [vmem:[%s1181 + $0xc0] sm:$0xff]
                  %1232 = vst [vmem:[%s1182 + $0xc0] sm:$0xff] %v1231
                  %v1233 = vld [vmem:[%s1181 + $0xc8] sm:$0xff]
                  %1234 = vst [vmem:[%s1182 + $0xc8] sm:$0xff] %v1233
                  %v1235 = vld [vmem:[%s1181 + $0xd0] sm:$0xff]
                  %1236 = vst [vmem:[%s1182 + $0xd0] sm:$0xff] %v1235
                  %v1237 = vld [vmem:[%s1181 + $0xd8] sm:$0xff]
                  %1238 = vst [vmem:[%s1182 + $0xd8] sm:$0xff] %v1237
                  %v1239 = vld [vmem:[%s1181 + $0xe0] sm:$0xff]
                  %1240 = vst [vmem:[%s1182 + $0xe0] sm:$0xff] %v1239
                  %v1241 = vld [vmem:[%s1181 + $0xe8] sm:$0xff]
                  %1242 = vst [vmem:[%s1182 + $0xe8] sm:$0xff] %v1241
                  %v1243 = vld [vmem:[%s1181 + $0xf0] sm:$0xff]
                  %1244 = vst [vmem:[%s1182 + $0xf0] sm:$0xff] %v1243
                  %v1245 = vld [vmem:[%s1181 + $0xf8] sm:$0xff]
                  %1246 = vst [vmem:[%s1182 + $0xf8] sm:$0xff] %v1245
                  %v1247 = vld [vmem:[%s1181 + $0x100] sm:$0xff]
                  %1248 = vst [vmem:[%s1182 + $0x100] sm:$0xff] %v1247
                  %v1249 = vld [vmem:[%s1181 + $0x108] sm:$0xff]
                  %1250 = vst [vmem:[%s1182 + $0x108] sm:$0xff] %v1249
                  %v1251 = vld [vmem:[%s1181 + $0x110] sm:$0xff]
                  %1252 = vst [vmem:[%s1182 + $0x110] sm:$0xff] %v1251
                  %v1253 = vld [vmem:[%s1181 + $0x118] sm:$0xff]
                  %1254 = vst [vmem:[%s1182 + $0x118] sm:$0xff] %v1253
                  %v1255 = vld [vmem:[%s1181 + $0x120] sm:$0xff]
                  %1256 = vst [vmem:[%s1182 + $0x120] sm:$0xff] %v1255
                  %v1257 = vld [vmem:[%s1181 + $0x128] sm:$0xff]
                  %1258 = vst [vmem:[%s1182 + $0x128] sm:$0xff] %v1257
                  %v1259 = vld [vmem:[%s1181 + $0x130] sm:$0xff]
                  %1260 = vst [vmem:[%s1182 + $0x130] sm:$0xff] %v1259
                  %v1261 = vld [vmem:[%s1181 + $0x138] sm:$0xff]
                  %1262 = vst [vmem:[%s1182 + $0x138] sm:$0xff] %v1261
                  %v1263 = vld [vmem:[%s1181 + $0x140] sm:$0xff]
                  %1264 = vst [vmem:[%s1182 + $0x140] sm:$0xff] %v1263
                  %v1265 = vld [vmem:[%s1181 + $0x148] sm:$0xff]
                  %1266 = vst [vmem:[%s1182 + $0x148] sm:$0xff] %v1265
                  %v1267 = vld [vmem:[%s1181 + $0x150] sm:$0xff]
                  %1268 = vst [vmem:[%s1182 + $0x150] sm:$0xff] %v1267
                  %v1269 = vld [vmem:[%s1181 + $0x158] sm:$0xff]
                  %1270 = vst [vmem:[%s1182 + $0x158] sm:$0xff] %v1269
                  %v1271 = vld [vmem:[%s1181 + $0x160] sm:$0xff]
                  %1272 = vst [vmem:[%s1182 + $0x160] sm:$0xff] %v1271
                  %v1273 = vld [vmem:[%s1181 + $0x168] sm:$0xff]
                  %1274 = vst [vmem:[%s1182 + $0x168] sm:$0xff] %v1273
                  %v1275 = vld [vmem:[%s1181 + $0x170] sm:$0xff]
                  %1276 = vst [vmem:[%s1182 + $0x170] sm:$0xff] %v1275
                  %v1277 = vld [vmem:[%s1181 + $0x178] sm:$0xff]
                  %1278 = vst [vmem:[%s1182 + $0x178] sm:$0xff] %v1277
                  %v1279 = vld [vmem:[%s1181 + $0x180] sm:$0xff]
                  %1280 = vst [vmem:[%s1182 + $0x180] sm:$0xff] %v1279
                  %v1281 = vld [vmem:[%s1181 + $0x188] sm:$0xff]
                  %1282 = vst [vmem:[%s1182 + $0x188] sm:$0xff] %v1281
                  %v1283 = vld [vmem:[%s1181 + $0x190] sm:$0xff]
                  %1284 = vst [vmem:[%s1182 + $0x190] sm:$0xff] %v1283
                  %v1285 = vld [vmem:[%s1181 + $0x198] sm:$0xff]
                  %1286 = vst [vmem:[%s1182 + $0x198] sm:$0xff] %v1285
                  %v1287 = vld [vmem:[%s1181 + $0x1a0] sm:$0xff]
                  %1288 = vst [vmem:[%s1182 + $0x1a0] sm:$0xff] %v1287
                  %v1289 = vld [vmem:[%s1181 + $0x1a8] sm:$0xff]
                  %1290 = vst [vmem:[%s1182 + $0x1a8] sm:$0xff] %v1289
                  %v1291 = vld [vmem:[%s1181 + $0x1b0] sm:$0xff]
                  %1292 = vst [vmem:[%s1182 + $0x1b0] sm:$0xff] %v1291
                  %v1293 = vld [vmem:[%s1181 + $0x1b8] sm:$0xff]
                  %1294 = vst [vmem:[%s1182 + $0x1b8] sm:$0xff] %v1293
                  %v1295 = vld [vmem:[%s1181 + $0x1c0] sm:$0xff]
                  %1296 = vst [vmem:[%s1182 + $0x1c0] sm:$0xff] %v1295
                  %v1297 = vld [vmem:[%s1181 + $0x1c8] sm:$0xff]
                  %1298 = vst [vmem:[%s1182 + $0x1c8] sm:$0xff] %v1297
                  %v1299 = vld [vmem:[%s1181 + $0x1d0] sm:$0xff]
                  %1300 = vst [vmem:[%s1182 + $0x1d0] sm:$0xff] %v1299
                  %v1301 = vld [vmem:[%s1181 + $0x1d8] sm:$0xff]
                  %1302 = vst [vmem:[%s1182 + $0x1d8] sm:$0xff] %v1301
                  %v1303 = vld [vmem:[%s1181 + $0x1e0] sm:$0xff]
                  %1304 = vst [vmem:[%s1182 + $0x1e0] sm:$0xff] %v1303
                  %v1305 = vld [vmem:[%s1181 + $0x1e8] sm:$0xff]
                  %1306 = vst [vmem:[%s1182 + $0x1e8] sm:$0xff] %v1305
                  %v1307 = vld [vmem:[%s1181 + $0x1f0] sm:$0xff]
                  %1308 = vst [vmem:[%s1182 + $0x1f0] sm:$0xff] %v1307
                  %v1309 = vld [vmem:[%s1181 + $0x1f8] sm:$0xff]
                  %1310 = vst [vmem:[%s1182 + $0x1f8] sm:$0xff] %v1309
                  %s1311 = sadd.s32 1, %s1180
                  %p1312 = scmp.ge.s32.totalorder %s1311, %s1173
                  %s1313 = scalar_select %p1312, 0, %s1311
                  %s1314 = smul.u32 %s1313, 512
                  %s1315 = smul.u32 %s1313, 512
                  %s1316 = scalar_lea.vmem %s981, %s1314 [#allocation2]
                  %s1317 = scalar_lea.vmem %s992, %s1315
                $region71: #{conv_module_forward.4} parent=65 // loop_footer
                  %s1177 = sadd.s32 %s1175, 1
                $region72: #{conv_module_forward.4} parent=65 // loop_footer_branch
                  %1174 = sbr.rel target = $region68
                $region73: #{conv_module_forward.4} parent=65 // loop_exit
                  _
                %s1318 = sshrl.u32 %s988, 6
                %s1319 = sand.u32 %s988, 63
                %s1320 = smul.u32 %s1318, 64
                %s1321 = smul.u32 8, %s1320
                %s1322 = scalar_lea.vmem %s981, %s1321 [#allocation2]
                %s1323 = smul.u32 8, %s1320
                %s1324 = scalar_lea.vmem %s992, %s1323
                // While loop
                $region74: #{conv_module_forward.4} parent=65 // loop_pre_header
                  _
                $region75: #{conv_module_forward.4} parent=65 // loop_header
                  %s1326 = sphi 0, %s1328
                  %p1327 = scmp.ge.s32.totalorder %s1326, %s1319
                  %s1331 = sphi 0, %s1338
                  %s1332 = sphi %s1322, %s1341
                  %s1333 = sphi %s1324, %s1342
                $region76: #{conv_module_forward.4} parent=65 // loop_header_branch
                  %1330 = sbr.rel (%p1327) target = $region80
                $region77: #{conv_module_forward.4} parent=65 // loop_body
                  %v1334 = vld [vmem:[%s1332] sm:$0xff]
                  %1335 = vst [vmem:[%s1333] sm:$0xff] %v1334
                  %s1336 = sadd.s32 1, %s1331
                  %p1337 = scmp.ge.s32.totalorder %s1336, %s1319
                  %s1338 = scalar_select %p1337, 0, %s1336
                  %s1339 = smul.u32 %s1338, 8
                  %s1340 = smul.u32 %s1338, 8
                  %s1341 = scalar_lea.vmem %s1322, %s1339 [#allocation2]
                  %s1342 = scalar_lea.vmem %s1324, %s1340
                $region78: #{conv_module_forward.4} parent=65 // loop_footer
                  %s1328 = sadd.s32 %s1326, 1
                $region79: #{conv_module_forward.4} parent=65 // loop_footer_branch
                  %1325 = sbr.rel target = $region75
                $region80: #{conv_module_forward.4} parent=65 // loop_exit
                  _
              $region66: #{conv_module_forward.4} parent=43 // pred_fallthru
                _
              // Predicated region
              $region81: #{conv_module_forward.4} parent=43 // pred_check
                _
              $region82: #{conv_module_forward.4} parent=43 // pred_check_branch
                %1344 = sbr.rel target = $region84
              $region83: #{conv_module_forward.4} parent=43 // pred_region
                _
              $region84: #{conv_module_forward.4} parent=43 // pred_fallthru
                _
            $region44: #{conv_module_forward.4} parent=39 // pred_fallthru
              _
            // Predicated region
            $region45: #{conv_module_forward.4} parent=39 // pred_check
              _
            $region46: #{conv_module_forward.4} parent=39 // pred_check_branch
              %999 = sbr.rel target = $region48
            $region47: #{conv_module_forward.4} parent=39 // pred_region
              %s1001 = sshrl.u32 %s988, 6
              // While loop
              $region49: #{conv_module_forward.4} parent=47 // loop_pre_header
                _
              $region50: #{conv_module_forward.4} parent=47 // loop_header
                %s1003 = sphi 0, %s1005
                %p1004 = scmp.ge.s32.totalorder %s1003, %s1001
                %s1008 = sphi 0, %s1141
                %s1009 = sphi %s981, %s1144
                %s1010 = sphi %s992, %s1145
              $region51: #{conv_module_forward.4} parent=47 // loop_header_branch
                %1007 = sbr.rel (%p1004) target = $region55
              $region52: #{conv_module_forward.4} parent=47 // loop_body
                %v1011 = vld [vmem:[%s1009] sm:$0xff]
                %1012 = vst [vmem:[%s1010] sm:$0xff] %v1011
                %v1013 = vld [vmem:[%s1009 + $0x8] sm:$0xff]
                %1014 = vst [vmem:[%s1010 + $0x8] sm:$0xff] %v1013
                %v1015 = vld [vmem:[%s1009 + $0x10] sm:$0xff]
                %1016 = vst [vmem:[%s1010 + $0x10] sm:$0xff] %v1015
                %v1017 = vld [vmem:[%s1009 + $0x18] sm:$0xff]
                %1018 = vst [vmem:[%s1010 + $0x18] sm:$0xff] %v1017
                %v1019 = vld [vmem:[%s1009 + $0x20] sm:$0xff]
                %1020 = vst [vmem:[%s1010 + $0x20] sm:$0xff] %v1019
                %v1021 = vld [vmem:[%s1009 + $0x28] sm:$0xff]
                %1022 = vst [vmem:[%s1010 + $0x28] sm:$0xff] %v1021
                %v1023 = vld [vmem:[%s1009 + $0x30] sm:$0xff]
                %1024 = vst [vmem:[%s1010 + $0x30] sm:$0xff] %v1023
                %v1025 = vld [vmem:[%s1009 + $0x38] sm:$0xff]
                %1026 = vst [vmem:[%s1010 + $0x38] sm:$0xff] %v1025
                %v1027 = vld [vmem:[%s1009 + $0x40] sm:$0xff]
                %1028 = vst [vmem:[%s1010 + $0x40] sm:$0xff] %v1027
                %v1029 = vld [vmem:[%s1009 + $0x48] sm:$0xff]
                %1030 = vst [vmem:[%s1010 + $0x48] sm:$0xff] %v1029
                %v1031 = vld [vmem:[%s1009 + $0x50] sm:$0xff]
                %1032 = vst [vmem:[%s1010 + $0x50] sm:$0xff] %v1031
                %v1033 = vld [vmem:[%s1009 + $0x58] sm:$0xff]
                %1034 = vst [vmem:[%s1010 + $0x58] sm:$0xff] %v1033
                %v1035 = vld [vmem:[%s1009 + $0x60] sm:$0xff]
                %1036 = vst [vmem:[%s1010 + $0x60] sm:$0xff] %v1035
                %v1037 = vld [vmem:[%s1009 + $0x68] sm:$0xff]
                %1038 = vst [vmem:[%s1010 + $0x68] sm:$0xff] %v1037
                %v1039 = vld [vmem:[%s1009 + $0x70] sm:$0xff]
                %1040 = vst [vmem:[%s1010 + $0x70] sm:$0xff] %v1039
                %v1041 = vld [vmem:[%s1009 + $0x78] sm:$0xff]
                %1042 = vst [vmem:[%s1010 + $0x78] sm:$0xff] %v1041
                %v1043 = vld [vmem:[%s1009 + $0x80] sm:$0xff]
                %1044 = vst [vmem:[%s1010 + $0x80] sm:$0xff] %v1043
                %v1045 = vld [vmem:[%s1009 + $0x88] sm:$0xff]
                %1046 = vst [vmem:[%s1010 + $0x88] sm:$0xff] %v1045
                %v1047 = vld [vmem:[%s1009 + $0x90] sm:$0xff]
                %1048 = vst [vmem:[%s1010 + $0x90] sm:$0xff] %v1047
                %v1049 = vld [vmem:[%s1009 + $0x98] sm:$0xff]
                %1050 = vst [vmem:[%s1010 + $0x98] sm:$0xff] %v1049
                %v1051 = vld [vmem:[%s1009 + $0xa0] sm:$0xff]
                %1052 = vst [vmem:[%s1010 + $0xa0] sm:$0xff] %v1051
                %v1053 = vld [vmem:[%s1009 + $0xa8] sm:$0xff]
                %1054 = vst [vmem:[%s1010 + $0xa8] sm:$0xff] %v1053
                %v1055 = vld [vmem:[%s1009 + $0xb0] sm:$0xff]
                %1056 = vst [vmem:[%s1010 + $0xb0] sm:$0xff] %v1055
                %v1057 = vld [vmem:[%s1009 + $0xb8] sm:$0xff]
                %1058 = vst [vmem:[%s1010 + $0xb8] sm:$0xff] %v1057
                %v1059 = vld [vmem:[%s1009 + $0xc0] sm:$0xff]
                %1060 = vst [vmem:[%s1010 + $0xc0] sm:$0xff] %v1059
                %v1061 = vld [vmem:[%s1009 + $0xc8] sm:$0xff]
                %1062 = vst [vmem:[%s1010 + $0xc8] sm:$0xff] %v1061
                %v1063 = vld [vmem:[%s1009 + $0xd0] sm:$0xff]
                %1064 = vst [vmem:[%s1010 + $0xd0] sm:$0xff] %v1063
                %v1065 = vld [vmem:[%s1009 + $0xd8] sm:$0xff]
                %1066 = vst [vmem:[%s1010 + $0xd8] sm:$0xff] %v1065
                %v1067 = vld [vmem:[%s1009 + $0xe0] sm:$0xff]
                %1068 = vst [vmem:[%s1010 + $0xe0] sm:$0xff] %v1067
                %v1069 = vld [vmem:[%s1009 + $0xe8] sm:$0xff]
                %1070 = vst [vmem:[%s1010 + $0xe8] sm:$0xff] %v1069
                %v1071 = vld [vmem:[%s1009 + $0xf0] sm:$0xff]
                %1072 = vst [vmem:[%s1010 + $0xf0] sm:$0xff] %v1071
                %v1073 = vld [vmem:[%s1009 + $0xf8] sm:$0xff]
                %1074 = vst [vmem:[%s1010 + $0xf8] sm:$0xff] %v1073
                %v1075 = vld [vmem:[%s1009 + $0x100] sm:$0xff]
                %1076 = vst [vmem:[%s1010 + $0x100] sm:$0xff] %v1075
                %v1077 = vld [vmem:[%s1009 + $0x108] sm:$0xff]
                %1078 = vst [vmem:[%s1010 + $0x108] sm:$0xff] %v1077
                %v1079 = vld [vmem:[%s1009 + $0x110] sm:$0xff]
                %1080 = vst [vmem:[%s1010 + $0x110] sm:$0xff] %v1079
                %v1081 = vld [vmem:[%s1009 + $0x118] sm:$0xff]
                %1082 = vst [vmem:[%s1010 + $0x118] sm:$0xff] %v1081
                %v1083 = vld [vmem:[%s1009 + $0x120] sm:$0xff]
                %1084 = vst [vmem:[%s1010 + $0x120] sm:$0xff] %v1083
                %v1085 = vld [vmem:[%s1009 + $0x128] sm:$0xff]
                %1086 = vst [vmem:[%s1010 + $0x128] sm:$0xff] %v1085
                %v1087 = vld [vmem:[%s1009 + $0x130] sm:$0xff]
                %1088 = vst [vmem:[%s1010 + $0x130] sm:$0xff] %v1087
                %v1089 = vld [vmem:[%s1009 + $0x138] sm:$0xff]
                %1090 = vst [vmem:[%s1010 + $0x138] sm:$0xff] %v1089
                %v1091 = vld [vmem:[%s1009 + $0x140] sm:$0xff]
                %1092 = vst [vmem:[%s1010 + $0x140] sm:$0xff] %v1091
                %v1093 = vld [vmem:[%s1009 + $0x148] sm:$0xff]
                %1094 = vst [vmem:[%s1010 + $0x148] sm:$0xff] %v1093
                %v1095 = vld [vmem:[%s1009 + $0x150] sm:$0xff]
                %1096 = vst [vmem:[%s1010 + $0x150] sm:$0xff] %v1095
                %v1097 = vld [vmem:[%s1009 + $0x158] sm:$0xff]
                %1098 = vst [vmem:[%s1010 + $0x158] sm:$0xff] %v1097
                %v1099 = vld [vmem:[%s1009 + $0x160] sm:$0xff]
                %1100 = vst [vmem:[%s1010 + $0x160] sm:$0xff] %v1099
                %v1101 = vld [vmem:[%s1009 + $0x168] sm:$0xff]
                %1102 = vst [vmem:[%s1010 + $0x168] sm:$0xff] %v1101
                %v1103 = vld [vmem:[%s1009 + $0x170] sm:$0xff]
                %1104 = vst [vmem:[%s1010 + $0x170] sm:$0xff] %v1103
                %v1105 = vld [vmem:[%s1009 + $0x178] sm:$0xff]
                %1106 = vst [vmem:[%s1010 + $0x178] sm:$0xff] %v1105
                %v1107 = vld [vmem:[%s1009 + $0x180] sm:$0xff]
                %1108 = vst [vmem:[%s1010 + $0x180] sm:$0xff] %v1107
                %v1109 = vld [vmem:[%s1009 + $0x188] sm:$0xff]
                %1110 = vst [vmem:[%s1010 + $0x188] sm:$0xff] %v1109
                %v1111 = vld [vmem:[%s1009 + $0x190] sm:$0xff]
                %1112 = vst [vmem:[%s1010 + $0x190] sm:$0xff] %v1111
                %v1113 = vld [vmem:[%s1009 + $0x198] sm:$0xff]
                %1114 = vst [vmem:[%s1010 + $0x198] sm:$0xff] %v1113
                %v1115 = vld [vmem:[%s1009 + $0x1a0] sm:$0xff]
                %1116 = vst [vmem:[%s1010 + $0x1a0] sm:$0xff] %v1115
                %v1117 = vld [vmem:[%s1009 + $0x1a8] sm:$0xff]
                %1118 = vst [vmem:[%s1010 + $0x1a8] sm:$0xff] %v1117
                %v1119 = vld [vmem:[%s1009 + $0x1b0] sm:$0xff]
                %1120 = vst [vmem:[%s1010 + $0x1b0] sm:$0xff] %v1119
                %v1121 = vld [vmem:[%s1009 + $0x1b8] sm:$0xff]
                %1122 = vst [vmem:[%s1010 + $0x1b8] sm:$0xff] %v1121
                %v1123 = vld [vmem:[%s1009 + $0x1c0] sm:$0xff]
                %1124 = vst [vmem:[%s1010 + $0x1c0] sm:$0xff] %v1123
                %v1125 = vld [vmem:[%s1009 + $0x1c8] sm:$0xff]
                %1126 = vst [vmem:[%s1010 + $0x1c8] sm:$0xff] %v1125
                %v1127 = vld [vmem:[%s1009 + $0x1d0] sm:$0xff]
                %1128 = vst [vmem:[%s1010 + $0x1d0] sm:$0xff] %v1127
                %v1129 = vld [vmem:[%s1009 + $0x1d8] sm:$0xff]
                %1130 = vst [vmem:[%s1010 + $0x1d8] sm:$0xff] %v1129
                %v1131 = vld [vmem:[%s1009 + $0x1e0] sm:$0xff]
                %1132 = vst [vmem:[%s1010 + $0x1e0] sm:$0xff] %v1131
                %v1133 = vld [vmem:[%s1009 + $0x1e8] sm:$0xff]
                %1134 = vst [vmem:[%s1010 + $0x1e8] sm:$0xff] %v1133
                %v1135 = vld [vmem:[%s1009 + $0x1f0] sm:$0xff]
                %1136 = vst [vmem:[%s1010 + $0x1f0] sm:$0xff] %v1135
                %v1137 = vld [vmem:[%s1009 + $0x1f8] sm:$0xff]
                %1138 = vst [vmem:[%s1010 + $0x1f8] sm:$0xff] %v1137
                %s1139 = sadd.s32 1, %s1008
                %p1140 = scmp.ge.s32.totalorder %s1139, %s1001
                %s1141 = scalar_select %p1140, 0, %s1139
                %s1142 = smul.u32 %s1141, 512
                %s1143 = smul.u32 %s1141, 512
                %s1144 = scalar_lea.vmem %s981, %s1142 [#allocation2]
                %s1145 = scalar_lea.vmem %s992, %s1143
              $region53: #{conv_module_forward.4} parent=47 // loop_footer
                %s1005 = sadd.s32 %s1003, 1
              $region54: #{conv_module_forward.4} parent=47 // loop_footer_branch
                %1002 = sbr.rel target = $region50
              $region55: #{conv_module_forward.4} parent=47 // loop_exit
                _
              %s1146 = sshrl.u32 %s988, 6
              %s1147 = sand.u32 %s988, 63
              %s1148 = smul.u32 %s1146, 64
              %s1149 = smul.u32 8, %s1148
              %s1150 = scalar_lea.vmem %s981, %s1149 [#allocation2]
              %s1151 = smul.u32 8, %s1148
              %s1152 = scalar_lea.vmem %s992, %s1151
              // While loop
              $region56: #{conv_module_forward.4} parent=47 // loop_pre_header
                _
              $region57: #{conv_module_forward.4} parent=47 // loop_header
                %s1154 = sphi 0, %s1156
                %p1155 = scmp.ge.s32.totalorder %s1154, %s1147
                %s1159 = sphi 0, %s1166
                %s1160 = sphi %s1150, %s1169
                %s1161 = sphi %s1152, %s1170
              $region58: #{conv_module_forward.4} parent=47 // loop_header_branch
                %1158 = sbr.rel (%p1155) target = $region62
              $region59: #{conv_module_forward.4} parent=47 // loop_body
                %v1162 = vld [vmem:[%s1160] sm:$0xff]
                %1163 = vst [vmem:[%s1161] sm:$0xff] %v1162
                %s1164 = sadd.s32 1, %s1159
                %p1165 = scmp.ge.s32.totalorder %s1164, %s1147
                %s1166 = scalar_select %p1165, 0, %s1164
                %s1167 = smul.u32 %s1166, 8
                %s1168 = smul.u32 %s1166, 8
                %s1169 = scalar_lea.vmem %s1150, %s1167 [#allocation2]
                %s1170 = scalar_lea.vmem %s1152, %s1168
              $region60: #{conv_module_forward.4} parent=47 // loop_footer
                %s1156 = sadd.s32 %s1154, 1
              $region61: #{conv_module_forward.4} parent=47 // loop_footer_branch
                %1153 = sbr.rel target = $region57
              $region62: #{conv_module_forward.4} parent=47 // loop_exit
                _
            $region48: #{conv_module_forward.4} parent=39 // pred_fallthru
              _
          $region40: #{conv_module_forward.4} parent=35 // pred_fallthru
            _
          %1345 = vnop
        $region36: #{conv_module_forward.4} parent=31 // pred_fallthru
          _
      $region32: #{conv_module_forward.4} parent=5 // pred_fallthru
        _
      %p1346 = scmp.le.s32.totalorder 2, %s9
      // Predicated region
      $region85: #{conv_module_forward.4} parent=5 // pred_check
        %p1347 = pneg %p1346
      $region86: #{conv_module_forward.4} parent=5 // pred_check_branch
        %1349 = sbr.rel (%p1347) target = $region88
      $region87: #{conv_module_forward.4} parent=5 // pred_region
        %s1350 = ssub.s32 %s9, 2
        // Predicated region
        $region89: #{conv_module_forward.4} parent=87 // pred_check
          %p1351 = pneg %p106
        $region90: #{conv_module_forward.4} parent=87 // pred_check_branch
          %1353 = sbr.rel (%p1351) target = $region92
        $region91: #{conv_module_forward.4} parent=87 // pred_region
          %s1354 = sand.u32 %s91, 1
          %s1355 = sand.u32 %s91, 1
          %s1356 = smul.addr %s1355, 512
          %s1357 = scalar_lea.vmem [#allocation2], %s1356
        $region92: #{conv_module_forward.4} parent=87 // pred_fallthru
          _
      $region88: #{conv_module_forward.4} parent=5 // pred_fallthru
        _
    $region6: #{conv_module_forward.4} parent=1 // loop_footer
      %s13 = sadd.s32 1, %s9
    $region7: #{conv_module_forward.4} parent=1 // loop_footer_branch
      %8 = sbr.rel target = $region3
    $region8: #{conv_module_forward.4} parent=1 // loop_exit
      _

// kernel: conv_module_forward.5
$region0: #{conv_module_forward.5}
  #allocation0 [shape = 'u32[]', space=smem, size = 0x4, offset = 0x4, fixed_abs, tag = 'smem constant byte address 0x4 - core index']
  #allocation1 [shape = 'u32[144,128]{1,0:T(1,128)}', space=vmem, size = 0x12000, scoped, tag = 'internal scratch']
  %s0 = inlined_call_operand.vmem [shape: bf16[722,1152], index: 0, kind: input, shape index: {}]
  %s1 = inlined_call_operand.vmem [shape: bf16[1152,128], index: 1, kind: input, shape index: {}]
  %s2 = inlined_call_operand.vmem [shape: f32[1,128], index: 2, kind: input, shape index: {}]
  %s3 = inlined_call_operand.vmem [shape: f32[722,128], index: 3, kind: output, shape index: {}]
  %s4 = sld [smem:[#allocation0]]
  $region93: #{conv_module_forward.5} parent=0
    _
  %s6 = ssub.s32 1, %s4
  %s7 = scalar_select 0, %s6, %s4
  $region1: #{conv_module_forward.5} parent=0
    #allocation2 [shape = 'u8[376832]{0}', space=vmem, size = 0x5c000, scoped, tag = 'output window, operand 0']
    loop: start=0, step=1, limit=4
    $region2: #{conv_module_forward.5} parent=1 // loop_pre_header
      _
    $region3: #{conv_module_forward.5} parent=1 // loop_header
      %s9 = sphi 0, %s13
      %p10 = scmp.ge.s32.totalorder %s9, 4
      %s19 = sphi 0, %s21
      %s22 = sphi 0, %s19
      %s23 = sphi 0, %s22
      %s39 = sphi 0, %s23
      %s43 = sphi 0, %s43
      %s45 = sphi 0, %s43
      %s46 = sphi 0, %s45
      %s60 = sphi 0, %s46
      %s64 = sphi 0, %s64
      %s66 = sphi 0, %s64
      %s67 = sphi 0, %s66
      %s81 = sphi 0, %s67
      %s87 = sphi 0, %s89
      %s90 = sphi 0, %s87
      %s91 = sphi 0, %s90
      %s107 = sphi 0, %s91
    $region4: #{conv_module_forward.5} parent=1 // loop_header_branch
      %12 = sbr.rel (%p10) target = $region8
    $region5: #{conv_module_forward.5} parent=1 // loop_body
      %s14 = ssub.s32 %s9, 1
      %s15 = ssub.s32 %s9, 2
      %s16 = sadd.s32 %s9, 1
      %s17 = ssub.s32 %s9, %s16
      %p18 = scmp.eq.s32.totalorder %s17, 0
      %s20 = sadd.s32 %s19, 1
      %s21 = scalar_select %p18, %s19, %s20
      %p24 = pneg %p18
      %p25 = scmp.eq.s32.totalorder %s9, 1
      %p26 = por %p24, %p25
      %p27 = scmp.ne.s32.totalorder %s19, %s22
      %p28 = scmp.eq.s32.totalorder %s9, 0
      %p29 = por %p27, %p28
      %p30 = scmp.ne.s32.totalorder %s19, %s22
      %p31 = scmp.eq.s32.totalorder %s14, 1
      %p32 = por %p30, %p31
      %p33 = scmp.ne.s32.totalorder %s22, %s23
      %p34 = scmp.eq.s32.totalorder %s14, 0
      %p35 = por %p33, %p34
      %p36 = scmp.ne.s32.totalorder %s22, %s23
      %p37 = scmp.eq.s32.totalorder %s15, 1
      %p38 = por %p36, %p37
      %p40 = scmp.ne.s32.totalorder %s23, %s39
      %p41 = scmp.eq.s32.totalorder %s15, 0
      %p42 = por %p40, %p41
      %s44 = sadd.s32 %s43, 1
      %p47 = scmp.eq.s32.totalorder %s9, 1
      %p48 = scmp.ne.s32.totalorder %s43, %s45
      %p49 = scmp.eq.s32.totalorder %s9, 0
      %p50 = por %p48, %p49
      %p51 = scmp.ne.s32.totalorder %s43, %s45
      %p52 = scmp.eq.s32.totalorder %s14, 1
      %p53 = por %p51, %p52
      %p54 = scmp.ne.s32.totalorder %s45, %s46
      %p55 = scmp.eq.s32.totalorder %s14, 0
      %p56 = por %p54, %p55
      %p57 = scmp.ne.s32.totalorder %s45, %s46
      %p58 = scmp.eq.s32.totalorder %s15, 1
      %p59 = por %p57, %p58
      %p61 = scmp.ne.s32.totalorder %s46, %s60
      %p62 = scmp.eq.s32.totalorder %s15, 0
      %p63 = por %p61, %p62
      %s65 = sadd.s32 %s64, 1
      %p68 = scmp.eq.s32.totalorder %s9, 1
      %p69 = scmp.ne.s32.totalorder %s64, %s66
      %p70 = scmp.eq.s32.totalorder %s9, 0
      %p71 = por %p69, %p70
      %p72 = scmp.ne.s32.totalorder %s64, %s66
      %p73 = scmp.eq.s32.totalorder %s14, 1
      %p74 = por %p72, %p73
      %p75 = scmp.ne.s32.totalorder %s66, %s67
      %p76 = scmp.eq.s32.totalorder %s14, 0
      %p77 = por %p75, %p76
      %p78 = scmp.ne.s32.totalorder %s66, %s67
      %p79 = scmp.eq.s32.totalorder %s15, 1
      %p80 = por %p78, %p79
      %p82 = scmp.ne.s32.totalorder %s67, %s81
      %p83 = scmp.eq.s32.totalorder %s15, 0
      %p84 = por %p82, %p83
      %s85 = ssub.s32 %s9, %s16
      %p86 = scmp.eq.s32.totalorder %s85, 0
      %s88 = sadd.s32 %s87, 1
      %s89 = scalar_select %p86, %s87, %s88
      %p92 = pneg %p86
      %p93 = scmp.eq.s32.totalorder %s9, 1
      %p94 = por %p92, %p93
      %p95 = scmp.ne.s32.totalorder %s87, %s90
      %p96 = scmp.eq.s32.totalorder %s9, 0
      %p97 = por %p95, %p96
      %p98 = scmp.ne.s32.totalorder %s87, %s90
      %p99 = scmp.eq.s32.totalorder %s14, 1
      %p100 = por %p98, %p99
      %p101 = scmp.ne.s32.totalorder %s90, %s91
      %p102 = scmp.eq.s32.totalorder %s14, 0
      %p103 = por %p101, %p102
      %p104 = scmp.ne.s32.totalorder %s90, %s91
      %p105 = scmp.eq.s32.totalorder %s15, 1
      %p106 = por %p104, %p105
      %p108 = scmp.ne.s32.totalorder %s91, %s107
      %p109 = scmp.eq.s32.totalorder %s15, 0
      %p110 = por %p108, %p109
      %p111 = scmp.le.s32.totalorder 1, %s9
      %p112 = scmp.lt.s32.totalorder %s9, 3
      %p113 = pnand %p111, %p112
      %p114 = pneg %p113
      // Predicated region
      $region9: #{conv_module_forward.5} parent=5 // pred_check
        _
      $region10: #{conv_module_forward.5} parent=5 // pred_check_branch
        %116 = sbr.rel (%p113) target = $region12
      $region11: #{conv_module_forward.5} parent=5 // pred_region
        %s117 = ssub.s32 %s9, 1
        // Predicated region
        $region13: #{conv_module_forward.5} parent=11 // pred_check
          %p118 = pneg %p56
        $region14: #{conv_module_forward.5} parent=11 // pred_check_branch
          %120 = sbr.rel (%p118) target = $region16
        $region15: #{conv_module_forward.5} parent=11 // pred_region
          _
        $region16: #{conv_module_forward.5} parent=11 // pred_fallthru
          _
        // Predicated region
        $region17: #{conv_module_forward.5} parent=11 // pred_check
          %p121 = pneg %p77
        $region18: #{conv_module_forward.5} parent=11 // pred_check_branch
          %123 = sbr.rel (%p121) target = $region20
        $region19: #{conv_module_forward.5} parent=11 // pred_region
          _
        $region20: #{conv_module_forward.5} parent=11 // pred_fallthru
          _
      $region12: #{conv_module_forward.5} parent=5 // pred_fallthru
        _
      %p124 = scmp.lt.s32.totalorder %s9, 2
      // Predicated region
      $region21: #{conv_module_forward.5} parent=5 // pred_check
        %p125 = pneg %p124
      $region22: #{conv_module_forward.5} parent=5 // pred_check_branch
        %127 = sbr.rel (%p125) target = $region24
      $region23: #{conv_module_forward.5} parent=5 // pred_region
        // Predicated region
        $region25: #{conv_module_forward.5} parent=23 // pred_check
          %p128 = pneg %p29
        $region26: #{conv_module_forward.5} parent=23 // pred_check_branch
          %130 = sbr.rel (%p128) target = $region28
        $region27: #{conv_module_forward.5} parent=23 // pred_region
          %s131 = smul.u32 46, %s9
          %s132 = ssub.s32 91, %s131
          %p133 = scmp.lt.s32.totalorder %s132, 46
          %s134 = scalar_select %p133, %s132, 46
          %s135 = smul.u32 64, %s134
          %s136 = smul.u32 %s135, 9
          %p137 = scmp.lt.s32.totalorder %s131, 90
          %s138 = scalar_select %p137, %s131, 90
          %s139 = smul.addr %s138, 9
          %s140 = smul.addr %s139, 4
          %s141 = scalar_lea.vmem %s0, %s140
          %s142 = smul.u32 46, %s9
          %s143 = ssub.s32 91, %s142
          %p144 = scmp.lt.s32.totalorder %s143, 46
          %s145 = scalar_select %p144, %s143, 46
          %s146 = smul.u32 64, %s145
          %s147 = smul.u32 %s146, 9
        $region28: #{conv_module_forward.5} parent=23 // pred_fallthru
          _
      $region24: #{conv_module_forward.5} parent=5 // pred_fallthru
        _
      %p148 = scmp.le.s32.totalorder 1, %s9
      %p149 = scmp.lt.s32.totalorder %s9, 3
      %p150 = pnand %p148, %p149
      %p151 = pneg %p150
      // Predicated region
      $region29: #{conv_module_forward.5} parent=5 // pred_check
        _
      $region30: #{conv_module_forward.5} parent=5 // pred_check_branch
        %153 = sbr.rel (%p150) target = $region32
      $region31: #{conv_module_forward.5} parent=5 // pred_region
        %s154 = ssub.s32 %s9, 1
        %s155 = smul.u32 46, %s14
        %s156 = ssub.s32 91, %s155
        %p157 = scmp.lt.s32.totalorder %s156, 46
        %s158 = scalar_select %p157, %s156, 46
        %s159 = smul.u32 64, %s158
        %s160 = smul.u32 %s159, 9
        %p161 = scmp.lt.s32.totalorder %s155, 90
        %s162 = scalar_select %p161, %s155, 90
        %s163 = smul.addr %s162, 9
        %s164 = smul.addr %s163, 4
        %s165 = scalar_lea.vmem %s0, %s164
        %p166 = pneg %p35
        %p167 = pneg %p32
        %p168 = pneg %p56
        %p169 = pneg %p53
        %p170 = pneg %p77
        %p171 = pneg %p74
        %p172 = pneg %p103
        %p173 = pneg %p100
        %s174 = sand.u32 %s90, 1
        %s175 = sand.u32 %s90, 1
        %s176 = smul.addr %s175, 368
        %s177 = scalar_lea.vmem [#allocation2], %s176
        %s178 = smul.u32 46, %s14
        %s179 = ssub.s32 91, %s178
        %p180 = scmp.lt.s32.totalorder %s179, 46
        %s181 = scalar_select %p180, %s179, 46
        %s182 = smul.u32 64, %s181
        %s183 = smul.u32 %s182, 9
        %p184 = scmp.lt.s32.totalorder %s178, 90
        %s185 = scalar_select %p184, %s178, 90
        %s186 = smul.addr %s185, 9
        %s187 = smul.addr %s186, 4
        %s188 = scalar_lea.vmem %s0, %s187
        %s189 = smul.u32 46, %s14
        %s190 = ssub.s32 91, %s189
        %p191 = scmp.lt.s32.totalorder %s190, 46
        %s192 = scalar_select %p191, %s190, 46
        %s193 = smul.u32 64, %s192
        %s194 = smul.u32 %s193, 9
        %s195 = smul.u32 46, %s14
        %s196 = ssub.s32 91, %s195
        %p197 = scmp.lt.s32.totalorder %s196, 46
        %s198 = scalar_select %p197, %s196, 46
        %s199 = smul.u32 128, %s198
        %v201 = vld [vmem:[%s188] sm:$0xff]
        %v202 = vld [vmem:[%s188 + $0x8] sm:$0xff]
        %v203 = vld [vmem:[%s188 + $0x10] sm:$0xff]
        %v204 = vld [vmem:[%s188 + $0x18] sm:$0xff]
        %v205 = vld [vmem:[%s188 + $0x20] sm:$0xf]
        %v206 = vld [vmem:[%s188 + $0x24] sm:$0xff]
        %v207 = vld [vmem:[%s188 + $0x2c] sm:$0xff]
        %v208 = vld [vmem:[%s188 + $0x34] sm:$0xff]
        %v209 = vld [vmem:[%s188 + $0x3c] sm:$0xff]
        %v210 = vld [vmem:[%s188 + $0x44] sm:$0xf]
        %v211 = vld [vmem:[%s188 + $0x48] sm:$0xff]
        %v212 = vld [vmem:[%s188 + $0x50] sm:$0xff]
        %v213 = vld [vmem:[%s188 + $0x58] sm:$0xff]
        %v214 = vld [vmem:[%s188 + $0x60] sm:$0xff]
        %v215 = vld [vmem:[%s188 + $0x68] sm:$0xf]
        %v216 = vld [vmem:[%s188 + $0x6c] sm:$0xff]
        %v217 = vld [vmem:[%s188 + $0x74] sm:$0xff]
        %v218 = vld [vmem:[%s188 + $0x7c] sm:$0xff]
        %v219 = vld [vmem:[%s188 + $0x84] sm:$0xff]
        %v220 = vld [vmem:[%s188 + $0x8c] sm:$0xf]
        %v221 = vld [vmem:[%s188 + $0x90] sm:$0xff]
        %v222 = vld [vmem:[%s188 + $0x98] sm:$0xff]
        %v223 = vld [vmem:[%s188 + $0xa0] sm:$0xff]
        %v224 = vld [vmem:[%s188 + $0xa8] sm:$0xff]
        %v225 = vld [vmem:[%s188 + $0xb0] sm:$0xf]
        %v226 = vld [vmem:[%s188 + $0xb4] sm:$0xff]
        %v227 = vld [vmem:[%s188 + $0xbc] sm:$0xff]
        %v228 = vld [vmem:[%s188 + $0xc4] sm:$0xff]
        %v229 = vld [vmem:[%s188 + $0xcc] sm:$0xff]
        %v230 = vld [vmem:[%s188 + $0xd4] sm:$0xf]
        %v231 = vld [vmem:[%s188 + $0xd8] sm:$0xff]
        %v232 = vld [vmem:[%s188 + $0xe0] sm:$0xff]
        %v233 = vld [vmem:[%s188 + $0xe8] sm:$0xff]
        %v234 = vld [vmem:[%s188 + $0xf0] sm:$0xff]
        %v235 = vld [vmem:[%s188 + $0xf8] sm:$0xf]
        %v236 = vld [vmem:[%s188 + $0xfc] sm:$0xff]
        %v237 = vld [vmem:[%s188 + $0x104] sm:$0xff]
        %v238 = vld [vmem:[%s188 + $0x10c] sm:$0xff]
        %v239 = vld [vmem:[%s188 + $0x114] sm:$0xff]
        %v240 = vld [vmem:[%s188 + $0x11c] sm:$0xf]
        %v241 = vld [vmem:[%s188 + $0x120] sm:$0xff]
        %v242 = vld [vmem:[%s188 + $0x128] sm:$0xff]
        %v243 = vld [vmem:[%s188 + $0x130] sm:$0xff]
        %v244 = vld [vmem:[%s188 + $0x138] sm:$0xff]
        %v245 = vld [vmem:[%s188 + $0x140] sm:$0xf]
        %v246 = vld [vmem:[%s188 + $0x144] sm:$0xff]
        %v247 = vld [vmem:[%s188 + $0x14c] sm:$0xff]
        %v248 = vld [vmem:[%s188 + $0x154] sm:$0xff]
        %v249 = vld [vmem:[%s188 + $0x15c] sm:$0xff]
        %v250 = vld [vmem:[%s188 + $0x164] sm:$0xf]
        %v251 = vld [vmem:[%s188 + $0x168] sm:$0xff]
        %v252 = vld [vmem:[%s188 + $0x170] sm:$0xff]
        %v253 = vld [vmem:[%s188 + $0x178] sm:$0xff]
        %v254 = vld [vmem:[%s188 + $0x180] sm:$0xff]
        %v255 = vld [vmem:[%s188 + $0x188] sm:$0xf]
        %v256 = vld [vmem:[%s188 + $0x18c] sm:$0xff]
        %v257 = vld [vmem:[%s188 + $0x194] sm:$0xff]
        %v258 = vld [vmem:[%s188 + $0x19c] sm:$0xff]
        %v259 = vld [vmem:[%s188 + $0x1a4] sm:$0xff]
        %v260 = vld [vmem:[%s188 + $0x1ac] sm:$0xf]
        %v261 = vld [vmem:[%s188 + $0x1b0] sm:$0xff]
        %v262 = vld [vmem:[%s188 + $0x1b8] sm:$0xff]
        %v263 = vld [vmem:[%s188 + $0x1c0] sm:$0xff]
        %v264 = vld [vmem:[%s188 + $0x1c8] sm:$0xff]
        %v265 = vld [vmem:[%s188 + $0x1d0] sm:$0xf]
        %v266 = vld [vmem:[%s188 + $0x1d4] sm:$0xff]
        %v267 = vld [vmem:[%s188 + $0x1dc] sm:$0xff]
        %v268 = vld [vmem:[%s188 + $0x1e4] sm:$0xff]
        %v269 = vld [vmem:[%s188 + $0x1ec] sm:$0xff]
        %v270 = vld [vmem:[%s188 + $0x1f4] sm:$0xf]
        %v271 = vld [vmem:[%s188 + $0x1f8] sm:$0xff]
        %v272 = vld [vmem:[%s188 + $0x200] sm:$0xff]
        %v273 = vld [vmem:[%s188 + $0x208] sm:$0xff]
        %v274 = vld [vmem:[%s188 + $0x210] sm:$0xff]
        %v275 = vld [vmem:[%s188 + $0x218] sm:$0xf]
        %v276 = vld [vmem:[%s188 + $0x21c] sm:$0xff]
        %v277 = vld [vmem:[%s188 + $0x224] sm:$0xff]
        %v278 = vld [vmem:[%s188 + $0x22c] sm:$0xff]
        %v279 = vld [vmem:[%s188 + $0x234] sm:$0xff]
        %v280 = vld [vmem:[%s188 + $0x23c] sm:$0xf]
        %v281 = vld [vmem:[%s188 + $0x240] sm:$0xff]
        %v282 = vld [vmem:[%s188 + $0x248] sm:$0xff]
        %v283 = vld [vmem:[%s188 + $0x250] sm:$0xff]
        %v284 = vld [vmem:[%s188 + $0x258] sm:$0xff]
        %v285 = vld [vmem:[%s188 + $0x260] sm:$0xf]
        %v286 = vld [vmem:[%s188 + $0x264] sm:$0xff]
        %v287 = vld [vmem:[%s188 + $0x26c] sm:$0xff]
        %v288 = vld [vmem:[%s188 + $0x274] sm:$0xff]
        %v289 = vld [vmem:[%s188 + $0x27c] sm:$0xff]
        %v290 = vld [vmem:[%s188 + $0x284] sm:$0xf]
        %v291 = vld [vmem:[%s188 + $0x288] sm:$0xff]
        %v292 = vld [vmem:[%s188 + $0x290] sm:$0xff]
        %v293 = vld [vmem:[%s188 + $0x298] sm:$0xff]
        %v294 = vld [vmem:[%s188 + $0x2a0] sm:$0xff]
        %v295 = vld [vmem:[%s188 + $0x2a8] sm:$0xf]
        %v296 = vld [vmem:[%s188 + $0x2ac] sm:$0xff]
        %v297 = vld [vmem:[%s188 + $0x2b4] sm:$0xff]
        %v298 = vld [vmem:[%s188 + $0x2bc] sm:$0xff]
        %v299 = vld [vmem:[%s188 + $0x2c4] sm:$0xff]
        %v300 = vld [vmem:[%s188 + $0x2cc] sm:$0xf]
        %v301 = vld [vmem:[%s188 + $0x2d0] sm:$0xff]
        %v302 = vld [vmem:[%s188 + $0x2d8] sm:$0xff]
        %v303 = vld [vmem:[%s188 + $0x2e0] sm:$0xff]
        %v304 = vld [vmem:[%s188 + $0x2e8] sm:$0xff]
        %v305 = vld [vmem:[%s188 + $0x2f0] sm:$0xf]
        %v306 = vld [vmem:[%s188 + $0x2f4] sm:$0xff]
        %v307 = vld [vmem:[%s188 + $0x2fc] sm:$0xff]
        %v308 = vld [vmem:[%s188 + $0x304] sm:$0xff]
        %v309 = vld [vmem:[%s188 + $0x30c] sm:$0xff]
        %v310 = vld [vmem:[%s188 + $0x314] sm:$0xf]
        %v311 = vld [vmem:[%s188 + $0x318] sm:$0xff]
        %v312 = vld [vmem:[%s188 + $0x320] sm:$0xff]
        %v313 = vld [vmem:[%s188 + $0x328] sm:$0xff]
        %v314 = vld [vmem:[%s188 + $0x330] sm:$0xff]
        %v315 = vld [vmem:[%s188 + $0x338] sm:$0xf]
        %v316 = vld [vmem:[%s188 + $0x33c] sm:$0xff]
        %v317 = vld [vmem:[%s188 + $0x344] sm:$0xff]
        %v318 = vld [vmem:[%s188 + $0x34c] sm:$0xff]
        %v319 = vld [vmem:[%s188 + $0x354] sm:$0xff]
        %v320 = vld [vmem:[%s188 + $0x35c] sm:$0xf]
        %v321 = vld [vmem:[%s188 + $0x360] sm:$0xff]
        %v322 = vld [vmem:[%s188 + $0x368] sm:$0xff]
        %v323 = vld [vmem:[%s188 + $0x370] sm:$0xff]
        %v324 = vld [vmem:[%s188 + $0x378] sm:$0xff]
        %v325 = vld [vmem:[%s188 + $0x380] sm:$0xf]
        %v326 = vld [vmem:[%s188 + $0x384] sm:$0xff]
        %v327 = vld [vmem:[%s188 + $0x38c] sm:$0xff]
        %v328 = vld [vmem:[%s188 + $0x394] sm:$0xff]
        %v329 = vld [vmem:[%s188 + $0x39c] sm:$0xff]
        %v330 = vld [vmem:[%s188 + $0x3a4] sm:$0xf]
        %v331 = vld [vmem:[%s188 + $0x3a8] sm:$0xff]
        %v332 = vld [vmem:[%s188 + $0x3b0] sm:$0xff]
        %v333 = vld [vmem:[%s188 + $0x3b8] sm:$0xff]
        %v334 = vld [vmem:[%s188 + $0x3c0] sm:$0xff]
        %v335 = vld [vmem:[%s188 + $0x3c8] sm:$0xf]
        %v336 = vld [vmem:[%s188 + $0x3cc] sm:$0xff]
        %v337 = vld [vmem:[%s188 + $0x3d4] sm:$0xff]
        %v338 = vld [vmem:[%s188 + $0x3dc] sm:$0xff]
        %v339 = vld [vmem:[%s188 + $0x3e4] sm:$0xff]
        %v340 = vld [vmem:[%s188 + $0x3ec] sm:$0xf]
        %v341 = vld [vmem:[%s188 + $0x3f0] sm:$0xff]
        %v342 = vld [vmem:[%s188 + $0x3f8] sm:$0xff]
        %v343 = vld [vmem:[%s188 + $0x400] sm:$0xff]
        %v344 = vld [vmem:[%s188 + $0x408] sm:$0xff]
        %v345 = vld [vmem:[%s188 + $0x410] sm:$0xf]
        %v346 = vld [vmem:[%s188 + $0x414] sm:$0xff]
        %v347 = vld [vmem:[%s188 + $0x41c] sm:$0xff]
        %v348 = vld [vmem:[%s188 + $0x424] sm:$0xff]
        %v349 = vld [vmem:[%s188 + $0x42c] sm:$0xff]
        %v350 = vld [vmem:[%s188 + $0x434] sm:$0xf]
        %v351 = vld [vmem:[%s188 + $0x438] sm:$0xff]
        %v352 = vld [vmem:[%s188 + $0x440] sm:$0xff]
        %v353 = vld [vmem:[%s188 + $0x448] sm:$0xff]
        %v354 = vld [vmem:[%s188 + $0x450] sm:$0xff]
        %v355 = vld [vmem:[%s188 + $0x458] sm:$0xf]
        %v356 = vld [vmem:[%s188 + $0x45c] sm:$0xff]
        %v357 = vld [vmem:[%s188 + $0x464] sm:$0xff]
        %v358 = vld [vmem:[%s188 + $0x46c] sm:$0xff]
        %v359 = vld [vmem:[%s188 + $0x474] sm:$0xff]
        %v360 = vld [vmem:[%s188 + $0x47c] sm:$0xf]
        %v361 = vld [vmem:[%s188 + $0x480] sm:$0xff]
        %v362 = vld [vmem:[%s188 + $0x488] sm:$0xff]
        %v363 = vld [vmem:[%s188 + $0x490] sm:$0xff]
        %v364 = vld [vmem:[%s188 + $0x498] sm:$0xff]
        %v365 = vld [vmem:[%s188 + $0x4a0] sm:$0xf]
        %v366 = vld [vmem:[%s188 + $0x4a4] sm:$0xff]
        %v367 = vld [vmem:[%s188 + $0x4ac] sm:$0xff]
        %v368 = vld [vmem:[%s188 + $0x4b4] sm:$0xff]
        %v369 = vld [vmem:[%s188 + $0x4bc] sm:$0xff]
        %v370 = vld [vmem:[%s188 + $0x4c4] sm:$0xf]
        %v371 = vld [vmem:[%s188 + $0x4c8] sm:$0xff]
        %v372 = vld [vmem:[%s188 + $0x4d0] sm:$0xff]
        %v373 = vld [vmem:[%s188 + $0x4d8] sm:$0xff]
        %v374 = vld [vmem:[%s188 + $0x4e0] sm:$0xff]
        %v375 = vld [vmem:[%s188 + $0x4e8] sm:$0xf]
        %v376 = vld [vmem:[%s188 + $0x4ec] sm:$0xff]
        %v377 = vld [vmem:[%s188 + $0x4f4] sm:$0xff]
        %v378 = vld [vmem:[%s188 + $0x4fc] sm:$0xff]
        %v379 = vld [vmem:[%s188 + $0x504] sm:$0xff]
        %v380 = vld [vmem:[%s188 + $0x50c] sm:$0xf]
        %v381 = vld [vmem:[%s188 + $0x510] sm:$0xff]
        %v382 = vld [vmem:[%s188 + $0x518] sm:$0xff]
        %v383 = vld [vmem:[%s188 + $0x520] sm:$0xff]
        %v384 = vld [vmem:[%s188 + $0x528] sm:$0xff]
        %v385 = vld [vmem:[%s188 + $0x530] sm:$0xf]
        %v386 = vld [vmem:[%s188 + $0x534] sm:$0xff]
        %v387 = vld [vmem:[%s188 + $0x53c] sm:$0xff]
        %v388 = vld [vmem:[%s188 + $0x544] sm:$0xff]
        %v389 = vld [vmem:[%s188 + $0x54c] sm:$0xff]
        %v390 = vld [vmem:[%s188 + $0x554] sm:$0xf]
        %v391 = vld [vmem:[%s188 + $0x558] sm:$0xff]
        %v392 = vld [vmem:[%s188 + $0x560] sm:$0xff]
        %v393 = vld [vmem:[%s188 + $0x568] sm:$0xff]
        %v394 = vld [vmem:[%s188 + $0x570] sm:$0xff]
        %v395 = vld [vmem:[%s188 + $0x578] sm:$0xf]
        %v396 = vld [vmem:[%s188 + $0x57c] sm:$0xff]
        %v397 = vld [vmem:[%s188 + $0x584] sm:$0xff]
        %v398 = vld [vmem:[%s188 + $0x58c] sm:$0xff]
        %v399 = vld [vmem:[%s188 + $0x594] sm:$0xff]
        %v400 = vld [vmem:[%s188 + $0x59c] sm:$0xf]
        %v401 = vld [vmem:[%s188 + $0x5a0] sm:$0xff]
        %v402 = vld [vmem:[%s188 + $0x5a8] sm:$0xff]
        %v403 = vld [vmem:[%s188 + $0x5b0] sm:$0xff]
        %v404 = vld [vmem:[%s188 + $0x5b8] sm:$0xff]
        %v405 = vld [vmem:[%s188 + $0x5c0] sm:$0xf]
        %v406 = vld [vmem:[%s188 + $0x5c4] sm:$0xff]
        %v407 = vld [vmem:[%s188 + $0x5cc] sm:$0xff]
        %v408 = vld [vmem:[%s188 + $0x5d4] sm:$0xff]
        %v409 = vld [vmem:[%s188 + $0x5dc] sm:$0xff]
        %v410 = vld [vmem:[%s188 + $0x5e4] sm:$0xf]
        %v411 = vld [vmem:[%s188 + $0x5e8] sm:$0xff]
        %v412 = vld [vmem:[%s188 + $0x5f0] sm:$0xff]
        %v413 = vld [vmem:[%s188 + $0x5f8] sm:$0xff]
        %v414 = vld [vmem:[%s188 + $0x600] sm:$0xff]
        %v415 = vld [vmem:[%s188 + $0x608] sm:$0xf]
        %v416 = vld [vmem:[%s188 + $0x60c] sm:$0xff]
        %v417 = vld [vmem:[%s188 + $0x614] sm:$0xff]
        %v418 = vld [vmem:[%s188 + $0x61c] sm:$0xff]
        %v419 = vld [vmem:[%s188 + $0x624] sm:$0xff]
        %v420 = vld [vmem:[%s188 + $0x62c] sm:$0xf]
        %v421 = vld [vmem:[%s188 + $0x630] sm:$0xff]
        %v422 = vld [vmem:[%s188 + $0x638] sm:$0xff]
        %v423 = vld [vmem:[%s188 + $0x640] sm:$0xff]
        %v424 = vld [vmem:[%s188 + $0x648] sm:$0xff]
        %v425 = vld [vmem:[%s188 + $0x650] sm:$0xf]
        %v426 = vld [vmem:[%s188 + $0x654] sm:$0xff]
        %v427 = vld [vmem:[%s188 + $0x65c] sm:$0xff]
        %v428 = vld [vmem:[%s188 + $0x664] sm:$0xff]
        %v429 = vld [vmem:[%s188 + $0x66c] sm:$0xff]
        %v430 = vld [vmem:[%s188 + $0x674] sm:$0xf]
        %v431 = vld [vmem:[%s1] sm:$0xf]
        %v432 = vld [vmem:[%s1 + $0x4] sm:$0xf]
        %v433 = vld [vmem:[%s1 + $0x8] sm:$0xf]
        %v434 = vld [vmem:[%s1 + $0xc] sm:$0xf]
        %v435 = vld [vmem:[%s1 + $0x10] sm:$0xf]
        %v436 = vld [vmem:[%s1 + $0x14] sm:$0xf]
        %v437 = vld [vmem:[%s1 + $0x18] sm:$0xf]
        %v438 = vld [vmem:[%s1 + $0x1c] sm:$0xf]
        %v439 = vld [vmem:[%s1 + $0x20] sm:$0xf]
        %v440 = vld [vmem:[%s1 + $0x24] sm:$0xf]
        %v441 = vld [vmem:[%s1 + $0x28] sm:$0xf]
        %v442 = vld [vmem:[%s1 + $0x2c] sm:$0xf]
        %v443 = vld [vmem:[%s1 + $0x30] sm:$0xf]
        %v444 = vld [vmem:[%s1 + $0x34] sm:$0xf]
        %v445 = vld [vmem:[%s1 + $0x38] sm:$0xf]
        %v446 = vld [vmem:[%s1 + $0x3c] sm:$0xf]
        %v447 = vld [vmem:[%s1 + $0x40] sm:$0xf]
        %v448 = vld [vmem:[%s1 + $0x44] sm:$0xf]
        %v449 = vld [vmem:[%s1 + $0x48] sm:$0xf]
        %v450 = vld [vmem:[%s1 + $0x4c] sm:$0xf]
        %v451 = vld [vmem:[%s1 + $0x50] sm:$0xf]
        %v452 = vld [vmem:[%s1 + $0x54] sm:$0xf]
        %v453 = vld [vmem:[%s1 + $0x58] sm:$0xf]
        %v454 = vld [vmem:[%s1 + $0x5c] sm:$0xf]
        %v455 = vld [vmem:[%s1 + $0x60] sm:$0xf]
        %v456 = vld [vmem:[%s1 + $0x64] sm:$0xf]
        %v457 = vld [vmem:[%s1 + $0x68] sm:$0xf]
        %v458 = vld [vmem:[%s1 + $0x6c] sm:$0xf]
        %v459 = vld [vmem:[%s1 + $0x70] sm:$0xf]
        %v460 = vld [vmem:[%s1 + $0x74] sm:$0xf]
        %v461 = vld [vmem:[%s1 + $0x78] sm:$0xf]
        %v462 = vld [vmem:[%s1 + $0x7c] sm:$0xf]
        %v463 = vld [vmem:[%s1 + $0x80] sm:$0xf]
        %v464 = vld [vmem:[%s1 + $0x84] sm:$0xf]
        %v465 = vld [vmem:[%s1 + $0x88] sm:$0xf]
        %v466 = vld [vmem:[%s1 + $0x8c] sm:$0xf]
        %v467 = vld [vmem:[%s1 + $0x90] sm:$0xf]
        %v468 = vld [vmem:[%s1 + $0x94] sm:$0xf]
        %v469 = vld [vmem:[%s1 + $0x98] sm:$0xf]
        %v470 = vld [vmem:[%s1 + $0x9c] sm:$0xf]
        %v471 = vld [vmem:[%s1 + $0xa0] sm:$0xf]
        %v472 = vld [vmem:[%s1 + $0xa4] sm:$0xf]
        %v473 = vld [vmem:[%s1 + $0xa8] sm:$0xf]
        %v474 = vld [vmem:[%s1 + $0xac] sm:$0xf]
        %v475 = vld [vmem:[%s1 + $0xb0] sm:$0xf]
        %v476 = vld [vmem:[%s1 + $0xb4] sm:$0xf]
        %v477 = vld [vmem:[%s1 + $0xb8] sm:$0xf]
        %v478 = vld [vmem:[%s1 + $0xbc] sm:$0xf]
        %v479 = vld [vmem:[%s1 + $0xc0] sm:$0xf]
        %v480 = vld [vmem:[%s1 + $0xc4] sm:$0xf]
        %v481 = vld [vmem:[%s1 + $0xc8] sm:$0xf]
        %v482 = vld [vmem:[%s1 + $0xcc] sm:$0xf]
        %v483 = vld [vmem:[%s1 + $0xd0] sm:$0xf]
        %v484 = vld [vmem:[%s1 + $0xd4] sm:$0xf]
        %v485 = vld [vmem:[%s1 + $0xd8] sm:$0xf]
        %v486 = vld [vmem:[%s1 + $0xdc] sm:$0xf]
        %v487 = vld [vmem:[%s1 + $0xe0] sm:$0xf]
        %v488 = vld [vmem:[%s1 + $0xe4] sm:$0xf]
        %v489 = vld [vmem:[%s1 + $0xe8] sm:$0xf]
        %v490 = vld [vmem:[%s1 + $0xec] sm:$0xf]
        %v491 = vld [vmem:[%s1 + $0xf0] sm:$0xf]
        %v492 = vld [vmem:[%s1 + $0xf4] sm:$0xf]
        %v493 = vld [vmem:[%s1 + $0xf8] sm:$0xf]
        %v494 = vld [vmem:[%s1 + $0xfc] sm:$0xf]
        %v495 = vld [vmem:[%s1 + $0x100] sm:$0xf]
        %v496 = vld [vmem:[%s1 + $0x104] sm:$0xf]
        %v497 = vld [vmem:[%s1 + $0x108] sm:$0xf]
        %v498 = vld [vmem:[%s1 + $0x10c] sm:$0xf]
        %v499 = vld [vmem:[%s1 + $0x110] sm:$0xf]
        %v500 = vld [vmem:[%s1 + $0x114] sm:$0xf]
        %v501 = vld [vmem:[%s1 + $0x118] sm:$0xf]
        %v502 = vld [vmem:[%s1 + $0x11c] sm:$0xf]
        %v503 = vld [vmem:[%s1 + $0x120] sm:$0xf]
        %v504 = vld [vmem:[%s1 + $0x124] sm:$0xf]
        %v505 = vld [vmem:[%s1 + $0x128] sm:$0xf]
        %v506 = vld [vmem:[%s1 + $0x12c] sm:$0xf]
        %v507 = vld [vmem:[%s1 + $0x130] sm:$0xf]
        %v508 = vld [vmem:[%s1 + $0x134] sm:$0xf]
        %v509 = vld [vmem:[%s1 + $0x138] sm:$0xf]
        %v510 = vld [vmem:[%s1 + $0x13c] sm:$0xf]
        %v511 = vld [vmem:[%s1 + $0x140] sm:$0xf]
        %v512 = vld [vmem:[%s1 + $0x144] sm:$0xf]
        %v513 = vld [vmem:[%s1 + $0x148] sm:$0xf]
        %v514 = vld [vmem:[%s1 + $0x14c] sm:$0xf]
        %v515 = vld [vmem:[%s1 + $0x150] sm:$0xf]
        %v516 = vld [vmem:[%s1 + $0x154] sm:$0xf]
        %v517 = vld [vmem:[%s1 + $0x158] sm:$0xf]
        %v518 = vld [vmem:[%s1 + $0x15c] sm:$0xf]
        %v519 = vld [vmem:[%s1 + $0x160] sm:$0xf]
        %v520 = vld [vmem:[%s1 + $0x164] sm:$0xf]
        %v521 = vld [vmem:[%s1 + $0x168] sm:$0xf]
        %v522 = vld [vmem:[%s1 + $0x16c] sm:$0xf]
        %v523 = vld [vmem:[%s1 + $0x170] sm:$0xf]
        %v524 = vld [vmem:[%s1 + $0x174] sm:$0xf]
        %v525 = vld [vmem:[%s1 + $0x178] sm:$0xf]
        %v526 = vld [vmem:[%s1 + $0x17c] sm:$0xf]
        %v527 = vld [vmem:[%s1 + $0x180] sm:$0xf]
        %v528 = vld [vmem:[%s1 + $0x184] sm:$0xf]
        %v529 = vld [vmem:[%s1 + $0x188] sm:$0xf]
        %v530 = vld [vmem:[%s1 + $0x18c] sm:$0xf]
        %v531 = vld [vmem:[%s1 + $0x190] sm:$0xf]
        %v532 = vld [vmem:[%s1 + $0x194] sm:$0xf]
        %v533 = vld [vmem:[%s1 + $0x198] sm:$0xf]
        %v534 = vld [vmem:[%s1 + $0x19c] sm:$0xf]
        %v535 = vld [vmem:[%s1 + $0x1a0] sm:$0xf]
        %v536 = vld [vmem:[%s1 + $0x1a4] sm:$0xf]
        %v537 = vld [vmem:[%s1 + $0x1a8] sm:$0xf]
        %v538 = vld [vmem:[%s1 + $0x1ac] sm:$0xf]
        %v539 = vld [vmem:[%s1 + $0x1b0] sm:$0xf]
        %v540 = vld [vmem:[%s1 + $0x1b4] sm:$0xf]
        %v541 = vld [vmem:[%s1 + $0x1b8] sm:$0xf]
        %v542 = vld [vmem:[%s1 + $0x1bc] sm:$0xf]
        %v543 = vld [vmem:[%s1 + $0x1c0] sm:$0xf]
        %v544 = vld [vmem:[%s1 + $0x1c4] sm:$0xf]
        %v545 = vld [vmem:[%s1 + $0x1c8] sm:$0xf]
        %v546 = vld [vmem:[%s1 + $0x1cc] sm:$0xf]
        %v547 = vld [vmem:[%s1 + $0x1d0] sm:$0xf]
        %v548 = vld [vmem:[%s1 + $0x1d4] sm:$0xf]
        %v549 = vld [vmem:[%s1 + $0x1d8] sm:$0xf]
        %v550 = vld [vmem:[%s1 + $0x1dc] sm:$0xf]
        %v551 = vld [vmem:[%s1 + $0x1e0] sm:$0xf]
        %v552 = vld [vmem:[%s1 + $0x1e4] sm:$0xf]
        %v553 = vld [vmem:[%s1 + $0x1e8] sm:$0xf]
        %v554 = vld [vmem:[%s1 + $0x1ec] sm:$0xf]
        %v555 = vld [vmem:[%s1 + $0x1f0] sm:$0xf]
        %v556 = vld [vmem:[%s1 + $0x1f4] sm:$0xf]
        %v557 = vld [vmem:[%s1 + $0x1f8] sm:$0xf]
        %v558 = vld [vmem:[%s1 + $0x1fc] sm:$0xf]
        %v559 = vld [vmem:[%s1 + $0x200] sm:$0xf]
        %v560 = vld [vmem:[%s1 + $0x204] sm:$0xf]
        %v561 = vld [vmem:[%s1 + $0x208] sm:$0xf]
        %v562 = vld [vmem:[%s1 + $0x20c] sm:$0xf]
        %v563 = vld [vmem:[%s1 + $0x210] sm:$0xf]
        %v564 = vld [vmem:[%s1 + $0x214] sm:$0xf]
        %v565 = vld [vmem:[%s1 + $0x218] sm:$0xf]
        %v566 = vld [vmem:[%s1 + $0x21c] sm:$0xf]
        %v567 = vld [vmem:[%s1 + $0x220] sm:$0xf]
        %v568 = vld [vmem:[%s1 + $0x224] sm:$0xf]
        %v569 = vld [vmem:[%s1 + $0x228] sm:$0xf]
        %v570 = vld [vmem:[%s1 + $0x22c] sm:$0xf]
        %v571 = vld [vmem:[%s1 + $0x230] sm:$0xf]
        %v572 = vld [vmem:[%s1 + $0x234] sm:$0xf]
        %v573 = vld [vmem:[%s1 + $0x238] sm:$0xf]
        %v574 = vld [vmem:[%s1 + $0x23c] sm:$0xf]
        %v575 = vld [vmem:[%s2] sm:$0x1]
        %v577 = vlaneseq
        %v578 = vshrl.u32 %v577, 7
        %v579 = vsub.s32 0, %v578
        %v580 = vrot.slane %v575, %v579
        %v812 = vunpack.c.l.b16 %v201
        %v813 = vunpack.c.h.b16 %v201
        %v814 = vunpack.c.l.b16 %v202
        %v815 = vunpack.c.h.b16 %v202
        %v816 = vunpack.c.l.b16 %v203
        %v817 = vunpack.c.h.b16 %v203
        %v818 = vunpack.c.l.b16 %v204
        %v819 = vunpack.c.h.b16 %v204
        %v820 = vunpack.c.l.b16 %v205
        %v821 = vunpack.c.l.b16 %v206
        %v822 = vunpack.c.h.b16 %v206
        %v823 = vunpack.c.l.b16 %v207
        %v824 = vunpack.c.h.b16 %v207
        %v825 = vunpack.c.l.b16 %v208
        %v826 = vunpack.c.h.b16 %v208
        %v827 = vunpack.c.l.b16 %v209
        %v828 = vunpack.c.h.b16 %v209
        %v829 = vunpack.c.l.b16 %v210
        %v830 = vunpack.c.l.b16 %v211
        %v831 = vunpack.c.h.b16 %v211
        %v832 = vunpack.c.l.b16 %v212
        %v833 = vunpack.c.h.b16 %v212
        %v834 = vunpack.c.l.b16 %v213
        %v835 = vunpack.c.h.b16 %v213
        %v836 = vunpack.c.l.b16 %v214
        %v837 = vunpack.c.h.b16 %v214
        %v838 = vunpack.c.l.b16 %v215
        %v839 = vunpack.c.l.b16 %v216
        %v840 = vunpack.c.h.b16 %v216
        %v841 = vunpack.c.l.b16 %v217
        %v842 = vunpack.c.h.b16 %v217
        %v843 = vunpack.c.l.b16 %v218
        %v844 = vunpack.c.h.b16 %v218
        %v845 = vunpack.c.l.b16 %v219
        %v846 = vunpack.c.h.b16 %v219
        %v847 = vunpack.c.l.b16 %v220
        %v848 = vunpack.c.l.b16 %v221
        %v849 = vunpack.c.h.b16 %v221
        %v850 = vunpack.c.l.b16 %v222
        %v851 = vunpack.c.h.b16 %v222
        %v852 = vunpack.c.l.b16 %v223
        %v853 = vunpack.c.h.b16 %v223
        %v854 = vunpack.c.l.b16 %v224
        %v855 = vunpack.c.h.b16 %v224
        %v856 = vunpack.c.l.b16 %v225
        %v857 = vunpack.c.l.b16 %v226
        %v858 = vunpack.c.h.b16 %v226
        %v859 = vunpack.c.l.b16 %v227
        %v860 = vunpack.c.h.b16 %v227
        %v861 = vunpack.c.l.b16 %v228
        %v862 = vunpack.c.h.b16 %v228
        %v863 = vunpack.c.l.b16 %v229
        %v864 = vunpack.c.h.b16 %v229
        %v865 = vunpack.c.l.b16 %v230
        %v866 = vunpack.c.l.b16 %v231
        %v867 = vunpack.c.h.b16 %v231
        %v868 = vunpack.c.l.b16 %v232
        %v869 = vunpack.c.h.b16 %v232
        %v870 = vunpack.c.l.b16 %v233
        %v871 = vunpack.c.h.b16 %v233
        %v872 = vunpack.c.l.b16 %v234
        %v873 = vunpack.c.h.b16 %v234
        %v874 = vunpack.c.l.b16 %v235
        %v875 = vunpack.c.l.b16 %v236
        %v876 = vunpack.c.h.b16 %v236
        %v877 = vunpack.c.l.b16 %v237
        %v878 = vunpack.c.h.b16 %v237
        %v879 = vunpack.c.l.b16 %v238
        %v880 = vunpack.c.h.b16 %v238
        %v881 = vunpack.c.l.b16 %v239
        %v882 = vunpack.c.h.b16 %v239
        %v883 = vunpack.c.l.b16 %v240
        %v884 = vunpack.c.l.b16 %v241
        %v885 = vunpack.c.h.b16 %v241
        %v886 = vunpack.c.l.b16 %v242
        %v887 = vunpack.c.h.b16 %v242
        %v888 = vunpack.c.l.b16 %v243
        %v889 = vunpack.c.h.b16 %v243
        %v890 = vunpack.c.l.b16 %v244
        %v891 = vunpack.c.h.b16 %v244
        %v892 = vunpack.c.l.b16 %v245
        %v893 = vunpack.c.l.b16 %v246
        %v894 = vunpack.c.h.b16 %v246
        %v895 = vunpack.c.l.b16 %v247
        %v896 = vunpack.c.h.b16 %v247
        %v897 = vunpack.c.l.b16 %v248
        %v898 = vunpack.c.h.b16 %v248
        %v899 = vunpack.c.l.b16 %v249
        %v900 = vunpack.c.h.b16 %v249
        %v901 = vunpack.c.l.b16 %v250
        %v902 = vunpack.c.l.b16 %v251
        %v903 = vunpack.c.h.b16 %v251
        %v904 = vunpack.c.l.b16 %v252
        %v905 = vunpack.c.h.b16 %v252
        %v906 = vunpack.c.l.b16 %v253
        %v907 = vunpack.c.h.b16 %v253
        %v908 = vunpack.c.l.b16 %v254
        %v909 = vunpack.c.h.b16 %v254
        %v910 = vunpack.c.l.b16 %v255
        %v911 = vunpack.c.l.b16 %v256
        %v912 = vunpack.c.h.b16 %v256
        %v913 = vunpack.c.l.b16 %v257
        %v914 = vunpack.c.h.b16 %v257
        %v915 = vunpack.c.l.b16 %v258
        %v916 = vunpack.c.h.b16 %v258
        %v917 = vunpack.c.l.b16 %v259
        %v918 = vunpack.c.h.b16 %v259
        %v919 = vunpack.c.l.b16 %v260
        %v920 = vunpack.c.l.b16 %v261
        %v921 = vunpack.c.h.b16 %v261
        %v922 = vunpack.c.l.b16 %v262
        %v923 = vunpack.c.h.b16 %v262
        %v924 = vunpack.c.l.b16 %v263
        %v925 = vunpack.c.h.b16 %v263
        %v926 = vunpack.c.l.b16 %v264
        %v927 = vunpack.c.h.b16 %v264
        %v928 = vunpack.c.l.b16 %v265
        %v929 = vunpack.c.l.b16 %v266
        %v930 = vunpack.c.h.b16 %v266
        %v931 = vunpack.c.l.b16 %v267
        %v932 = vunpack.c.h.b16 %v267
        %v933 = vunpack.c.l.b16 %v268
        %v934 = vunpack.c.h.b16 %v268
        %v935 = vunpack.c.l.b16 %v269
        %v936 = vunpack.c.h.b16 %v269
        %v937 = vunpack.c.l.b16 %v270
        %v938 = vunpack.c.l.b16 %v271
        %v939 = vunpack.c.h.b16 %v271
        %v940 = vunpack.c.l.b16 %v272
        %v941 = vunpack.c.h.b16 %v272
        %v942 = vunpack.c.l.b16 %v273
        %v943 = vunpack.c.h.b16 %v273
        %v944 = vunpack.c.l.b16 %v274
        %v945 = vunpack.c.h.b16 %v274
        %v946 = vunpack.c.l.b16 %v275
        %v947 = vunpack.c.l.b16 %v276
        %v948 = vunpack.c.h.b16 %v276
        %v949 = vunpack.c.l.b16 %v277
        %v950 = vunpack.c.h.b16 %v277
        %v951 = vunpack.c.l.b16 %v278
        %v952 = vunpack.c.h.b16 %v278
        %v953 = vunpack.c.l.b16 %v279
        %v954 = vunpack.c.h.b16 %v279
        %v955 = vunpack.c.l.b16 %v280
        %v956 = vunpack.c.l.b16 %v281
        %v957 = vunpack.c.h.b16 %v281
        %v958 = vunpack.c.l.b16 %v282
        %v959 = vunpack.c.h.b16 %v282
        %v960 = vunpack.c.l.b16 %v283
        %v961 = vunpack.c.h.b16 %v283
        %v962 = vunpack.c.l.b16 %v284
        %v963 = vunpack.c.h.b16 %v284
        %v964 = vunpack.c.l.b16 %v285
        %v965 = vunpack.c.l.b16 %v286
        %v966 = vunpack.c.h.b16 %v286
        %v967 = vunpack.c.l.b16 %v287
        %v968 = vunpack.c.h.b16 %v287
        %v969 = vunpack.c.l.b16 %v288
        %v970 = vunpack.c.h.b16 %v288
        %v971 = vunpack.c.l.b16 %v289
        %v972 = vunpack.c.h.b16 %v289
        %v973 = vunpack.c.l.b16 %v290
        %v974 = vunpack.c.l.b16 %v291
        %v975 = vunpack.c.h.b16 %v291
        %v976 = vunpack.c.l.b16 %v292
        %v977 = vunpack.c.h.b16 %v292
        %v978 = vunpack.c.l.b16 %v293
        %v979 = vunpack.c.h.b16 %v293
        %v980 = vunpack.c.l.b16 %v294
        %v981 = vunpack.c.h.b16 %v294
        %v982 = vunpack.c.l.b16 %v295
        %v983 = vunpack.c.l.b16 %v296
        %v984 = vunpack.c.h.b16 %v296
        %v985 = vunpack.c.l.b16 %v297
        %v986 = vunpack.c.h.b16 %v297
        %v987 = vunpack.c.l.b16 %v298
        %v988 = vunpack.c.h.b16 %v298
        %v989 = vunpack.c.l.b16 %v299
        %v990 = vunpack.c.h.b16 %v299
        %v991 = vunpack.c.l.b16 %v300
        %v992 = vunpack.c.l.b16 %v301
        %v993 = vunpack.c.h.b16 %v301
        %v994 = vunpack.c.l.b16 %v302
        %v995 = vunpack.c.h.b16 %v302
        %v996 = vunpack.c.l.b16 %v303
        %v997 = vunpack.c.h.b16 %v303
        %v998 = vunpack.c.l.b16 %v304
        %v999 = vunpack.c.h.b16 %v304
        %v1000 = vunpack.c.l.b16 %v305
        %v1001 = vunpack.c.l.b16 %v306
        %v1002 = vunpack.c.h.b16 %v306
        %v1003 = vunpack.c.l.b16 %v307
        %v1004 = vunpack.c.h.b16 %v307
        %v1005 = vunpack.c.l.b16 %v308
        %v1006 = vunpack.c.h.b16 %v308
        %v1007 = vunpack.c.l.b16 %v309
        %v1008 = vunpack.c.h.b16 %v309
        %v1009 = vunpack.c.l.b16 %v310
        %v1010 = vunpack.c.l.b16 %v311
        %v1011 = vunpack.c.h.b16 %v311
        %v1012 = vunpack.c.l.b16 %v312
        %v1013 = vunpack.c.h.b16 %v312
        %v1014 = vunpack.c.l.b16 %v313
        %v1015 = vunpack.c.h.b16 %v313
        %v1016 = vunpack.c.l.b16 %v314
        %v1017 = vunpack.c.h.b16 %v314
        %v1018 = vunpack.c.l.b16 %v315
        %v1019 = vunpack.c.l.b16 %v316
        %v1020 = vunpack.c.h.b16 %v316
        %v1021 = vunpack.c.l.b16 %v317
        %v1022 = vunpack.c.h.b16 %v317
        %v1023 = vunpack.c.l.b16 %v318
        %v1024 = vunpack.c.h.b16 %v318
        %v1025 = vunpack.c.l.b16 %v319
        %v1026 = vunpack.c.h.b16 %v319
        %v1027 = vunpack.c.l.b16 %v320
        %v1028 = vunpack.c.l.b16 %v321
        %v1029 = vunpack.c.h.b16 %v321
        %v1030 = vunpack.c.l.b16 %v322
        %v1031 = vunpack.c.h.b16 %v322
        %v1032 = vunpack.c.l.b16 %v323
        %v1033 = vunpack.c.h.b16 %v323
        %v1034 = vunpack.c.l.b16 %v324
        %v1035 = vunpack.c.h.b16 %v324
        %v1036 = vunpack.c.l.b16 %v325
        %v1037 = vunpack.c.l.b16 %v326
        %v1038 = vunpack.c.h.b16 %v326
        %v1039 = vunpack.c.l.b16 %v327
        %v1040 = vunpack.c.h.b16 %v327
        %v1041 = vunpack.c.l.b16 %v328
        %v1042 = vunpack.c.h.b16 %v328
        %v1043 = vunpack.c.l.b16 %v329
        %v1044 = vunpack.c.h.b16 %v329
        %v1045 = vunpack.c.l.b16 %v330
        %v1046 = vunpack.c.l.b16 %v331
        %v1047 = vunpack.c.h.b16 %v331
        %v1048 = vunpack.c.l.b16 %v332
        %v1049 = vunpack.c.h.b16 %v332
        %v1050 = vunpack.c.l.b16 %v333
        %v1051 = vunpack.c.h.b16 %v333
        %v1052 = vunpack.c.l.b16 %v334
        %v1053 = vunpack.c.h.b16 %v334
        %v1054 = vunpack.c.l.b16 %v335
        %v1055 = vunpack.c.l.b16 %v336
        %v1056 = vunpack.c.h.b16 %v336
        %v1057 = vunpack.c.l.b16 %v337
        %v1058 = vunpack.c.h.b16 %v337
        %v1059 = vunpack.c.l.b16 %v338
        %v1060 = vunpack.c.h.b16 %v338
        %v1061 = vunpack.c.l.b16 %v339
        %v1062 = vunpack.c.h.b16 %v339
        %v1063 = vunpack.c.l.b16 %v340
        %v1064 = vunpack.c.l.b16 %v341
        %v1065 = vunpack.c.h.b16 %v341
        %v1066 = vunpack.c.l.b16 %v342
        %v1067 = vunpack.c.h.b16 %v342
        %v1068 = vunpack.c.l.b16 %v343
        %v1069 = vunpack.c.h.b16 %v343
        %v1070 = vunpack.c.l.b16 %v344
        %v1071 = vunpack.c.h.b16 %v344
        %v1072 = vunpack.c.l.b16 %v345
        %v1073 = vunpack.c.l.b16 %v346
        %v1074 = vunpack.c.h.b16 %v346
        %v1075 = vunpack.c.l.b16 %v347
        %v1076 = vunpack.c.h.b16 %v347
        %v1077 = vunpack.c.l.b16 %v348
        %v1078 = vunpack.c.h.b16 %v348
        %v1079 = vunpack.c.l.b16 %v349
        %v1080 = vunpack.c.h.b16 %v349
        %v1081 = vunpack.c.l.b16 %v350
        %v1082 = vunpack.c.l.b16 %v351
        %v1083 = vunpack.c.h.b16 %v351
        %v1084 = vunpack.c.l.b16 %v352
        %v1085 = vunpack.c.h.b16 %v352
        %v1086 = vunpack.c.l.b16 %v353
        %v1087 = vunpack.c.h.b16 %v353
        %v1088 = vunpack.c.l.b16 %v354
        %v1089 = vunpack.c.h.b16 %v354
        %v1090 = vunpack.c.l.b16 %v355
        %v1091 = vunpack.c.l.b16 %v356
        %v1092 = vunpack.c.h.b16 %v356
        %v1093 = vunpack.c.l.b16 %v357
        %v1094 = vunpack.c.h.b16 %v357
        %v1095 = vunpack.c.l.b16 %v358
        %v1096 = vunpack.c.h.b16 %v358
        %v1097 = vunpack.c.l.b16 %v359
        %v1098 = vunpack.c.h.b16 %v359
        %v1099 = vunpack.c.l.b16 %v360
        %v1100 = vunpack.c.l.b16 %v361
        %v1101 = vunpack.c.h.b16 %v361
        %v1102 = vunpack.c.l.b16 %v362
        %v1103 = vunpack.c.h.b16 %v362
        %v1104 = vunpack.c.l.b16 %v363
        %v1105 = vunpack.c.h.b16 %v363
        %v1106 = vunpack.c.l.b16 %v364
        %v1107 = vunpack.c.h.b16 %v364
        %v1108 = vunpack.c.l.b16 %v365
        %v1109 = vunpack.c.l.b16 %v366
        %v1110 = vunpack.c.h.b16 %v366
        %v1111 = vunpack.c.l.b16 %v367
        %v1112 = vunpack.c.h.b16 %v367
        %v1113 = vunpack.c.l.b16 %v368
        %v1114 = vunpack.c.h.b16 %v368
        %v1115 = vunpack.c.l.b16 %v369
        %v1116 = vunpack.c.h.b16 %v369
        %v1117 = vunpack.c.l.b16 %v370
        %v1118 = vunpack.c.l.b16 %v371
        %v1119 = vunpack.c.h.b16 %v371
        %v1120 = vunpack.c.l.b16 %v372
        %v1121 = vunpack.c.h.b16 %v372
        %v1122 = vunpack.c.l.b16 %v373
        %v1123 = vunpack.c.h.b16 %v373
        %v1124 = vunpack.c.l.b16 %v374
        %v1125 = vunpack.c.h.b16 %v374
        %v1126 = vunpack.c.l.b16 %v375
        %v1127 = vunpack.c.l.b16 %v376
        %v1128 = vunpack.c.h.b16 %v376
        %v1129 = vunpack.c.l.b16 %v377
        %v1130 = vunpack.c.h.b16 %v377
        %v1131 = vunpack.c.l.b16 %v378
        %v1132 = vunpack.c.h.b16 %v378
        %v1133 = vunpack.c.l.b16 %v379
        %v1134 = vunpack.c.h.b16 %v379
        %v1135 = vunpack.c.l.b16 %v380
        %v1136 = vunpack.c.l.b16 %v381
        %v1137 = vunpack.c.h.b16 %v381
        %v1138 = vunpack.c.l.b16 %v382
        %v1139 = vunpack.c.h.b16 %v382
        %v1140 = vunpack.c.l.b16 %v383
        %v1141 = vunpack.c.h.b16 %v383
        %v1142 = vunpack.c.l.b16 %v384
        %v1143 = vunpack.c.h.b16 %v384
        %v1144 = vunpack.c.l.b16 %v385
        %v1145 = vunpack.c.l.b16 %v386
        %v1146 = vunpack.c.h.b16 %v386
        %v1147 = vunpack.c.l.b16 %v387
        %v1148 = vunpack.c.h.b16 %v387
        %v1149 = vunpack.c.l.b16 %v388
        %v1150 = vunpack.c.h.b16 %v388
        %v1151 = vunpack.c.l.b16 %v389
        %v1152 = vunpack.c.h.b16 %v389
        %v1153 = vunpack.c.l.b16 %v390
        %v1154 = vunpack.c.l.b16 %v391
        %v1155 = vunpack.c.h.b16 %v391
        %v1156 = vunpack.c.l.b16 %v392
        %v1157 = vunpack.c.h.b16 %v392
        %v1158 = vunpack.c.l.b16 %v393
        %v1159 = vunpack.c.h.b16 %v393
        %v1160 = vunpack.c.l.b16 %v394
        %v1161 = vunpack.c.h.b16 %v394
        %v1162 = vunpack.c.l.b16 %v395
        %v1163 = vunpack.c.l.b16 %v396
        %v1164 = vunpack.c.h.b16 %v396
        %v1165 = vunpack.c.l.b16 %v397
        %v1166 = vunpack.c.h.b16 %v397
        %v1167 = vunpack.c.l.b16 %v398
        %v1168 = vunpack.c.h.b16 %v398
        %v1169 = vunpack.c.l.b16 %v399
        %v1170 = vunpack.c.h.b16 %v399
        %v1171 = vunpack.c.l.b16 %v400
        %v1172 = vunpack.c.l.b16 %v401
        %v1173 = vunpack.c.h.b16 %v401
        %v1174 = vunpack.c.l.b16 %v402
        %v1175 = vunpack.c.h.b16 %v402
        %v1176 = vunpack.c.l.b16 %v403
        %v1177 = vunpack.c.h.b16 %v403
        %v1178 = vunpack.c.l.b16 %v404
        %v1179 = vunpack.c.h.b16 %v404
        %v1180 = vunpack.c.l.b16 %v405
        %v1181 = vunpack.c.l.b16 %v406
        %v1182 = vunpack.c.h.b16 %v406
        %v1183 = vunpack.c.l.b16 %v407
        %v1184 = vunpack.c.h.b16 %v407
        %v1185 = vunpack.c.l.b16 %v408
        %v1186 = vunpack.c.h.b16 %v408
        %v1187 = vunpack.c.l.b16 %v409
        %v1188 = vunpack.c.h.b16 %v409
        %v1189 = vunpack.c.l.b16 %v410
        %v1190 = vunpack.c.l.b16 %v411
        %v1191 = vunpack.c.h.b16 %v411
        %v1192 = vunpack.c.l.b16 %v412
        %v1193 = vunpack.c.h.b16 %v412
        %v1194 = vunpack.c.l.b16 %v413
        %v1195 = vunpack.c.h.b16 %v413
        %v1196 = vunpack.c.l.b16 %v414
        %v1197 = vunpack.c.h.b16 %v414
        %v1198 = vunpack.c.l.b16 %v415
        %v1199 = vunpack.c.l.b16 %v416
        %v1200 = vunpack.c.h.b16 %v416
        %v1201 = vunpack.c.l.b16 %v417
        %v1202 = vunpack.c.h.b16 %v417
        %v1203 = vunpack.c.l.b16 %v418
        %v1204 = vunpack.c.h.b16 %v418
        %v1205 = vunpack.c.l.b16 %v419
        %v1206 = vunpack.c.h.b16 %v419
        %v1207 = vunpack.c.l.b16 %v420
        %v1208 = vunpack.c.l.b16 %v421
        %v1209 = vunpack.c.h.b16 %v421
        %v1210 = vunpack.c.l.b16 %v422
        %v1211 = vunpack.c.h.b16 %v422
        %v1212 = vunpack.c.l.b16 %v423
        %v1213 = vunpack.c.h.b16 %v423
        %v1214 = vunpack.c.l.b16 %v424
        %v1215 = vunpack.c.h.b16 %v424
        %v1216 = vunpack.c.l.b16 %v425
        %v1217 = vunpack.c.l.b16 %v426
        %v1218 = vunpack.c.h.b16 %v426
        %v1219 = vunpack.c.l.b16 %v427
        %v1220 = vunpack.c.h.b16 %v427
        %v1221 = vunpack.c.l.b16 %v428
        %v1222 = vunpack.c.h.b16 %v428
        %v1223 = vunpack.c.l.b16 %v429
        %v1224 = vunpack.c.h.b16 %v429
        %v1225 = vunpack.c.l.b16 %v430
        %v1226 = vpack.c.b16 %v821, %v812
        %v1227 = vpack.c.b16 %v822, %v813
        %v1228 = vpack.c.b16 %v823, %v814
        %v1229 = vpack.c.b16 %v824, %v815
        %v1230 = vpack.c.b16 %v825, %v816
        %v1231 = vpack.c.b16 %v826, %v817
        %v1232 = vpack.c.b16 %v827, %v818
        %v1233 = vpack.c.b16 %v828, %v819
        %v1234 = vpack.c.b16 %v829, %v820
        %v1235 = vpack.c.b16 %v839, %v830
        %v1236 = vpack.c.b16 %v840, %v831
        %v1237 = vpack.c.b16 %v841, %v832
        %v1238 = vpack.c.b16 %v842, %v833
        %v1239 = vpack.c.b16 %v843, %v834
        %v1240 = vpack.c.b16 %v844, %v835
        %v1241 = vpack.c.b16 %v845, %v836
        %v1242 = vpack.c.b16 %v846, %v837
        %v1243 = vpack.c.b16 %v847, %v838
        %v1244 = vpack.c.b16 %v857, %v848
        %v1245 = vpack.c.b16 %v858, %v849
        %v1246 = vpack.c.b16 %v859, %v850
        %v1247 = vpack.c.b16 %v860, %v851
        %v1248 = vpack.c.b16 %v861, %v852
        %v1249 = vpack.c.b16 %v862, %v853
        %v1250 = vpack.c.b16 %v863, %v854
        %v1251 = vpack.c.b16 %v864, %v855
        %v1252 = vpack.c.b16 %v865, %v856
        %v1253 = vpack.c.b16 %v875, %v866
        %v1254 = vpack.c.b16 %v876, %v867
        %v1255 = vpack.c.b16 %v877, %v868
        %v1256 = vpack.c.b16 %v878, %v869
        %v1257 = vpack.c.b16 %v879, %v870
        %v1258 = vpack.c.b16 %v880, %v871
        %v1259 = vpack.c.b16 %v881, %v872
        %v1260 = vpack.c.b16 %v882, %v873
        %v1261 = vpack.c.b16 %v883, %v874
        %v1262 = vpack.c.b16 %v893, %v884
        %v1263 = vpack.c.b16 %v894, %v885
        %v1264 = vpack.c.b16 %v895, %v886
        %v1265 = vpack.c.b16 %v896, %v887
        %v1266 = vpack.c.b16 %v897, %v888
        %v1267 = vpack.c.b16 %v898, %v889
        %v1268 = vpack.c.b16 %v899, %v890
        %v1269 = vpack.c.b16 %v900, %v891
        %v1270 = vpack.c.b16 %v901, %v892
        %v1271 = vpack.c.b16 %v911, %v902
        %v1272 = vpack.c.b16 %v912, %v903
        %v1273 = vpack.c.b16 %v913, %v904
        %v1274 = vpack.c.b16 %v914, %v905
        %v1275 = vpack.c.b16 %v915, %v906
        %v1276 = vpack.c.b16 %v916, %v907
        %v1277 = vpack.c.b16 %v917, %v908
        %v1278 = vpack.c.b16 %v918, %v909
        %v1279 = vpack.c.b16 %v919, %v910
        %v1280 = vpack.c.b16 %v929, %v920
        %v1281 = vpack.c.b16 %v930, %v921
        %v1282 = vpack.c.b16 %v931, %v922
        %v1283 = vpack.c.b16 %v932, %v923
        %v1284 = vpack.c.b16 %v933, %v924
        %v1285 = vpack.c.b16 %v934, %v925
        %v1286 = vpack.c.b16 %v935, %v926
        %v1287 = vpack.c.b16 %v936, %v927
        %v1288 = vpack.c.b16 %v937, %v928
        %v1289 = vpack.c.b16 %v947, %v938
        %v1290 = vpack.c.b16 %v948, %v939
        %v1291 = vpack.c.b16 %v949, %v940
        %v1292 = vpack.c.b16 %v950, %v941
        %v1293 = vpack.c.b16 %v951, %v942
        %v1294 = vpack.c.b16 %v952, %v943
        %v1295 = vpack.c.b16 %v953, %v944
        %v1296 = vpack.c.b16 %v954, %v945
        %v1297 = vpack.c.b16 %v955, %v946
        %v1298 = vpack.c.b16 %v965, %v956
        %v1299 = vpack.c.b16 %v966, %v957
        %v1300 = vpack.c.b16 %v967, %v958
        %v1301 = vpack.c.b16 %v968, %v959
        %v1302 = vpack.c.b16 %v969, %v960
        %v1303 = vpack.c.b16 %v970, %v961
        %v1304 = vpack.c.b16 %v971, %v962
        %v1305 = vpack.c.b16 %v972, %v963
        %v1306 = vpack.c.b16 %v973, %v964
        %v1307 = vpack.c.b16 %v983, %v974
        %v1308 = vpack.c.b16 %v984, %v975
        %v1309 = vpack.c.b16 %v985, %v976
        %v1310 = vpack.c.b16 %v986, %v977
        %v1311 = vpack.c.b16 %v987, %v978
        %v1312 = vpack.c.b16 %v988, %v979
        %v1313 = vpack.c.b16 %v989, %v980
        %v1314 = vpack.c.b16 %v990, %v981
        %v1315 = vpack.c.b16 %v991, %v982
        %v1316 = vpack.c.b16 %v1001, %v992
        %v1317 = vpack.c.b16 %v1002, %v993
        %v1318 = vpack.c.b16 %v1003, %v994
        %v1319 = vpack.c.b16 %v1004, %v995
        %v1320 = vpack.c.b16 %v1005, %v996
        %v1321 = vpack.c.b16 %v1006, %v997
        %v1322 = vpack.c.b16 %v1007, %v998
        %v1323 = vpack.c.b16 %v1008, %v999
        %v1324 = vpack.c.b16 %v1009, %v1000
        %v1325 = vpack.c.b16 %v1019, %v1010
        %v1326 = vpack.c.b16 %v1020, %v1011
        %v1327 = vpack.c.b16 %v1021, %v1012
        %v1328 = vpack.c.b16 %v1022, %v1013
        %v1329 = vpack.c.b16 %v1023, %v1014
        %v1330 = vpack.c.b16 %v1024, %v1015
        %v1331 = vpack.c.b16 %v1025, %v1016
        %v1332 = vpack.c.b16 %v1026, %v1017
        %v1333 = vpack.c.b16 %v1027, %v1018
        %v1334 = vpack.c.b16 %v1037, %v1028
        %v1335 = vpack.c.b16 %v1038, %v1029
        %v1336 = vpack.c.b16 %v1039, %v1030
        %v1337 = vpack.c.b16 %v1040, %v1031
        %v1338 = vpack.c.b16 %v1041, %v1032
        %v1339 = vpack.c.b16 %v1042, %v1033
        %v1340 = vpack.c.b16 %v1043, %v1034
        %v1341 = vpack.c.b16 %v1044, %v1035
        %v1342 = vpack.c.b16 %v1045, %v1036
        %v1343 = vpack.c.b16 %v1055, %v1046
        %v1344 = vpack.c.b16 %v1056, %v1047
        %v1345 = vpack.c.b16 %v1057, %v1048
        %v1346 = vpack.c.b16 %v1058, %v1049
        %v1347 = vpack.c.b16 %v1059, %v1050
        %v1348 = vpack.c.b16 %v1060, %v1051
        %v1349 = vpack.c.b16 %v1061, %v1052
        %v1350 = vpack.c.b16 %v1062, %v1053
        %v1351 = vpack.c.b16 %v1063, %v1054
        %v1352 = vpack.c.b16 %v1073, %v1064
        %v1353 = vpack.c.b16 %v1074, %v1065
        %v1354 = vpack.c.b16 %v1075, %v1066
        %v1355 = vpack.c.b16 %v1076, %v1067
        %v1356 = vpack.c.b16 %v1077, %v1068
        %v1357 = vpack.c.b16 %v1078, %v1069
        %v1358 = vpack.c.b16 %v1079, %v1070
        %v1359 = vpack.c.b16 %v1080, %v1071
        %v1360 = vpack.c.b16 %v1081, %v1072
        %v1361 = vpack.c.b16 %v1091, %v1082
        %v1362 = vpack.c.b16 %v1092, %v1083
        %v1363 = vpack.c.b16 %v1093, %v1084
        %v1364 = vpack.c.b16 %v1094, %v1085
        %v1365 = vpack.c.b16 %v1095, %v1086
        %v1366 = vpack.c.b16 %v1096, %v1087
        %v1367 = vpack.c.b16 %v1097, %v1088
        %v1368 = vpack.c.b16 %v1098, %v1089
        %v1369 = vpack.c.b16 %v1099, %v1090
        %v1370 = vpack.c.b16 %v1109, %v1100
        %v1371 = vpack.c.b16 %v1110, %v1101
        %v1372 = vpack.c.b16 %v1111, %v1102
        %v1373 = vpack.c.b16 %v1112, %v1103
        %v1374 = vpack.c.b16 %v1113, %v1104
        %v1375 = vpack.c.b16 %v1114, %v1105
        %v1376 = vpack.c.b16 %v1115, %v1106
        %v1377 = vpack.c.b16 %v1116, %v1107
        %v1378 = vpack.c.b16 %v1117, %v1108
        %v1379 = vpack.c.b16 %v1127, %v1118
        %v1380 = vpack.c.b16 %v1128, %v1119
        %v1381 = vpack.c.b16 %v1129, %v1120
        %v1382 = vpack.c.b16 %v1130, %v1121
        %v1383 = vpack.c.b16 %v1131, %v1122
        %v1384 = vpack.c.b16 %v1132, %v1123
        %v1385 = vpack.c.b16 %v1133, %v1124
        %v1386 = vpack.c.b16 %v1134, %v1125
        %v1387 = vpack.c.b16 %v1135, %v1126
        %v1388 = vpack.c.b16 %v1145, %v1136
        %v1389 = vpack.c.b16 %v1146, %v1137
        %v1390 = vpack.c.b16 %v1147, %v1138
        %v1391 = vpack.c.b16 %v1148, %v1139
        %v1392 = vpack.c.b16 %v1149, %v1140
        %v1393 = vpack.c.b16 %v1150, %v1141
        %v1394 = vpack.c.b16 %v1151, %v1142
        %v1395 = vpack.c.b16 %v1152, %v1143
        %v1396 = vpack.c.b16 %v1153, %v1144
        %v1397 = vpack.c.b16 %v1163, %v1154
        %v1398 = vpack.c.b16 %v1164, %v1155
        %v1399 = vpack.c.b16 %v1165, %v1156
        %v1400 = vpack.c.b16 %v1166, %v1157
        %v1401 = vpack.c.b16 %v1167, %v1158
        %v1402 = vpack.c.b16 %v1168, %v1159
        %v1403 = vpack.c.b16 %v1169, %v1160
        %v1404 = vpack.c.b16 %v1170, %v1161
        %v1405 = vpack.c.b16 %v1171, %v1162
        %v1406 = vpack.c.b16 %v1181, %v1172
        %v1407 = vpack.c.b16 %v1182, %v1173
        %v1408 = vpack.c.b16 %v1183, %v1174
        %v1409 = vpack.c.b16 %v1184, %v1175
        %v1410 = vpack.c.b16 %v1185, %v1176
        %v1411 = vpack.c.b16 %v1186, %v1177
        %v1412 = vpack.c.b16 %v1187, %v1178
        %v1413 = vpack.c.b16 %v1188, %v1179
        %v1414 = vpack.c.b16 %v1189, %v1180
        %v1415 = vpack.c.b16 %v1199, %v1190
        %v1416 = vpack.c.b16 %v1200, %v1191
        %v1417 = vpack.c.b16 %v1201, %v1192
        %v1418 = vpack.c.b16 %v1202, %v1193
        %v1419 = vpack.c.b16 %v1203, %v1194
        %v1420 = vpack.c.b16 %v1204, %v1195
        %v1421 = vpack.c.b16 %v1205, %v1196
        %v1422 = vpack.c.b16 %v1206, %v1197
        %v1423 = vpack.c.b16 %v1207, %v1198
        %v1424 = vpack.c.b16 %v1217, %v1208
        %v1425 = vpack.c.b16 %v1218, %v1209
        %v1426 = vpack.c.b16 %v1219, %v1210
        %v1427 = vpack.c.b16 %v1220, %v1211
        %v1428 = vpack.c.b16 %v1221, %v1212
        %v1429 = vpack.c.b16 %v1222, %v1213
        %v1430 = vpack.c.b16 %v1223, %v1214
        %v1431 = vpack.c.b16 %v1224, %v1215
        %v1432 = vpack.c.b16 %v1225, %v1216
        %v1784 = vunpack.c.l.b16 %v431
        %v1785 = vunpack.c.l.b16 %v432
        %v1786 = vunpack.c.l.b16 %v433
        %v1787 = vunpack.c.l.b16 %v434
        %v1788 = vunpack.c.l.b16 %v435
        %v1789 = vunpack.c.l.b16 %v436
        %v1790 = vunpack.c.l.b16 %v437
        %v1791 = vunpack.c.l.b16 %v438
        %v1792 = vunpack.c.l.b16 %v439
        %v1793 = vunpack.c.l.b16 %v440
        %v1794 = vunpack.c.l.b16 %v441
        %v1795 = vunpack.c.l.b16 %v442
        %v1796 = vunpack.c.l.b16 %v443
        %v1797 = vunpack.c.l.b16 %v444
        %v1798 = vunpack.c.l.b16 %v445
        %v1799 = vunpack.c.l.b16 %v446
        %v1800 = vunpack.c.l.b16 %v447
        %v1801 = vunpack.c.l.b16 %v448
        %v1802 = vunpack.c.l.b16 %v449
        %v1803 = vunpack.c.l.b16 %v450
        %v1804 = vunpack.c.l.b16 %v451
        %v1805 = vunpack.c.l.b16 %v452
        %v1806 = vunpack.c.l.b16 %v453
        %v1807 = vunpack.c.l.b16 %v454
        %v1808 = vunpack.c.l.b16 %v455
        %v1809 = vunpack.c.l.b16 %v456
        %v1810 = vunpack.c.l.b16 %v457
        %v1811 = vunpack.c.l.b16 %v458
        %v1812 = vunpack.c.l.b16 %v459
        %v1813 = vunpack.c.l.b16 %v460
        %v1814 = vunpack.c.l.b16 %v461
        %v1815 = vunpack.c.l.b16 %v462
        %v1816 = vunpack.c.l.b16 %v463
        %v1817 = vunpack.c.l.b16 %v464
        %v1818 = vunpack.c.l.b16 %v465
        %v1819 = vunpack.c.l.b16 %v466
        %v1820 = vunpack.c.l.b16 %v467
        %v1821 = vunpack.c.l.b16 %v468
        %v1822 = vunpack.c.l.b16 %v469
        %v1823 = vunpack.c.l.b16 %v470
        %v1824 = vunpack.c.l.b16 %v471
        %v1825 = vunpack.c.l.b16 %v472
        %v1826 = vunpack.c.l.b16 %v473
        %v1827 = vunpack.c.l.b16 %v474
        %v1828 = vunpack.c.l.b16 %v475
        %v1829 = vunpack.c.l.b16 %v476
        %v1830 = vunpack.c.l.b16 %v477
        %v1831 = vunpack.c.l.b16 %v478
        %v1832 = vunpack.c.l.b16 %v479
        %v1833 = vunpack.c.l.b16 %v480
        %v1834 = vunpack.c.l.b16 %v481
        %v1835 = vunpack.c.l.b16 %v482
        %v1836 = vunpack.c.l.b16 %v483
        %v1837 = vunpack.c.l.b16 %v484
        %v1838 = vunpack.c.l.b16 %v485
        %v1839 = vunpack.c.l.b16 %v486
        %v1840 = vunpack.c.l.b16 %v487
        %v1841 = vunpack.c.l.b16 %v488
        %v1842 = vunpack.c.l.b16 %v489
        %v1843 = vunpack.c.l.b16 %v490
        %v1844 = vunpack.c.l.b16 %v491
        %v1845 = vunpack.c.l.b16 %v492
        %v1846 = vunpack.c.l.b16 %v493
        %v1847 = vunpack.c.l.b16 %v494
        %v1848 = vunpack.c.l.b16 %v495
        %v1849 = vunpack.c.l.b16 %v496
        %v1850 = vunpack.c.l.b16 %v497
        %v1851 = vunpack.c.l.b16 %v498
        %v1852 = vunpack.c.l.b16 %v499
        %v1853 = vunpack.c.l.b16 %v500
        %v1854 = vunpack.c.l.b16 %v501
        %v1855 = vunpack.c.l.b16 %v502
        %v1856 = vunpack.c.l.b16 %v503
        %v1857 = vunpack.c.l.b16 %v504
        %v1858 = vunpack.c.l.b16 %v505
        %v1859 = vunpack.c.l.b16 %v506
        %v1860 = vunpack.c.l.b16 %v507
        %v1861 = vunpack.c.l.b16 %v508
        %v1862 = vunpack.c.l.b16 %v509
        %v1863 = vunpack.c.l.b16 %v510
        %v1864 = vunpack.c.l.b16 %v511
        %v1865 = vunpack.c.l.b16 %v512
        %v1866 = vunpack.c.l.b16 %v513
        %v1867 = vunpack.c.l.b16 %v514
        %v1868 = vunpack.c.l.b16 %v515
        %v1869 = vunpack.c.l.b16 %v516
        %v1870 = vunpack.c.l.b16 %v517
        %v1871 = vunpack.c.l.b16 %v518
        %v1872 = vunpack.c.l.b16 %v519
        %v1873 = vunpack.c.l.b16 %v520
        %v1874 = vunpack.c.l.b16 %v521
        %v1875 = vunpack.c.l.b16 %v522
        %v1876 = vunpack.c.l.b16 %v523
        %v1877 = vunpack.c.l.b16 %v524
        %v1878 = vunpack.c.l.b16 %v525
        %v1879 = vunpack.c.l.b16 %v526
        %v1880 = vunpack.c.l.b16 %v527
        %v1881 = vunpack.c.l.b16 %v528
        %v1882 = vunpack.c.l.b16 %v529
        %v1883 = vunpack.c.l.b16 %v530
        %v1884 = vunpack.c.l.b16 %v531
        %v1885 = vunpack.c.l.b16 %v532
        %v1886 = vunpack.c.l.b16 %v533
        %v1887 = vunpack.c.l.b16 %v534
        %v1888 = vunpack.c.l.b16 %v535
        %v1889 = vunpack.c.l.b16 %v536
        %v1890 = vunpack.c.l.b16 %v537
        %v1891 = vunpack.c.l.b16 %v538
        %v1892 = vunpack.c.l.b16 %v539
        %v1893 = vunpack.c.l.b16 %v540
        %v1894 = vunpack.c.l.b16 %v541
        %v1895 = vunpack.c.l.b16 %v542
        %v1896 = vunpack.c.l.b16 %v543
        %v1897 = vunpack.c.l.b16 %v544
        %v1898 = vunpack.c.l.b16 %v545
        %v1899 = vunpack.c.l.b16 %v546
        %v1900 = vunpack.c.l.b16 %v547
        %v1901 = vunpack.c.l.b16 %v548
        %v1902 = vunpack.c.l.b16 %v549
        %v1903 = vunpack.c.l.b16 %v550
        %v1904 = vunpack.c.l.b16 %v551
        %v1905 = vunpack.c.l.b16 %v552
        %v1906 = vunpack.c.l.b16 %v553
        %v1907 = vunpack.c.l.b16 %v554
        %v1908 = vunpack.c.l.b16 %v555
        %v1909 = vunpack.c.l.b16 %v556
        %v1910 = vunpack.c.l.b16 %v557
        %v1911 = vunpack.c.l.b16 %v558
        %v1912 = vunpack.c.l.b16 %v559
        %v1913 = vunpack.c.l.b16 %v560
        %v1914 = vunpack.c.l.b16 %v561
        %v1915 = vunpack.c.l.b16 %v562
        %v1916 = vunpack.c.l.b16 %v563
        %v1917 = vunpack.c.l.b16 %v564
        %v1918 = vunpack.c.l.b16 %v565
        %v1919 = vunpack.c.l.b16 %v566
        %v1920 = vunpack.c.l.b16 %v567
        %v1921 = vunpack.c.l.b16 %v568
        %v1922 = vunpack.c.l.b16 %v569
        %v1923 = vunpack.c.l.b16 %v570
        %v1924 = vunpack.c.l.b16 %v571
        %v1925 = vunpack.c.l.b16 %v572
        %v1926 = vunpack.c.l.b16 %v573
        %v1927 = vunpack.c.l.b16 %v574
        %v1928 = vpack.c.b16 %v1785, %v1784
        %v1929 = vpack.c.b16 %v1787, %v1786
        %v1930 = vpack.c.b16 %v1789, %v1788
        %v1931 = vpack.c.b16 %v1791, %v1790
        %v1932 = vpack.c.b16 %v1793, %v1792
        %v1933 = vpack.c.b16 %v1795, %v1794
        %v1934 = vpack.c.b16 %v1797, %v1796
        %v1935 = vpack.c.b16 %v1799, %v1798
        %v1936 = vpack.c.b16 %v1801, %v1800
        %v1937 = vpack.c.b16 %v1803, %v1802
        %v1938 = vpack.c.b16 %v1805, %v1804
        %v1939 = vpack.c.b16 %v1807, %v1806
        %v1940 = vpack.c.b16 %v1809, %v1808
        %v1941 = vpack.c.b16 %v1811, %v1810
        %v1942 = vpack.c.b16 %v1813, %v1812
        %v1943 = vpack.c.b16 %v1815, %v1814
        %v1944 = vpack.c.b16 %v1817, %v1816
        %v1945 = vpack.c.b16 %v1819, %v1818
        %v1946 = vpack.c.b16 %v1821, %v1820
        %v1947 = vpack.c.b16 %v1823, %v1822
        %v1948 = vpack.c.b16 %v1825, %v1824
        %v1949 = vpack.c.b16 %v1827, %v1826
        %v1950 = vpack.c.b16 %v1829, %v1828
        %v1951 = vpack.c.b16 %v1831, %v1830
        %v1952 = vpack.c.b16 %v1833, %v1832
        %v1953 = vpack.c.b16 %v1835, %v1834
        %v1954 = vpack.c.b16 %v1837, %v1836
        %v1955 = vpack.c.b16 %v1839, %v1838
        %v1956 = vpack.c.b16 %v1841, %v1840
        %v1957 = vpack.c.b16 %v1843, %v1842
        %v1958 = vpack.c.b16 %v1845, %v1844
        %v1959 = vpack.c.b16 %v1847, %v1846
        %v1960 = vpack.c.b16 %v1849, %v1848
        %v1961 = vpack.c.b16 %v1851, %v1850
        %v1962 = vpack.c.b16 %v1853, %v1852
        %v1963 = vpack.c.b16 %v1855, %v1854
        %v1964 = vpack.c.b16 %v1857, %v1856
        %v1965 = vpack.c.b16 %v1859, %v1858
        %v1966 = vpack.c.b16 %v1861, %v1860
        %v1967 = vpack.c.b16 %v1863, %v1862
        %v1968 = vpack.c.b16 %v1865, %v1864
        %v1969 = vpack.c.b16 %v1867, %v1866
        %v1970 = vpack.c.b16 %v1869, %v1868
        %v1971 = vpack.c.b16 %v1871, %v1870
        %v1972 = vpack.c.b16 %v1873, %v1872
        %v1973 = vpack.c.b16 %v1875, %v1874
        %v1974 = vpack.c.b16 %v1877, %v1876
        %v1975 = vpack.c.b16 %v1879, %v1878
        %v1976 = vpack.c.b16 %v1881, %v1880
        %v1977 = vpack.c.b16 %v1883, %v1882
        %v1978 = vpack.c.b16 %v1885, %v1884
        %v1979 = vpack.c.b16 %v1887, %v1886
        %v1980 = vpack.c.b16 %v1889, %v1888
        %v1981 = vpack.c.b16 %v1891, %v1890
        %v1982 = vpack.c.b16 %v1893, %v1892
        %v1983 = vpack.c.b16 %v1895, %v1894
        %v1984 = vpack.c.b16 %v1897, %v1896
        %v1985 = vpack.c.b16 %v1899, %v1898
        %v1986 = vpack.c.b16 %v1901, %v1900
        %v1987 = vpack.c.b16 %v1903, %v1902
        %v1988 = vpack.c.b16 %v1905, %v1904
        %v1989 = vpack.c.b16 %v1907, %v1906
        %v1990 = vpack.c.b16 %v1909, %v1908
        %v1991 = vpack.c.b16 %v1911, %v1910
        %v1992 = vpack.c.b16 %v1913, %v1912
        %v1993 = vpack.c.b16 %v1915, %v1914
        %v1994 = vpack.c.b16 %v1917, %v1916
        %v1995 = vpack.c.b16 %v1919, %v1918
        %v1996 = vpack.c.b16 %v1921, %v1920
        %v1997 = vpack.c.b16 %v1923, %v1922
        %v1998 = vpack.c.b16 %v1925, %v1924
        %v1999 = vpack.c.b16 %v1927, %v1926
        %2072 = vmatprep.subr.bf16.mxu0 0
        %2073 = vmatpush1.bf16.msra.mxu0 %v1928
        %2074 = vmatprep.subr.bf16.mxu0 0
        %2075 = vmatpush1.bf16.msra.mxu0 %v1929
        %2076 = vmatprep.subr.bf16.mxu0 0
        %2077 = vmatpush1.bf16.msra.mxu0 %v1930
        %2078 = vmatprep.subr.bf16.mxu0 0
        %2079 = vmatpush1.bf16.msra.mxu0 %v1931
        %2080 = vmatprep.subr.bf16.mxu0 0
        %2081 = vmatpush1.bf16.msra.mxu0 %v1932
        %2082 = vmatprep.subr.bf16.mxu0 0
        %2083 = vmatpush1.bf16.msra.mxu0 %v1933
        %2084 = vmatprep.subr.bf16.mxu0 0
        %2085 = vmatpush1.bf16.msra.mxu0 %v1934
        %2086 = vmatprep.subr.bf16.mxu0 0
        %2087 = vmatpush1.bf16.msra.mxu0 %v1935
        %2088 = vmatprep.subr.bf16.mxu0 0
        %2089 = vmatpush1.bf16.msra.mxu0 %v1936
        %2090 = vmatprep.subr.bf16.mxu0 0
        %2091 = vmatpush1.bf16.msra.mxu0 %v1937
        %2092 = vmatprep.subr.bf16.mxu0 0
        %2093 = vmatpush1.bf16.msra.mxu0 %v1938
        %2094 = vmatprep.subr.bf16.mxu0 0
        %2095 = vmatpush1.bf16.msra.mxu0 %v1939
        %2096 = vmatprep.subr.bf16.mxu0 0
        %2097 = vmatpush1.bf16.msra.mxu0 %v1940
        %2098 = vmatprep.subr.bf16.mxu0 0
        %2099 = vmatpush1.bf16.msra.mxu0 %v1941
        %2100 = vmatprep.subr.bf16.mxu0 0
        %2101 = vmatpush1.bf16.msra.mxu0 %v1942
        %2102 = vmatprep.subr.bf16.mxu0 0
        %2103 = vmatpush1.bf16.msra.mxu0 %v1943
        %2104 = vmatprep.mubr.bf16.mxu0 %v1227
        %2105 = vmatmul.mubr.bf16.gmra.mrb[0].mxu0 %v1226
        %v2106 = vpop.f32.mrb[0].mxu0
        %v2107 = vadd.f32 %v580, %v2106
        %v2108 = vpop.f32.mrb[0].mxu0
        %v2109 = vpop.f32.mrb[0].mxu0
        %v2110 = vadd.f32 %v580, %v2109
        %v2111 = vpop.f32.mrb[0].mxu0
        %2112 = vmatprep.mubr.bf16.mxu0 %v1236
        %2113 = vmatmul.mubr.bf16.gmra.mrb[0].mxu0 %v1235
        %v2114 = vpop.f32.mrb[0].mxu0
        %v2115 = vadd.f32 %v580, %v2114
        %v2116 = vpop.f32.mrb[0].mxu0
        %v2117 = vpop.f32.mrb[0].mxu0
        %v2118 = vadd.f32 %v580, %v2117
        %v2119 = vpop.f32.mrb[0].mxu0
        %2120 = vmatprep.mubr.bf16.mxu0 %v1245
        %2121 = vmatmul.mubr.bf16.gmra.mrb[0].mxu0 %v1244
        %v2122 = vpop.f32.mrb[0].mxu0
        %v2123 = vadd.f32 %v580, %v2122
        %v2124 = vpop.f32.mrb[0].mxu0
        %v2125 = vpop.f32.mrb[0].mxu0
        %v2126 = vadd.f32 %v580, %v2125
        %v2127 = vpop.f32.mrb[0].mxu0
        %2128 = vmatprep.mubr.bf16.mxu0 %v1254
        %2129 = vmatmul.mubr.bf16.gmra.mrb[0].mxu0 %v1253
        %v2130 = vpop.f32.mrb[0].mxu0
        %v2131 = vadd.f32 %v580, %v2130
        %v2132 = vpop.f32.mrb[0].mxu0
        %v2133 = vpop.f32.mrb[0].mxu0
        %v2134 = vadd.f32 %v580, %v2133
        %v2135 = vpop.f32.mrb[0].mxu0
        %2136 = vmatprep.mubr.bf16.mxu0 %v1263
        %2137 = vmatmul.mubr.bf16.gmra.mrb[0].mxu0 %v1262
        %v2138 = vpop.f32.mrb[0].mxu0
        %v2139 = vadd.f32 %v580, %v2138
        %v2140 = vpop.f32.mrb[0].mxu0
        %v2141 = vpop.f32.mrb[0].mxu0
        %v2142 = vadd.f32 %v580, %v2141
        %v2143 = vpop.f32.mrb[0].mxu0
        %2144 = vmatprep.mubr.bf16.mxu0 %v1272
        %2145 = vmatmul.mubr.bf16.gmra.mrb[0].mxu0 %v1271
        %v2146 = vpop.f32.mrb[0].mxu0
        %v2147 = vadd.f32 %v580, %v2146
        %v2148 = vpop.f32.mrb[0].mxu0
        %v2149 = vpop.f32.mrb[0].mxu0
        %v2150 = vadd.f32 %v580, %v2149
        %v2151 = vpop.f32.mrb[0].mxu0
        %2152 = vmatprep.mubr.bf16.mxu0 %v1281
        %2153 = vmatmul.mubr.bf16.gmra.mrb[0].mxu0 %v1280
        %v2154 = vpop.f32.mrb[0].mxu0
        %v2155 = vadd.f32 %v580, %v2154
        %v2156 = vpop.f32.mrb[0].mxu0
        %v2157 = vpop.f32.mrb[0].mxu0
        %v2158 = vadd.f32 %v580, %v2157
        %v2159 = vpop.f32.mrb[0].mxu0
        %2160 = vmatprep.mubr.bf16.mxu0 %v1290
        %2161 = vmatmul.mubr.bf16.gmra.mrb[0].mxu0 %v1289
        %v2162 = vpop.f32.mrb[0].mxu0
        %v2163 = vadd.f32 %v580, %v2162
        %v2164 = vpop.f32.mrb[0].mxu0
        %v2165 = vpop.f32.mrb[0].mxu0
        %v2166 = vadd.f32 %v580, %v2165
        %v2167 = vpop.f32.mrb[0].mxu0
        %2168 = vmatprep.mubr.bf16.mxu0 %v1299
        %2169 = vmatmul.mubr.bf16.gmra.mrb[0].mxu0 %v1298
        %v2170 = vpop.f32.mrb[0].mxu0
        %v2171 = vadd.f32 %v580, %v2170
        %v2172 = vpop.f32.mrb[0].mxu0
        %v2173 = vpop.f32.mrb[0].mxu0
        %v2174 = vadd.f32 %v580, %v2173
        %v2175 = vpop.f32.mrb[0].mxu0
        %2176 = vmatprep.mubr.bf16.mxu0 %v1308
        %2177 = vmatmul.mubr.bf16.gmra.mrb[0].mxu0 %v1307
        %v2178 = vpop.f32.mrb[0].mxu0
        %v2179 = vadd.f32 %v580, %v2178
        %v2180 = vpop.f32.mrb[0].mxu0
        %v2181 = vpop.f32.mrb[0].mxu0
        %v2182 = vadd.f32 %v580, %v2181
        %v2183 = vpop.f32.mrb[0].mxu0
        %2184 = vmatprep.mubr.bf16.mxu0 %v1317
        %2185 = vmatmul.mubr.bf16.gmra.mrb[0].mxu0 %v1316
        %v2186 = vpop.f32.mrb[0].mxu0
        %v2187 = vadd.f32 %v580, %v2186
        %v2188 = vpop.f32.mrb[0].mxu0
        %v2189 = vpop.f32.mrb[0].mxu0
        %v2190 = vadd.f32 %v580, %v2189
        %v2191 = vpop.f32.mrb[0].mxu0
        %2192 = vmatprep.mubr.bf16.mxu0 %v1326
        %2193 = vmatmul.mubr.bf16.gmra.mrb[0].mxu0 %v1325
        %v2194 = vpop.f32.mrb[0].mxu0
        %v2195 = vadd.f32 %v580, %v2194
        %v2196 = vpop.f32.mrb[0].mxu0
        %v2197 = vpop.f32.mrb[0].mxu0
        %v2198 = vadd.f32 %v580, %v2197
        %v2199 = vpop.f32.mrb[0].mxu0
        %2200 = vmatprep.mubr.bf16.mxu0 %v1335
        %2201 = vmatmul.mubr.bf16.gmra.mrb[0].mxu0 %v1334
        %v2202 = vpop.f32.mrb[0].mxu0
        %v2203 = vadd.f32 %v580, %v2202
        %v2204 = vpop.f32.mrb[0].mxu0
        %v2205 = vpop.f32.mrb[0].mxu0
        %v2206 = vadd.f32 %v580, %v2205
        %v2207 = vpop.f32.mrb[0].mxu0
        %2208 = vmatprep.mubr.bf16.mxu0 %v1344
        %2209 = vmatmul.mubr.bf16.gmra.mrb[0].mxu0 %v1343
        %v2210 = vpop.f32.mrb[0].mxu0
        %v2211 = vadd.f32 %v580, %v2210
        %v2212 = vpop.f32.mrb[0].mxu0
        %v2213 = vpop.f32.mrb[0].mxu0
        %v2214 = vadd.f32 %v580, %v2213
        %v2215 = vpop.f32.mrb[0].mxu0
        %2216 = vmatprep.mubr.bf16.mxu0 %v1353
        %2217 = vmatmul.mubr.bf16.gmra.mrb[0].mxu0 %v1352
        %v2218 = vpop.f32.mrb[0].mxu0
        %v2219 = vadd.f32 %v580, %v2218
        %v2220 = vpop.f32.mrb[0].mxu0
        %v2221 = vpop.f32.mrb[0].mxu0
        %v2222 = vadd.f32 %v580, %v2221
        %v2223 = vpop.f32.mrb[0].mxu0
        %2224 = vmatprep.mubr.bf16.mxu0 %v1362
        %2225 = vmatmul.mubr.bf16.gmra.mrb[0].mxu0 %v1361
        %v2226 = vpop.f32.mrb[0].mxu0
        %v2227 = vadd.f32 %v580, %v2226
        %v2228 = vpop.f32.mrb[0].mxu0
        %v2229 = vpop.f32.mrb[0].mxu0
        %v2230 = vadd.f32 %v580, %v2229
        %v2231 = vpop.f32.mrb[0].mxu0
        %2232 = vmatprep.mubr.bf16.mxu0 %v1371
        %2233 = vmatmul.mubr.bf16.gmra.mrb[0].mxu0 %v1370
        %v2234 = vpop.f32.mrb[0].mxu0
        %v2235 = vadd.f32 %v580, %v2234
        %v2236 = vpop.f32.mrb[0].mxu0
        %v2237 = vpop.f32.mrb[0].mxu0
        %v2238 = vadd.f32 %v580, %v2237
        %v2239 = vpop.f32.mrb[0].mxu0
        %2240 = vmatprep.mubr.bf16.mxu0 %v1380
        %2241 = vmatmul.mubr.bf16.gmra.mrb[0].mxu0 %v1379
        %v2242 = vpop.f32.mrb[0].mxu0
        %v2243 = vadd.f32 %v580, %v2242
        %v2244 = vpop.f32.mrb[0].mxu0
        %v2245 = vpop.f32.mrb[0].mxu0
        %v2246 = vadd.f32 %v580, %v2245
        %v2247 = vpop.f32.mrb[0].mxu0
        %2248 = vmatprep.mubr.bf16.mxu0 %v1389
        %2249 = vmatmul.mubr.bf16.gmra.mrb[0].mxu0 %v1388
        %v2250 = vpop.f32.mrb[0].mxu0
        %v2251 = vadd.f32 %v580, %v2250
        %v2252 = vpop.f32.mrb[0].mxu0
        %v2253 = vpop.f32.mrb[0].mxu0
        %v2254 = vadd.f32 %v580, %v2253
        %v2255 = vpop.f32.mrb[0].mxu0
        %2256 = vmatprep.mubr.bf16.mxu0 %v1398
        %2257 = vmatmul.mubr.bf16.gmra.mrb[0].mxu0 %v1397
        %v2258 = vpop.f32.mrb[0].mxu0
        %v2259 = vadd.f32 %v580, %v2258
        %v2260 = vpop.f32.mrb[0].mxu0
        %v2261 = vpop.f32.mrb[0].mxu0
        %v2262 = vadd.f32 %v580, %v2261
        %v2263 = vpop.f32.mrb[0].mxu0
        %2264 = vmatprep.mubr.bf16.mxu0 %v1407
        %2265 = vmatmul.mubr.bf16.gmra.mrb[0].mxu0 %v1406
        %v2266 = vpop.f32.mrb[0].mxu0
        %v2267 = vadd.f32 %v580, %v2266
        %v2268 = vpop.f32.mrb[0].mxu0
        %v2269 = vpop.f32.mrb[0].mxu0
        %v2270 = vadd.f32 %v580, %v2269
        %v2271 = vpop.f32.mrb[0].mxu0
        %2272 = vmatprep.mubr.bf16.mxu0 %v1416
        %2273 = vmatmul.mubr.bf16.gmra.mrb[0].mxu0 %v1415
        %v2274 = vpop.f32.mrb[0].mxu0
        %v2275 = vadd.f32 %v580, %v2274
        %v2276 = vpop.f32.mrb[0].mxu0
        %v2277 = vpop.f32.mrb[0].mxu0
        %v2278 = vadd.f32 %v580, %v2277
        %v2279 = vpop.f32.mrb[0].mxu0
        %2280 = vmatprep.mubr.bf16.mxu0 %v1425
        %2281 = vmatmul.mubr.bf16.gmra.mrb[0].mxu0 %v1424
        %v2282 = vpop.f32.mrb[0].mxu0
        %v2283 = vadd.f32 %v580, %v2282
        %v2284 = vpop.f32.mrb[0].mxu0
        %v2285 = vpop.f32.mrb[0].mxu0
        %v2286 = vadd.f32 %v580, %v2285
        %v2287 = vpop.f32.mrb[0].mxu0
        %2288 = vdwg.mxu0
        %2289 = vmatprep.subr.bf16.mxu0 0
        %2290 = vmatpush1.bf16.msra.mxu0 %v1944
        %2291 = vmatprep.subr.bf16.mxu0 0
        %2292 = vmatpush1.bf16.msra.mxu0 %v1945
        %2293 = vmatprep.subr.bf16.mxu0 0
        %2294 = vmatpush1.bf16.msra.mxu0 %v1946
        %2295 = vmatprep.subr.bf16.mxu0 0
        %2296 = vmatpush1.bf16.msra.mxu0 %v1947
        %2297 = vmatprep.subr.bf16.mxu0 0
        %2298 = vmatpush1.bf16.msra.mxu0 %v1948
        %2299 = vmatprep.subr.bf16.mxu0 0
        %2300 = vmatpush1.bf16.msra.mxu0 %v1949
        %2301 = vmatprep.subr.bf16.mxu0 0
        %2302 = vmatpush1.bf16.msra.mxu0 %v1950
        %2303 = vmatprep.subr.bf16.mxu0 0
        %2304 = vmatpush1.bf16.msra.mxu0 %v1951
        %2305 = vmatprep.subr.bf16.mxu0 0
        %2306 = vmatpush1.bf16.msra.mxu0 %v1952
        %2307 = vmatprep.subr.bf16.mxu0 0
        %2308 = vmatpush1.bf16.msra.mxu0 %v1953
        %2309 = vmatprep.subr.bf16.mxu0 0
        %2310 = vmatpush1.bf16.msra.mxu0 %v1954
        %2311 = vmatprep.subr.bf16.mxu0 0
        %2312 = vmatpush1.bf16.msra.mxu0 %v1955
        %2313 = vmatprep.subr.bf16.mxu0 0
        %2314 = vmatpush1.bf16.msra.mxu0 %v1956
        %2315 = vmatprep.subr.bf16.mxu0 0
        %2316 = vmatpush1.bf16.msra.mxu0 %v1957
        %2317 = vmatprep.subr.bf16.mxu0 0
        %2318 = vmatpush1.bf16.msra.mxu0 %v1958
        %2319 = vmatprep.subr.bf16.mxu0 0
        %2320 = vmatpush1.bf16.msra.mxu0 %v1959
        %2321 = vmatprep.mubr.bf16.mxu0 %v1229
        %2322 = vmatmul.mubr.bf16.gmra.mrb[0].mxu0 %v1228
        %v2323 = vpop.f32.mrb[0].mxu0
        %v2324 = vadd.f32 %v2107, %v2323
        %v2325 = vpop.f32.mrb[0].mxu0
        %v2326 = vpop.f32.mrb[0].mxu0
        %v2327 = vadd.f32 %v2110, %v2326
        %v2328 = vpop.f32.mrb[0].mxu0
        %2329 = vmatprep.mubr.bf16.mxu0 %v1238
        %2330 = vmatmul.mubr.bf16.gmra.mrb[0].mxu0 %v1237
        %v2331 = vpop.f32.mrb[0].mxu0
        %v2332 = vadd.f32 %v2115, %v2331
        %v2333 = vpop.f32.mrb[0].mxu0
        %v2334 = vpop.f32.mrb[0].mxu0
        %v2335 = vadd.f32 %v2118, %v2334
        %v2336 = vpop.f32.mrb[0].mxu0
        %2337 = vmatprep.mubr.bf16.mxu0 %v1247
        %2338 = vmatmul.mubr.bf16.gmra.mrb[0].mxu0 %v1246
        %v2339 = vpop.f32.mrb[0].mxu0
        %v2340 = vadd.f32 %v2123, %v2339
        %v2341 = vpop.f32.mrb[0].mxu0
        %v2342 = vpop.f32.mrb[0].mxu0
        %v2343 = vadd.f32 %v2126, %v2342
        %v2344 = vpop.f32.mrb[0].mxu0
        %2345 = vmatprep.mubr.bf16.mxu0 %v1256
        %2346 = vmatmul.mubr.bf16.gmra.mrb[0].mxu0 %v1255
        %v2347 = vpop.f32.mrb[0].mxu0
        %v2348 = vadd.f32 %v2131, %v2347
        %v2349 = vpop.f32.mrb[0].mxu0
        %v2350 = vpop.f32.mrb[0].mxu0
        %v2351 = vadd.f32 %v2134, %v2350
        %v2352 = vpop.f32.mrb[0].mxu0
        %2353 = vmatprep.mubr.bf16.mxu0 %v1265
        %2354 = vmatmul.mubr.bf16.gmra.mrb[0].mxu0 %v1264
        %v2355 = vpop.f32.mrb[0].mxu0
        %v2356 = vadd.f32 %v2139, %v2355
        %v2357 = vpop.f32.mrb[0].mxu0
        %v2358 = vpop.f32.mrb[0].mxu0
        %v2359 = vadd.f32 %v2142, %v2358
        %v2360 = vpop.f32.mrb[0].mxu0
        %2361 = vmatprep.mubr.bf16.mxu0 %v1274
        %2362 = vmatmul.mubr.bf16.gmra.mrb[0].mxu0 %v1273
        %v2363 = vpop.f32.mrb[0].mxu0
        %v2364 = vadd.f32 %v2147, %v2363
        %v2365 = vpop.f32.mrb[0].mxu0
        %v2366 = vpop.f32.mrb[0].mxu0
        %v2367 = vadd.f32 %v2150, %v2366
        %v2368 = vpop.f32.mrb[0].mxu0
        %2369 = vmatprep.mubr.bf16.mxu0 %v1283
        %2370 = vmatmul.mubr.bf16.gmra.mrb[0].mxu0 %v1282
        %v2371 = vpop.f32.mrb[0].mxu0
        %v2372 = vadd.f32 %v2155, %v2371
        %v2373 = vpop.f32.mrb[0].mxu0
        %v2374 = vpop.f32.mrb[0].mxu0
        %v2375 = vadd.f32 %v2158, %v2374
        %v2376 = vpop.f32.mrb[0].mxu0
        %2377 = vmatprep.mubr.bf16.mxu0 %v1292
        %2378 = vmatmul.mubr.bf16.gmra.mrb[0].mxu0 %v1291
        %v2379 = vpop.f32.mrb[0].mxu0
        %v2380 = vadd.f32 %v2163, %v2379
        %v2381 = vpop.f32.mrb[0].mxu0
        %v2382 = vpop.f32.mrb[0].mxu0
        %v2383 = vadd.f32 %v2166, %v2382
        %v2384 = vpop.f32.mrb[0].mxu0
        %2385 = vmatprep.mubr.bf16.mxu0 %v1301
        %2386 = vmatmul.mubr.bf16.gmra.mrb[0].mxu0 %v1300
        %v2387 = vpop.f32.mrb[0].mxu0
        %v2388 = vadd.f32 %v2171, %v2387
        %v2389 = vpop.f32.mrb[0].mxu0
        %v2390 = vpop.f32.mrb[0].mxu0
        %v2391 = vadd.f32 %v2174, %v2390
        %v2392 = vpop.f32.mrb[0].mxu0
        %2393 = vmatprep.mubr.bf16.mxu0 %v1310
        %2394 = vmatmul.mubr.bf16.gmra.mrb[0].mxu0 %v1309
        %v2395 = vpop.f32.mrb[0].mxu0
        %v2396 = vadd.f32 %v2179, %v2395
        %v2397 = vpop.f32.mrb[0].mxu0
        %v2398 = vpop.f32.mrb[0].mxu0
        %v2399 = vadd.f32 %v2182, %v2398
        %v2400 = vpop.f32.mrb[0].mxu0
        %2401 = vmatprep.mubr.bf16.mxu0 %v1319
        %2402 = vmatmul.mubr.bf16.gmra.mrb[0].mxu0 %v1318
        %v2403 = vpop.f32.mrb[0].mxu0
        %v2404 = vadd.f32 %v2187, %v2403
        %v2405 = vpop.f32.mrb[0].mxu0
        %v2406 = vpop.f32.mrb[0].mxu0
        %v2407 = vadd.f32 %v2190, %v2406
        %v2408 = vpop.f32.mrb[0].mxu0
        %2409 = vmatprep.mubr.bf16.mxu0 %v1328
        %2410 = vmatmul.mubr.bf16.gmra.mrb[0].mxu0 %v1327
        %v2411 = vpop.f32.mrb[0].mxu0
        %v2412 = vadd.f32 %v2195, %v2411
        %v2413 = vpop.f32.mrb[0].mxu0
        %v2414 = vpop.f32.mrb[0].mxu0
        %v2415 = vadd.f32 %v2198, %v2414
        %v2416 = vpop.f32.mrb[0].mxu0
        %2417 = vmatprep.mubr.bf16.mxu0 %v1337
        %2418 = vmatmul.mubr.bf16.gmra.mrb[0].mxu0 %v1336
        %v2419 = vpop.f32.mrb[0].mxu0
        %v2420 = vadd.f32 %v2203, %v2419
        %v2421 = vpop.f32.mrb[0].mxu0
        %v2422 = vpop.f32.mrb[0].mxu0
        %v2423 = vadd.f32 %v2206, %v2422
        %v2424 = vpop.f32.mrb[0].mxu0
        %2425 = vmatprep.mubr.bf16.mxu0 %v1346
        %2426 = vmatmul.mubr.bf16.gmra.mrb[0].mxu0 %v1345
        %v2427 = vpop.f32.mrb[0].mxu0
        %v2428 = vadd.f32 %v2211, %v2427
        %v2429 = vpop.f32.mrb[0].mxu0
        %v2430 = vpop.f32.mrb[0].mxu0
        %v2431 = vadd.f32 %v2214, %v2430
        %v2432 = vpop.f32.mrb[0].mxu0
        %2433 = vmatprep.mubr.bf16.mxu0 %v1355
        %2434 = vmatmul.mubr.bf16.gmra.mrb[0].mxu0 %v1354
        %v2435 = vpop.f32.mrb[0].mxu0
        %v2436 = vadd.f32 %v2219, %v2435
        %v2437 = vpop.f32.mrb[0].mxu0
        %v2438 = vpop.f32.mrb[0].mxu0
        %v2439 = vadd.f32 %v2222, %v2438
        %v2440 = vpop.f32.mrb[0].mxu0
        %2441 = vmatprep.mubr.bf16.mxu0 %v1364
        %2442 = vmatmul.mubr.bf16.gmra.mrb[0].mxu0 %v1363
        %v2443 = vpop.f32.mrb[0].mxu0
        %v2444 = vadd.f32 %v2227, %v2443
        %v2445 = vpop.f32.mrb[0].mxu0
        %v2446 = vpop.f32.mrb[0].mxu0
        %v2447 = vadd.f32 %v2230, %v2446
        %v2448 = vpop.f32.mrb[0].mxu0
        %2449 = vmatprep.mubr.bf16.mxu0 %v1373
        %2450 = vmatmul.mubr.bf16.gmra.mrb[0].mxu0 %v1372
        %v2451 = vpop.f32.mrb[0].mxu0
        %v2452 = vadd.f32 %v2235, %v2451
        %v2453 = vpop.f32.mrb[0].mxu0
        %v2454 = vpop.f32.mrb[0].mxu0
        %v2455 = vadd.f32 %v2238, %v2454
        %v2456 = vpop.f32.mrb[0].mxu0
        %2457 = vmatprep.mubr.bf16.mxu0 %v1382
        %2458 = vmatmul.mubr.bf16.gmra.mrb[0].mxu0 %v1381
        %v2459 = vpop.f32.mrb[0].mxu0
        %v2460 = vadd.f32 %v2243, %v2459
        %v2461 = vpop.f32.mrb[0].mxu0
        %v2462 = vpop.f32.mrb[0].mxu0
        %v2463 = vadd.f32 %v2246, %v2462
        %v2464 = vpop.f32.mrb[0].mxu0
        %2465 = vmatprep.mubr.bf16.mxu0 %v1391
        %2466 = vmatmul.mubr.bf16.gmra.mrb[0].mxu0 %v1390
        %v2467 = vpop.f32.mrb[0].mxu0
        %v2468 = vadd.f32 %v2251, %v2467
        %v2469 = vpop.f32.mrb[0].mxu0
        %v2470 = vpop.f32.mrb[0].mxu0
        %v2471 = vadd.f32 %v2254, %v2470
        %v2472 = vpop.f32.mrb[0].mxu0
        %2473 = vmatprep.mubr.bf16.mxu0 %v1400
        %2474 = vmatmul.mubr.bf16.gmra.mrb[0].mxu0 %v1399
        %v2475 = vpop.f32.mrb[0].mxu0
        %v2476 = vadd.f32 %v2259, %v2475
        %v2477 = vpop.f32.mrb[0].mxu0
        %v2478 = vpop.f32.mrb[0].mxu0
        %v2479 = vadd.f32 %v2262, %v2478
        %v2480 = vpop.f32.mrb[0].mxu0
        %2481 = vmatprep.mubr.bf16.mxu0 %v1409
        %2482 = vmatmul.mubr.bf16.gmra.mrb[0].mxu0 %v1408
        %v2483 = vpop.f32.mrb[0].mxu0
        %v2484 = vadd.f32 %v2267, %v2483
        %v2485 = vpop.f32.mrb[0].mxu0
        %v2486 = vpop.f32.mrb[0].mxu0
        %v2487 = vadd.f32 %v2270, %v2486
        %v2488 = vpop.f32.mrb[0].mxu0
        %2489 = vmatprep.mubr.bf16.mxu0 %v1418
        %2490 = vmatmul.mubr.bf16.gmra.mrb[0].mxu0 %v1417
        %v2491 = vpop.f32.mrb[0].mxu0
        %v2492 = vadd.f32 %v2275, %v2491
        %v2493 = vpop.f32.mrb[0].mxu0
        %v2494 = vpop.f32.mrb[0].mxu0
        %v2495 = vadd.f32 %v2278, %v2494
        %v2496 = vpop.f32.mrb[0].mxu0
        %2497 = vmatprep.mubr.bf16.mxu0 %v1427
        %2498 = vmatmul.mubr.bf16.gmra.mrb[0].mxu0 %v1426
        %v2499 = vpop.f32.mrb[0].mxu0
        %v2500 = vadd.f32 %v2283, %v2499
        %v2501 = vpop.f32.mrb[0].mxu0
        %v2502 = vpop.f32.mrb[0].mxu0
        %v2503 = vadd.f32 %v2286, %v2502
        %v2504 = vpop.f32.mrb[0].mxu0
        %2505 = vdwg.mxu0
        %2506 = vmatprep.subr.bf16.mxu0 0
        %2507 = vmatpush1.bf16.msra.mxu0 %v1960
        %2508 = vmatprep.subr.bf16.mxu0 0
        %2509 = vmatpush1.bf16.msra.mxu0 %v1961
        %2510 = vmatprep.subr.bf16.mxu0 0
        %2511 = vmatpush1.bf16.msra.mxu0 %v1962
        %2512 = vmatprep.subr.bf16.mxu0 0
        %2513 = vmatpush1.bf16.msra.mxu0 %v1963
        %2514 = vmatprep.subr.bf16.mxu0 0
        %2515 = vmatpush1.bf16.msra.mxu0 %v1964
        %2516 = vmatprep.subr.bf16.mxu0 0
        %2517 = vmatpush1.bf16.msra.mxu0 %v1965
        %2518 = vmatprep.subr.bf16.mxu0 0
        %2519 = vmatpush1.bf16.msra.mxu0 %v1966
        %2520 = vmatprep.subr.bf16.mxu0 0
        %2521 = vmatpush1.bf16.msra.mxu0 %v1967
        %2522 = vmatprep.subr.bf16.mxu0 0
        %2523 = vmatpush1.bf16.msra.mxu0 %v1968
        %2524 = vmatprep.subr.bf16.mxu0 0
        %2525 = vmatpush1.bf16.msra.mxu0 %v1969
        %2526 = vmatprep.subr.bf16.mxu0 0
        %2527 = vmatpush1.bf16.msra.mxu0 %v1970
        %2528 = vmatprep.subr.bf16.mxu0 0
        %2529 = vmatpush1.bf16.msra.mxu0 %v1971
        %2530 = vmatprep.subr.bf16.mxu0 0
        %2531 = vmatpush1.bf16.msra.mxu0 %v1972
        %2532 = vmatprep.subr.bf16.mxu0 0
        %2533 = vmatpush1.bf16.msra.mxu0 %v1973
        %2534 = vmatprep.subr.bf16.mxu0 0
        %2535 = vmatpush1.bf16.msra.mxu0 %v1974
        %2536 = vmatprep.subr.bf16.mxu0 0
        %2537 = vmatpush1.bf16.msra.mxu0 %v1975
        %2538 = vmatprep.mubr.bf16.mxu0 %v1231
        %2539 = vmatmul.mubr.bf16.gmra.mrb[0].mxu0 %v1230
        %v2540 = vpop.f32.mrb[0].mxu0
        %v2541 = vadd.f32 %v2324, %v2540
        %v2542 = vpop.f32.mrb[0].mxu0
        %v2543 = vpop.f32.mrb[0].mxu0
        %v2544 = vadd.f32 %v2327, %v2543
        %v2545 = vpop.f32.mrb[0].mxu0
        %2546 = vmatprep.mubr.bf16.mxu0 %v1240
        %2547 = vmatmul.mubr.bf16.gmra.mrb[0].mxu0 %v1239
        %v2548 = vpop.f32.mrb[0].mxu0
        %v2549 = vadd.f32 %v2332, %v2548
        %v2550 = vpop.f32.mrb[0].mxu0
        %v2551 = vpop.f32.mrb[0].mxu0
        %v2552 = vadd.f32 %v2335, %v2551
        %v2553 = vpop.f32.mrb[0].mxu0
        %2554 = vmatprep.mubr.bf16.mxu0 %v1249
        %2555 = vmatmul.mubr.bf16.gmra.mrb[0].mxu0 %v1248
        %v2556 = vpop.f32.mrb[0].mxu0
        %v2557 = vadd.f32 %v2340, %v2556
        %v2558 = vpop.f32.mrb[0].mxu0
        %v2559 = vpop.f32.mrb[0].mxu0
        %v2560 = vadd.f32 %v2343, %v2559
        %v2561 = vpop.f32.mrb[0].mxu0
        %2562 = vmatprep.mubr.bf16.mxu0 %v1258
        %2563 = vmatmul.mubr.bf16.gmra.mrb[0].mxu0 %v1257
        %v2564 = vpop.f32.mrb[0].mxu0
        %v2565 = vadd.f32 %v2348, %v2564
        %v2566 = vpop.f32.mrb[0].mxu0
        %v2567 = vpop.f32.mrb[0].mxu0
        %v2568 = vadd.f32 %v2351, %v2567
        %v2569 = vpop.f32.mrb[0].mxu0
        %2570 = vmatprep.mubr.bf16.mxu0 %v1267
        %2571 = vmatmul.mubr.bf16.gmra.mrb[0].mxu0 %v1266
        %v2572 = vpop.f32.mrb[0].mxu0
        %v2573 = vadd.f32 %v2356, %v2572
        %v2574 = vpop.f32.mrb[0].mxu0
        %v2575 = vpop.f32.mrb[0].mxu0
        %v2576 = vadd.f32 %v2359, %v2575
        %v2577 = vpop.f32.mrb[0].mxu0
        %2578 = vmatprep.mubr.bf16.mxu0 %v1276
        %2579 = vmatmul.mubr.bf16.gmra.mrb[0].mxu0 %v1275
        %v2580 = vpop.f32.mrb[0].mxu0
        %v2581 = vadd.f32 %v2364, %v2580
        %v2582 = vpop.f32.mrb[0].mxu0
        %v2583 = vpop.f32.mrb[0].mxu0
        %v2584 = vadd.f32 %v2367, %v2583
        %v2585 = vpop.f32.mrb[0].mxu0
        %2586 = vmatprep.mubr.bf16.mxu0 %v1285
        %2587 = vmatmul.mubr.bf16.gmra.mrb[0].mxu0 %v1284
        %v2588 = vpop.f32.mrb[0].mxu0
        %v2589 = vadd.f32 %v2372, %v2588
        %v2590 = vpop.f32.mrb[0].mxu0
        %v2591 = vpop.f32.mrb[0].mxu0
        %v2592 = vadd.f32 %v2375, %v2591
        %v2593 = vpop.f32.mrb[0].mxu0
        %2594 = vmatprep.mubr.bf16.mxu0 %v1294
        %2595 = vmatmul.mubr.bf16.gmra.mrb[0].mxu0 %v1293
        %v2596 = vpop.f32.mrb[0].mxu0
        %v2597 = vadd.f32 %v2380, %v2596
        %v2598 = vpop.f32.mrb[0].mxu0
        %v2599 = vpop.f32.mrb[0].mxu0
        %v2600 = vadd.f32 %v2383, %v2599
        %v2601 = vpop.f32.mrb[0].mxu0
        %2602 = vmatprep.mubr.bf16.mxu0 %v1303
        %2603 = vmatmul.mubr.bf16.gmra.mrb[0].mxu0 %v1302
        %v2604 = vpop.f32.mrb[0].mxu0
        %v2605 = vadd.f32 %v2388, %v2604
        %v2606 = vpop.f32.mrb[0].mxu0
        %v2607 = vpop.f32.mrb[0].mxu0
        %v2608 = vadd.f32 %v2391, %v2607
        %v2609 = vpop.f32.mrb[0].mxu0
        %2610 = vmatprep.mubr.bf16.mxu0 %v1312
        %2611 = vmatmul.mubr.bf16.gmra.mrb[0].mxu0 %v1311
        %v2612 = vpop.f32.mrb[0].mxu0
        %v2613 = vadd.f32 %v2396, %v2612
        %v2614 = vpop.f32.mrb[0].mxu0
        %v2615 = vpop.f32.mrb[0].mxu0
        %v2616 = vadd.f32 %v2399, %v2615
        %v2617 = vpop.f32.mrb[0].mxu0
        %2618 = vmatprep.mubr.bf16.mxu0 %v1321
        %2619 = vmatmul.mubr.bf16.gmra.mrb[0].mxu0 %v1320
        %v2620 = vpop.f32.mrb[0].mxu0
        %v2621 = vadd.f32 %v2404, %v2620
        %v2622 = vpop.f32.mrb[0].mxu0
        %v2623 = vpop.f32.mrb[0].mxu0
        %v2624 = vadd.f32 %v2407, %v2623
        %v2625 = vpop.f32.mrb[0].mxu0
        %2626 = vmatprep.mubr.bf16.mxu0 %v1330
        %2627 = vmatmul.mubr.bf16.gmra.mrb[0].mxu0 %v1329
        %v2628 = vpop.f32.mrb[0].mxu0
        %v2629 = vadd.f32 %v2412, %v2628
        %v2630 = vpop.f32.mrb[0].mxu0
        %v2631 = vpop.f32.mrb[0].mxu0
        %v2632 = vadd.f32 %v2415, %v2631
        %v2633 = vpop.f32.mrb[0].mxu0
        %2634 = vmatprep.mubr.bf16.mxu0 %v1339
        %2635 = vmatmul.mubr.bf16.gmra.mrb[0].mxu0 %v1338
        %v2636 = vpop.f32.mrb[0].mxu0
        %v2637 = vadd.f32 %v2420, %v2636
        %v2638 = vpop.f32.mrb[0].mxu0
        %v2639 = vpop.f32.mrb[0].mxu0
        %v2640 = vadd.f32 %v2423, %v2639
        %v2641 = vpop.f32.mrb[0].mxu0
        %2642 = vmatprep.mubr.bf16.mxu0 %v1348
        %2643 = vmatmul.mubr.bf16.gmra.mrb[0].mxu0 %v1347
        %v2644 = vpop.f32.mrb[0].mxu0
        %v2645 = vadd.f32 %v2428, %v2644
        %v2646 = vpop.f32.mrb[0].mxu0
        %v2647 = vpop.f32.mrb[0].mxu0
        %v2648 = vadd.f32 %v2431, %v2647
        %v2649 = vpop.f32.mrb[0].mxu0
        %2650 = vmatprep.mubr.bf16.mxu0 %v1357
        %2651 = vmatmul.mubr.bf16.gmra.mrb[0].mxu0 %v1356
        %v2652 = vpop.f32.mrb[0].mxu0
        %v2653 = vadd.f32 %v2436, %v2652
        %v2654 = vpop.f32.mrb[0].mxu0
        %v2655 = vpop.f32.mrb[0].mxu0
        %v2656 = vadd.f32 %v2439, %v2655
        %v2657 = vpop.f32.mrb[0].mxu0
        %2658 = vmatprep.mubr.bf16.mxu0 %v1366
        %2659 = vmatmul.mubr.bf16.gmra.mrb[0].mxu0 %v1365
        %v2660 = vpop.f32.mrb[0].mxu0
        %v2661 = vadd.f32 %v2444, %v2660
        %v2662 = vpop.f32.mrb[0].mxu0
        %v2663 = vpop.f32.mrb[0].mxu0
        %v2664 = vadd.f32 %v2447, %v2663
        %v2665 = vpop.f32.mrb[0].mxu0
        %2666 = vmatprep.mubr.bf16.mxu0 %v1375
        %2667 = vmatmul.mubr.bf16.gmra.mrb[0].mxu0 %v1374
        %v2668 = vpop.f32.mrb[0].mxu0
        %v2669 = vadd.f32 %v2452, %v2668
        %v2670 = vpop.f32.mrb[0].mxu0
        %v2671 = vpop.f32.mrb[0].mxu0
        %v2672 = vadd.f32 %v2455, %v2671
        %v2673 = vpop.f32.mrb[0].mxu0
        %2674 = vmatprep.mubr.bf16.mxu0 %v1384
        %2675 = vmatmul.mubr.bf16.gmra.mrb[0].mxu0 %v1383
        %v2676 = vpop.f32.mrb[0].mxu0
        %v2677 = vadd.f32 %v2460, %v2676
        %v2678 = vpop.f32.mrb[0].mxu0
        %v2679 = vpop.f32.mrb[0].mxu0
        %v2680 = vadd.f32 %v2463, %v2679
        %v2681 = vpop.f32.mrb[0].mxu0
        %2682 = vmatprep.mubr.bf16.mxu0 %v1393
        %2683 = vmatmul.mubr.bf16.gmra.mrb[0].mxu0 %v1392
        %v2684 = vpop.f32.mrb[0].mxu0
        %v2685 = vadd.f32 %v2468, %v2684
        %v2686 = vpop.f32.mrb[0].mxu0
        %v2687 = vpop.f32.mrb[0].mxu0
        %v2688 = vadd.f32 %v2471, %v2687
        %v2689 = vpop.f32.mrb[0].mxu0
        %2690 = vmatprep.mubr.bf16.mxu0 %v1402
        %2691 = vmatmul.mubr.bf16.gmra.mrb[0].mxu0 %v1401
        %v2692 = vpop.f32.mrb[0].mxu0
        %v2693 = vadd.f32 %v2476, %v2692
        %v2694 = vpop.f32.mrb[0].mxu0
        %v2695 = vpop.f32.mrb[0].mxu0
        %v2696 = vadd.f32 %v2479, %v2695
        %v2697 = vpop.f32.mrb[0].mxu0
        %2698 = vmatprep.mubr.bf16.mxu0 %v1411
        %2699 = vmatmul.mubr.bf16.gmra.mrb[0].mxu0 %v1410
        %v2700 = vpop.f32.mrb[0].mxu0
        %v2701 = vadd.f32 %v2484, %v2700
        %v2702 = vpop.f32.mrb[0].mxu0
        %v2703 = vpop.f32.mrb[0].mxu0
        %v2704 = vadd.f32 %v2487, %v2703
        %v2705 = vpop.f32.mrb[0].mxu0
        %2706 = vmatprep.mubr.bf16.mxu0 %v1420
        %2707 = vmatmul.mubr.bf16.gmra.mrb[0].mxu0 %v1419
        %v2708 = vpop.f32.mrb[0].mxu0
        %v2709 = vadd.f32 %v2492, %v2708
        %v2710 = vpop.f32.mrb[0].mxu0
        %v2711 = vpop.f32.mrb[0].mxu0
        %v2712 = vadd.f32 %v2495, %v2711
        %v2713 = vpop.f32.mrb[0].mxu0
        %2714 = vmatprep.mubr.bf16.mxu0 %v1429
        %2715 = vmatmul.mubr.bf16.gmra.mrb[0].mxu0 %v1428
        %v2716 = vpop.f32.mrb[0].mxu0
        %v2717 = vadd.f32 %v2500, %v2716
        %v2718 = vpop.f32.mrb[0].mxu0
        %v2719 = vpop.f32.mrb[0].mxu0
        %v2720 = vadd.f32 %v2503, %v2719
        %v2721 = vpop.f32.mrb[0].mxu0
        %2722 = vdwg.mxu0
        %2723 = vmatprep.subr.bf16.mxu0 0
        %2724 = vmatpush1.bf16.msra.mxu0 %v1976
        %2725 = vmatprep.subr.bf16.mxu0 0
        %2726 = vmatpush1.bf16.msra.mxu0 %v1977
        %2727 = vmatprep.subr.bf16.mxu0 0
        %2728 = vmatpush1.bf16.msra.mxu0 %v1978
        %2729 = vmatprep.subr.bf16.mxu0 0
        %2730 = vmatpush1.bf16.msra.mxu0 %v1979
        %2731 = vmatprep.subr.bf16.mxu0 0
        %2732 = vmatpush1.bf16.msra.mxu0 %v1980
        %2733 = vmatprep.subr.bf16.mxu0 0
        %2734 = vmatpush1.bf16.msra.mxu0 %v1981
        %2735 = vmatprep.subr.bf16.mxu0 0
        %2736 = vmatpush1.bf16.msra.mxu0 %v1982
        %2737 = vmatprep.subr.bf16.mxu0 0
        %2738 = vmatpush1.bf16.msra.mxu0 %v1983
        %2739 = vmatprep.subr.bf16.mxu0 0
        %2740 = vmatpush1.bf16.msra.mxu0 %v1984
        %2741 = vmatprep.subr.bf16.mxu0 0
        %2742 = vmatpush1.bf16.msra.mxu0 %v1985
        %2743 = vmatprep.subr.bf16.mxu0 0
        %2744 = vmatpush1.bf16.msra.mxu0 %v1986
        %2745 = vmatprep.subr.bf16.mxu0 0
        %2746 = vmatpush1.bf16.msra.mxu0 %v1987
        %2747 = vmatprep.subr.bf16.mxu0 0
        %2748 = vmatpush1.bf16.msra.mxu0 %v1988
        %2749 = vmatprep.subr.bf16.mxu0 0
        %2750 = vmatpush1.bf16.msra.mxu0 %v1989
        %2751 = vmatprep.subr.bf16.mxu0 0
        %2752 = vmatpush1.bf16.msra.mxu0 %v1990
        %2753 = vmatprep.subr.bf16.mxu0 0
        %2754 = vmatpush1.bf16.msra.mxu0 %v1991
        %2755 = vmatprep.mubr.bf16.mxu0 %v1233
        %2756 = vmatmul.mubr.bf16.gmra.mrb[0].mxu0 %v1232
        %v2757 = vpop.f32.mrb[0].mxu0
        %v2758 = vadd.f32 %v2541, %v2757
        %v2759 = vpop.f32.mrb[0].mxu0
        %v2760 = vpop.f32.mrb[0].mxu0
        %v2761 = vadd.f32 %v2544, %v2760
        %v2762 = vpop.f32.mrb[0].mxu0
        %2763 = vmatprep.mubr.bf16.mxu0 %v1242
        %2764 = vmatmul.mubr.bf16.gmra.mrb[0].mxu0 %v1241
        %v2765 = vpop.f32.mrb[0].mxu0
        %v2766 = vadd.f32 %v2549, %v2765
        %v2767 = vpop.f32.mrb[0].mxu0
        %v2768 = vpop.f32.mrb[0].mxu0
        %v2769 = vadd.f32 %v2552, %v2768
        %v2770 = vpop.f32.mrb[0].mxu0
        %2771 = vmatprep.mubr.bf16.mxu0 %v1251
        %2772 = vmatmul.mubr.bf16.gmra.mrb[0].mxu0 %v1250
        %v2773 = vpop.f32.mrb[0].mxu0
        %v2774 = vadd.f32 %v2557, %v2773
        %v2775 = vpop.f32.mrb[0].mxu0
        %v2776 = vpop.f32.mrb[0].mxu0
        %v2777 = vadd.f32 %v2560, %v2776
        %v2778 = vpop.f32.mrb[0].mxu0
        %2779 = vmatprep.mubr.bf16.mxu0 %v1260
        %2780 = vmatmul.mubr.bf16.gmra.mrb[0].mxu0 %v1259
        %v2781 = vpop.f32.mrb[0].mxu0
        %v2782 = vadd.f32 %v2565, %v2781
        %v2783 = vpop.f32.mrb[0].mxu0
        %v2784 = vpop.f32.mrb[0].mxu0
        %v2785 = vadd.f32 %v2568, %v2784
        %v2786 = vpop.f32.mrb[0].mxu0
        %2787 = vmatprep.mubr.bf16.mxu0 %v1269
        %2788 = vmatmul.mubr.bf16.gmra.mrb[0].mxu0 %v1268
        %v2789 = vpop.f32.mrb[0].mxu0
        %v2790 = vadd.f32 %v2573, %v2789
        %v2791 = vpop.f32.mrb[0].mxu0
        %v2792 = vpop.f32.mrb[0].mxu0
        %v2793 = vadd.f32 %v2576, %v2792
        %v2794 = vpop.f32.mrb[0].mxu0
        %2795 = vmatprep.mubr.bf16.mxu0 %v1278
        %2796 = vmatmul.mubr.bf16.gmra.mrb[0].mxu0 %v1277
        %v2797 = vpop.f32.mrb[0].mxu0
        %v2798 = vadd.f32 %v2581, %v2797
        %v2799 = vpop.f32.mrb[0].mxu0
        %v2800 = vpop.f32.mrb[0].mxu0
        %v2801 = vadd.f32 %v2584, %v2800
        %v2802 = vpop.f32.mrb[0].mxu0
        %2803 = vmatprep.mubr.bf16.mxu0 %v1287
        %2804 = vmatmul.mubr.bf16.gmra.mrb[0].mxu0 %v1286
        %v2805 = vpop.f32.mrb[0].mxu0
        %v2806 = vadd.f32 %v2589, %v2805
        %v2807 = vpop.f32.mrb[0].mxu0
        %v2808 = vpop.f32.mrb[0].mxu0
        %v2809 = vadd.f32 %v2592, %v2808
        %v2810 = vpop.f32.mrb[0].mxu0
        %2811 = vmatprep.mubr.bf16.mxu0 %v1296
        %2812 = vmatmul.mubr.bf16.gmra.mrb[0].mxu0 %v1295
        %v2813 = vpop.f32.mrb[0].mxu0
        %v2814 = vadd.f32 %v2597, %v2813
        %v2815 = vpop.f32.mrb[0].mxu0
        %v2816 = vpop.f32.mrb[0].mxu0
        %v2817 = vadd.f32 %v2600, %v2816
        %v2818 = vpop.f32.mrb[0].mxu0
        %2819 = vmatprep.mubr.bf16.mxu0 %v1305
        %2820 = vmatmul.mubr.bf16.gmra.mrb[0].mxu0 %v1304
        %v2821 = vpop.f32.mrb[0].mxu0
        %v2822 = vadd.f32 %v2605, %v2821
        %v2823 = vpop.f32.mrb[0].mxu0
        %v2824 = vpop.f32.mrb[0].mxu0
        %v2825 = vadd.f32 %v2608, %v2824
        %v2826 = vpop.f32.mrb[0].mxu0
        %2827 = vmatprep.mubr.bf16.mxu0 %v1314
        %2828 = vmatmul.mubr.bf16.gmra.mrb[0].mxu0 %v1313
        %v2829 = vpop.f32.mrb[0].mxu0
        %v2830 = vadd.f32 %v2613, %v2829
        %v2831 = vpop.f32.mrb[0].mxu0
        %v2832 = vpop.f32.mrb[0].mxu0
        %v2833 = vadd.f32 %v2616, %v2832
        %v2834 = vpop.f32.mrb[0].mxu0
        %2835 = vmatprep.mubr.bf16.mxu0 %v1323
        %2836 = vmatmul.mubr.bf16.gmra.mrb[0].mxu0 %v1322
        %v2837 = vpop.f32.mrb[0].mxu0
        %v2838 = vadd.f32 %v2621, %v2837
        %v2839 = vpop.f32.mrb[0].mxu0
        %v2840 = vpop.f32.mrb[0].mxu0
        %v2841 = vadd.f32 %v2624, %v2840
        %v2842 = vpop.f32.mrb[0].mxu0
        %2843 = vmatprep.mubr.bf16.mxu0 %v1332
        %2844 = vmatmul.mubr.bf16.gmra.mrb[0].mxu0 %v1331
        %v2845 = vpop.f32.mrb[0].mxu0
        %v2846 = vadd.f32 %v2629, %v2845
        %v2847 = vpop.f32.mrb[0].mxu0
        %v2848 = vpop.f32.mrb[0].mxu0
        %v2849 = vadd.f32 %v2632, %v2848
        %v2850 = vpop.f32.mrb[0].mxu0
        %2851 = vmatprep.mubr.bf16.mxu0 %v1341
        %2852 = vmatmul.mubr.bf16.gmra.mrb[0].mxu0 %v1340
        %v2853 = vpop.f32.mrb[0].mxu0
        %v2854 = vadd.f32 %v2637, %v2853
        %v2855 = vpop.f32.mrb[0].mxu0
        %v2856 = vpop.f32.mrb[0].mxu0
        %v2857 = vadd.f32 %v2640, %v2856
        %v2858 = vpop.f32.mrb[0].mxu0
        %2859 = vmatprep.mubr.bf16.mxu0 %v1350
        %2860 = vmatmul.mubr.bf16.gmra.mrb[0].mxu0 %v1349
        %v2861 = vpop.f32.mrb[0].mxu0
        %v2862 = vadd.f32 %v2645, %v2861
        %v2863 = vpop.f32.mrb[0].mxu0
        %v2864 = vpop.f32.mrb[0].mxu0
        %v2865 = vadd.f32 %v2648, %v2864
        %v2866 = vpop.f32.mrb[0].mxu0
        %2867 = vmatprep.mubr.bf16.mxu0 %v1359
        %2868 = vmatmul.mubr.bf16.gmra.mrb[0].mxu0 %v1358
        %v2869 = vpop.f32.mrb[0].mxu0
        %v2870 = vadd.f32 %v2653, %v2869
        %v2871 = vpop.f32.mrb[0].mxu0
        %v2872 = vpop.f32.mrb[0].mxu0
        %v2873 = vadd.f32 %v2656, %v2872
        %v2874 = vpop.f32.mrb[0].mxu0
        %2875 = vmatprep.mubr.bf16.mxu0 %v1368
        %2876 = vmatmul.mubr.bf16.gmra.mrb[0].mxu0 %v1367
        %v2877 = vpop.f32.mrb[0].mxu0
        %v2878 = vadd.f32 %v2661, %v2877
        %v2879 = vpop.f32.mrb[0].mxu0
        %v2880 = vpop.f32.mrb[0].mxu0
        %v2881 = vadd.f32 %v2664, %v2880
        %v2882 = vpop.f32.mrb[0].mxu0
        %2883 = vmatprep.mubr.bf16.mxu0 %v1377
        %2884 = vmatmul.mubr.bf16.gmra.mrb[0].mxu0 %v1376
        %v2885 = vpop.f32.mrb[0].mxu0
        %v2886 = vadd.f32 %v2669, %v2885
        %v2887 = vpop.f32.mrb[0].mxu0
        %v2888 = vpop.f32.mrb[0].mxu0
        %v2889 = vadd.f32 %v2672, %v2888
        %v2890 = vpop.f32.mrb[0].mxu0
        %2891 = vmatprep.mubr.bf16.mxu0 %v1386
        %2892 = vmatmul.mubr.bf16.gmra.mrb[0].mxu0 %v1385
        %v2893 = vpop.f32.mrb[0].mxu0
        %v2894 = vadd.f32 %v2677, %v2893
        %v2895 = vpop.f32.mrb[0].mxu0
        %v2896 = vpop.f32.mrb[0].mxu0
        %v2897 = vadd.f32 %v2680, %v2896
        %v2898 = vpop.f32.mrb[0].mxu0
        %2899 = vmatprep.mubr.bf16.mxu0 %v1395
        %2900 = vmatmul.mubr.bf16.gmra.mrb[0].mxu0 %v1394
        %v2901 = vpop.f32.mrb[0].mxu0
        %v2902 = vadd.f32 %v2685, %v2901
        %v2903 = vpop.f32.mrb[0].mxu0
        %v2904 = vpop.f32.mrb[0].mxu0
        %v2905 = vadd.f32 %v2688, %v2904
        %v2906 = vpop.f32.mrb[0].mxu0
        %2907 = vmatprep.mubr.bf16.mxu0 %v1404
        %2908 = vmatmul.mubr.bf16.gmra.mrb[0].mxu0 %v1403
        %v2909 = vpop.f32.mrb[0].mxu0
        %v2910 = vadd.f32 %v2693, %v2909
        %v2911 = vpop.f32.mrb[0].mxu0
        %v2912 = vpop.f32.mrb[0].mxu0
        %v2913 = vadd.f32 %v2696, %v2912
        %v2914 = vpop.f32.mrb[0].mxu0
        %2915 = vmatprep.mubr.bf16.mxu0 %v1413
        %2916 = vmatmul.mubr.bf16.gmra.mrb[0].mxu0 %v1412
        %v2917 = vpop.f32.mrb[0].mxu0
        %v2918 = vadd.f32 %v2701, %v2917
        %v2919 = vpop.f32.mrb[0].mxu0
        %v2920 = vpop.f32.mrb[0].mxu0
        %v2921 = vadd.f32 %v2704, %v2920
        %v2922 = vpop.f32.mrb[0].mxu0
        %2923 = vmatprep.mubr.bf16.mxu0 %v1422
        %2924 = vmatmul.mubr.bf16.gmra.mrb[0].mxu0 %v1421
        %v2925 = vpop.f32.mrb[0].mxu0
        %v2926 = vadd.f32 %v2709, %v2925
        %v2927 = vpop.f32.mrb[0].mxu0
        %v2928 = vpop.f32.mrb[0].mxu0
        %v2929 = vadd.f32 %v2712, %v2928
        %v2930 = vpop.f32.mrb[0].mxu0
        %2931 = vmatprep.mubr.bf16.mxu0 %v1431
        %2932 = vmatmul.mubr.bf16.gmra.mrb[0].mxu0 %v1430
        %v2933 = vpop.f32.mrb[0].mxu0
        %v2934 = vadd.f32 %v2717, %v2933
        %v2935 = vpop.f32.mrb[0].mxu0
        %v2936 = vpop.f32.mrb[0].mxu0
        %v2937 = vadd.f32 %v2720, %v2936
        %v2938 = vpop.f32.mrb[0].mxu0
        %2939 = vdwg.mxu0
        %2940 = vmatprep.subr.bf16.mxu0 0
        %2941 = vmatpush1.bf16.msra.mxu0 %v1992
        %2942 = vmatprep.subr.bf16.mxu0 0
        %2943 = vmatpush1.bf16.msra.mxu0 %v1993
        %2944 = vmatprep.subr.bf16.mxu0 0
        %2945 = vmatpush1.bf16.msra.mxu0 %v1994
        %2946 = vmatprep.subr.bf16.mxu0 0
        %2947 = vmatpush1.bf16.msra.mxu0 %v1995
        %2948 = vmatprep.subr.bf16.mxu0 0
        %2949 = vmatpush1.bf16.msra.mxu0 %v1996
        %2950 = vmatprep.subr.bf16.mxu0 0
        %2951 = vmatpush1.bf16.msra.mxu0 %v1997
        %2952 = vmatprep.subr.bf16.mxu0 0
        %2953 = vmatpush1.bf16.msra.mxu0 %v1998
        %2954 = vmatprep.subr.bf16.mxu0 0
        %2955 = vmatpush1.bf16.msra.mxu0 %v1999
        %2956 = vmatprep.subr.bf16.mxu0 0
        %2957 = vmatpush1.bf16.msra.mxu0 0
        %2958 = vmatprep.subr.bf16.mxu0 0
        %2959 = vmatpush1.bf16.msra.mxu0 0
        %2960 = vmatprep.subr.bf16.mxu0 0
        %2961 = vmatpush1.bf16.msra.mxu0 0
        %2962 = vmatprep.subr.bf16.mxu0 0
        %2963 = vmatpush1.bf16.msra.mxu0 0
        %2964 = vmatprep.subr.bf16.mxu0 0
        %2965 = vmatpush1.bf16.msra.mxu0 0
        %2966 = vmatprep.subr.bf16.mxu0 0
        %2967 = vmatpush1.bf16.msra.mxu0 0
        %2968 = vmatprep.subr.bf16.mxu0 0
        %2969 = vmatpush1.bf16.msra.mxu0 0
        %2970 = vmatprep.subr.bf16.mxu0 0
        %2971 = vmatpush1.bf16.msra.mxu0 0
        %2972 = vmatprep.mubr.bf16.mxu0 0
        %2973 = vmatmul.mubr.bf16.gmra.mrb[0].mxu0 %v1234
        %v2974 = vpop.f32.mrb[0].mxu0
        %v2975 = vadd.f32 %v2758, %v2974
        %v2976 = vpop.f32.mrb[0].mxu0
        %v2977 = vpop.f32.mrb[0].mxu0
        %v2978 = vadd.f32 %v2761, %v2977
        %v2979 = vpop.f32.mrb[0].mxu0
        %2980 = vmatprep.mubr.bf16.mxu0 0
        %2981 = vmatmul.mubr.bf16.gmra.mrb[0].mxu0 %v1243
        %v2982 = vpop.f32.mrb[0].mxu0
        %v2983 = vadd.f32 %v2766, %v2982
        %v2984 = vpop.f32.mrb[0].mxu0
        %v2985 = vpop.f32.mrb[0].mxu0
        %v2986 = vadd.f32 %v2769, %v2985
        %v2987 = vpop.f32.mrb[0].mxu0
        %2988 = vmatprep.mubr.bf16.mxu0 0
        %2989 = vmatmul.mubr.bf16.gmra.mrb[0].mxu0 %v1252
        %v2990 = vpop.f32.mrb[0].mxu0
        %v2991 = vadd.f32 %v2774, %v2990
        %v2992 = vpop.f32.mrb[0].mxu0
        %v2993 = vpop.f32.mrb[0].mxu0
        %v2994 = vadd.f32 %v2777, %v2993
        %v2995 = vpop.f32.mrb[0].mxu0
        %2996 = vmatprep.mubr.bf16.mxu0 0
        %2997 = vmatmul.mubr.bf16.gmra.mrb[0].mxu0 %v1261
        %v2998 = vpop.f32.mrb[0].mxu0
        %v2999 = vadd.f32 %v2782, %v2998
        %v3000 = vpop.f32.mrb[0].mxu0
        %v3001 = vpop.f32.mrb[0].mxu0
        %v3002 = vadd.f32 %v2785, %v3001
        %v3003 = vpop.f32.mrb[0].mxu0
        %3004 = vmatprep.mubr.bf16.mxu0 0
        %3005 = vmatmul.mubr.bf16.gmra.mrb[0].mxu0 %v1270
        %v3006 = vpop.f32.mrb[0].mxu0
        %v3007 = vadd.f32 %v2790, %v3006
        %v3008 = vpop.f32.mrb[0].mxu0
        %v3009 = vpop.f32.mrb[0].mxu0
        %v3010 = vadd.f32 %v2793, %v3009
        %v3011 = vpop.f32.mrb[0].mxu0
        %3012 = vmatprep.mubr.bf16.mxu0 0
        %3013 = vmatmul.mubr.bf16.gmra.mrb[0].mxu0 %v1279
        %v3014 = vpop.f32.mrb[0].mxu0
        %v3015 = vadd.f32 %v2798, %v3014
        %v3016 = vpop.f32.mrb[0].mxu0
        %v3017 = vpop.f32.mrb[0].mxu0
        %v3018 = vadd.f32 %v2801, %v3017
        %v3019 = vpop.f32.mrb[0].mxu0
        %3020 = vmatprep.mubr.bf16.mxu0 0
        %3021 = vmatmul.mubr.bf16.gmra.mrb[0].mxu0 %v1288
        %v3022 = vpop.f32.mrb[0].mxu0
        %v3023 = vadd.f32 %v2806, %v3022
        %v3024 = vpop.f32.mrb[0].mxu0
        %v3025 = vpop.f32.mrb[0].mxu0
        %v3026 = vadd.f32 %v2809, %v3025
        %v3027 = vpop.f32.mrb[0].mxu0
        %3028 = vmatprep.mubr.bf16.mxu0 0
        %3029 = vmatmul.mubr.bf16.gmra.mrb[0].mxu0 %v1297
        %v3030 = vpop.f32.mrb[0].mxu0
        %v3031 = vadd.f32 %v2814, %v3030
        %v3032 = vpop.f32.mrb[0].mxu0
        %v3033 = vpop.f32.mrb[0].mxu0
        %v3034 = vadd.f32 %v2817, %v3033
        %v3035 = vpop.f32.mrb[0].mxu0
        %3036 = vmatprep.mubr.bf16.mxu0 0
        %3037 = vmatmul.mubr.bf16.gmra.mrb[0].mxu0 %v1306
        %v3038 = vpop.f32.mrb[0].mxu0
        %v3039 = vadd.f32 %v2822, %v3038
        %v3040 = vpop.f32.mrb[0].mxu0
        %v3041 = vpop.f32.mrb[0].mxu0
        %v3042 = vadd.f32 %v2825, %v3041
        %v3043 = vpop.f32.mrb[0].mxu0
        %3044 = vmatprep.mubr.bf16.mxu0 0
        %3045 = vmatmul.mubr.bf16.gmra.mrb[0].mxu0 %v1315
        %v3046 = vpop.f32.mrb[0].mxu0
        %v3047 = vadd.f32 %v2830, %v3046
        %v3048 = vpop.f32.mrb[0].mxu0
        %v3049 = vpop.f32.mrb[0].mxu0
        %v3050 = vadd.f32 %v2833, %v3049
        %v3051 = vpop.f32.mrb[0].mxu0
        %3052 = vmatprep.mubr.bf16.mxu0 0
        %3053 = vmatmul.mubr.bf16.gmra.mrb[0].mxu0 %v1324
        %v3054 = vpop.f32.mrb[0].mxu0
        %v3055 = vadd.f32 %v2838, %v3054
        %v3056 = vpop.f32.mrb[0].mxu0
        %v3057 = vpop.f32.mrb[0].mxu0
        %v3058 = vadd.f32 %v2841, %v3057
        %v3059 = vpop.f32.mrb[0].mxu0
        %3060 = vmatprep.mubr.bf16.mxu0 0
        %3061 = vmatmul.mubr.bf16.gmra.mrb[0].mxu0 %v1333
        %v3062 = vpop.f32.mrb[0].mxu0
        %v3063 = vadd.f32 %v2846, %v3062
        %v3064 = vpop.f32.mrb[0].mxu0
        %v3065 = vpop.f32.mrb[0].mxu0
        %v3066 = vadd.f32 %v2849, %v3065
        %v3067 = vpop.f32.mrb[0].mxu0
        %3068 = vmatprep.mubr.bf16.mxu0 0
        %3069 = vmatmul.mubr.bf16.gmra.mrb[0].mxu0 %v1342
        %v3070 = vpop.f32.mrb[0].mxu0
        %v3071 = vadd.f32 %v2854, %v3070
        %v3072 = vpop.f32.mrb[0].mxu0
        %v3073 = vpop.f32.mrb[0].mxu0
        %v3074 = vadd.f32 %v2857, %v3073
        %v3075 = vpop.f32.mrb[0].mxu0
        %3076 = vmatprep.mubr.bf16.mxu0 0
        %3077 = vmatmul.mubr.bf16.gmra.mrb[0].mxu0 %v1351
        %v3078 = vpop.f32.mrb[0].mxu0
        %v3079 = vadd.f32 %v2862, %v3078
        %v3080 = vpop.f32.mrb[0].mxu0
        %v3081 = vpop.f32.mrb[0].mxu0
        %v3082 = vadd.f32 %v2865, %v3081
        %v3083 = vpop.f32.mrb[0].mxu0
        %3084 = vmatprep.mubr.bf16.mxu0 0
        %3085 = vmatmul.mubr.bf16.gmra.mrb[0].mxu0 %v1360
        %v3086 = vpop.f32.mrb[0].mxu0
        %v3087 = vadd.f32 %v2870, %v3086
        %v3088 = vpop.f32.mrb[0].mxu0
        %v3089 = vpop.f32.mrb[0].mxu0
        %v3090 = vadd.f32 %v2873, %v3089
        %v3091 = vpop.f32.mrb[0].mxu0
        %3092 = vmatprep.mubr.bf16.mxu0 0
        %3093 = vmatmul.mubr.bf16.gmra.mrb[0].mxu0 %v1369
        %v3094 = vpop.f32.mrb[0].mxu0
        %v3095 = vadd.f32 %v2878, %v3094
        %v3096 = vpop.f32.mrb[0].mxu0
        %v3097 = vpop.f32.mrb[0].mxu0
        %v3098 = vadd.f32 %v2881, %v3097
        %v3099 = vpop.f32.mrb[0].mxu0
        %3100 = vmatprep.mubr.bf16.mxu0 0
        %3101 = vmatmul.mubr.bf16.gmra.mrb[0].mxu0 %v1378
        %v3102 = vpop.f32.mrb[0].mxu0
        %v3103 = vadd.f32 %v2886, %v3102
        %v3104 = vpop.f32.mrb[0].mxu0
        %v3105 = vpop.f32.mrb[0].mxu0
        %v3106 = vadd.f32 %v2889, %v3105
        %v3107 = vpop.f32.mrb[0].mxu0
        %3108 = vmatprep.mubr.bf16.mxu0 0
        %3109 = vmatmul.mubr.bf16.gmra.mrb[0].mxu0 %v1387
        %v3110 = vpop.f32.mrb[0].mxu0
        %v3111 = vadd.f32 %v2894, %v3110
        %v3112 = vpop.f32.mrb[0].mxu0
        %v3113 = vpop.f32.mrb[0].mxu0
        %v3114 = vadd.f32 %v2897, %v3113
        %v3115 = vpop.f32.mrb[0].mxu0
        %3116 = vmatprep.mubr.bf16.mxu0 0
        %3117 = vmatmul.mubr.bf16.gmra.mrb[0].mxu0 %v1396
        %v3118 = vpop.f32.mrb[0].mxu0
        %v3119 = vadd.f32 %v2902, %v3118
        %v3120 = vpop.f32.mrb[0].mxu0
        %v3121 = vpop.f32.mrb[0].mxu0
        %v3122 = vadd.f32 %v2905, %v3121
        %v3123 = vpop.f32.mrb[0].mxu0
        %3124 = vmatprep.mubr.bf16.mxu0 0
        %3125 = vmatmul.mubr.bf16.gmra.mrb[0].mxu0 %v1405
        %v3126 = vpop.f32.mrb[0].mxu0
        %v3127 = vadd.f32 %v2910, %v3126
        %v3128 = vpop.f32.mrb[0].mxu0
        %v3129 = vpop.f32.mrb[0].mxu0
        %v3130 = vadd.f32 %v2913, %v3129
        %v3131 = vpop.f32.mrb[0].mxu0
        %3132 = vmatprep.mubr.bf16.mxu0 0
        %3133 = vmatmul.mubr.bf16.gmra.mrb[0].mxu0 %v1414
        %v3134 = vpop.f32.mrb[0].mxu0
        %v3135 = vadd.f32 %v2918, %v3134
        %v3136 = vpop.f32.mrb[0].mxu0
        %v3137 = vpop.f32.mrb[0].mxu0
        %v3138 = vadd.f32 %v2921, %v3137
        %v3139 = vpop.f32.mrb[0].mxu0
        %3140 = vmatprep.mubr.bf16.mxu0 0
        %3141 = vmatmul.mubr.bf16.gmra.mrb[0].mxu0 %v1423
        %v3142 = vpop.f32.mrb[0].mxu0
        %v3143 = vadd.f32 %v2926, %v3142
        %v3144 = vpop.f32.mrb[0].mxu0
        %v3145 = vpop.f32.mrb[0].mxu0
        %v3146 = vadd.f32 %v2929, %v3145
        %v3147 = vpop.f32.mrb[0].mxu0
        %3148 = vmatprep.mubr.bf16.mxu0 0
        %3149 = vmatmul.mubr.bf16.gmra.mrb[0].mxu0 %v1432
        %v3150 = vpop.f32.mrb[0].mxu0
        %v3151 = vadd.f32 %v2934, %v3150
        %v3152 = vpop.f32.mrb[0].mxu0
        %v3153 = vpop.f32.mrb[0].mxu0
        %v3154 = vadd.f32 %v2937, %v3153
        %v3155 = vpop.f32.mrb[0].mxu0
        %3156 = vdwg.mxu0
        %v3157 = vmax.f32 %v2975, 0.0
        %v3158 = vmax.f32 %v2978, 0.0
        %v3159 = vmax.f32 %v2983, 0.0
        %v3160 = vmax.f32 %v2986, 0.0
        %v3161 = vmax.f32 %v2991, 0.0
        %v3162 = vmax.f32 %v2994, 0.0
        %v3163 = vmax.f32 %v2999, 0.0
        %v3164 = vmax.f32 %v3002, 0.0
        %v3165 = vmax.f32 %v3007, 0.0
        %v3166 = vmax.f32 %v3010, 0.0
        %v3167 = vmax.f32 %v3015, 0.0
        %v3168 = vmax.f32 %v3018, 0.0
        %v3169 = vmax.f32 %v3023, 0.0
        %v3170 = vmax.f32 %v3026, 0.0
        %v3171 = vmax.f32 %v3031, 0.0
        %v3172 = vmax.f32 %v3034, 0.0
        %v3173 = vmax.f32 %v3039, 0.0
        %v3174 = vmax.f32 %v3042, 0.0
        %v3175 = vmax.f32 %v3047, 0.0
        %v3176 = vmax.f32 %v3050, 0.0
        %v3177 = vmax.f32 %v3055, 0.0
        %v3178 = vmax.f32 %v3058, 0.0
        %v3179 = vmax.f32 %v3063, 0.0
        %v3180 = vmax.f32 %v3066, 0.0
        %v3181 = vmax.f32 %v3071, 0.0
        %v3182 = vmax.f32 %v3074, 0.0
        %v3183 = vmax.f32 %v3079, 0.0
        %v3184 = vmax.f32 %v3082, 0.0
        %v3185 = vmax.f32 %v3087, 0.0
        %v3186 = vmax.f32 %v3090, 0.0
        %v3187 = vmax.f32 %v3095, 0.0
        %v3188 = vmax.f32 %v3098, 0.0
        %v3189 = vmax.f32 %v3103, 0.0
        %v3190 = vmax.f32 %v3106, 0.0
        %v3191 = vmax.f32 %v3111, 0.0
        %v3192 = vmax.f32 %v3114, 0.0
        %v3193 = vmax.f32 %v3119, 0.0
        %v3194 = vmax.f32 %v3122, 0.0
        %v3195 = vmax.f32 %v3127, 0.0
        %v3196 = vmax.f32 %v3130, 0.0
        %v3197 = vmax.f32 %v3135, 0.0
        %v3198 = vmax.f32 %v3138, 0.0
        %v3199 = vmax.f32 %v3143, 0.0
        %v3200 = vmax.f32 %v3146, 0.0
        %v3201 = vmax.f32 %v3151, 0.0
        %v3202 = vmax.f32 %v3154, 0.0
        %3203 = vst [vmem:[%s177] sm:$0xff] %v3157
        %3204 = vst [vmem:[%s177 + $0x8] sm:$0xff] %v3158
        %3205 = vst [vmem:[%s177 + $0x10] sm:$0xff] %v3159
        %3206 = vst [vmem:[%s177 + $0x18] sm:$0xff] %v3160
        %3207 = vst [vmem:[%s177 + $0x20] sm:$0xff] %v3161
        %3208 = vst [vmem:[%s177 + $0x28] sm:$0xff] %v3162
        %3209 = vst [vmem:[%s177 + $0x30] sm:$0xff] %v3163
        %3210 = vst [vmem:[%s177 + $0x38] sm:$0xff] %v3164
        %3211 = vst [vmem:[%s177 + $0x40] sm:$0xff] %v3165
        %3212 = vst [vmem:[%s177 + $0x48] sm:$0xff] %v3166
        %3213 = vst [vmem:[%s177 + $0x50] sm:$0xff] %v3167
        %3214 = vst [vmem:[%s177 + $0x58] sm:$0xff] %v3168
        %3215 = vst [vmem:[%s177 + $0x60] sm:$0xff] %v3169
        %3216 = vst [vmem:[%s177 + $0x68] sm:$0xff] %v3170
        %3217 = vst [vmem:[%s177 + $0x70] sm:$0xff] %v3171
        %3218 = vst [vmem:[%s177 + $0x78] sm:$0xff] %v3172
        %3219 = vst [vmem:[%s177 + $0x80] sm:$0xff] %v3173
        %3220 = vst [vmem:[%s177 + $0x88] sm:$0xff] %v3174
        %3221 = vst [vmem:[%s177 + $0x90] sm:$0xff] %v3175
        %3222 = vst [vmem:[%s177 + $0x98] sm:$0xff] %v3176
        %3223 = vst [vmem:[%s177 + $0xa0] sm:$0xff] %v3177
        %3224 = vst [vmem:[%s177 + $0xa8] sm:$0xff] %v3178
        %3225 = vst [vmem:[%s177 + $0xb0] sm:$0xff] %v3179
        %3226 = vst [vmem:[%s177 + $0xb8] sm:$0xff] %v3180
        %3227 = vst [vmem:[%s177 + $0xc0] sm:$0xff] %v3181
        %3228 = vst [vmem:[%s177 + $0xc8] sm:$0xff] %v3182
        %3229 = vst [vmem:[%s177 + $0xd0] sm:$0xff] %v3183
        %3230 = vst [vmem:[%s177 + $0xd8] sm:$0xff] %v3184
        %3231 = vst [vmem:[%s177 + $0xe0] sm:$0xff] %v3185
        %3232 = vst [vmem:[%s177 + $0xe8] sm:$0xff] %v3186
        %3233 = vst [vmem:[%s177 + $0xf0] sm:$0xff] %v3187
        %3234 = vst [vmem:[%s177 + $0xf8] sm:$0xff] %v3188
        %3235 = vst [vmem:[%s177 + $0x100] sm:$0xff] %v3189
        %3236 = vst [vmem:[%s177 + $0x108] sm:$0xff] %v3190
        %3237 = vst [vmem:[%s177 + $0x110] sm:$0xff] %v3191
        %3238 = vst [vmem:[%s177 + $0x118] sm:$0xff] %v3192
        %3239 = vst [vmem:[%s177 + $0x120] sm:$0xff] %v3193
        %3240 = vst [vmem:[%s177 + $0x128] sm:$0xff] %v3194
        %3241 = vst [vmem:[%s177 + $0x130] sm:$0xff] %v3195
        %3242 = vst [vmem:[%s177 + $0x138] sm:$0xff] %v3196
        %3243 = vst [vmem:[%s177 + $0x140] sm:$0xff] %v3197
        %3244 = vst [vmem:[%s177 + $0x148] sm:$0xff] %v3198
        %3245 = vst [vmem:[%s177 + $0x150] sm:$0xff] %v3199
        %3246 = vst [vmem:[%s177 + $0x158] sm:$0xff] %v3200
        %3247 = vst [vmem:[%s177 + $0x160] sm:$0xff] %v3201
        %3248 = vst [vmem:[%s177 + $0x168] sm:$0xff] %v3202
        %s3249 = sand.u32 %s90, 1
        %s3250 = sand.u32 %s90, 1
        %s3251 = smul.addr %s3250, 368
        %s3252 = scalar_lea.vmem [#allocation2], %s3251
        // Predicated region
        $region33: #{conv_module_forward.5} parent=31 // pred_check
          %p3253 = pneg %p100
        $region34: #{conv_module_forward.5} parent=31 // pred_check_branch
          %3255 = sbr.rel (%p3253) target = $region36
        $region35: #{conv_module_forward.5} parent=31 // pred_region
          %s3256 = smul.u32 46, %s14
          %s3257 = ssub.s32 91, %s3256
          %p3258 = scmp.lt.s32.totalorder %s3257, 46
          %s3259 = scalar_select %p3258, %s3257, 46
          %s3260 = smul.u32 128, %s3259
          %p3261 = scmp.ne.s32.totalorder 0, %s3260
          %s3262 = smul.addr %s3256, 8
          %s3263 = scalar_lea.vmem %s3, %s3262
          // Predicated region
          $region37: #{conv_module_forward.5} parent=35 // pred_check
            %p3264 = pneg %p3261
          $region38: #{conv_module_forward.5} parent=35 // pred_check_branch
            %3266 = sbr.rel (%p3264) target = $region40
          $region39: #{conv_module_forward.5} parent=35 // pred_region
            // Predicated region
            $region41: #{conv_module_forward.5} parent=39 // pred_check
              _
            $region42: #{conv_module_forward.5} parent=39 // pred_check_branch
              %3268 = sbr.rel (0) target = $region44
            $region43: #{conv_module_forward.5} parent=39 // pred_region
              // Predicated region
              $region63: #{conv_module_forward.5} parent=43 // pred_check
                _
              $region64: #{conv_module_forward.5} parent=43 // pred_check_branch
                %3408 = sbr.rel (0) target = $region66
              $region65: #{conv_module_forward.5} parent=43 // pred_region
                %s3409 = sdiv.u32.pop %s3259, 46
                %s3410 = srem.u32.pop %s3259, 46
                // While loop
                $region67: #{conv_module_forward.5} parent=65 // loop_pre_header
                  _
                $region68: #{conv_module_forward.5} parent=65 // loop_header
                  %s3412 = sphi 0, %s3414
                  %p3413 = scmp.ge.s32.totalorder %s3412, %s3409
                  %s3417 = sphi 0, %s3514
                  %s3418 = sphi %s3252, %s3517
                  %s3419 = sphi %s3263, %s3518
                $region69: #{conv_module_forward.5} parent=65 // loop_header_branch
                  %3416 = sbr.rel (%p3413) target = $region73
                $region70: #{conv_module_forward.5} parent=65 // loop_body
                  %v3420 = vld [vmem:[%s3418] sm:$0xff]
                  %3421 = vst [vmem:[%s3419] sm:$0xff] %v3420
                  %v3422 = vld [vmem:[%s3418 + $0x8] sm:$0xff]
                  %3423 = vst [vmem:[%s3419 + $0x8] sm:$0xff] %v3422
                  %v3424 = vld [vmem:[%s3418 + $0x10] sm:$0xff]
                  %3425 = vst [vmem:[%s3419 + $0x10] sm:$0xff] %v3424
                  %v3426 = vld [vmem:[%s3418 + $0x18] sm:$0xff]
                  %3427 = vst [vmem:[%s3419 + $0x18] sm:$0xff] %v3426
                  %v3428 = vld [vmem:[%s3418 + $0x20] sm:$0xff]
                  %3429 = vst [vmem:[%s3419 + $0x20] sm:$0xff] %v3428
                  %v3430 = vld [vmem:[%s3418 + $0x28] sm:$0xff]
                  %3431 = vst [vmem:[%s3419 + $0x28] sm:$0xff] %v3430
                  %v3432 = vld [vmem:[%s3418 + $0x30] sm:$0xff]
                  %3433 = vst [vmem:[%s3419 + $0x30] sm:$0xff] %v3432
                  %v3434 = vld [vmem:[%s3418 + $0x38] sm:$0xff]
                  %3435 = vst [vmem:[%s3419 + $0x38] sm:$0xff] %v3434
                  %v3436 = vld [vmem:[%s3418 + $0x40] sm:$0xff]
                  %3437 = vst [vmem:[%s3419 + $0x40] sm:$0xff] %v3436
                  %v3438 = vld [vmem:[%s3418 + $0x48] sm:$0xff]
                  %3439 = vst [vmem:[%s3419 + $0x48] sm:$0xff] %v3438
                  %v3440 = vld [vmem:[%s3418 + $0x50] sm:$0xff]
                  %3441 = vst [vmem:[%s3419 + $0x50] sm:$0xff] %v3440
                  %v3442 = vld [vmem:[%s3418 + $0x58] sm:$0xff]
                  %3443 = vst [vmem:[%s3419 + $0x58] sm:$0xff] %v3442
                  %v3444 = vld [vmem:[%s3418 + $0x60] sm:$0xff]
                  %3445 = vst [vmem:[%s3419 + $0x60] sm:$0xff] %v3444
                  %v3446 = vld [vmem:[%s3418 + $0x68] sm:$0xff]
                  %3447 = vst [vmem:[%s3419 + $0x68] sm:$0xff] %v3446
                  %v3448 = vld [vmem:[%s3418 + $0x70] sm:$0xff]
                  %3449 = vst [vmem:[%s3419 + $0x70] sm:$0xff] %v3448
                  %v3450 = vld [vmem:[%s3418 + $0x78] sm:$0xff]
                  %3451 = vst [vmem:[%s3419 + $0x78] sm:$0xff] %v3450
                  %v3452 = vld [vmem:[%s3418 + $0x80] sm:$0xff]
                  %3453 = vst [vmem:[%s3419 + $0x80] sm:$0xff] %v3452
                  %v3454 = vld [vmem:[%s3418 + $0x88] sm:$0xff]
                  %3455 = vst [vmem:[%s3419 + $0x88] sm:$0xff] %v3454
                  %v3456 = vld [vmem:[%s3418 + $0x90] sm:$0xff]
                  %3457 = vst [vmem:[%s3419 + $0x90] sm:$0xff] %v3456
                  %v3458 = vld [vmem:[%s3418 + $0x98] sm:$0xff]
                  %3459 = vst [vmem:[%s3419 + $0x98] sm:$0xff] %v3458
                  %v3460 = vld [vmem:[%s3418 + $0xa0] sm:$0xff]
                  %3461 = vst [vmem:[%s3419 + $0xa0] sm:$0xff] %v3460
                  %v3462 = vld [vmem:[%s3418 + $0xa8] sm:$0xff]
                  %3463 = vst [vmem:[%s3419 + $0xa8] sm:$0xff] %v3462
                  %v3464 = vld [vmem:[%s3418 + $0xb0] sm:$0xff]
                  %3465 = vst [vmem:[%s3419 + $0xb0] sm:$0xff] %v3464
                  %v3466 = vld [vmem:[%s3418 + $0xb8] sm:$0xff]
                  %3467 = vst [vmem:[%s3419 + $0xb8] sm:$0xff] %v3466
                  %v3468 = vld [vmem:[%s3418 + $0xc0] sm:$0xff]
                  %3469 = vst [vmem:[%s3419 + $0xc0] sm:$0xff] %v3468
                  %v3470 = vld [vmem:[%s3418 + $0xc8] sm:$0xff]
                  %3471 = vst [vmem:[%s3419 + $0xc8] sm:$0xff] %v3470
                  %v3472 = vld [vmem:[%s3418 + $0xd0] sm:$0xff]
                  %3473 = vst [vmem:[%s3419 + $0xd0] sm:$0xff] %v3472
                  %v3474 = vld [vmem:[%s3418 + $0xd8] sm:$0xff]
                  %3475 = vst [vmem:[%s3419 + $0xd8] sm:$0xff] %v3474
                  %v3476 = vld [vmem:[%s3418 + $0xe0] sm:$0xff]
                  %3477 = vst [vmem:[%s3419 + $0xe0] sm:$0xff] %v3476
                  %v3478 = vld [vmem:[%s3418 + $0xe8] sm:$0xff]
                  %3479 = vst [vmem:[%s3419 + $0xe8] sm:$0xff] %v3478
                  %v3480 = vld [vmem:[%s3418 + $0xf0] sm:$0xff]
                  %3481 = vst [vmem:[%s3419 + $0xf0] sm:$0xff] %v3480
                  %v3482 = vld [vmem:[%s3418 + $0xf8] sm:$0xff]
                  %3483 = vst [vmem:[%s3419 + $0xf8] sm:$0xff] %v3482
                  %v3484 = vld [vmem:[%s3418 + $0x100] sm:$0xff]
                  %3485 = vst [vmem:[%s3419 + $0x100] sm:$0xff] %v3484
                  %v3486 = vld [vmem:[%s3418 + $0x108] sm:$0xff]
                  %3487 = vst [vmem:[%s3419 + $0x108] sm:$0xff] %v3486
                  %v3488 = vld [vmem:[%s3418 + $0x110] sm:$0xff]
                  %3489 = vst [vmem:[%s3419 + $0x110] sm:$0xff] %v3488
                  %v3490 = vld [vmem:[%s3418 + $0x118] sm:$0xff]
                  %3491 = vst [vmem:[%s3419 + $0x118] sm:$0xff] %v3490
                  %v3492 = vld [vmem:[%s3418 + $0x120] sm:$0xff]
                  %3493 = vst [vmem:[%s3419 + $0x120] sm:$0xff] %v3492
                  %v3494 = vld [vmem:[%s3418 + $0x128] sm:$0xff]
                  %3495 = vst [vmem:[%s3419 + $0x128] sm:$0xff] %v3494
                  %v3496 = vld [vmem:[%s3418 + $0x130] sm:$0xff]
                  %3497 = vst [vmem:[%s3419 + $0x130] sm:$0xff] %v3496
                  %v3498 = vld [vmem:[%s3418 + $0x138] sm:$0xff]
                  %3499 = vst [vmem:[%s3419 + $0x138] sm:$0xff] %v3498
                  %v3500 = vld [vmem:[%s3418 + $0x140] sm:$0xff]
                  %3501 = vst [vmem:[%s3419 + $0x140] sm:$0xff] %v3500
                  %v3502 = vld [vmem:[%s3418 + $0x148] sm:$0xff]
                  %3503 = vst [vmem:[%s3419 + $0x148] sm:$0xff] %v3502
                  %v3504 = vld [vmem:[%s3418 + $0x150] sm:$0xff]
                  %3505 = vst [vmem:[%s3419 + $0x150] sm:$0xff] %v3504
                  %v3506 = vld [vmem:[%s3418 + $0x158] sm:$0xff]
                  %3507 = vst [vmem:[%s3419 + $0x158] sm:$0xff] %v3506
                  %v3508 = vld [vmem:[%s3418 + $0x160] sm:$0xff]
                  %3509 = vst [vmem:[%s3419 + $0x160] sm:$0xff] %v3508
                  %v3510 = vld [vmem:[%s3418 + $0x168] sm:$0xff]
                  %3511 = vst [vmem:[%s3419 + $0x168] sm:$0xff] %v3510
                  %s3512 = sadd.s32 1, %s3417
                  %p3513 = scmp.ge.s32.totalorder %s3512, %s3409
                  %s3514 = scalar_select %p3513, 0, %s3512
                  %s3515 = smul.u32 %s3514, 368
                  %s3516 = smul.u32 %s3514, 368
                  %s3517 = scalar_lea.vmem %s3252, %s3515 [#allocation2]
                  %s3518 = scalar_lea.vmem %s3263, %s3516
                $region71: #{conv_module_forward.5} parent=65 // loop_footer
                  %s3414 = sadd.s32 %s3412, 1
                $region72: #{conv_module_forward.5} parent=65 // loop_footer_branch
                  %3411 = sbr.rel target = $region68
                $region73: #{conv_module_forward.5} parent=65 // loop_exit
                  _
                %s3519 = sdiv.u32.pop %s3259, 46
                %s3520 = srem.u32.pop %s3259, 46
                %s3521 = smul.u32 %s3519, 46
                %s3522 = smul.u32 8, %s3521
                %s3523 = scalar_lea.vmem %s3252, %s3522 [#allocation2]
                %s3524 = smul.u32 8, %s3521
                %s3525 = scalar_lea.vmem %s3263, %s3524
                // While loop
                $region74: #{conv_module_forward.5} parent=65 // loop_pre_header
                  _
                $region75: #{conv_module_forward.5} parent=65 // loop_header
                  %s3527 = sphi 0, %s3529
                  %p3528 = scmp.ge.s32.totalorder %s3527, %s3520
                  %s3532 = sphi 0, %s3539
                  %s3533 = sphi %s3523, %s3542
                  %s3534 = sphi %s3525, %s3543
                $region76: #{conv_module_forward.5} parent=65 // loop_header_branch
                  %3531 = sbr.rel (%p3528) target = $region80
                $region77: #{conv_module_forward.5} parent=65 // loop_body
                  %v3535 = vld [vmem:[%s3533] sm:$0xff]
                  %3536 = vst [vmem:[%s3534] sm:$0xff] %v3535
                  %s3537 = sadd.s32 1, %s3532
                  %p3538 = scmp.ge.s32.totalorder %s3537, %s3520
                  %s3539 = scalar_select %p3538, 0, %s3537
                  %s3540 = smul.u32 %s3539, 8
                  %s3541 = smul.u32 %s3539, 8
                  %s3542 = scalar_lea.vmem %s3523, %s3540 [#allocation2]
                  %s3543 = scalar_lea.vmem %s3525, %s3541
                $region78: #{conv_module_forward.5} parent=65 // loop_footer
                  %s3529 = sadd.s32 %s3527, 1
                $region79: #{conv_module_forward.5} parent=65 // loop_footer_branch
                  %3526 = sbr.rel target = $region75
                $region80: #{conv_module_forward.5} parent=65 // loop_exit
                  _
              $region66: #{conv_module_forward.5} parent=43 // pred_fallthru
                _
              // Predicated region
              $region81: #{conv_module_forward.5} parent=43 // pred_check
                _
              $region82: #{conv_module_forward.5} parent=43 // pred_check_branch
                %3545 = sbr.rel target = $region84
              $region83: #{conv_module_forward.5} parent=43 // pred_region
                _
              $region84: #{conv_module_forward.5} parent=43 // pred_fallthru
                _
            $region44: #{conv_module_forward.5} parent=39 // pred_fallthru
              _
            // Predicated region
            $region45: #{conv_module_forward.5} parent=39 // pred_check
              _
            $region46: #{conv_module_forward.5} parent=39 // pred_check_branch
              %3270 = sbr.rel target = $region48
            $region47: #{conv_module_forward.5} parent=39 // pred_region
              %s3272 = sdiv.u32.pop %s3259, 46
              %s3273 = srem.u32.pop %s3259, 46
              // While loop
              $region49: #{conv_module_forward.5} parent=47 // loop_pre_header
                _
              $region50: #{conv_module_forward.5} parent=47 // loop_header
                %s3275 = sphi 0, %s3277
                %p3276 = scmp.ge.s32.totalorder %s3275, %s3272
                %s3280 = sphi 0, %s3377
                %s3281 = sphi %s3252, %s3380
                %s3282 = sphi %s3263, %s3381
              $region51: #{conv_module_forward.5} parent=47 // loop_header_branch
                %3279 = sbr.rel (%p3276) target = $region55
              $region52: #{conv_module_forward.5} parent=47 // loop_body
                %v3283 = vld [vmem:[%s3281] sm:$0xff]
                %3284 = vst [vmem:[%s3282] sm:$0xff] %v3283
                %v3285 = vld [vmem:[%s3281 + $0x8] sm:$0xff]
                %3286 = vst [vmem:[%s3282 + $0x8] sm:$0xff] %v3285
                %v3287 = vld [vmem:[%s3281 + $0x10] sm:$0xff]
                %3288 = vst [vmem:[%s3282 + $0x10] sm:$0xff] %v3287
                %v3289 = vld [vmem:[%s3281 + $0x18] sm:$0xff]
                %3290 = vst [vmem:[%s3282 + $0x18] sm:$0xff] %v3289
                %v3291 = vld [vmem:[%s3281 + $0x20] sm:$0xff]
                %3292 = vst [vmem:[%s3282 + $0x20] sm:$0xff] %v3291
                %v3293 = vld [vmem:[%s3281 + $0x28] sm:$0xff]
                %3294 = vst [vmem:[%s3282 + $0x28] sm:$0xff] %v3293
                %v3295 = vld [vmem:[%s3281 + $0x30] sm:$0xff]
                %3296 = vst [vmem:[%s3282 + $0x30] sm:$0xff] %v3295
                %v3297 = vld [vmem:[%s3281 + $0x38] sm:$0xff]
                %3298 = vst [vmem:[%s3282 + $0x38] sm:$0xff] %v3297
                %v3299 = vld [vmem:[%s3281 + $0x40] sm:$0xff]
                %3300 = vst [vmem:[%s3282 + $0x40] sm:$0xff] %v3299
                %v3301 = vld [vmem:[%s3281 + $0x48] sm:$0xff]
                %3302 = vst [vmem:[%s3282 + $0x48] sm:$0xff] %v3301
                %v3303 = vld [vmem:[%s3281 + $0x50] sm:$0xff]
                %3304 = vst [vmem:[%s3282 + $0x50] sm:$0xff] %v3303
                %v3305 = vld [vmem:[%s3281 + $0x58] sm:$0xff]
                %3306 = vst [vmem:[%s3282 + $0x58] sm:$0xff] %v3305
                %v3307 = vld [vmem:[%s3281 + $0x60] sm:$0xff]
                %3308 = vst [vmem:[%s3282 + $0x60] sm:$0xff] %v3307
                %v3309 = vld [vmem:[%s3281 + $0x68] sm:$0xff]
                %3310 = vst [vmem:[%s3282 + $0x68] sm:$0xff] %v3309
                %v3311 = vld [vmem:[%s3281 + $0x70] sm:$0xff]
                %3312 = vst [vmem:[%s3282 + $0x70] sm:$0xff] %v3311
                %v3313 = vld [vmem:[%s3281 + $0x78] sm:$0xff]
                %3314 = vst [vmem:[%s3282 + $0x78] sm:$0xff] %v3313
                %v3315 = vld [vmem:[%s3281 + $0x80] sm:$0xff]
                %3316 = vst [vmem:[%s3282 + $0x80] sm:$0xff] %v3315
                %v3317 = vld [vmem:[%s3281 + $0x88] sm:$0xff]
                %3318 = vst [vmem:[%s3282 + $0x88] sm:$0xff] %v3317
                %v3319 = vld [vmem:[%s3281 + $0x90] sm:$0xff]
                %3320 = vst [vmem:[%s3282 + $0x90] sm:$0xff] %v3319
                %v3321 = vld [vmem:[%s3281 + $0x98] sm:$0xff]
                %3322 = vst [vmem:[%s3282 + $0x98] sm:$0xff] %v3321
                %v3323 = vld [vmem:[%s3281 + $0xa0] sm:$0xff]
                %3324 = vst [vmem:[%s3282 + $0xa0] sm:$0xff] %v3323
                %v3325 = vld [vmem:[%s3281 + $0xa8] sm:$0xff]
                %3326 = vst [vmem:[%s3282 + $0xa8] sm:$0xff] %v3325
                %v3327 = vld [vmem:[%s3281 + $0xb0] sm:$0xff]
                %3328 = vst [vmem:[%s3282 + $0xb0] sm:$0xff] %v3327
                %v3329 = vld [vmem:[%s3281 + $0xb8] sm:$0xff]
                %3330 = vst [vmem:[%s3282 + $0xb8] sm:$0xff] %v3329
                %v3331 = vld [vmem:[%s3281 + $0xc0] sm:$0xff]
                %3332 = vst [vmem:[%s3282 + $0xc0] sm:$0xff] %v3331
                %v3333 = vld [vmem:[%s3281 + $0xc8] sm:$0xff]
                %3334 = vst [vmem:[%s3282 + $0xc8] sm:$0xff] %v3333
                %v3335 = vld [vmem:[%s3281 + $0xd0] sm:$0xff]
                %3336 = vst [vmem:[%s3282 + $0xd0] sm:$0xff] %v3335
                %v3337 = vld [vmem:[%s3281 + $0xd8] sm:$0xff]
                %3338 = vst [vmem:[%s3282 + $0xd8] sm:$0xff] %v3337
                %v3339 = vld [vmem:[%s3281 + $0xe0] sm:$0xff]
                %3340 = vst [vmem:[%s3282 + $0xe0] sm:$0xff] %v3339
                %v3341 = vld [vmem:[%s3281 + $0xe8] sm:$0xff]
                %3342 = vst [vmem:[%s3282 + $0xe8] sm:$0xff] %v3341
                %v3343 = vld [vmem:[%s3281 + $0xf0] sm:$0xff]
                %3344 = vst [vmem:[%s3282 + $0xf0] sm:$0xff] %v3343
                %v3345 = vld [vmem:[%s3281 + $0xf8] sm:$0xff]
                %3346 = vst [vmem:[%s3282 + $0xf8] sm:$0xff] %v3345
                %v3347 = vld [vmem:[%s3281 + $0x100] sm:$0xff]
                %3348 = vst [vmem:[%s3282 + $0x100] sm:$0xff] %v3347
                %v3349 = vld [vmem:[%s3281 + $0x108] sm:$0xff]
                %3350 = vst [vmem:[%s3282 + $0x108] sm:$0xff] %v3349
                %v3351 = vld [vmem:[%s3281 + $0x110] sm:$0xff]
                %3352 = vst [vmem:[%s3282 + $0x110] sm:$0xff] %v3351
                %v3353 = vld [vmem:[%s3281 + $0x118] sm:$0xff]
                %3354 = vst [vmem:[%s3282 + $0x118] sm:$0xff] %v3353
                %v3355 = vld [vmem:[%s3281 + $0x120] sm:$0xff]
                %3356 = vst [vmem:[%s3282 + $0x120] sm:$0xff] %v3355
                %v3357 = vld [vmem:[%s3281 + $0x128] sm:$0xff]
                %3358 = vst [vmem:[%s3282 + $0x128] sm:$0xff] %v3357
                %v3359 = vld [vmem:[%s3281 + $0x130] sm:$0xff]
                %3360 = vst [vmem:[%s3282 + $0x130] sm:$0xff] %v3359
                %v3361 = vld [vmem:[%s3281 + $0x138] sm:$0xff]
                %3362 = vst [vmem:[%s3282 + $0x138] sm:$0xff] %v3361
                %v3363 = vld [vmem:[%s3281 + $0x140] sm:$0xff]
                %3364 = vst [vmem:[%s3282 + $0x140] sm:$0xff] %v3363
                %v3365 = vld [vmem:[%s3281 + $0x148] sm:$0xff]
                %3366 = vst [vmem:[%s3282 + $0x148] sm:$0xff] %v3365
                %v3367 = vld [vmem:[%s3281 + $0x150] sm:$0xff]
                %3368 = vst [vmem:[%s3282 + $0x150] sm:$0xff] %v3367
                %v3369 = vld [vmem:[%s3281 + $0x158] sm:$0xff]
                %3370 = vst [vmem:[%s3282 + $0x158] sm:$0xff] %v3369
                %v3371 = vld [vmem:[%s3281 + $0x160] sm:$0xff]
                %3372 = vst [vmem:[%s3282 + $0x160] sm:$0xff] %v3371
                %v3373 = vld [vmem:[%s3281 + $0x168] sm:$0xff]
                %3374 = vst [vmem:[%s3282 + $0x168] sm:$0xff] %v3373
                %s3375 = sadd.s32 1, %s3280
                %p3376 = scmp.ge.s32.totalorder %s3375, %s3272
                %s3377 = scalar_select %p3376, 0, %s3375
                %s3378 = smul.u32 %s3377, 368
                %s3379 = smul.u32 %s3377, 368
                %s3380 = scalar_lea.vmem %s3252, %s3378 [#allocation2]
                %s3381 = scalar_lea.vmem %s3263, %s3379
              $region53: #{conv_module_forward.5} parent=47 // loop_footer
                %s3277 = sadd.s32 %s3275, 1
              $region54: #{conv_module_forward.5} parent=47 // loop_footer_branch
                %3274 = sbr.rel target = $region50
              $region55: #{conv_module_forward.5} parent=47 // loop_exit
                _
              %s3382 = sdiv.u32.pop %s3259, 46
              %s3383 = srem.u32.pop %s3259, 46
              %s3384 = smul.u32 %s3382, 46
              %s3385 = smul.u32 8, %s3384
              %s3386 = scalar_lea.vmem %s3252, %s3385 [#allocation2]
              %s3387 = smul.u32 8, %s3384
              %s3388 = scalar_lea.vmem %s3263, %s3387
              // While loop
              $region56: #{conv_module_forward.5} parent=47 // loop_pre_header
                _
              $region57: #{conv_module_forward.5} parent=47 // loop_header
                %s3390 = sphi 0, %s3392
                %p3391 = scmp.ge.s32.totalorder %s3390, %s3383
                %s3395 = sphi 0, %s3402
                %s3396 = sphi %s3386, %s3405
                %s3397 = sphi %s3388, %s3406
              $region58: #{conv_module_forward.5} parent=47 // loop_header_branch
                %3394 = sbr.rel (%p3391) target = $region62
              $region59: #{conv_module_forward.5} parent=47 // loop_body
                %v3398 = vld [vmem:[%s3396] sm:$0xff]
                %3399 = vst [vmem:[%s3397] sm:$0xff] %v3398
                %s3400 = sadd.s32 1, %s3395
                %p3401 = scmp.ge.s32.totalorder %s3400, %s3383
                %s3402 = scalar_select %p3401, 0, %s3400
                %s3403 = smul.u32 %s3402, 8
                %s3404 = smul.u32 %s3402, 8
                %s3405 = scalar_lea.vmem %s3386, %s3403 [#allocation2]
                %s3406 = scalar_lea.vmem %s3388, %s3404
              $region60: #{conv_module_forward.5} parent=47 // loop_footer
                %s3392 = sadd.s32 %s3390, 1
              $region61: #{conv_module_forward.5} parent=47 // loop_footer_branch
                %3389 = sbr.rel target = $region57
              $region62: #{conv_module_forward.5} parent=47 // loop_exit
                _
            $region48: #{conv_module_forward.5} parent=39 // pred_fallthru
              _
          $region40: #{conv_module_forward.5} parent=35 // pred_fallthru
            _
          %3546 = vnop
        $region36: #{conv_module_forward.5} parent=31 // pred_fallthru
          _
      $region32: #{conv_module_forward.5} parent=5 // pred_fallthru
        _
      %p3547 = scmp.le.s32.totalorder 2, %s9
      // Predicated region
      $region85: #{conv_module_forward.5} parent=5 // pred_check
        %p3548 = pneg %p3547
      $region86: #{conv_module_forward.5} parent=5 // pred_check_branch
        %3550 = sbr.rel (%p3548) target = $region88
      $region87: #{conv_module_forward.5} parent=5 // pred_region
        %s3551 = ssub.s32 %s9, 2
        // Predicated region
        $region89: #{conv_module_forward.5} parent=87 // pred_check
          %p3552 = pneg %p106
        $region90: #{conv_module_forward.5} parent=87 // pred_check_branch
          %3554 = sbr.rel (%p3552) target = $region92
        $region91: #{conv_module_forward.5} parent=87 // pred_region
          %s3555 = sand.u32 %s91, 1
          %s3556 = sand.u32 %s91, 1
          %s3557 = smul.addr %s3556, 368
          %s3558 = scalar_lea.vmem [#allocation2], %s3557
        $region92: #{conv_module_forward.5} parent=87 // pred_fallthru
          _
      $region88: #{conv_module_forward.5} parent=5 // pred_fallthru
        _
    $region6: #{conv_module_forward.5} parent=1 // loop_footer
      %s13 = sadd.s32 1, %s9
    $region7: #{conv_module_forward.5} parent=1 // loop_footer_branch
      %8 = sbr.rel target = $region3
    $region8: #{conv_module_forward.5} parent=1 // loop_exit
      _

// kernel: conv_module_forward.6
$region0: #{conv_module_forward.6}
  #allocation0 [shape = 'u32[]', space=smem, size = 0x4, offset = 0x4, fixed_abs, tag = 'smem constant byte address 0x4 - core index']
  #allocation1 [shape = 'u32[144,128]{1,0:T(1,128)}', space=vmem, size = 0x12000, scoped, tag = 'internal scratch']
  %s0 = inlined_call_operand.vmem [shape: bf16[162,1152], index: 0, kind: input, shape index: {}]
  %s1 = inlined_call_operand.vmem [shape: bf16[1152,128], index: 1, kind: input, shape index: {}]
  %s2 = inlined_call_operand.vmem [shape: f32[1,128], index: 2, kind: input, shape index: {}]
  %s3 = inlined_call_operand.vmem [shape: f32[162,128], index: 3, kind: output, shape index: {}]
  %s4 = sld [smem:[#allocation0]]
  $region93: #{conv_module_forward.6} parent=0
    _
  %s6 = ssub.s32 1, %s4
  %s7 = scalar_select 0, %s6, %s4
  $region1: #{conv_module_forward.6} parent=0
    #allocation2 [shape = 'u8[98304]{0}', space=vmem, size = 0x18000, scoped, tag = 'output window, operand 0']
    loop: start=0, step=1, limit=4
    $region2: #{conv_module_forward.6} parent=1 // loop_pre_header
      _
    $region3: #{conv_module_forward.6} parent=1 // loop_header
      %s9 = sphi 0, %s13
      %p10 = scmp.ge.s32.totalorder %s9, 4
      %s19 = sphi 0, %s21
      %s22 = sphi 0, %s19
      %s23 = sphi 0, %s22
      %s39 = sphi 0, %s23
      %s43 = sphi 0, %s43
      %s45 = sphi 0, %s43
      %s46 = sphi 0, %s45
      %s60 = sphi 0, %s46
      %s64 = sphi 0, %s64
      %s66 = sphi 0, %s64
      %s67 = sphi 0, %s66
      %s81 = sphi 0, %s67
      %s87 = sphi 0, %s89
      %s90 = sphi 0, %s87
      %s91 = sphi 0, %s90
      %s107 = sphi 0, %s91
    $region4: #{conv_module_forward.6} parent=1 // loop_header_branch
      %12 = sbr.rel (%p10) target = $region8
    $region5: #{conv_module_forward.6} parent=1 // loop_body
      %s14 = ssub.s32 %s9, 1
      %s15 = ssub.s32 %s9, 2
      %s16 = sadd.s32 %s9, 1
      %s17 = ssub.s32 %s9, %s16
      %p18 = scmp.eq.s32.totalorder %s17, 0
      %s20 = sadd.s32 %s19, 1
      %s21 = scalar_select %p18, %s19, %s20
      %p24 = pneg %p18
      %p25 = scmp.eq.s32.totalorder %s9, 1
      %p26 = por %p24, %p25
      %p27 = scmp.ne.s32.totalorder %s19, %s22
      %p28 = scmp.eq.s32.totalorder %s9, 0
      %p29 = por %p27, %p28
      %p30 = scmp.ne.s32.totalorder %s19, %s22
      %p31 = scmp.eq.s32.totalorder %s14, 1
      %p32 = por %p30, %p31
      %p33 = scmp.ne.s32.totalorder %s22, %s23
      %p34 = scmp.eq.s32.totalorder %s14, 0
      %p35 = por %p33, %p34
      %p36 = scmp.ne.s32.totalorder %s22, %s23
      %p37 = scmp.eq.s32.totalorder %s15, 1
      %p38 = por %p36, %p37
      %p40 = scmp.ne.s32.totalorder %s23, %s39
      %p41 = scmp.eq.s32.totalorder %s15, 0
      %p42 = por %p40, %p41
      %s44 = sadd.s32 %s43, 1
      %p47 = scmp.eq.s32.totalorder %s9, 1
      %p48 = scmp.ne.s32.totalorder %s43, %s45
      %p49 = scmp.eq.s32.totalorder %s9, 0
      %p50 = por %p48, %p49
      %p51 = scmp.ne.s32.totalorder %s43, %s45
      %p52 = scmp.eq.s32.totalorder %s14, 1
      %p53 = por %p51, %p52
      %p54 = scmp.ne.s32.totalorder %s45, %s46
      %p55 = scmp.eq.s32.totalorder %s14, 0
      %p56 = por %p54, %p55
      %p57 = scmp.ne.s32.totalorder %s45, %s46
      %p58 = scmp.eq.s32.totalorder %s15, 1
      %p59 = por %p57, %p58
      %p61 = scmp.ne.s32.totalorder %s46, %s60
      %p62 = scmp.eq.s32.totalorder %s15, 0
      %p63 = por %p61, %p62
      %s65 = sadd.s32 %s64, 1
      %p68 = scmp.eq.s32.totalorder %s9, 1
      %p69 = scmp.ne.s32.totalorder %s64, %s66
      %p70 = scmp.eq.s32.totalorder %s9, 0
      %p71 = por %p69, %p70
      %p72 = scmp.ne.s32.totalorder %s64, %s66
      %p73 = scmp.eq.s32.totalorder %s14, 1
      %p74 = por %p72, %p73
      %p75 = scmp.ne.s32.totalorder %s66, %s67
      %p76 = scmp.eq.s32.totalorder %s14, 0
      %p77 = por %p75, %p76
      %p78 = scmp.ne.s32.totalorder %s66, %s67
      %p79 = scmp.eq.s32.totalorder %s15, 1
      %p80 = por %p78, %p79
      %p82 = scmp.ne.s32.totalorder %s67, %s81
      %p83 = scmp.eq.s32.totalorder %s15, 0
      %p84 = por %p82, %p83
      %s85 = ssub.s32 %s9, %s16
      %p86 = scmp.eq.s32.totalorder %s85, 0
      %s88 = sadd.s32 %s87, 1
      %s89 = scalar_select %p86, %s87, %s88
      %p92 = pneg %p86
      %p93 = scmp.eq.s32.totalorder %s9, 1
      %p94 = por %p92, %p93
      %p95 = scmp.ne.s32.totalorder %s87, %s90
      %p96 = scmp.eq.s32.totalorder %s9, 0
      %p97 = por %p95, %p96
      %p98 = scmp.ne.s32.totalorder %s87, %s90
      %p99 = scmp.eq.s32.totalorder %s14, 1
      %p100 = por %p98, %p99
      %p101 = scmp.ne.s32.totalorder %s90, %s91
      %p102 = scmp.eq.s32.totalorder %s14, 0
      %p103 = por %p101, %p102
      %p104 = scmp.ne.s32.totalorder %s90, %s91
      %p105 = scmp.eq.s32.totalorder %s15, 1
      %p106 = por %p104, %p105
      %p108 = scmp.ne.s32.totalorder %s91, %s107
      %p109 = scmp.eq.s32.totalorder %s15, 0
      %p110 = por %p108, %p109
      %p111 = scmp.le.s32.totalorder 1, %s9
      %p112 = scmp.lt.s32.totalorder %s9, 3
      %p113 = pnand %p111, %p112
      %p114 = pneg %p113
      // Predicated region
      $region9: #{conv_module_forward.6} parent=5 // pred_check
        _
      $region10: #{conv_module_forward.6} parent=5 // pred_check_branch
        %116 = sbr.rel (%p113) target = $region12
      $region11: #{conv_module_forward.6} parent=5 // pred_region
        %s117 = ssub.s32 %s9, 1
        // Predicated region
        $region13: #{conv_module_forward.6} parent=11 // pred_check
          %p118 = pneg %p56
        $region14: #{conv_module_forward.6} parent=11 // pred_check_branch
          %120 = sbr.rel (%p118) target = $region16
        $region15: #{conv_module_forward.6} parent=11 // pred_region
          _
        $region16: #{conv_module_forward.6} parent=11 // pred_fallthru
          _
        // Predicated region
        $region17: #{conv_module_forward.6} parent=11 // pred_check
          %p121 = pneg %p77
        $region18: #{conv_module_forward.6} parent=11 // pred_check_branch
          %123 = sbr.rel (%p121) target = $region20
        $region19: #{conv_module_forward.6} parent=11 // pred_region
          _
        $region20: #{conv_module_forward.6} parent=11 // pred_fallthru
          _
      $region12: #{conv_module_forward.6} parent=5 // pred_fallthru
        _
      %p124 = scmp.lt.s32.totalorder %s9, 2
      // Predicated region
      $region21: #{conv_module_forward.6} parent=5 // pred_check
        %p125 = pneg %p124
      $region22: #{conv_module_forward.6} parent=5 // pred_check_branch
        %127 = sbr.rel (%p125) target = $region24
      $region23: #{conv_module_forward.6} parent=5 // pred_region
        // Predicated region
        $region25: #{conv_module_forward.6} parent=23 // pred_check
          %p128 = pneg %p29
        $region26: #{conv_module_forward.6} parent=23 // pred_check_branch
          %130 = sbr.rel (%p128) target = $region28
        $region27: #{conv_module_forward.6} parent=23 // pred_region
          %s131 = smul.u32 12, %s9
          %s132 = ssub.s32 21, %s131
          %p133 = scmp.lt.s32.totalorder %s132, 12
          %s134 = scalar_select %p133, %s132, 12
          %s135 = smul.u32 64, %s134
          %s136 = smul.u32 %s135, 9
          %p137 = scmp.lt.s32.totalorder %s131, 20
          %s138 = scalar_select %p137, %s131, 20
          %s139 = smul.addr %s138, 9
          %s140 = smul.addr %s139, 4
          %s141 = scalar_lea.vmem %s0, %s140
          %s142 = smul.u32 12, %s9
          %s143 = ssub.s32 21, %s142
          %p144 = scmp.lt.s32.totalorder %s143, 12
          %s145 = scalar_select %p144, %s143, 12
          %s146 = smul.u32 64, %s145
          %s147 = smul.u32 %s146, 9
        $region28: #{conv_module_forward.6} parent=23 // pred_fallthru
          _
      $region24: #{conv_module_forward.6} parent=5 // pred_fallthru
        _
      %p148 = scmp.le.s32.totalorder 1, %s9
      %p149 = scmp.lt.s32.totalorder %s9, 3
      %p150 = pnand %p148, %p149
      %p151 = pneg %p150
      // Predicated region
      $region29: #{conv_module_forward.6} parent=5 // pred_check
        _
      $region30: #{conv_module_forward.6} parent=5 // pred_check_branch
        %153 = sbr.rel (%p150) target = $region32
      $region31: #{conv_module_forward.6} parent=5 // pred_region
        %s154 = ssub.s32 %s9, 1
        %s155 = smul.u32 12, %s14
        %s156 = ssub.s32 21, %s155
        %p157 = scmp.lt.s32.totalorder %s156, 12
        %s158 = scalar_select %p157, %s156, 12
        %s159 = smul.u32 64, %s158
        %s160 = smul.u32 %s159, 9
        %p161 = scmp.lt.s32.totalorder %s155, 20
        %s162 = scalar_select %p161, %s155, 20
        %s163 = smul.addr %s162, 9
        %s164 = smul.addr %s163, 4
        %s165 = scalar_lea.vmem %s0, %s164
        %p166 = pneg %p35
        %p167 = pneg %p32
        %p168 = pneg %p56
        %p169 = pneg %p53
        %p170 = pneg %p77
        %p171 = pneg %p74
        %p172 = pneg %p103
        %p173 = pneg %p100
        %s174 = sand.u32 %s90, 1
        %s175 = sand.u32 %s90, 1
        %s176 = smul.addr %s175, 96
        %s177 = scalar_lea.vmem [#allocation2], %s176
        %s178 = smul.u32 12, %s14
        %s179 = ssub.s32 21, %s178
        %p180 = scmp.lt.s32.totalorder %s179, 12
        %s181 = scalar_select %p180, %s179, 12
        %s182 = smul.u32 64, %s181
        %s183 = smul.u32 %s182, 9
        %p184 = scmp.lt.s32.totalorder %s178, 20
        %s185 = scalar_select %p184, %s178, 20
        %s186 = smul.addr %s185, 9
        %s187 = smul.addr %s186, 4
        %s188 = scalar_lea.vmem %s0, %s187
        %s189 = smul.u32 12, %s14
        %s190 = ssub.s32 21, %s189
        %p191 = scmp.lt.s32.totalorder %s190, 12
        %s192 = scalar_select %p191, %s190, 12
        %s193 = smul.u32 64, %s192
        %s194 = smul.u32 %s193, 9
        %s195 = smul.u32 12, %s14
        %s196 = ssub.s32 21, %s195
        %p197 = scmp.lt.s32.totalorder %s196, 12
        %s198 = scalar_select %p197, %s196, 12
        %s199 = smul.u32 128, %s198
        %v201 = vld [vmem:[%s188] sm:$0xff]
        %v202 = vld [vmem:[%s188 + $0x8] sm:$0xff]
        %v203 = vld [vmem:[%s188 + $0x10] sm:$0xff]
        %v204 = vld [vmem:[%s188 + $0x18] sm:$0xff]
        %v205 = vld [vmem:[%s188 + $0x20] sm:$0xf]
        %v206 = vld [vmem:[%s188 + $0x24] sm:$0xff]
        %v207 = vld [vmem:[%s188 + $0x2c] sm:$0xff]
        %v208 = vld [vmem:[%s188 + $0x34] sm:$0xff]
        %v209 = vld [vmem:[%s188 + $0x3c] sm:$0xff]
        %v210 = vld [vmem:[%s188 + $0x44] sm:$0xf]
        %v211 = vld [vmem:[%s188 + $0x48] sm:$0xff]
        %v212 = vld [vmem:[%s188 + $0x50] sm:$0xff]
        %v213 = vld [vmem:[%s188 + $0x58] sm:$0xff]
        %v214 = vld [vmem:[%s188 + $0x60] sm:$0xff]
        %v215 = vld [vmem:[%s188 + $0x68] sm:$0xf]
        %v216 = vld [vmem:[%s188 + $0x6c] sm:$0xff]
        %v217 = vld [vmem:[%s188 + $0x74] sm:$0xff]
        %v218 = vld [vmem:[%s188 + $0x7c] sm:$0xff]
        %v219 = vld [vmem:[%s188 + $0x84] sm:$0xff]
        %v220 = vld [vmem:[%s188 + $0x8c] sm:$0xf]
        %v221 = vld [vmem:[%s188 + $0x90] sm:$0xff]
        %v222 = vld [vmem:[%s188 + $0x98] sm:$0xff]
        %v223 = vld [vmem:[%s188 + $0xa0] sm:$0xff]
        %v224 = vld [vmem:[%s188 + $0xa8] sm:$0xff]
        %v225 = vld [vmem:[%s188 + $0xb0] sm:$0xf]
        %v226 = vld [vmem:[%s188 + $0xb4] sm:$0xff]
        %v227 = vld [vmem:[%s188 + $0xbc] sm:$0xff]
        %v228 = vld [vmem:[%s188 + $0xc4] sm:$0xff]
        %v229 = vld [vmem:[%s188 + $0xcc] sm:$0xff]
        %v230 = vld [vmem:[%s188 + $0xd4] sm:$0xf]
        %v231 = vld [vmem:[%s188 + $0xd8] sm:$0xff]
        %v232 = vld [vmem:[%s188 + $0xe0] sm:$0xff]
        %v233 = vld [vmem:[%s188 + $0xe8] sm:$0xff]
        %v234 = vld [vmem:[%s188 + $0xf0] sm:$0xff]
        %v235 = vld [vmem:[%s188 + $0xf8] sm:$0xf]
        %v236 = vld [vmem:[%s188 + $0xfc] sm:$0xff]
        %v237 = vld [vmem:[%s188 + $0x104] sm:$0xff]
        %v238 = vld [vmem:[%s188 + $0x10c] sm:$0xff]
        %v239 = vld [vmem:[%s188 + $0x114] sm:$0xff]
        %v240 = vld [vmem:[%s188 + $0x11c] sm:$0xf]
        %v241 = vld [vmem:[%s188 + $0x120] sm:$0xff]
        %v242 = vld [vmem:[%s188 + $0x128] sm:$0xff]
        %v243 = vld [vmem:[%s188 + $0x130] sm:$0xff]
        %v244 = vld [vmem:[%s188 + $0x138] sm:$0xff]
        %v245 = vld [vmem:[%s188 + $0x140] sm:$0xf]
        %v246 = vld [vmem:[%s188 + $0x144] sm:$0xff]
        %v247 = vld [vmem:[%s188 + $0x14c] sm:$0xff]
        %v248 = vld [vmem:[%s188 + $0x154] sm:$0xff]
        %v249 = vld [vmem:[%s188 + $0x15c] sm:$0xff]
        %v250 = vld [vmem:[%s188 + $0x164] sm:$0xf]
        %v251 = vld [vmem:[%s188 + $0x168] sm:$0xff]
        %v252 = vld [vmem:[%s188 + $0x170] sm:$0xff]
        %v253 = vld [vmem:[%s188 + $0x178] sm:$0xff]
        %v254 = vld [vmem:[%s188 + $0x180] sm:$0xff]
        %v255 = vld [vmem:[%s188 + $0x188] sm:$0xf]
        %v256 = vld [vmem:[%s188 + $0x18c] sm:$0xff]
        %v257 = vld [vmem:[%s188 + $0x194] sm:$0xff]
        %v258 = vld [vmem:[%s188 + $0x19c] sm:$0xff]
        %v259 = vld [vmem:[%s188 + $0x1a4] sm:$0xff]
        %v260 = vld [vmem:[%s188 + $0x1ac] sm:$0xf]
        %v261 = vld [vmem:[%s1] sm:$0xf]
        %v262 = vld [vmem:[%s1 + $0x4] sm:$0xf]
        %v263 = vld [vmem:[%s1 + $0x8] sm:$0xf]
        %v264 = vld [vmem:[%s1 + $0xc] sm:$0xf]
        %v265 = vld [vmem:[%s1 + $0x10] sm:$0xf]
        %v266 = vld [vmem:[%s1 + $0x14] sm:$0xf]
        %v267 = vld [vmem:[%s1 + $0x18] sm:$0xf]
        %v268 = vld [vmem:[%s1 + $0x1c] sm:$0xf]
        %v269 = vld [vmem:[%s1 + $0x20] sm:$0xf]
        %v270 = vld [vmem:[%s1 + $0x24] sm:$0xf]
        %v271 = vld [vmem:[%s1 + $0x28] sm:$0xf]
        %v272 = vld [vmem:[%s1 + $0x2c] sm:$0xf]
        %v273 = vld [vmem:[%s1 + $0x30] sm:$0xf]
        %v274 = vld [vmem:[%s1 + $0x34] sm:$0xf]
        %v275 = vld [vmem:[%s1 + $0x38] sm:$0xf]
        %v276 = vld [vmem:[%s1 + $0x3c] sm:$0xf]
        %v277 = vld [vmem:[%s1 + $0x40] sm:$0xf]
        %v278 = vld [vmem:[%s1 + $0x44] sm:$0xf]
        %v279 = vld [vmem:[%s1 + $0x48] sm:$0xf]
        %v280 = vld [vmem:[%s1 + $0x4c] sm:$0xf]
        %v281 = vld [vmem:[%s1 + $0x50] sm:$0xf]
        %v282 = vld [vmem:[%s1 + $0x54] sm:$0xf]
        %v283 = vld [vmem:[%s1 + $0x58] sm:$0xf]
        %v284 = vld [vmem:[%s1 + $0x5c] sm:$0xf]
        %v285 = vld [vmem:[%s1 + $0x60] sm:$0xf]
        %v286 = vld [vmem:[%s1 + $0x64] sm:$0xf]
        %v287 = vld [vmem:[%s1 + $0x68] sm:$0xf]
        %v288 = vld [vmem:[%s1 + $0x6c] sm:$0xf]
        %v289 = vld [vmem:[%s1 + $0x70] sm:$0xf]
        %v290 = vld [vmem:[%s1 + $0x74] sm:$0xf]
        %v291 = vld [vmem:[%s1 + $0x78] sm:$0xf]
        %v292 = vld [vmem:[%s1 + $0x7c] sm:$0xf]
        %v293 = vld [vmem:[%s1 + $0x80] sm:$0xf]
        %v294 = vld [vmem:[%s1 + $0x84] sm:$0xf]
        %v295 = vld [vmem:[%s1 + $0x88] sm:$0xf]
        %v296 = vld [vmem:[%s1 + $0x8c] sm:$0xf]
        %v297 = vld [vmem:[%s1 + $0x90] sm:$0xf]
        %v298 = vld [vmem:[%s1 + $0x94] sm:$0xf]
        %v299 = vld [vmem:[%s1 + $0x98] sm:$0xf]
        %v300 = vld [vmem:[%s1 + $0x9c] sm:$0xf]
        %v301 = vld [vmem:[%s1 + $0xa0] sm:$0xf]
        %v302 = vld [vmem:[%s1 + $0xa4] sm:$0xf]
        %v303 = vld [vmem:[%s1 + $0xa8] sm:$0xf]
        %v304 = vld [vmem:[%s1 + $0xac] sm:$0xf]
        %v305 = vld [vmem:[%s1 + $0xb0] sm:$0xf]
        %v306 = vld [vmem:[%s1 + $0xb4] sm:$0xf]
        %v307 = vld [vmem:[%s1 + $0xb8] sm:$0xf]
        %v308 = vld [vmem:[%s1 + $0xbc] sm:$0xf]
        %v309 = vld [vmem:[%s1 + $0xc0] sm:$0xf]
        %v310 = vld [vmem:[%s1 + $0xc4] sm:$0xf]
        %v311 = vld [vmem:[%s1 + $0xc8] sm:$0xf]
        %v312 = vld [vmem:[%s1 + $0xcc] sm:$0xf]
        %v313 = vld [vmem:[%s1 + $0xd0] sm:$0xf]
        %v314 = vld [vmem:[%s1 + $0xd4] sm:$0xf]
        %v315 = vld [vmem:[%s1 + $0xd8] sm:$0xf]
        %v316 = vld [vmem:[%s1 + $0xdc] sm:$0xf]
        %v317 = vld [vmem:[%s1 + $0xe0] sm:$0xf]
        %v318 = vld [vmem:[%s1 + $0xe4] sm:$0xf]
        %v319 = vld [vmem:[%s1 + $0xe8] sm:$0xf]
        %v320 = vld [vmem:[%s1 + $0xec] sm:$0xf]
        %v321 = vld [vmem:[%s1 + $0xf0] sm:$0xf]
        %v322 = vld [vmem:[%s1 + $0xf4] sm:$0xf]
        %v323 = vld [vmem:[%s1 + $0xf8] sm:$0xf]
        %v324 = vld [vmem:[%s1 + $0xfc] sm:$0xf]
        %v325 = vld [vmem:[%s1 + $0x100] sm:$0xf]
        %v326 = vld [vmem:[%s1 + $0x104] sm:$0xf]
        %v327 = vld [vmem:[%s1 + $0x108] sm:$0xf]
        %v328 = vld [vmem:[%s1 + $0x10c] sm:$0xf]
        %v329 = vld [vmem:[%s1 + $0x110] sm:$0xf]
        %v330 = vld [vmem:[%s1 + $0x114] sm:$0xf]
        %v331 = vld [vmem:[%s1 + $0x118] sm:$0xf]
        %v332 = vld [vmem:[%s1 + $0x11c] sm:$0xf]
        %v333 = vld [vmem:[%s1 + $0x120] sm:$0xf]
        %v334 = vld [vmem:[%s1 + $0x124] sm:$0xf]
        %v335 = vld [vmem:[%s1 + $0x128] sm:$0xf]
        %v336 = vld [vmem:[%s1 + $0x12c] sm:$0xf]
        %v337 = vld [vmem:[%s1 + $0x130] sm:$0xf]
        %v338 = vld [vmem:[%s1 + $0x134] sm:$0xf]
        %v339 = vld [vmem:[%s1 + $0x138] sm:$0xf]
        %v340 = vld [vmem:[%s1 + $0x13c] sm:$0xf]
        %v341 = vld [vmem:[%s1 + $0x140] sm:$0xf]
        %v342 = vld [vmem:[%s1 + $0x144] sm:$0xf]
        %v343 = vld [vmem:[%s1 + $0x148] sm:$0xf]
        %v344 = vld [vmem:[%s1 + $0x14c] sm:$0xf]
        %v345 = vld [vmem:[%s1 + $0x150] sm:$0xf]
        %v346 = vld [vmem:[%s1 + $0x154] sm:$0xf]
        %v347 = vld [vmem:[%s1 + $0x158] sm:$0xf]
        %v348 = vld [vmem:[%s1 + $0x15c] sm:$0xf]
        %v349 = vld [vmem:[%s1 + $0x160] sm:$0xf]
        %v350 = vld [vmem:[%s1 + $0x164] sm:$0xf]
        %v351 = vld [vmem:[%s1 + $0x168] sm:$0xf]
        %v352 = vld [vmem:[%s1 + $0x16c] sm:$0xf]
        %v353 = vld [vmem:[%s1 + $0x170] sm:$0xf]
        %v354 = vld [vmem:[%s1 + $0x174] sm:$0xf]
        %v355 = vld [vmem:[%s1 + $0x178] sm:$0xf]
        %v356 = vld [vmem:[%s1 + $0x17c] sm:$0xf]
        %v357 = vld [vmem:[%s1 + $0x180] sm:$0xf]
        %v358 = vld [vmem:[%s1 + $0x184] sm:$0xf]
        %v359 = vld [vmem:[%s1 + $0x188] sm:$0xf]
        %v360 = vld [vmem:[%s1 + $0x18c] sm:$0xf]
        %v361 = vld [vmem:[%s1 + $0x190] sm:$0xf]
        %v362 = vld [vmem:[%s1 + $0x194] sm:$0xf]
        %v363 = vld [vmem:[%s1 + $0x198] sm:$0xf]
        %v364 = vld [vmem:[%s1 + $0x19c] sm:$0xf]
        %v365 = vld [vmem:[%s1 + $0x1a0] sm:$0xf]
        %v366 = vld [vmem:[%s1 + $0x1a4] sm:$0xf]
        %v367 = vld [vmem:[%s1 + $0x1a8] sm:$0xf]
        %v368 = vld [vmem:[%s1 + $0x1ac] sm:$0xf]
        %v369 = vld [vmem:[%s1 + $0x1b0] sm:$0xf]
        %v370 = vld [vmem:[%s1 + $0x1b4] sm:$0xf]
        %v371 = vld [vmem:[%s1 + $0x1b8] sm:$0xf]
        %v372 = vld [vmem:[%s1 + $0x1bc] sm:$0xf]
        %v373 = vld [vmem:[%s1 + $0x1c0] sm:$0xf]
        %v374 = vld [vmem:[%s1 + $0x1c4] sm:$0xf]
        %v375 = vld [vmem:[%s1 + $0x1c8] sm:$0xf]
        %v376 = vld [vmem:[%s1 + $0x1cc] sm:$0xf]
        %v377 = vld [vmem:[%s1 + $0x1d0] sm:$0xf]
        %v378 = vld [vmem:[%s1 + $0x1d4] sm:$0xf]
        %v379 = vld [vmem:[%s1 + $0x1d8] sm:$0xf]
        %v380 = vld [vmem:[%s1 + $0x1dc] sm:$0xf]
        %v381 = vld [vmem:[%s1 + $0x1e0] sm:$0xf]
        %v382 = vld [vmem:[%s1 + $0x1e4] sm:$0xf]
        %v383 = vld [vmem:[%s1 + $0x1e8] sm:$0xf]
        %v384 = vld [vmem:[%s1 + $0x1ec] sm:$0xf]
        %v385 = vld [vmem:[%s1 + $0x1f0] sm:$0xf]
        %v386 = vld [vmem:[%s1 + $0x1f4] sm:$0xf]
        %v387 = vld [vmem:[%s1 + $0x1f8] sm:$0xf]
        %v388 = vld [vmem:[%s1 + $0x1fc] sm:$0xf]
        %v389 = vld [vmem:[%s1 + $0x200] sm:$0xf]
        %v390 = vld [vmem:[%s1 + $0x204] sm:$0xf]
        %v391 = vld [vmem:[%s1 + $0x208] sm:$0xf]
        %v392 = vld [vmem:[%s1 + $0x20c] sm:$0xf]
        %v393 = vld [vmem:[%s1 + $0x210] sm:$0xf]
        %v394 = vld [vmem:[%s1 + $0x214] sm:$0xf]
        %v395 = vld [vmem:[%s1 + $0x218] sm:$0xf]
        %v396 = vld [vmem:[%s1 + $0x21c] sm:$0xf]
        %v397 = vld [vmem:[%s1 + $0x220] sm:$0xf]
        %v398 = vld [vmem:[%s1 + $0x224] sm:$0xf]
        %v399 = vld [vmem:[%s1 + $0x228] sm:$0xf]
        %v400 = vld [vmem:[%s1 + $0x22c] sm:$0xf]
        %v401 = vld [vmem:[%s1 + $0x230] sm:$0xf]
        %v402 = vld [vmem:[%s1 + $0x234] sm:$0xf]
        %v403 = vld [vmem:[%s1 + $0x238] sm:$0xf]
        %v404 = vld [vmem:[%s1 + $0x23c] sm:$0xf]
        %v405 = vld [vmem:[%s2] sm:$0x1]
        %v407 = vlaneseq
        %v408 = vshrl.u32 %v407, 7
        %v409 = vsub.s32 0, %v408
        %v410 = vrot.slane %v405, %v409
        %v472 = vunpack.c.l.b16 %v201
        %v473 = vunpack.c.h.b16 %v201
        %v474 = vunpack.c.l.b16 %v202
        %v475 = vunpack.c.h.b16 %v202
        %v476 = vunpack.c.l.b16 %v203
        %v477 = vunpack.c.h.b16 %v203
        %v478 = vunpack.c.l.b16 %v204
        %v479 = vunpack.c.h.b16 %v204
        %v480 = vunpack.c.l.b16 %v205
        %v481 = vunpack.c.l.b16 %v206
        %v482 = vunpack.c.h.b16 %v206
        %v483 = vunpack.c.l.b16 %v207
        %v484 = vunpack.c.h.b16 %v207
        %v485 = vunpack.c.l.b16 %v208
        %v486 = vunpack.c.h.b16 %v208
        %v487 = vunpack.c.l.b16 %v209
        %v488 = vunpack.c.h.b16 %v209
        %v489 = vunpack.c.l.b16 %v210
        %v490 = vunpack.c.l.b16 %v211
        %v491 = vunpack.c.h.b16 %v211
        %v492 = vunpack.c.l.b16 %v212
        %v493 = vunpack.c.h.b16 %v212
        %v494 = vunpack.c.l.b16 %v213
        %v495 = vunpack.c.h.b16 %v213
        %v496 = vunpack.c.l.b16 %v214
        %v497 = vunpack.c.h.b16 %v214
        %v498 = vunpack.c.l.b16 %v215
        %v499 = vunpack.c.l.b16 %v216
        %v500 = vunpack.c.h.b16 %v216
        %v501 = vunpack.c.l.b16 %v217
        %v502 = vunpack.c.h.b16 %v217
        %v503 = vunpack.c.l.b16 %v218
        %v504 = vunpack.c.h.b16 %v218
        %v505 = vunpack.c.l.b16 %v219
        %v506 = vunpack.c.h.b16 %v219
        %v507 = vunpack.c.l.b16 %v220
        %v508 = vunpack.c.l.b16 %v221
        %v509 = vunpack.c.h.b16 %v221
        %v510 = vunpack.c.l.b16 %v222
        %v511 = vunpack.c.h.b16 %v222
        %v512 = vunpack.c.l.b16 %v223
        %v513 = vunpack.c.h.b16 %v223
        %v514 = vunpack.c.l.b16 %v224
        %v515 = vunpack.c.h.b16 %v224
        %v516 = vunpack.c.l.b16 %v225
        %v517 = vunpack.c.l.b16 %v226
        %v518 = vunpack.c.h.b16 %v226
        %v519 = vunpack.c.l.b16 %v227
        %v520 = vunpack.c.h.b16 %v227
        %v521 = vunpack.c.l.b16 %v228
        %v522 = vunpack.c.h.b16 %v228
        %v523 = vunpack.c.l.b16 %v229
        %v524 = vunpack.c.h.b16 %v229
        %v525 = vunpack.c.l.b16 %v230
        %v526 = vunpack.c.l.b16 %v231
        %v527 = vunpack.c.h.b16 %v231
        %v528 = vunpack.c.l.b16 %v232
        %v529 = vunpack.c.h.b16 %v232
        %v530 = vunpack.c.l.b16 %v233
        %v531 = vunpack.c.h.b16 %v233
        %v532 = vunpack.c.l.b16 %v234
        %v533 = vunpack.c.h.b16 %v234
        %v534 = vunpack.c.l.b16 %v235
        %v535 = vunpack.c.l.b16 %v236
        %v536 = vunpack.c.h.b16 %v236
        %v537 = vunpack.c.l.b16 %v237
        %v538 = vunpack.c.h.b16 %v237
        %v539 = vunpack.c.l.b16 %v238
        %v540 = vunpack.c.h.b16 %v238
        %v541 = vunpack.c.l.b16 %v239
        %v542 = vunpack.c.h.b16 %v239
        %v543 = vunpack.c.l.b16 %v240
        %v544 = vunpack.c.l.b16 %v241
        %v545 = vunpack.c.h.b16 %v241
        %v546 = vunpack.c.l.b16 %v242
        %v547 = vunpack.c.h.b16 %v242
        %v548 = vunpack.c.l.b16 %v243
        %v549 = vunpack.c.h.b16 %v243
        %v550 = vunpack.c.l.b16 %v244
        %v551 = vunpack.c.h.b16 %v244
        %v552 = vunpack.c.l.b16 %v245
        %v553 = vunpack.c.l.b16 %v246
        %v554 = vunpack.c.h.b16 %v246
        %v555 = vunpack.c.l.b16 %v247
        %v556 = vunpack.c.h.b16 %v247
        %v557 = vunpack.c.l.b16 %v248
        %v558 = vunpack.c.h.b16 %v248
        %v559 = vunpack.c.l.b16 %v249
        %v560 = vunpack.c.h.b16 %v249
        %v561 = vunpack.c.l.b16 %v250
        %v562 = vunpack.c.l.b16 %v251
        %v563 = vunpack.c.h.b16 %v251
        %v564 = vunpack.c.l.b16 %v252
        %v565 = vunpack.c.h.b16 %v252
        %v566 = vunpack.c.l.b16 %v253
        %v567 = vunpack.c.h.b16 %v253
        %v568 = vunpack.c.l.b16 %v254
        %v569 = vunpack.c.h.b16 %v254
        %v570 = vunpack.c.l.b16 %v255
        %v571 = vunpack.c.l.b16 %v256
        %v572 = vunpack.c.h.b16 %v256
        %v573 = vunpack.c.l.b16 %v257
        %v574 = vunpack.c.h.b16 %v257
        %v575 = vunpack.c.l.b16 %v258
        %v576 = vunpack.c.h.b16 %v258
        %v577 = vunpack.c.l.b16 %v259
        %v578 = vunpack.c.h.b16 %v259
        %v579 = vunpack.c.l.b16 %v260
        %v580 = vpack.c.b16 %v481, %v472
        %v581 = vpack.c.b16 %v482, %v473
        %v582 = vpack.c.b16 %v483, %v474
        %v583 = vpack.c.b16 %v484, %v475
        %v584 = vpack.c.b16 %v485, %v476
        %v585 = vpack.c.b16 %v486, %v477
        %v586 = vpack.c.b16 %v487, %v478
        %v587 = vpack.c.b16 %v488, %v479
        %v588 = vpack.c.b16 %v489, %v480
        %v589 = vpack.c.b16 %v499, %v490
        %v590 = vpack.c.b16 %v500, %v491
        %v591 = vpack.c.b16 %v501, %v492
        %v592 = vpack.c.b16 %v502, %v493
        %v593 = vpack.c.b16 %v503, %v494
        %v594 = vpack.c.b16 %v504, %v495
        %v595 = vpack.c.b16 %v505, %v496
        %v596 = vpack.c.b16 %v506, %v497
        %v597 = vpack.c.b16 %v507, %v498
        %v598 = vpack.c.b16 %v517, %v508
        %v599 = vpack.c.b16 %v518, %v509
        %v600 = vpack.c.b16 %v519, %v510
        %v601 = vpack.c.b16 %v520, %v511
        %v602 = vpack.c.b16 %v521, %v512
        %v603 = vpack.c.b16 %v522, %v513
        %v604 = vpack.c.b16 %v523, %v514
        %v605 = vpack.c.b16 %v524, %v515
        %v606 = vpack.c.b16 %v525, %v516
        %v607 = vpack.c.b16 %v535, %v526
        %v608 = vpack.c.b16 %v536, %v527
        %v609 = vpack.c.b16 %v537, %v528
        %v610 = vpack.c.b16 %v538, %v529
        %v611 = vpack.c.b16 %v539, %v530
        %v612 = vpack.c.b16 %v540, %v531
        %v613 = vpack.c.b16 %v541, %v532
        %v614 = vpack.c.b16 %v542, %v533
        %v615 = vpack.c.b16 %v543, %v534
        %v616 = vpack.c.b16 %v553, %v544
        %v617 = vpack.c.b16 %v554, %v545
        %v618 = vpack.c.b16 %v555, %v546
        %v619 = vpack.c.b16 %v556, %v547
        %v620 = vpack.c.b16 %v557, %v548
        %v621 = vpack.c.b16 %v558, %v549
        %v622 = vpack.c.b16 %v559, %v550
        %v623 = vpack.c.b16 %v560, %v551
        %v624 = vpack.c.b16 %v561, %v552
        %v625 = vpack.c.b16 %v571, %v562
        %v626 = vpack.c.b16 %v572, %v563
        %v627 = vpack.c.b16 %v573, %v564
        %v628 = vpack.c.b16 %v574, %v565
        %v629 = vpack.c.b16 %v575, %v566
        %v630 = vpack.c.b16 %v576, %v567
        %v631 = vpack.c.b16 %v577, %v568
        %v632 = vpack.c.b16 %v578, %v569
        %v633 = vpack.c.b16 %v579, %v570
        %v832 = vunpack.c.l.b16 %v261
        %v833 = vunpack.c.l.b16 %v262
        %v834 = vunpack.c.l.b16 %v263
        %v835 = vunpack.c.l.b16 %v264
        %v836 = vunpack.c.l.b16 %v265
        %v837 = vunpack.c.l.b16 %v266
        %v838 = vunpack.c.l.b16 %v267
        %v839 = vunpack.c.l.b16 %v268
        %v840 = vunpack.c.l.b16 %v269
        %v841 = vunpack.c.l.b16 %v270
        %v842 = vunpack.c.l.b16 %v271
        %v843 = vunpack.c.l.b16 %v272
        %v844 = vunpack.c.l.b16 %v273
        %v845 = vunpack.c.l.b16 %v274
        %v846 = vunpack.c.l.b16 %v275
        %v847 = vunpack.c.l.b16 %v276
        %v848 = vunpack.c.l.b16 %v277
        %v849 = vunpack.c.l.b16 %v278
        %v850 = vunpack.c.l.b16 %v279
        %v851 = vunpack.c.l.b16 %v280
        %v852 = vunpack.c.l.b16 %v281
        %v853 = vunpack.c.l.b16 %v282
        %v854 = vunpack.c.l.b16 %v283
        %v855 = vunpack.c.l.b16 %v284
        %v856 = vunpack.c.l.b16 %v285
        %v857 = vunpack.c.l.b16 %v286
        %v858 = vunpack.c.l.b16 %v287
        %v859 = vunpack.c.l.b16 %v288
        %v860 = vunpack.c.l.b16 %v289
        %v861 = vunpack.c.l.b16 %v290
        %v862 = vunpack.c.l.b16 %v291
        %v863 = vunpack.c.l.b16 %v292
        %v864 = vunpack.c.l.b16 %v293
        %v865 = vunpack.c.l.b16 %v294
        %v866 = vunpack.c.l.b16 %v295
        %v867 = vunpack.c.l.b16 %v296
        %v868 = vunpack.c.l.b16 %v297
        %v869 = vunpack.c.l.b16 %v298
        %v870 = vunpack.c.l.b16 %v299
        %v871 = vunpack.c.l.b16 %v300
        %v872 = vunpack.c.l.b16 %v301
        %v873 = vunpack.c.l.b16 %v302
        %v874 = vunpack.c.l.b16 %v303
        %v875 = vunpack.c.l.b16 %v304
        %v876 = vunpack.c.l.b16 %v305
        %v877 = vunpack.c.l.b16 %v306
        %v878 = vunpack.c.l.b16 %v307
        %v879 = vunpack.c.l.b16 %v308
        %v880 = vunpack.c.l.b16 %v309
        %v881 = vunpack.c.l.b16 %v310
        %v882 = vunpack.c.l.b16 %v311
        %v883 = vunpack.c.l.b16 %v312
        %v884 = vunpack.c.l.b16 %v313
        %v885 = vunpack.c.l.b16 %v314
        %v886 = vunpack.c.l.b16 %v315
        %v887 = vunpack.c.l.b16 %v316
        %v888 = vunpack.c.l.b16 %v317
        %v889 = vunpack.c.l.b16 %v318
        %v890 = vunpack.c.l.b16 %v319
        %v891 = vunpack.c.l.b16 %v320
        %v892 = vunpack.c.l.b16 %v321
        %v893 = vunpack.c.l.b16 %v322
        %v894 = vunpack.c.l.b16 %v323
        %v895 = vunpack.c.l.b16 %v324
        %v896 = vunpack.c.l.b16 %v325
        %v897 = vunpack.c.l.b16 %v326
        %v898 = vunpack.c.l.b16 %v327
        %v899 = vunpack.c.l.b16 %v328
        %v900 = vunpack.c.l.b16 %v329
        %v901 = vunpack.c.l.b16 %v330
        %v902 = vunpack.c.l.b16 %v331
        %v903 = vunpack.c.l.b16 %v332
        %v904 = vunpack.c.l.b16 %v333
        %v905 = vunpack.c.l.b16 %v334
        %v906 = vunpack.c.l.b16 %v335
        %v907 = vunpack.c.l.b16 %v336
        %v908 = vunpack.c.l.b16 %v337
        %v909 = vunpack.c.l.b16 %v338
        %v910 = vunpack.c.l.b16 %v339
        %v911 = vunpack.c.l.b16 %v340
        %v912 = vunpack.c.l.b16 %v341
        %v913 = vunpack.c.l.b16 %v342
        %v914 = vunpack.c.l.b16 %v343
        %v915 = vunpack.c.l.b16 %v344
        %v916 = vunpack.c.l.b16 %v345
        %v917 = vunpack.c.l.b16 %v346
        %v918 = vunpack.c.l.b16 %v347
        %v919 = vunpack.c.l.b16 %v348
        %v920 = vunpack.c.l.b16 %v349
        %v921 = vunpack.c.l.b16 %v350
        %v922 = vunpack.c.l.b16 %v351
        %v923 = vunpack.c.l.b16 %v352
        %v924 = vunpack.c.l.b16 %v353
        %v925 = vunpack.c.l.b16 %v354
        %v926 = vunpack.c.l.b16 %v355
        %v927 = vunpack.c.l.b16 %v356
        %v928 = vunpack.c.l.b16 %v357
        %v929 = vunpack.c.l.b16 %v358
        %v930 = vunpack.c.l.b16 %v359
        %v931 = vunpack.c.l.b16 %v360
        %v932 = vunpack.c.l.b16 %v361
        %v933 = vunpack.c.l.b16 %v362
        %v934 = vunpack.c.l.b16 %v363
        %v935 = vunpack.c.l.b16 %v364
        %v936 = vunpack.c.l.b16 %v365
        %v937 = vunpack.c.l.b16 %v366
        %v938 = vunpack.c.l.b16 %v367
        %v939 = vunpack.c.l.b16 %v368
        %v940 = vunpack.c.l.b16 %v369
        %v941 = vunpack.c.l.b16 %v370
        %v942 = vunpack.c.l.b16 %v371
        %v943 = vunpack.c.l.b16 %v372
        %v944 = vunpack.c.l.b16 %v373
        %v945 = vunpack.c.l.b16 %v374
        %v946 = vunpack.c.l.b16 %v375
        %v947 = vunpack.c.l.b16 %v376
        %v948 = vunpack.c.l.b16 %v377
        %v949 = vunpack.c.l.b16 %v378
        %v950 = vunpack.c.l.b16 %v379
        %v951 = vunpack.c.l.b16 %v380
        %v952 = vunpack.c.l.b16 %v381
        %v953 = vunpack.c.l.b16 %v382
        %v954 = vunpack.c.l.b16 %v383
        %v955 = vunpack.c.l.b16 %v384
        %v956 = vunpack.c.l.b16 %v385
        %v957 = vunpack.c.l.b16 %v386
        %v958 = vunpack.c.l.b16 %v387
        %v959 = vunpack.c.l.b16 %v388
        %v960 = vunpack.c.l.b16 %v389
        %v961 = vunpack.c.l.b16 %v390
        %v962 = vunpack.c.l.b16 %v391
        %v963 = vunpack.c.l.b16 %v392
        %v964 = vunpack.c.l.b16 %v393
        %v965 = vunpack.c.l.b16 %v394
        %v966 = vunpack.c.l.b16 %v395
        %v967 = vunpack.c.l.b16 %v396
        %v968 = vunpack.c.l.b16 %v397
        %v969 = vunpack.c.l.b16 %v398
        %v970 = vunpack.c.l.b16 %v399
        %v971 = vunpack.c.l.b16 %v400
        %v972 = vunpack.c.l.b16 %v401
        %v973 = vunpack.c.l.b16 %v402
        %v974 = vunpack.c.l.b16 %v403
        %v975 = vunpack.c.l.b16 %v404
        %v976 = vpack.c.b16 %v833, %v832
        %v977 = vpack.c.b16 %v835, %v834
        %v978 = vpack.c.b16 %v837, %v836
        %v979 = vpack.c.b16 %v839, %v838
        %v980 = vpack.c.b16 %v841, %v840
        %v981 = vpack.c.b16 %v843, %v842
        %v982 = vpack.c.b16 %v845, %v844
        %v983 = vpack.c.b16 %v847, %v846
        %v984 = vpack.c.b16 %v849, %v848
        %v985 = vpack.c.b16 %v851, %v850
        %v986 = vpack.c.b16 %v853, %v852
        %v987 = vpack.c.b16 %v855, %v854
        %v988 = vpack.c.b16 %v857, %v856
        %v989 = vpack.c.b16 %v859, %v858
        %v990 = vpack.c.b16 %v861, %v860
        %v991 = vpack.c.b16 %v863, %v862
        %v992 = vpack.c.b16 %v865, %v864
        %v993 = vpack.c.b16 %v867, %v866
        %v994 = vpack.c.b16 %v869, %v868
        %v995 = vpack.c.b16 %v871, %v870
        %v996 = vpack.c.b16 %v873, %v872
        %v997 = vpack.c.b16 %v875, %v874
        %v998 = vpack.c.b16 %v877, %v876
        %v999 = vpack.c.b16 %v879, %v878
        %v1000 = vpack.c.b16 %v881, %v880
        %v1001 = vpack.c.b16 %v883, %v882
        %v1002 = vpack.c.b16 %v885, %v884
        %v1003 = vpack.c.b16 %v887, %v886
        %v1004 = vpack.c.b16 %v889, %v888
        %v1005 = vpack.c.b16 %v891, %v890
        %v1006 = vpack.c.b16 %v893, %v892
        %v1007 = vpack.c.b16 %v895, %v894
        %v1008 = vpack.c.b16 %v897, %v896
        %v1009 = vpack.c.b16 %v899, %v898
        %v1010 = vpack.c.b16 %v901, %v900
        %v1011 = vpack.c.b16 %v903, %v902
        %v1012 = vpack.c.b16 %v905, %v904
        %v1013 = vpack.c.b16 %v907, %v906
        %v1014 = vpack.c.b16 %v909, %v908
        %v1015 = vpack.c.b16 %v911, %v910
        %v1016 = vpack.c.b16 %v913, %v912
        %v1017 = vpack.c.b16 %v915, %v914
        %v1018 = vpack.c.b16 %v917, %v916
        %v1019 = vpack.c.b16 %v919, %v918
        %v1020 = vpack.c.b16 %v921, %v920
        %v1021 = vpack.c.b16 %v923, %v922
        %v1022 = vpack.c.b16 %v925, %v924
        %v1023 = vpack.c.b16 %v927, %v926
        %v1024 = vpack.c.b16 %v929, %v928
        %v1025 = vpack.c.b16 %v931, %v930
        %v1026 = vpack.c.b16 %v933, %v932
        %v1027 = vpack.c.b16 %v935, %v934
        %v1028 = vpack.c.b16 %v937, %v936
        %v1029 = vpack.c.b16 %v939, %v938
        %v1030 = vpack.c.b16 %v941, %v940
        %v1031 = vpack.c.b16 %v943, %v942
        %v1032 = vpack.c.b16 %v945, %v944
        %v1033 = vpack.c.b16 %v947, %v946
        %v1034 = vpack.c.b16 %v949, %v948
        %v1035 = vpack.c.b16 %v951, %v950
        %v1036 = vpack.c.b16 %v953, %v952
        %v1037 = vpack.c.b16 %v955, %v954
        %v1038 = vpack.c.b16 %v957, %v956
        %v1039 = vpack.c.b16 %v959, %v958
        %v1040 = vpack.c.b16 %v961, %v960
        %v1041 = vpack.c.b16 %v963, %v962
        %v1042 = vpack.c.b16 %v965, %v964
        %v1043 = vpack.c.b16 %v967, %v966
        %v1044 = vpack.c.b16 %v969, %v968
        %v1045 = vpack.c.b16 %v971, %v970
        %v1046 = vpack.c.b16 %v973, %v972
        %v1047 = vpack.c.b16 %v975, %v974
        %1120 = vmatprep.subr.bf16.mxu0 0
        %1121 = vmatpush1.bf16.msra.mxu0 %v976
        %1122 = vmatprep.subr.bf16.mxu0 0
        %1123 = vmatpush1.bf16.msra.mxu0 %v977
        %1124 = vmatprep.subr.bf16.mxu0 0
        %1125 = vmatpush1.bf16.msra.mxu0 %v978
        %1126 = vmatprep.subr.bf16.mxu0 0
        %1127 = vmatpush1.bf16.msra.mxu0 %v979
        %1128 = vmatprep.subr.bf16.mxu0 0
        %1129 = vmatpush1.bf16.msra.mxu0 %v980
        %1130 = vmatprep.subr.bf16.mxu0 0
        %1131 = vmatpush1.bf16.msra.mxu0 %v981
        %1132 = vmatprep.subr.bf16.mxu0 0
        %1133 = vmatpush1.bf16.msra.mxu0 %v982
        %1134 = vmatprep.subr.bf16.mxu0 0
        %1135 = vmatpush1.bf16.msra.mxu0 %v983
        %1136 = vmatprep.subr.bf16.mxu0 0
        %1137 = vmatpush1.bf16.msra.mxu0 %v984
        %1138 = vmatprep.subr.bf16.mxu0 0
        %1139 = vmatpush1.bf16.msra.mxu0 %v985
        %1140 = vmatprep.subr.bf16.mxu0 0
        %1141 = vmatpush1.bf16.msra.mxu0 %v986
        %1142 = vmatprep.subr.bf16.mxu0 0
        %1143 = vmatpush1.bf16.msra.mxu0 %v987
        %1144 = vmatprep.subr.bf16.mxu0 0
        %1145 = vmatpush1.bf16.msra.mxu0 %v988
        %1146 = vmatprep.subr.bf16.mxu0 0
        %1147 = vmatpush1.bf16.msra.mxu0 %v989
        %1148 = vmatprep.subr.bf16.mxu0 0
        %1149 = vmatpush1.bf16.msra.mxu0 %v990
        %1150 = vmatprep.subr.bf16.mxu0 0
        %1151 = vmatpush1.bf16.msra.mxu0 %v991
        %1152 = vmatprep.mubr.bf16.mxu0 %v581
        %1153 = vmatmul.mubr.bf16.gmra.mrb[0].mxu0 %v580
        %v1154 = vpop.f32.mrb[0].mxu0
        %v1155 = vadd.f32 %v410, %v1154
        %v1156 = vpop.f32.mrb[0].mxu0
        %v1157 = vpop.f32.mrb[0].mxu0
        %v1158 = vadd.f32 %v410, %v1157
        %v1159 = vpop.f32.mrb[0].mxu0
        %1160 = vmatprep.mubr.bf16.mxu0 %v590
        %1161 = vmatmul.mubr.bf16.gmra.mrb[0].mxu0 %v589
        %v1162 = vpop.f32.mrb[0].mxu0
        %v1163 = vadd.f32 %v410, %v1162
        %v1164 = vpop.f32.mrb[0].mxu0
        %v1165 = vpop.f32.mrb[0].mxu0
        %v1166 = vadd.f32 %v410, %v1165
        %v1167 = vpop.f32.mrb[0].mxu0
        %1168 = vmatprep.mubr.bf16.mxu0 %v599
        %1169 = vmatmul.mubr.bf16.gmra.mrb[0].mxu0 %v598
        %v1170 = vpop.f32.mrb[0].mxu0
        %v1171 = vadd.f32 %v410, %v1170
        %v1172 = vpop.f32.mrb[0].mxu0
        %v1173 = vpop.f32.mrb[0].mxu0
        %v1174 = vadd.f32 %v410, %v1173
        %v1175 = vpop.f32.mrb[0].mxu0
        %1176 = vmatprep.mubr.bf16.mxu0 %v608
        %1177 = vmatmul.mubr.bf16.gmra.mrb[0].mxu0 %v607
        %v1178 = vpop.f32.mrb[0].mxu0
        %v1179 = vadd.f32 %v410, %v1178
        %v1180 = vpop.f32.mrb[0].mxu0
        %v1181 = vpop.f32.mrb[0].mxu0
        %v1182 = vadd.f32 %v410, %v1181
        %v1183 = vpop.f32.mrb[0].mxu0
        %1184 = vmatprep.mubr.bf16.mxu0 %v617
        %1185 = vmatmul.mubr.bf16.gmra.mrb[0].mxu0 %v616
        %v1186 = vpop.f32.mrb[0].mxu0
        %v1187 = vadd.f32 %v410, %v1186
        %v1188 = vpop.f32.mrb[0].mxu0
        %v1189 = vpop.f32.mrb[0].mxu0
        %v1190 = vadd.f32 %v410, %v1189
        %v1191 = vpop.f32.mrb[0].mxu0
        %1192 = vmatprep.mubr.bf16.mxu0 %v626
        %1193 = vmatmul.mubr.bf16.gmra.mrb[0].mxu0 %v625
        %v1194 = vpop.f32.mrb[0].mxu0
        %v1195 = vadd.f32 %v410, %v1194
        %v1196 = vpop.f32.mrb[0].mxu0
        %v1197 = vpop.f32.mrb[0].mxu0
        %v1198 = vadd.f32 %v410, %v1197
        %v1199 = vpop.f32.mrb[0].mxu0
        %1200 = vdwg.mxu0
        %1201 = vmatprep.subr.bf16.mxu0 0
        %1202 = vmatpush1.bf16.msra.mxu0 %v992
        %1203 = vmatprep.subr.bf16.mxu0 0
        %1204 = vmatpush1.bf16.msra.mxu0 %v993
        %1205 = vmatprep.subr.bf16.mxu0 0
        %1206 = vmatpush1.bf16.msra.mxu0 %v994
        %1207 = vmatprep.subr.bf16.mxu0 0
        %1208 = vmatpush1.bf16.msra.mxu0 %v995
        %1209 = vmatprep.subr.bf16.mxu0 0
        %1210 = vmatpush1.bf16.msra.mxu0 %v996
        %1211 = vmatprep.subr.bf16.mxu0 0
        %1212 = vmatpush1.bf16.msra.mxu0 %v997
        %1213 = vmatprep.subr.bf16.mxu0 0
        %1214 = vmatpush1.bf16.msra.mxu0 %v998
        %1215 = vmatprep.subr.bf16.mxu0 0
        %1216 = vmatpush1.bf16.msra.mxu0 %v999
        %1217 = vmatprep.subr.bf16.mxu0 0
        %1218 = vmatpush1.bf16.msra.mxu0 %v1000
        %1219 = vmatprep.subr.bf16.mxu0 0
        %1220 = vmatpush1.bf16.msra.mxu0 %v1001
        %1221 = vmatprep.subr.bf16.mxu0 0
        %1222 = vmatpush1.bf16.msra.mxu0 %v1002
        %1223 = vmatprep.subr.bf16.mxu0 0
        %1224 = vmatpush1.bf16.msra.mxu0 %v1003
        %1225 = vmatprep.subr.bf16.mxu0 0
        %1226 = vmatpush1.bf16.msra.mxu0 %v1004
        %1227 = vmatprep.subr.bf16.mxu0 0
        %1228 = vmatpush1.bf16.msra.mxu0 %v1005
        %1229 = vmatprep.subr.bf16.mxu0 0
        %1230 = vmatpush1.bf16.msra.mxu0 %v1006
        %1231 = vmatprep.subr.bf16.mxu0 0
        %1232 = vmatpush1.bf16.msra.mxu0 %v1007
        %1233 = vmatprep.mubr.bf16.mxu0 %v583
        %1234 = vmatmul.mubr.bf16.gmra.mrb[0].mxu0 %v582
        %v1235 = vpop.f32.mrb[0].mxu0
        %v1236 = vadd.f32 %v1155, %v1235
        %v1237 = vpop.f32.mrb[0].mxu0
        %v1238 = vpop.f32.mrb[0].mxu0
        %v1239 = vadd.f32 %v1158, %v1238
        %v1240 = vpop.f32.mrb[0].mxu0
        %1241 = vmatprep.mubr.bf16.mxu0 %v592
        %1242 = vmatmul.mubr.bf16.gmra.mrb[0].mxu0 %v591
        %v1243 = vpop.f32.mrb[0].mxu0
        %v1244 = vadd.f32 %v1163, %v1243
        %v1245 = vpop.f32.mrb[0].mxu0
        %v1246 = vpop.f32.mrb[0].mxu0
        %v1247 = vadd.f32 %v1166, %v1246
        %v1248 = vpop.f32.mrb[0].mxu0
        %1249 = vmatprep.mubr.bf16.mxu0 %v601
        %1250 = vmatmul.mubr.bf16.gmra.mrb[0].mxu0 %v600
        %v1251 = vpop.f32.mrb[0].mxu0
        %v1252 = vadd.f32 %v1171, %v1251
        %v1253 = vpop.f32.mrb[0].mxu0
        %v1254 = vpop.f32.mrb[0].mxu0
        %v1255 = vadd.f32 %v1174, %v1254
        %v1256 = vpop.f32.mrb[0].mxu0
        %1257 = vmatprep.mubr.bf16.mxu0 %v610
        %1258 = vmatmul.mubr.bf16.gmra.mrb[0].mxu0 %v609
        %v1259 = vpop.f32.mrb[0].mxu0
        %v1260 = vadd.f32 %v1179, %v1259
        %v1261 = vpop.f32.mrb[0].mxu0
        %v1262 = vpop.f32.mrb[0].mxu0
        %v1263 = vadd.f32 %v1182, %v1262
        %v1264 = vpop.f32.mrb[0].mxu0
        %1265 = vmatprep.mubr.bf16.mxu0 %v619
        %1266 = vmatmul.mubr.bf16.gmra.mrb[0].mxu0 %v618
        %v1267 = vpop.f32.mrb[0].mxu0
        %v1268 = vadd.f32 %v1187, %v1267
        %v1269 = vpop.f32.mrb[0].mxu0
        %v1270 = vpop.f32.mrb[0].mxu0
        %v1271 = vadd.f32 %v1190, %v1270
        %v1272 = vpop.f32.mrb[0].mxu0
        %1273 = vmatprep.mubr.bf16.mxu0 %v628
        %1274 = vmatmul.mubr.bf16.gmra.mrb[0].mxu0 %v627
        %v1275 = vpop.f32.mrb[0].mxu0
        %v1276 = vadd.f32 %v1195, %v1275
        %v1277 = vpop.f32.mrb[0].mxu0
        %v1278 = vpop.f32.mrb[0].mxu0
        %v1279 = vadd.f32 %v1198, %v1278
        %v1280 = vpop.f32.mrb[0].mxu0
        %1281 = vdwg.mxu0
        %1282 = vmatprep.subr.bf16.mxu0 0
        %1283 = vmatpush1.bf16.msra.mxu0 %v1008
        %1284 = vmatprep.subr.bf16.mxu0 0
        %1285 = vmatpush1.bf16.msra.mxu0 %v1009
        %1286 = vmatprep.subr.bf16.mxu0 0
        %1287 = vmatpush1.bf16.msra.mxu0 %v1010
        %1288 = vmatprep.subr.bf16.mxu0 0
        %1289 = vmatpush1.bf16.msra.mxu0 %v1011
        %1290 = vmatprep.subr.bf16.mxu0 0
        %1291 = vmatpush1.bf16.msra.mxu0 %v1012
        %1292 = vmatprep.subr.bf16.mxu0 0
        %1293 = vmatpush1.bf16.msra.mxu0 %v1013
        %1294 = vmatprep.subr.bf16.mxu0 0
        %1295 = vmatpush1.bf16.msra.mxu0 %v1014
        %1296 = vmatprep.subr.bf16.mxu0 0
        %1297 = vmatpush1.bf16.msra.mxu0 %v1015
        %1298 = vmatprep.subr.bf16.mxu0 0
        %1299 = vmatpush1.bf16.msra.mxu0 %v1016
        %1300 = vmatprep.subr.bf16.mxu0 0
        %1301 = vmatpush1.bf16.msra.mxu0 %v1017
        %1302 = vmatprep.subr.bf16.mxu0 0
        %1303 = vmatpush1.bf16.msra.mxu0 %v1018
        %1304 = vmatprep.subr.bf16.mxu0 0
        %1305 = vmatpush1.bf16.msra.mxu0 %v1019
        %1306 = vmatprep.subr.bf16.mxu0 0
        %1307 = vmatpush1.bf16.msra.mxu0 %v1020
        %1308 = vmatprep.subr.bf16.mxu0 0
        %1309 = vmatpush1.bf16.msra.mxu0 %v1021
        %1310 = vmatprep.subr.bf16.mxu0 0
        %1311 = vmatpush1.bf16.msra.mxu0 %v1022
        %1312 = vmatprep.subr.bf16.mxu0 0
        %1313 = vmatpush1.bf16.msra.mxu0 %v1023
        %1314 = vmatprep.mubr.bf16.mxu0 %v585
        %1315 = vmatmul.mubr.bf16.gmra.mrb[0].mxu0 %v584
        %v1316 = vpop.f32.mrb[0].mxu0
        %v1317 = vadd.f32 %v1236, %v1316
        %v1318 = vpop.f32.mrb[0].mxu0
        %v1319 = vpop.f32.mrb[0].mxu0
        %v1320 = vadd.f32 %v1239, %v1319
        %v1321 = vpop.f32.mrb[0].mxu0
        %1322 = vmatprep.mubr.bf16.mxu0 %v594
        %1323 = vmatmul.mubr.bf16.gmra.mrb[0].mxu0 %v593
        %v1324 = vpop.f32.mrb[0].mxu0
        %v1325 = vadd.f32 %v1244, %v1324
        %v1326 = vpop.f32.mrb[0].mxu0
        %v1327 = vpop.f32.mrb[0].mxu0
        %v1328 = vadd.f32 %v1247, %v1327
        %v1329 = vpop.f32.mrb[0].mxu0
        %1330 = vmatprep.mubr.bf16.mxu0 %v603
        %1331 = vmatmul.mubr.bf16.gmra.mrb[0].mxu0 %v602
        %v1332 = vpop.f32.mrb[0].mxu0
        %v1333 = vadd.f32 %v1252, %v1332
        %v1334 = vpop.f32.mrb[0].mxu0
        %v1335 = vpop.f32.mrb[0].mxu0
        %v1336 = vadd.f32 %v1255, %v1335
        %v1337 = vpop.f32.mrb[0].mxu0
        %1338 = vmatprep.mubr.bf16.mxu0 %v612
        %1339 = vmatmul.mubr.bf16.gmra.mrb[0].mxu0 %v611
        %v1340 = vpop.f32.mrb[0].mxu0
        %v1341 = vadd.f32 %v1260, %v1340
        %v1342 = vpop.f32.mrb[0].mxu0
        %v1343 = vpop.f32.mrb[0].mxu0
        %v1344 = vadd.f32 %v1263, %v1343
        %v1345 = vpop.f32.mrb[0].mxu0
        %1346 = vmatprep.mubr.bf16.mxu0 %v621
        %1347 = vmatmul.mubr.bf16.gmra.mrb[0].mxu0 %v620
        %v1348 = vpop.f32.mrb[0].mxu0
        %v1349 = vadd.f32 %v1268, %v1348
        %v1350 = vpop.f32.mrb[0].mxu0
        %v1351 = vpop.f32.mrb[0].mxu0
        %v1352 = vadd.f32 %v1271, %v1351
        %v1353 = vpop.f32.mrb[0].mxu0
        %1354 = vmatprep.mubr.bf16.mxu0 %v630
        %1355 = vmatmul.mubr.bf16.gmra.mrb[0].mxu0 %v629
        %v1356 = vpop.f32.mrb[0].mxu0
        %v1357 = vadd.f32 %v1276, %v1356
        %v1358 = vpop.f32.mrb[0].mxu0
        %v1359 = vpop.f32.mrb[0].mxu0
        %v1360 = vadd.f32 %v1279, %v1359
        %v1361 = vpop.f32.mrb[0].mxu0
        %1362 = vdwg.mxu0
        %1363 = vmatprep.subr.bf16.mxu0 0
        %1364 = vmatpush1.bf16.msra.mxu0 %v1024
        %1365 = vmatprep.subr.bf16.mxu0 0
        %1366 = vmatpush1.bf16.msra.mxu0 %v1025
        %1367 = vmatprep.subr.bf16.mxu0 0
        %1368 = vmatpush1.bf16.msra.mxu0 %v1026
        %1369 = vmatprep.subr.bf16.mxu0 0
        %1370 = vmatpush1.bf16.msra.mxu0 %v1027
        %1371 = vmatprep.subr.bf16.mxu0 0
        %1372 = vmatpush1.bf16.msra.mxu0 %v1028
        %1373 = vmatprep.subr.bf16.mxu0 0
        %1374 = vmatpush1.bf16.msra.mxu0 %v1029
        %1375 = vmatprep.subr.bf16.mxu0 0
        %1376 = vmatpush1.bf16.msra.mxu0 %v1030
        %1377 = vmatprep.subr.bf16.mxu0 0
        %1378 = vmatpush1.bf16.msra.mxu0 %v1031
        %1379 = vmatprep.subr.bf16.mxu0 0
        %1380 = vmatpush1.bf16.msra.mxu0 %v1032
        %1381 = vmatprep.subr.bf16.mxu0 0
        %1382 = vmatpush1.bf16.msra.mxu0 %v1033
        %1383 = vmatprep.subr.bf16.mxu0 0
        %1384 = vmatpush1.bf16.msra.mxu0 %v1034
        %1385 = vmatprep.subr.bf16.mxu0 0
        %1386 = vmatpush1.bf16.msra.mxu0 %v1035
        %1387 = vmatprep.subr.bf16.mxu0 0
        %1388 = vmatpush1.bf16.msra.mxu0 %v1036
        %1389 = vmatprep.subr.bf16.mxu0 0
        %1390 = vmatpush1.bf16.msra.mxu0 %v1037
        %1391 = vmatprep.subr.bf16.mxu0 0
        %1392 = vmatpush1.bf16.msra.mxu0 %v1038
        %1393 = vmatprep.subr.bf16.mxu0 0
        %1394 = vmatpush1.bf16.msra.mxu0 %v1039
        %1395 = vmatprep.mubr.bf16.mxu0 %v587
        %1396 = vmatmul.mubr.bf16.gmra.mrb[0].mxu0 %v586
        %v1397 = vpop.f32.mrb[0].mxu0
        %v1398 = vadd.f32 %v1317, %v1397
        %v1399 = vpop.f32.mrb[0].mxu0
        %v1400 = vpop.f32.mrb[0].mxu0
        %v1401 = vadd.f32 %v1320, %v1400
        %v1402 = vpop.f32.mrb[0].mxu0
        %1403 = vmatprep.mubr.bf16.mxu0 %v596
        %1404 = vmatmul.mubr.bf16.gmra.mrb[0].mxu0 %v595
        %v1405 = vpop.f32.mrb[0].mxu0
        %v1406 = vadd.f32 %v1325, %v1405
        %v1407 = vpop.f32.mrb[0].mxu0
        %v1408 = vpop.f32.mrb[0].mxu0
        %v1409 = vadd.f32 %v1328, %v1408
        %v1410 = vpop.f32.mrb[0].mxu0
        %1411 = vmatprep.mubr.bf16.mxu0 %v605
        %1412 = vmatmul.mubr.bf16.gmra.mrb[0].mxu0 %v604
        %v1413 = vpop.f32.mrb[0].mxu0
        %v1414 = vadd.f32 %v1333, %v1413
        %v1415 = vpop.f32.mrb[0].mxu0
        %v1416 = vpop.f32.mrb[0].mxu0
        %v1417 = vadd.f32 %v1336, %v1416
        %v1418 = vpop.f32.mrb[0].mxu0
        %1419 = vmatprep.mubr.bf16.mxu0 %v614
        %1420 = vmatmul.mubr.bf16.gmra.mrb[0].mxu0 %v613
        %v1421 = vpop.f32.mrb[0].mxu0
        %v1422 = vadd.f32 %v1341, %v1421
        %v1423 = vpop.f32.mrb[0].mxu0
        %v1424 = vpop.f32.mrb[0].mxu0
        %v1425 = vadd.f32 %v1344, %v1424
        %v1426 = vpop.f32.mrb[0].mxu0
        %1427 = vmatprep.mubr.bf16.mxu0 %v623
        %1428 = vmatmul.mubr.bf16.gmra.mrb[0].mxu0 %v622
        %v1429 = vpop.f32.mrb[0].mxu0
        %v1430 = vadd.f32 %v1349, %v1429
        %v1431 = vpop.f32.mrb[0].mxu0
        %v1432 = vpop.f32.mrb[0].mxu0
        %v1433 = vadd.f32 %v1352, %v1432
        %v1434 = vpop.f32.mrb[0].mxu0
        %1435 = vmatprep.mubr.bf16.mxu0 %v632
        %1436 = vmatmul.mubr.bf16.gmra.mrb[0].mxu0 %v631
        %v1437 = vpop.f32.mrb[0].mxu0
        %v1438 = vadd.f32 %v1357, %v1437
        %v1439 = vpop.f32.mrb[0].mxu0
        %v1440 = vpop.f32.mrb[0].mxu0
        %v1441 = vadd.f32 %v1360, %v1440
        %v1442 = vpop.f32.mrb[0].mxu0
        %1443 = vdwg.mxu0
        %1444 = vmatprep.subr.bf16.mxu0 0
        %1445 = vmatpush1.bf16.msra.mxu0 %v1040
        %1446 = vmatprep.subr.bf16.mxu0 0
        %1447 = vmatpush1.bf16.msra.mxu0 %v1041
        %1448 = vmatprep.subr.bf16.mxu0 0
        %1449 = vmatpush1.bf16.msra.mxu0 %v1042
        %1450 = vmatprep.subr.bf16.mxu0 0
        %1451 = vmatpush1.bf16.msra.mxu0 %v1043
        %1452 = vmatprep.subr.bf16.mxu0 0
        %1453 = vmatpush1.bf16.msra.mxu0 %v1044
        %1454 = vmatprep.subr.bf16.mxu0 0
        %1455 = vmatpush1.bf16.msra.mxu0 %v1045
        %1456 = vmatprep.subr.bf16.mxu0 0
        %1457 = vmatpush1.bf16.msra.mxu0 %v1046
        %1458 = vmatprep.subr.bf16.mxu0 0
        %1459 = vmatpush1.bf16.msra.mxu0 %v1047
        %1460 = vmatprep.subr.bf16.mxu0 0
        %1461 = vmatpush1.bf16.msra.mxu0 0
        %1462 = vmatprep.subr.bf16.mxu0 0
        %1463 = vmatpush1.bf16.msra.mxu0 0
        %1464 = vmatprep.subr.bf16.mxu0 0
        %1465 = vmatpush1.bf16.msra.mxu0 0
        %1466 = vmatprep.subr.bf16.mxu0 0
        %1467 = vmatpush1.bf16.msra.mxu0 0
        %1468 = vmatprep.subr.bf16.mxu0 0
        %1469 = vmatpush1.bf16.msra.mxu0 0
        %1470 = vmatprep.subr.bf16.mxu0 0
        %1471 = vmatpush1.bf16.msra.mxu0 0
        %1472 = vmatprep.subr.bf16.mxu0 0
        %1473 = vmatpush1.bf16.msra.mxu0 0
        %1474 = vmatprep.subr.bf16.mxu0 0
        %1475 = vmatpush1.bf16.msra.mxu0 0
        %1476 = vmatprep.mubr.bf16.mxu0 0
        %1477 = vmatmul.mubr.bf16.gmra.mrb[0].mxu0 %v588
        %v1478 = vpop.f32.mrb[0].mxu0
        %v1479 = vadd.f32 %v1398, %v1478
        %v1480 = vpop.f32.mrb[0].mxu0
        %v1481 = vpop.f32.mrb[0].mxu0
        %v1482 = vadd.f32 %v1401, %v1481
        %v1483 = vpop.f32.mrb[0].mxu0
        %1484 = vmatprep.mubr.bf16.mxu0 0
        %1485 = vmatmul.mubr.bf16.gmra.mrb[0].mxu0 %v597
        %v1486 = vpop.f32.mrb[0].mxu0
        %v1487 = vadd.f32 %v1406, %v1486
        %v1488 = vpop.f32.mrb[0].mxu0
        %v1489 = vpop.f32.mrb[0].mxu0
        %v1490 = vadd.f32 %v1409, %v1489
        %v1491 = vpop.f32.mrb[0].mxu0
        %1492 = vmatprep.mubr.bf16.mxu0 0
        %1493 = vmatmul.mubr.bf16.gmra.mrb[0].mxu0 %v606
        %v1494 = vpop.f32.mrb[0].mxu0
        %v1495 = vadd.f32 %v1414, %v1494
        %v1496 = vpop.f32.mrb[0].mxu0
        %v1497 = vpop.f32.mrb[0].mxu0
        %v1498 = vadd.f32 %v1417, %v1497
        %v1499 = vpop.f32.mrb[0].mxu0
        %1500 = vmatprep.mubr.bf16.mxu0 0
        %1501 = vmatmul.mubr.bf16.gmra.mrb[0].mxu0 %v615
        %v1502 = vpop.f32.mrb[0].mxu0
        %v1503 = vadd.f32 %v1422, %v1502
        %v1504 = vpop.f32.mrb[0].mxu0
        %v1505 = vpop.f32.mrb[0].mxu0
        %v1506 = vadd.f32 %v1425, %v1505
        %v1507 = vpop.f32.mrb[0].mxu0
        %1508 = vmatprep.mubr.bf16.mxu0 0
        %1509 = vmatmul.mubr.bf16.gmra.mrb[0].mxu0 %v624
        %v1510 = vpop.f32.mrb[0].mxu0
        %v1511 = vadd.f32 %v1430, %v1510
        %v1512 = vpop.f32.mrb[0].mxu0
        %v1513 = vpop.f32.mrb[0].mxu0
        %v1514 = vadd.f32 %v1433, %v1513
        %v1515 = vpop.f32.mrb[0].mxu0
        %1516 = vmatprep.mubr.bf16.mxu0 0
        %1517 = vmatmul.mubr.bf16.gmra.mrb[0].mxu0 %v633
        %v1518 = vpop.f32.mrb[0].mxu0
        %v1519 = vadd.f32 %v1438, %v1518
        %v1520 = vpop.f32.mrb[0].mxu0
        %v1521 = vpop.f32.mrb[0].mxu0
        %v1522 = vadd.f32 %v1441, %v1521
        %v1523 = vpop.f32.mrb[0].mxu0
        %1524 = vdwg.mxu0
        %v1525 = vmax.f32 %v1479, 0.0
        %v1526 = vmax.f32 %v1482, 0.0
        %v1527 = vmax.f32 %v1487, 0.0
        %v1528 = vmax.f32 %v1490, 0.0
        %v1529 = vmax.f32 %v1495, 0.0
        %v1530 = vmax.f32 %v1498, 0.0
        %v1531 = vmax.f32 %v1503, 0.0
        %v1532 = vmax.f32 %v1506, 0.0
        %v1533 = vmax.f32 %v1511, 0.0
        %v1534 = vmax.f32 %v1514, 0.0
        %v1535 = vmax.f32 %v1519, 0.0
        %v1536 = vmax.f32 %v1522, 0.0
        %1537 = vst [vmem:[%s177] sm:$0xff] %v1525
        %1538 = vst [vmem:[%s177 + $0x8] sm:$0xff] %v1526
        %1539 = vst [vmem:[%s177 + $0x10] sm:$0xff] %v1527
        %1540 = vst [vmem:[%s177 + $0x18] sm:$0xff] %v1528
        %1541 = vst [vmem:[%s177 + $0x20] sm:$0xff] %v1529
        %1542 = vst [vmem:[%s177 + $0x28] sm:$0xff] %v1530
        %1543 = vst [vmem:[%s177 + $0x30] sm:$0xff] %v1531
        %1544 = vst [vmem:[%s177 + $0x38] sm:$0xff] %v1532
        %1545 = vst [vmem:[%s177 + $0x40] sm:$0xff] %v1533
        %1546 = vst [vmem:[%s177 + $0x48] sm:$0xff] %v1534
        %1547 = vst [vmem:[%s177 + $0x50] sm:$0xff] %v1535
        %1548 = vst [vmem:[%s177 + $0x58] sm:$0xff] %v1536
        %s1549 = sand.u32 %s90, 1
        %s1550 = sand.u32 %s90, 1
        %s1551 = smul.addr %s1550, 96
        %s1552 = scalar_lea.vmem [#allocation2], %s1551
        // Predicated region
        $region33: #{conv_module_forward.6} parent=31 // pred_check
          %p1553 = pneg %p100
        $region34: #{conv_module_forward.6} parent=31 // pred_check_branch
          %1555 = sbr.rel (%p1553) target = $region36
        $region35: #{conv_module_forward.6} parent=31 // pred_region
          %s1556 = smul.u32 12, %s14
          %s1557 = ssub.s32 21, %s1556
          %p1558 = scmp.lt.s32.totalorder %s1557, 12
          %s1559 = scalar_select %p1558, %s1557, 12
          %s1560 = smul.u32 128, %s1559
          %p1561 = scmp.ne.s32.totalorder 0, %s1560
          %s1562 = smul.addr %s1556, 8
          %s1563 = scalar_lea.vmem %s3, %s1562
          // Predicated region
          $region37: #{conv_module_forward.6} parent=35 // pred_check
            %p1564 = pneg %p1561
          $region38: #{conv_module_forward.6} parent=35 // pred_check_branch
            %1566 = sbr.rel (%p1564) target = $region40
          $region39: #{conv_module_forward.6} parent=35 // pred_region
            // Predicated region
            $region41: #{conv_module_forward.6} parent=39 // pred_check
              _
            $region42: #{conv_module_forward.6} parent=39 // pred_check_branch
              %1568 = sbr.rel (0) target = $region44
            $region43: #{conv_module_forward.6} parent=39 // pred_region
              // Predicated region
              $region63: #{conv_module_forward.6} parent=43 // pred_check
                _
              $region64: #{conv_module_forward.6} parent=43 // pred_check_branch
                %1640 = sbr.rel (0) target = $region66
              $region65: #{conv_module_forward.6} parent=43 // pred_region
                %s1641 = sdiv.u32.pop %s1559, 12
                %s1642 = srem.u32.pop %s1559, 12
                // While loop
                $region67: #{conv_module_forward.6} parent=65 // loop_pre_header
                  _
                $region68: #{conv_module_forward.6} parent=65 // loop_header
                  %s1644 = sphi 0, %s1646
                  %p1645 = scmp.ge.s32.totalorder %s1644, %s1641
                  %s1649 = sphi 0, %s1678
                  %s1650 = sphi %s1552, %s1681
                  %s1651 = sphi %s1563, %s1682
                $region69: #{conv_module_forward.6} parent=65 // loop_header_branch
                  %1648 = sbr.rel (%p1645) target = $region73
                $region70: #{conv_module_forward.6} parent=65 // loop_body
                  %v1652 = vld [vmem:[%s1650] sm:$0xff]
                  %1653 = vst [vmem:[%s1651] sm:$0xff] %v1652
                  %v1654 = vld [vmem:[%s1650 + $0x8] sm:$0xff]
                  %1655 = vst [vmem:[%s1651 + $0x8] sm:$0xff] %v1654
                  %v1656 = vld [vmem:[%s1650 + $0x10] sm:$0xff]
                  %1657 = vst [vmem:[%s1651 + $0x10] sm:$0xff] %v1656
                  %v1658 = vld [vmem:[%s1650 + $0x18] sm:$0xff]
                  %1659 = vst [vmem:[%s1651 + $0x18] sm:$0xff] %v1658
                  %v1660 = vld [vmem:[%s1650 + $0x20] sm:$0xff]
                  %1661 = vst [vmem:[%s1651 + $0x20] sm:$0xff] %v1660
                  %v1662 = vld [vmem:[%s1650 + $0x28] sm:$0xff]
                  %1663 = vst [vmem:[%s1651 + $0x28] sm:$0xff] %v1662
                  %v1664 = vld [vmem:[%s1650 + $0x30] sm:$0xff]
                  %1665 = vst [vmem:[%s1651 + $0x30] sm:$0xff] %v1664
                  %v1666 = vld [vmem:[%s1650 + $0x38] sm:$0xff]
                  %1667 = vst [vmem:[%s1651 + $0x38] sm:$0xff] %v1666
                  %v1668 = vld [vmem:[%s1650 + $0x40] sm:$0xff]
                  %1669 = vst [vmem:[%s1651 + $0x40] sm:$0xff] %v1668
                  %v1670 = vld [vmem:[%s1650 + $0x48] sm:$0xff]
                  %1671 = vst [vmem:[%s1651 + $0x48] sm:$0xff] %v1670
                  %v1672 = vld [vmem:[%s1650 + $0x50] sm:$0xff]
                  %1673 = vst [vmem:[%s1651 + $0x50] sm:$0xff] %v1672
                  %v1674 = vld [vmem:[%s1650 + $0x58] sm:$0xff]
                  %1675 = vst [vmem:[%s1651 + $0x58] sm:$0xff] %v1674
                  %s1676 = sadd.s32 1, %s1649
                  %p1677 = scmp.ge.s32.totalorder %s1676, %s1641
                  %s1678 = scalar_select %p1677, 0, %s1676
                  %s1679 = smul.u32 %s1678, 96
                  %s1680 = smul.u32 %s1678, 96
                  %s1681 = scalar_lea.vmem %s1552, %s1679 [#allocation2]
                  %s1682 = scalar_lea.vmem %s1563, %s1680
                $region71: #{conv_module_forward.6} parent=65 // loop_footer
                  %s1646 = sadd.s32 %s1644, 1
                $region72: #{conv_module_forward.6} parent=65 // loop_footer_branch
                  %1643 = sbr.rel target = $region68
                $region73: #{conv_module_forward.6} parent=65 // loop_exit
                  _
                %s1683 = sdiv.u32.pop %s1559, 12
                %s1684 = srem.u32.pop %s1559, 12
                %s1685 = smul.u32 %s1683, 12
                %s1686 = smul.u32 8, %s1685
                %s1687 = scalar_lea.vmem %s1552, %s1686 [#allocation2]
                %s1688 = smul.u32 8, %s1685
                %s1689 = scalar_lea.vmem %s1563, %s1688
                // While loop
                $region74: #{conv_module_forward.6} parent=65 // loop_pre_header
                  _
                $region75: #{conv_module_forward.6} parent=65 // loop_header
                  %s1691 = sphi 0, %s1693
                  %p1692 = scmp.ge.s32.totalorder %s1691, %s1684
                  %s1696 = sphi 0, %s1703
                  %s1697 = sphi %s1687, %s1706
                  %s1698 = sphi %s1689, %s1707
                $region76: #{conv_module_forward.6} parent=65 // loop_header_branch
                  %1695 = sbr.rel (%p1692) target = $region80
                $region77: #{conv_module_forward.6} parent=65 // loop_body
                  %v1699 = vld [vmem:[%s1697] sm:$0xff]
                  %1700 = vst [vmem:[%s1698] sm:$0xff] %v1699
                  %s1701 = sadd.s32 1, %s1696
                  %p1702 = scmp.ge.s32.totalorder %s1701, %s1684
                  %s1703 = scalar_select %p1702, 0, %s1701
                  %s1704 = smul.u32 %s1703, 8
                  %s1705 = smul.u32 %s1703, 8
                  %s1706 = scalar_lea.vmem %s1687, %s1704 [#allocation2]
                  %s1707 = scalar_lea.vmem %s1689, %s1705
                $region78: #{conv_module_forward.6} parent=65 // loop_footer
                  %s1693 = sadd.s32 %s1691, 1
                $region79: #{conv_module_forward.6} parent=65 // loop_footer_branch
                  %1690 = sbr.rel target = $region75
                $region80: #{conv_module_forward.6} parent=65 // loop_exit
                  _
              $region66: #{conv_module_forward.6} parent=43 // pred_fallthru
                _
              // Predicated region
              $region81: #{conv_module_forward.6} parent=43 // pred_check
                _
              $region82: #{conv_module_forward.6} parent=43 // pred_check_branch
                %1709 = sbr.rel target = $region84
              $region83: #{conv_module_forward.6} parent=43 // pred_region
                _
              $region84: #{conv_module_forward.6} parent=43 // pred_fallthru
                _
            $region44: #{conv_module_forward.6} parent=39 // pred_fallthru
              _
            // Predicated region
            $region45: #{conv_module_forward.6} parent=39 // pred_check
              _
            $region46: #{conv_module_forward.6} parent=39 // pred_check_branch
              %1570 = sbr.rel target = $region48
            $region47: #{conv_module_forward.6} parent=39 // pred_region
              %s1572 = sdiv.u32.pop %s1559, 12
              %s1573 = srem.u32.pop %s1559, 12
              // While loop
              $region49: #{conv_module_forward.6} parent=47 // loop_pre_header
                _
              $region50: #{conv_module_forward.6} parent=47 // loop_header
                %s1575 = sphi 0, %s1577
                %p1576 = scmp.ge.s32.totalorder %s1575, %s1572
                %s1580 = sphi 0, %s1609
                %s1581 = sphi %s1552, %s1612
                %s1582 = sphi %s1563, %s1613
              $region51: #{conv_module_forward.6} parent=47 // loop_header_branch
                %1579 = sbr.rel (%p1576) target = $region55
              $region52: #{conv_module_forward.6} parent=47 // loop_body
                %v1583 = vld [vmem:[%s1581] sm:$0xff]
                %1584 = vst [vmem:[%s1582] sm:$0xff] %v1583
                %v1585 = vld [vmem:[%s1581 + $0x8] sm:$0xff]
                %1586 = vst [vmem:[%s1582 + $0x8] sm:$0xff] %v1585
                %v1587 = vld [vmem:[%s1581 + $0x10] sm:$0xff]
                %1588 = vst [vmem:[%s1582 + $0x10] sm:$0xff] %v1587
                %v1589 = vld [vmem:[%s1581 + $0x18] sm:$0xff]
                %1590 = vst [vmem:[%s1582 + $0x18] sm:$0xff] %v1589
                %v1591 = vld [vmem:[%s1581 + $0x20] sm:$0xff]
                %1592 = vst [vmem:[%s1582 + $0x20] sm:$0xff] %v1591
                %v1593 = vld [vmem:[%s1581 + $0x28] sm:$0xff]
                %1594 = vst [vmem:[%s1582 + $0x28] sm:$0xff] %v1593
                %v1595 = vld [vmem:[%s1581 + $0x30] sm:$0xff]
                %1596 = vst [vmem:[%s1582 + $0x30] sm:$0xff] %v1595
                %v1597 = vld [vmem:[%s1581 + $0x38] sm:$0xff]
                %1598 = vst [vmem:[%s1582 + $0x38] sm:$0xff] %v1597
                %v1599 = vld [vmem:[%s1581 + $0x40] sm:$0xff]
                %1600 = vst [vmem:[%s1582 + $0x40] sm:$0xff] %v1599
                %v1601 = vld [vmem:[%s1581 + $0x48] sm:$0xff]
                %1602 = vst [vmem:[%s1582 + $0x48] sm:$0xff] %v1601
                %v1603 = vld [vmem:[%s1581 + $0x50] sm:$0xff]
                %1604 = vst [vmem:[%s1582 + $0x50] sm:$0xff] %v1603
                %v1605 = vld [vmem:[%s1581 + $0x58] sm:$0xff]
                %1606 = vst [vmem:[%s1582 + $0x58] sm:$0xff] %v1605
                %s1607 = sadd.s32 1, %s1580
                %p1608 = scmp.ge.s32.totalorder %s1607, %s1572
                %s1609 = scalar_select %p1608, 0, %s1607
                %s1610 = smul.u32 %s1609, 96
                %s1611 = smul.u32 %s1609, 96
                %s1612 = scalar_lea.vmem %s1552, %s1610 [#allocation2]
                %s1613 = scalar_lea.vmem %s1563, %s1611
              $region53: #{conv_module_forward.6} parent=47 // loop_footer
                %s1577 = sadd.s32 %s1575, 1
              $region54: #{conv_module_forward.6} parent=47 // loop_footer_branch
                %1574 = sbr.rel target = $region50
              $region55: #{conv_module_forward.6} parent=47 // loop_exit
                _
              %s1614 = sdiv.u32.pop %s1559, 12
              %s1615 = srem.u32.pop %s1559, 12
              %s1616 = smul.u32 %s1614, 12
              %s1617 = smul.u32 8, %s1616
              %s1618 = scalar_lea.vmem %s1552, %s1617 [#allocation2]
              %s1619 = smul.u32 8, %s1616
              %s1620 = scalar_lea.vmem %s1563, %s1619
              // While loop
              $region56: #{conv_module_forward.6} parent=47 // loop_pre_header
                _
              $region57: #{conv_module_forward.6} parent=47 // loop_header
                %s1622 = sphi 0, %s1624
                %p1623 = scmp.ge.s32.totalorder %s1622, %s1615
                %s1627 = sphi 0, %s1634
                %s1628 = sphi %s1618, %s1637
                %s1629 = sphi %s1620, %s1638
              $region58: #{conv_module_forward.6} parent=47 // loop_header_branch
                %1626 = sbr.rel (%p1623) target = $region62
              $region59: #{conv_module_forward.6} parent=47 // loop_body
                %v1630 = vld [vmem:[%s1628] sm:$0xff]
                %1631 = vst [vmem:[%s1629] sm:$0xff] %v1630
                %s1632 = sadd.s32 1, %s1627
                %p1633 = scmp.ge.s32.totalorder %s1632, %s1615
                %s1634 = scalar_select %p1633, 0, %s1632
                %s1635 = smul.u32 %s1634, 8
                %s1636 = smul.u32 %s1634, 8
                %s1637 = scalar_lea.vmem %s1618, %s1635 [#allocation2]
                %s1638 = scalar_lea.vmem %s1620, %s1636
              $region60: #{conv_module_forward.6} parent=47 // loop_footer
                %s1624 = sadd.s32 %s1622, 1
              $region61: #{conv_module_forward.6} parent=47 // loop_footer_branch
                %1621 = sbr.rel target = $region57
              $region62: #{conv_module_forward.6} parent=47 // loop_exit
                _
            $region48: #{conv_module_forward.6} parent=39 // pred_fallthru
              _
          $region40: #{conv_module_forward.6} parent=35 // pred_fallthru
            _
          %1710 = vnop
        $region36: #{conv_module_forward.6} parent=31 // pred_fallthru
          _
      $region32: #{conv_module_forward.6} parent=5 // pred_fallthru
        _
      %p1711 = scmp.le.s32.totalorder 2, %s9
      // Predicated region
      $region85: #{conv_module_forward.6} parent=5 // pred_check
        %p1712 = pneg %p1711
      $region86: #{conv_module_forward.6} parent=5 // pred_check_branch
        %1714 = sbr.rel (%p1712) target = $region88
      $region87: #{conv_module_forward.6} parent=5 // pred_region
        %s1715 = ssub.s32 %s9, 2
        // Predicated region
        $region89: #{conv_module_forward.6} parent=87 // pred_check
          %p1716 = pneg %p106
        $region90: #{conv_module_forward.6} parent=87 // pred_check_branch
          %1718 = sbr.rel (%p1716) target = $region92
        $region91: #{conv_module_forward.6} parent=87 // pred_region
          %s1719 = sand.u32 %s91, 1
          %s1720 = sand.u32 %s91, 1
          %s1721 = smul.addr %s1720, 96
          %s1722 = scalar_lea.vmem [#allocation2], %s1721
        $region92: #{conv_module_forward.6} parent=87 // pred_fallthru
          _
      $region88: #{conv_module_forward.6} parent=5 // pred_fallthru
        _
    $region6: #{conv_module_forward.6} parent=1 // loop_footer
      %s13 = sadd.s32 1, %s9
    $region7: #{conv_module_forward.6} parent=1 // loop_footer_branch
      %8 = sbr.rel target = $region3
    $region8: #{conv_module_forward.6} parent=1 // loop_exit
      _

// kernel: conv_module_forward.7
$region0: #{conv_module_forward.7}
  #allocation0 [shape = 'u32[]', space=smem, size = 0x4, offset = 0x4, fixed_abs, tag = 'smem constant byte address 0x4 - core index']
  #allocation1 [shape = 'u32[144,128]{1,0:T(1,128)}', space=vmem, size = 0x12000, scoped, tag = 'internal scratch']
  %s0 = inlined_call_operand.vmem [shape: bf16[32,1152], index: 0, kind: input, shape index: {}]
  %s1 = inlined_call_operand.vmem [shape: bf16[1152,128], index: 1, kind: input, shape index: {}]
  %s2 = inlined_call_operand.vmem [shape: f32[1,128], index: 2, kind: input, shape index: {}]
  %s3 = inlined_call_operand.vmem [shape: f32[32,128], index: 3, kind: output, shape index: {}]
  %s4 = sld [smem:[#allocation0]]
  $region45: #{conv_module_forward.7} parent=0
    _
  %s6 = ssub.s32 1, %s4
  %s7 = scalar_select 0, %s6, %s4
  loop: start=0, step=1, limit=4
  $region2: #{conv_module_forward.7} parent=0 // loop_pre_header
    _
  $region3: #{conv_module_forward.7} parent=0 // loop_header
    %s9 = sphi 0, %s13
    %p10 = scmp.ge.s32.totalorder %s9, 4
    %s19 = sphi 0, %s21
    %s22 = sphi 0, %s19
    %s23 = sphi 0, %s22
    %s39 = sphi 0, %s23
    %s43 = sphi 0, %s43
    %s45 = sphi 0, %s43
    %s46 = sphi 0, %s45
    %s60 = sphi 0, %s46
    %s64 = sphi 0, %s64
    %s66 = sphi 0, %s64
    %s67 = sphi 0, %s66
    %s81 = sphi 0, %s67
    %s87 = sphi 0, %s89
    %s90 = sphi 0, %s87
    %s91 = sphi 0, %s90
    %s107 = sphi 0, %s91
  $region4: #{conv_module_forward.7} parent=0 // loop_header_branch
    %12 = sbr.rel (%p10) target = $region8
  $region5: #{conv_module_forward.7} parent=0 // loop_body
    %s14 = ssub.s32 %s9, 1
    %s15 = ssub.s32 %s9, 2
    %s16 = sadd.s32 %s9, 1
    %s17 = ssub.s32 %s9, %s16
    %p18 = scmp.eq.s32.totalorder %s17, 0
    %s20 = sadd.s32 %s19, 1
    %s21 = scalar_select %p18, %s19, %s20
    %p24 = pneg %p18
    %p25 = scmp.eq.s32.totalorder %s9, 1
    %p26 = por %p24, %p25
    %p27 = scmp.ne.s32.totalorder %s19, %s22
    %p28 = scmp.eq.s32.totalorder %s9, 0
    %p29 = por %p27, %p28
    %p30 = scmp.ne.s32.totalorder %s19, %s22
    %p31 = scmp.eq.s32.totalorder %s14, 1
    %p32 = por %p30, %p31
    %p33 = scmp.ne.s32.totalorder %s22, %s23
    %p34 = scmp.eq.s32.totalorder %s14, 0
    %p35 = por %p33, %p34
    %p36 = scmp.ne.s32.totalorder %s22, %s23
    %p37 = scmp.eq.s32.totalorder %s15, 1
    %p38 = por %p36, %p37
    %p40 = scmp.ne.s32.totalorder %s23, %s39
    %p41 = scmp.eq.s32.totalorder %s15, 0
    %p42 = por %p40, %p41
    %s44 = sadd.s32 %s43, 1
    %p47 = scmp.eq.s32.totalorder %s9, 1
    %p48 = scmp.ne.s32.totalorder %s43, %s45
    %p49 = scmp.eq.s32.totalorder %s9, 0
    %p50 = por %p48, %p49
    %p51 = scmp.ne.s32.totalorder %s43, %s45
    %p52 = scmp.eq.s32.totalorder %s14, 1
    %p53 = por %p51, %p52
    %p54 = scmp.ne.s32.totalorder %s45, %s46
    %p55 = scmp.eq.s32.totalorder %s14, 0
    %p56 = por %p54, %p55
    %p57 = scmp.ne.s32.totalorder %s45, %s46
    %p58 = scmp.eq.s32.totalorder %s15, 1
    %p59 = por %p57, %p58
    %p61 = scmp.ne.s32.totalorder %s46, %s60
    %p62 = scmp.eq.s32.totalorder %s15, 0
    %p63 = por %p61, %p62
    %s65 = sadd.s32 %s64, 1
    %p68 = scmp.eq.s32.totalorder %s9, 1
    %p69 = scmp.ne.s32.totalorder %s64, %s66
    %p70 = scmp.eq.s32.totalorder %s9, 0
    %p71 = por %p69, %p70
    %p72 = scmp.ne.s32.totalorder %s64, %s66
    %p73 = scmp.eq.s32.totalorder %s14, 1
    %p74 = por %p72, %p73
    %p75 = scmp.ne.s32.totalorder %s66, %s67
    %p76 = scmp.eq.s32.totalorder %s14, 0
    %p77 = por %p75, %p76
    %p78 = scmp.ne.s32.totalorder %s66, %s67
    %p79 = scmp.eq.s32.totalorder %s15, 1
    %p80 = por %p78, %p79
    %p82 = scmp.ne.s32.totalorder %s67, %s81
    %p83 = scmp.eq.s32.totalorder %s15, 0
    %p84 = por %p82, %p83
    %s85 = ssub.s32 %s9, %s16
    %p86 = scmp.eq.s32.totalorder %s85, 0
    %s88 = sadd.s32 %s87, 1
    %s89 = scalar_select %p86, %s87, %s88
    %p92 = pneg %p86
    %p93 = scmp.eq.s32.totalorder %s9, 1
    %p94 = por %p92, %p93
    %p95 = scmp.ne.s32.totalorder %s87, %s90
    %p96 = scmp.eq.s32.totalorder %s9, 0
    %p97 = por %p95, %p96
    %p98 = scmp.ne.s32.totalorder %s87, %s90
    %p99 = scmp.eq.s32.totalorder %s14, 1
    %p100 = por %p98, %p99
    %p101 = scmp.ne.s32.totalorder %s90, %s91
    %p102 = scmp.eq.s32.totalorder %s14, 0
    %p103 = por %p101, %p102
    %p104 = scmp.ne.s32.totalorder %s90, %s91
    %p105 = scmp.eq.s32.totalorder %s15, 1
    %p106 = por %p104, %p105
    %p108 = scmp.ne.s32.totalorder %s91, %s107
    %p109 = scmp.eq.s32.totalorder %s15, 0
    %p110 = por %p108, %p109
    %p111 = scmp.le.s32.totalorder 1, %s9
    %p112 = scmp.lt.s32.totalorder %s9, 3
    %p113 = pnand %p111, %p112
    %p114 = pneg %p113
    // Predicated region
    $region9: #{conv_module_forward.7} parent=5 // pred_check
      _
    $region10: #{conv_module_forward.7} parent=5 // pred_check_branch
      %116 = sbr.rel (%p113) target = $region12
    $region11: #{conv_module_forward.7} parent=5 // pred_region
      %s117 = ssub.s32 %s9, 1
      // Predicated region
      $region13: #{conv_module_forward.7} parent=11 // pred_check
        %p118 = pneg %p56
      $region14: #{conv_module_forward.7} parent=11 // pred_check_branch
        %120 = sbr.rel (%p118) target = $region16
      $region15: #{conv_module_forward.7} parent=11 // pred_region
        _
      $region16: #{conv_module_forward.7} parent=11 // pred_fallthru
        _
      // Predicated region
      $region17: #{conv_module_forward.7} parent=11 // pred_check
        %p121 = pneg %p77
      $region18: #{conv_module_forward.7} parent=11 // pred_check_branch
        %123 = sbr.rel (%p121) target = $region20
      $region19: #{conv_module_forward.7} parent=11 // pred_region
        _
      $region20: #{conv_module_forward.7} parent=11 // pred_fallthru
        _
    $region12: #{conv_module_forward.7} parent=5 // pred_fallthru
      _
    %p124 = scmp.lt.s32.totalorder %s9, 2
    // Predicated region
    $region21: #{conv_module_forward.7} parent=5 // pred_check
      %p125 = pneg %p124
    $region22: #{conv_module_forward.7} parent=5 // pred_check_branch
      %127 = sbr.rel (%p125) target = $region24
    $region23: #{conv_module_forward.7} parent=5 // pred_region
      // Predicated region
      $region25: #{conv_module_forward.7} parent=23 // pred_check
        %p128 = pneg %p29
      $region26: #{conv_module_forward.7} parent=23 // pred_check_branch
        %130 = sbr.rel (%p128) target = $region28
      $region27: #{conv_module_forward.7} parent=23 // pred_region
        %s131 = smul.u32 2, %s9
        %p132 = scmp.lt.s32.totalorder %s131, 3
        %s133 = scalar_select %p132, %s131, 3
        %s134 = smul.addr %s133, 9
        %s135 = smul.addr %s134, 4
        %s136 = scalar_lea.vmem %s0, %s135
        %s137 = smul.u32 2, %s9
      $region28: #{conv_module_forward.7} parent=23 // pred_fallthru
        _
    $region24: #{conv_module_forward.7} parent=5 // pred_fallthru
      _
    %p138 = scmp.le.s32.totalorder 1, %s9
    %p139 = scmp.lt.s32.totalorder %s9, 3
    %p140 = pnand %p138, %p139
    %p141 = pneg %p140
    // Predicated region
    $region29: #{conv_module_forward.7} parent=5 // pred_check
      _
    $region30: #{conv_module_forward.7} parent=5 // pred_check_branch
      %143 = sbr.rel (%p140) target = $region32
    $region31: #{conv_module_forward.7} parent=5 // pred_region
      %s144 = ssub.s32 %s9, 1
      %s145 = smul.u32 2, %s14
      %p146 = scmp.lt.s32.totalorder %s145, 3
      %s147 = scalar_select %p146, %s145, 3
      %s148 = smul.addr %s147, 9
      %s149 = smul.addr %s148, 4
      %s150 = scalar_lea.vmem %s0, %s149
      %p151 = pneg %p35
      %p152 = pneg %p32
      %p153 = pneg %p56
      %p154 = pneg %p53
      %p155 = pneg %p77
      %p156 = pneg %p74
      %p157 = pneg %p103
      %p158 = pneg %p100
      %s159 = smul.u32 2, %s14
      %p160 = scmp.lt.s32.totalorder %s159, 3
      %s161 = scalar_select %p160, %s159, 3
      %s162 = smul.addr %s161, 8
      %s163 = scalar_lea.vmem %s3, %s162
      %s164 = smul.u32 2, %s14
      %p165 = scmp.lt.s32.totalorder %s164, 3
      %s166 = scalar_select %p165, %s164, 3
      %s167 = smul.addr %s166, 9
      %s168 = smul.addr %s167, 4
      %s169 = scalar_lea.vmem %s0, %s168
      %s170 = smul.u32 2, %s14
      %s171 = smul.u32 2, %s14
      %p172 = scmp.lt.s32.totalorder %s171, 3
      %s173 = scalar_select %p172, %s171, 3
      %s174 = smul.addr %s173, 8
      %s175 = scalar_lea.vmem %s3, %s174
      %s176 = smul.u32 2, %s14
      %v178 = vld [vmem:[%s169] sm:$0xff]
      %v179 = vld [vmem:[%s169 + $0x8] sm:$0xff]
      %v180 = vld [vmem:[%s169 + $0x10] sm:$0xff]
      %v181 = vld [vmem:[%s169 + $0x18] sm:$0xff]
      %v182 = vld [vmem:[%s169 + $0x20] sm:$0xf]
      %v183 = vld [vmem:[%s169 + $0x24] sm:$0xff]
      %v184 = vld [vmem:[%s169 + $0x2c] sm:$0xff]
      %v185 = vld [vmem:[%s169 + $0x34] sm:$0xff]
      %v186 = vld [vmem:[%s169 + $0x3c] sm:$0xff]
      %v187 = vld [vmem:[%s169 + $0x44] sm:$0xf]
      %v188 = vld [vmem:[%s1] sm:$0xf]
      %v189 = vld [vmem:[%s1 + $0x4] sm:$0xf]
      %v190 = vld [vmem:[%s1 + $0x8] sm:$0xf]
      %v191 = vld [vmem:[%s1 + $0xc] sm:$0xf]
      %v192 = vld [vmem:[%s1 + $0x10] sm:$0xf]
      %v193 = vld [vmem:[%s1 + $0x14] sm:$0xf]
      %v194 = vld [vmem:[%s1 + $0x18] sm:$0xf]
      %v195 = vld [vmem:[%s1 + $0x1c] sm:$0xf]
      %v196 = vld [vmem:[%s1 + $0x20] sm:$0xf]
      %v197 = vld [vmem:[%s1 + $0x24] sm:$0xf]
      %v198 = vld [vmem:[%s1 + $0x28] sm:$0xf]
      %v199 = vld [vmem:[%s1 + $0x2c] sm:$0xf]
      %v200 = vld [vmem:[%s1 + $0x30] sm:$0xf]
      %v201 = vld [vmem:[%s1 + $0x34] sm:$0xf]
      %v202 = vld [vmem:[%s1 + $0x38] sm:$0xf]
      %v203 = vld [vmem:[%s1 + $0x3c] sm:$0xf]
      %v204 = vld [vmem:[%s1 + $0x40] sm:$0xf]
      %v205 = vld [vmem:[%s1 + $0x44] sm:$0xf]
      %v206 = vld [vmem:[%s1 + $0x48] sm:$0xf]
      %v207 = vld [vmem:[%s1 + $0x4c] sm:$0xf]
      %v208 = vld [vmem:[%s1 + $0x50] sm:$0xf]
      %v209 = vld [vmem:[%s1 + $0x54] sm:$0xf]
      %v210 = vld [vmem:[%s1 + $0x58] sm:$0xf]
      %v211 = vld [vmem:[%s1 + $0x5c] sm:$0xf]
      %v212 = vld [vmem:[%s1 + $0x60] sm:$0xf]
      %v213 = vld [vmem:[%s1 + $0x64] sm:$0xf]
      %v214 = vld [vmem:[%s1 + $0x68] sm:$0xf]
      %v215 = vld [vmem:[%s1 + $0x6c] sm:$0xf]
      %v216 = vld [vmem:[%s1 + $0x70] sm:$0xf]
      %v217 = vld [vmem:[%s1 + $0x74] sm:$0xf]
      %v218 = vld [vmem:[%s1 + $0x78] sm:$0xf]
      %v219 = vld [vmem:[%s1 + $0x7c] sm:$0xf]
      %v220 = vld [vmem:[%s1 + $0x80] sm:$0xf]
      %v221 = vld [vmem:[%s1 + $0x84] sm:$0xf]
      %v222 = vld [vmem:[%s1 + $0x88] sm:$0xf]
      %v223 = vld [vmem:[%s1 + $0x8c] sm:$0xf]
      %v224 = vld [vmem:[%s1 + $0x90] sm:$0xf]
      %v225 = vld [vmem:[%s1 + $0x94] sm:$0xf]
      %v226 = vld [vmem:[%s1 + $0x98] sm:$0xf]
      %v227 = vld [vmem:[%s1 + $0x9c] sm:$0xf]
      %v228 = vld [vmem:[%s1 + $0xa0] sm:$0xf]
      %v229 = vld [vmem:[%s1 + $0xa4] sm:$0xf]
      %v230 = vld [vmem:[%s1 + $0xa8] sm:$0xf]
      %v231 = vld [vmem:[%s1 + $0xac] sm:$0xf]
      %v232 = vld [vmem:[%s1 + $0xb0] sm:$0xf]
      %v233 = vld [vmem:[%s1 + $0xb4] sm:$0xf]
      %v234 = vld [vmem:[%s1 + $0xb8] sm:$0xf]
      %v235 = vld [vmem:[%s1 + $0xbc] sm:$0xf]
      %v236 = vld [vmem:[%s1 + $0xc0] sm:$0xf]
      %v237 = vld [vmem:[%s1 + $0xc4] sm:$0xf]
      %v238 = vld [vmem:[%s1 + $0xc8] sm:$0xf]
      %v239 = vld [vmem:[%s1 + $0xcc] sm:$0xf]
      %v240 = vld [vmem:[%s1 + $0xd0] sm:$0xf]
      %v241 = vld [vmem:[%s1 + $0xd4] sm:$0xf]
      %v242 = vld [vmem:[%s1 + $0xd8] sm:$0xf]
      %v243 = vld [vmem:[%s1 + $0xdc] sm:$0xf]
      %v244 = vld [vmem:[%s1 + $0xe0] sm:$0xf]
      %v245 = vld [vmem:[%s1 + $0xe4] sm:$0xf]
      %v246 = vld [vmem:[%s1 + $0xe8] sm:$0xf]
      %v247 = vld [vmem:[%s1 + $0xec] sm:$0xf]
      %v248 = vld [vmem:[%s1 + $0xf0] sm:$0xf]
      %v249 = vld [vmem:[%s1 + $0xf4] sm:$0xf]
      %v250 = vld [vmem:[%s1 + $0xf8] sm:$0xf]
      %v251 = vld [vmem:[%s1 + $0xfc] sm:$0xf]
      %v252 = vld [vmem:[%s1 + $0x100] sm:$0xf]
      %v253 = vld [vmem:[%s1 + $0x104] sm:$0xf]
      %v254 = vld [vmem:[%s1 + $0x108] sm:$0xf]
      %v255 = vld [vmem:[%s1 + $0x10c] sm:$0xf]
      %v256 = vld [vmem:[%s1 + $0x110] sm:$0xf]
      %v257 = vld [vmem:[%s1 + $0x114] sm:$0xf]
      %v258 = vld [vmem:[%s1 + $0x118] sm:$0xf]
      %v259 = vld [vmem:[%s1 + $0x11c] sm:$0xf]
      %v260 = vld [vmem:[%s1 + $0x120] sm:$0xf]
      %v261 = vld [vmem:[%s1 + $0x124] sm:$0xf]
      %v262 = vld [vmem:[%s1 + $0x128] sm:$0xf]
      %v263 = vld [vmem:[%s1 + $0x12c] sm:$0xf]
      %v264 = vld [vmem:[%s1 + $0x130] sm:$0xf]
      %v265 = vld [vmem:[%s1 + $0x134] sm:$0xf]
      %v266 = vld [vmem:[%s1 + $0x138] sm:$0xf]
      %v267 = vld [vmem:[%s1 + $0x13c] sm:$0xf]
      %v268 = vld [vmem:[%s1 + $0x140] sm:$0xf]
      %v269 = vld [vmem:[%s1 + $0x144] sm:$0xf]
      %v270 = vld [vmem:[%s1 + $0x148] sm:$0xf]
      %v271 = vld [vmem:[%s1 + $0x14c] sm:$0xf]
      %v272 = vld [vmem:[%s1 + $0x150] sm:$0xf]
      %v273 = vld [vmem:[%s1 + $0x154] sm:$0xf]
      %v274 = vld [vmem:[%s1 + $0x158] sm:$0xf]
      %v275 = vld [vmem:[%s1 + $0x15c] sm:$0xf]
      %v276 = vld [vmem:[%s1 + $0x160] sm:$0xf]
      %v277 = vld [vmem:[%s1 + $0x164] sm:$0xf]
      %v278 = vld [vmem:[%s1 + $0x168] sm:$0xf]
      %v279 = vld [vmem:[%s1 + $0x16c] sm:$0xf]
      %v280 = vld [vmem:[%s1 + $0x170] sm:$0xf]
      %v281 = vld [vmem:[%s1 + $0x174] sm:$0xf]
      %v282 = vld [vmem:[%s1 + $0x178] sm:$0xf]
      %v283 = vld [vmem:[%s1 + $0x17c] sm:$0xf]
      %v284 = vld [vmem:[%s1 + $0x180] sm:$0xf]
      %v285 = vld [vmem:[%s1 + $0x184] sm:$0xf]
      %v286 = vld [vmem:[%s1 + $0x188] sm:$0xf]
      %v287 = vld [vmem:[%s1 + $0x18c] sm:$0xf]
      %v288 = vld [vmem:[%s1 + $0x190] sm:$0xf]
      %v289 = vld [vmem:[%s1 + $0x194] sm:$0xf]
      %v290 = vld [vmem:[%s1 + $0x198] sm:$0xf]
      %v291 = vld [vmem:[%s1 + $0x19c] sm:$0xf]
      %v292 = vld [vmem:[%s1 + $0x1a0] sm:$0xf]
      %v293 = vld [vmem:[%s1 + $0x1a4] sm:$0xf]
      %v294 = vld [vmem:[%s1 + $0x1a8] sm:$0xf]
      %v295 = vld [vmem:[%s1 + $0x1ac] sm:$0xf]
      %v296 = vld [vmem:[%s1 + $0x1b0] sm:$0xf]
      %v297 = vld [vmem:[%s1 + $0x1b4] sm:$0xf]
      %v298 = vld [vmem:[%s1 + $0x1b8] sm:$0xf]
      %v299 = vld [vmem:[%s1 + $0x1bc] sm:$0xf]
      %v300 = vld [vmem:[%s1 + $0x1c0] sm:$0xf]
      %v301 = vld [vmem:[%s1 + $0x1c4] sm:$0xf]
      %v302 = vld [vmem:[%s1 + $0x1c8] sm:$0xf]
      %v303 = vld [vmem:[%s1 + $0x1cc] sm:$0xf]
      %v304 = vld [vmem:[%s1 + $0x1d0] sm:$0xf]
      %v305 = vld [vmem:[%s1 + $0x1d4] sm:$0xf]
      %v306 = vld [vmem:[%s1 + $0x1d8] sm:$0xf]
      %v307 = vld [vmem:[%s1 + $0x1dc] sm:$0xf]
      %v308 = vld [vmem:[%s1 + $0x1e0] sm:$0xf]
      %v309 = vld [vmem:[%s1 + $0x1e4] sm:$0xf]
      %v310 = vld [vmem:[%s1 + $0x1e8] sm:$0xf]
      %v311 = vld [vmem:[%s1 + $0x1ec] sm:$0xf]
      %v312 = vld [vmem:[%s1 + $0x1f0] sm:$0xf]
      %v313 = vld [vmem:[%s1 + $0x1f4] sm:$0xf]
      %v314 = vld [vmem:[%s1 + $0x1f8] sm:$0xf]
      %v315 = vld [vmem:[%s1 + $0x1fc] sm:$0xf]
      %v316 = vld [vmem:[%s1 + $0x200] sm:$0xf]
      %v317 = vld [vmem:[%s1 + $0x204] sm:$0xf]
      %v318 = vld [vmem:[%s1 + $0x208] sm:$0xf]
      %v319 = vld [vmem:[%s1 + $0x20c] sm:$0xf]
      %v320 = vld [vmem:[%s1 + $0x210] sm:$0xf]
      %v321 = vld [vmem:[%s1 + $0x214] sm:$0xf]
      %v322 = vld [vmem:[%s1 + $0x218] sm:$0xf]
      %v323 = vld [vmem:[%s1 + $0x21c] sm:$0xf]
      %v324 = vld [vmem:[%s1 + $0x220] sm:$0xf]
      %v325 = vld [vmem:[%s1 + $0x224] sm:$0xf]
      %v326 = vld [vmem:[%s1 + $0x228] sm:$0xf]
      %v327 = vld [vmem:[%s1 + $0x22c] sm:$0xf]
      %v328 = vld [vmem:[%s1 + $0x230] sm:$0xf]
      %v329 = vld [vmem:[%s1 + $0x234] sm:$0xf]
      %v330 = vld [vmem:[%s1 + $0x238] sm:$0xf]
      %v331 = vld [vmem:[%s1 + $0x23c] sm:$0xf]
      %v332 = vld [vmem:[%s2] sm:$0x1]
      %v334 = vlaneseq
      %v335 = vshrl.u32 %v334, 7
      %v336 = vsub.s32 0, %v335
      %v337 = vrot.slane %v332, %v336
      %v349 = vunpack.c.l.b16 %v178
      %v350 = vunpack.c.h.b16 %v178
      %v351 = vunpack.c.l.b16 %v179
      %v352 = vunpack.c.h.b16 %v179
      %v353 = vunpack.c.l.b16 %v180
      %v354 = vunpack.c.h.b16 %v180
      %v355 = vunpack.c.l.b16 %v181
      %v356 = vunpack.c.h.b16 %v181
      %v357 = vunpack.c.l.b16 %v182
      %v358 = vunpack.c.l.b16 %v183
      %v359 = vunpack.c.h.b16 %v183
      %v360 = vunpack.c.l.b16 %v184
      %v361 = vunpack.c.h.b16 %v184
      %v362 = vunpack.c.l.b16 %v185
      %v363 = vunpack.c.h.b16 %v185
      %v364 = vunpack.c.l.b16 %v186
      %v365 = vunpack.c.h.b16 %v186
      %v366 = vunpack.c.l.b16 %v187
      %v367 = vpack.c.b16 %v358, %v349
      %v368 = vpack.c.b16 %v359, %v350
      %v369 = vpack.c.b16 %v360, %v351
      %v370 = vpack.c.b16 %v361, %v352
      %v371 = vpack.c.b16 %v362, %v353
      %v372 = vpack.c.b16 %v363, %v354
      %v373 = vpack.c.b16 %v364, %v355
      %v374 = vpack.c.b16 %v365, %v356
      %v375 = vpack.c.b16 %v366, %v357
      %v529 = vunpack.c.l.b16 %v188
      %v530 = vunpack.c.l.b16 %v189
      %v531 = vunpack.c.l.b16 %v190
      %v532 = vunpack.c.l.b16 %v191
      %v533 = vunpack.c.l.b16 %v192
      %v534 = vunpack.c.l.b16 %v193
      %v535 = vunpack.c.l.b16 %v194
      %v536 = vunpack.c.l.b16 %v195
      %v537 = vunpack.c.l.b16 %v196
      %v538 = vunpack.c.l.b16 %v197
      %v539 = vunpack.c.l.b16 %v198
      %v540 = vunpack.c.l.b16 %v199
      %v541 = vunpack.c.l.b16 %v200
      %v542 = vunpack.c.l.b16 %v201
      %v543 = vunpack.c.l.b16 %v202
      %v544 = vunpack.c.l.b16 %v203
      %v545 = vunpack.c.l.b16 %v204
      %v546 = vunpack.c.l.b16 %v205
      %v547 = vunpack.c.l.b16 %v206
      %v548 = vunpack.c.l.b16 %v207
      %v549 = vunpack.c.l.b16 %v208
      %v550 = vunpack.c.l.b16 %v209
      %v551 = vunpack.c.l.b16 %v210
      %v552 = vunpack.c.l.b16 %v211
      %v553 = vunpack.c.l.b16 %v212
      %v554 = vunpack.c.l.b16 %v213
      %v555 = vunpack.c.l.b16 %v214
      %v556 = vunpack.c.l.b16 %v215
      %v557 = vunpack.c.l.b16 %v216
      %v558 = vunpack.c.l.b16 %v217
      %v559 = vunpack.c.l.b16 %v218
      %v560 = vunpack.c.l.b16 %v219
      %v561 = vunpack.c.l.b16 %v220
      %v562 = vunpack.c.l.b16 %v221
      %v563 = vunpack.c.l.b16 %v222
      %v564 = vunpack.c.l.b16 %v223
      %v565 = vunpack.c.l.b16 %v224
      %v566 = vunpack.c.l.b16 %v225
      %v567 = vunpack.c.l.b16 %v226
      %v568 = vunpack.c.l.b16 %v227
      %v569 = vunpack.c.l.b16 %v228
      %v570 = vunpack.c.l.b16 %v229
      %v571 = vunpack.c.l.b16 %v230
      %v572 = vunpack.c.l.b16 %v231
      %v573 = vunpack.c.l.b16 %v232
      %v574 = vunpack.c.l.b16 %v233
      %v575 = vunpack.c.l.b16 %v234
      %v576 = vunpack.c.l.b16 %v235
      %v577 = vunpack.c.l.b16 %v236
      %v578 = vunpack.c.l.b16 %v237
      %v579 = vunpack.c.l.b16 %v238
      %v580 = vunpack.c.l.b16 %v239
      %v581 = vunpack.c.l.b16 %v240
      %v582 = vunpack.c.l.b16 %v241
      %v583 = vunpack.c.l.b16 %v242
      %v584 = vunpack.c.l.b16 %v243
      %v585 = vunpack.c.l.b16 %v244
      %v586 = vunpack.c.l.b16 %v245
      %v587 = vunpack.c.l.b16 %v246
      %v588 = vunpack.c.l.b16 %v247
      %v589 = vunpack.c.l.b16 %v248
      %v590 = vunpack.c.l.b16 %v249
      %v591 = vunpack.c.l.b16 %v250
      %v592 = vunpack.c.l.b16 %v251
      %v593 = vunpack.c.l.b16 %v252
      %v594 = vunpack.c.l.b16 %v253
      %v595 = vunpack.c.l.b16 %v254
      %v596 = vunpack.c.l.b16 %v255
      %v597 = vunpack.c.l.b16 %v256
      %v598 = vunpack.c.l.b16 %v257
      %v599 = vunpack.c.l.b16 %v258
      %v600 = vunpack.c.l.b16 %v259
      %v601 = vunpack.c.l.b16 %v260
      %v602 = vunpack.c.l.b16 %v261
      %v603 = vunpack.c.l.b16 %v262
      %v604 = vunpack.c.l.b16 %v263
      %v605 = vunpack.c.l.b16 %v264
      %v606 = vunpack.c.l.b16 %v265
      %v607 = vunpack.c.l.b16 %v266
      %v608 = vunpack.c.l.b16 %v267
      %v609 = vunpack.c.l.b16 %v268
      %v610 = vunpack.c.l.b16 %v269
      %v611 = vunpack.c.l.b16 %v270
      %v612 = vunpack.c.l.b16 %v271
      %v613 = vunpack.c.l.b16 %v272
      %v614 = vunpack.c.l.b16 %v273
      %v615 = vunpack.c.l.b16 %v274
      %v616 = vunpack.c.l.b16 %v275
      %v617 = vunpack.c.l.b16 %v276
      %v618 = vunpack.c.l.b16 %v277
      %v619 = vunpack.c.l.b16 %v278
      %v620 = vunpack.c.l.b16 %v279
      %v621 = vunpack.c.l.b16 %v280
      %v622 = vunpack.c.l.b16 %v281
      %v623 = vunpack.c.l.b16 %v282
      %v624 = vunpack.c.l.b16 %v283
      %v625 = vunpack.c.l.b16 %v284
      %v626 = vunpack.c.l.b16 %v285
      %v627 = vunpack.c.l.b16 %v286
      %v628 = vunpack.c.l.b16 %v287
      %v629 = vunpack.c.l.b16 %v288
      %v630 = vunpack.c.l.b16 %v289
      %v631 = vunpack.c.l.b16 %v290
      %v632 = vunpack.c.l.b16 %v291
      %v633 = vunpack.c.l.b16 %v292
      %v634 = vunpack.c.l.b16 %v293
      %v635 = vunpack.c.l.b16 %v294
      %v636 = vunpack.c.l.b16 %v295
      %v637 = vunpack.c.l.b16 %v296
      %v638 = vunpack.c.l.b16 %v297
      %v639 = vunpack.c.l.b16 %v298
      %v640 = vunpack.c.l.b16 %v299
      %v641 = vunpack.c.l.b16 %v300
      %v642 = vunpack.c.l.b16 %v301
      %v643 = vunpack.c.l.b16 %v302
      %v644 = vunpack.c.l.b16 %v303
      %v645 = vunpack.c.l.b16 %v304
      %v646 = vunpack.c.l.b16 %v305
      %v647 = vunpack.c.l.b16 %v306
      %v648 = vunpack.c.l.b16 %v307
      %v649 = vunpack.c.l.b16 %v308
      %v650 = vunpack.c.l.b16 %v309
      %v651 = vunpack.c.l.b16 %v310
      %v652 = vunpack.c.l.b16 %v311
      %v653 = vunpack.c.l.b16 %v312
      %v654 = vunpack.c.l.b16 %v313
      %v655 = vunpack.c.l.b16 %v314
      %v656 = vunpack.c.l.b16 %v315
      %v657 = vunpack.c.l.b16 %v316
      %v658 = vunpack.c.l.b16 %v317
      %v659 = vunpack.c.l.b16 %v318
      %v660 = vunpack.c.l.b16 %v319
      %v661 = vunpack.c.l.b16 %v320
      %v662 = vunpack.c.l.b16 %v321
      %v663 = vunpack.c.l.b16 %v322
      %v664 = vunpack.c.l.b16 %v323
      %v665 = vunpack.c.l.b16 %v324
      %v666 = vunpack.c.l.b16 %v325
      %v667 = vunpack.c.l.b16 %v326
      %v668 = vunpack.c.l.b16 %v327
      %v669 = vunpack.c.l.b16 %v328
      %v670 = vunpack.c.l.b16 %v329
      %v671 = vunpack.c.l.b16 %v330
      %v672 = vunpack.c.l.b16 %v331
      %v673 = vpack.c.b16 %v530, %v529
      %v674 = vpack.c.b16 %v532, %v531
      %v675 = vpack.c.b16 %v534, %v533
      %v676 = vpack.c.b16 %v536, %v535
      %v677 = vpack.c.b16 %v538, %v537
      %v678 = vpack.c.b16 %v540, %v539
      %v679 = vpack.c.b16 %v542, %v541
      %v680 = vpack.c.b16 %v544, %v543
      %v681 = vpack.c.b16 %v546, %v545
      %v682 = vpack.c.b16 %v548, %v547
      %v683 = vpack.c.b16 %v550, %v549
      %v684 = vpack.c.b16 %v552, %v551
      %v685 = vpack.c.b16 %v554, %v553
      %v686 = vpack.c.b16 %v556, %v555
      %v687 = vpack.c.b16 %v558, %v557
      %v688 = vpack.c.b16 %v560, %v559
      %v689 = vpack.c.b16 %v562, %v561
      %v690 = vpack.c.b16 %v564, %v563
      %v691 = vpack.c.b16 %v566, %v565
      %v692 = vpack.c.b16 %v568, %v567
      %v693 = vpack.c.b16 %v570, %v569
      %v694 = vpack.c.b16 %v572, %v571
      %v695 = vpack.c.b16 %v574, %v573
      %v696 = vpack.c.b16 %v576, %v575
      %v697 = vpack.c.b16 %v578, %v577
      %v698 = vpack.c.b16 %v580, %v579
      %v699 = vpack.c.b16 %v582, %v581
      %v700 = vpack.c.b16 %v584, %v583
      %v701 = vpack.c.b16 %v586, %v585
      %v702 = vpack.c.b16 %v588, %v587
      %v703 = vpack.c.b16 %v590, %v589
      %v704 = vpack.c.b16 %v592, %v591
      %v705 = vpack.c.b16 %v594, %v593
      %v706 = vpack.c.b16 %v596, %v595
      %v707 = vpack.c.b16 %v598, %v597
      %v708 = vpack.c.b16 %v600, %v599
      %v709 = vpack.c.b16 %v602, %v601
      %v710 = vpack.c.b16 %v604, %v603
      %v711 = vpack.c.b16 %v606, %v605
      %v712 = vpack.c.b16 %v608, %v607
      %v713 = vpack.c.b16 %v610, %v609
      %v714 = vpack.c.b16 %v612, %v611
      %v715 = vpack.c.b16 %v614, %v613
      %v716 = vpack.c.b16 %v616, %v615
      %v717 = vpack.c.b16 %v618, %v617
      %v718 = vpack.c.b16 %v620, %v619
      %v719 = vpack.c.b16 %v622, %v621
      %v720 = vpack.c.b16 %v624, %v623
      %v721 = vpack.c.b16 %v626, %v625
      %v722 = vpack.c.b16 %v628, %v627
      %v723 = vpack.c.b16 %v630, %v629
      %v724 = vpack.c.b16 %v632, %v631
      %v725 = vpack.c.b16 %v634, %v633
      %v726 = vpack.c.b16 %v636, %v635
      %v727 = vpack.c.b16 %v638, %v637
      %v728 = vpack.c.b16 %v640, %v639
      %v729 = vpack.c.b16 %v642, %v641
      %v730 = vpack.c.b16 %v644, %v643
      %v731 = vpack.c.b16 %v646, %v645
      %v732 = vpack.c.b16 %v648, %v647
      %v733 = vpack.c.b16 %v650, %v649
      %v734 = vpack.c.b16 %v652, %v651
      %v735 = vpack.c.b16 %v654, %v653
      %v736 = vpack.c.b16 %v656, %v655
      %v737 = vpack.c.b16 %v658, %v657
      %v738 = vpack.c.b16 %v660, %v659
      %v739 = vpack.c.b16 %v662, %v661
      %v740 = vpack.c.b16 %v664, %v663
      %v741 = vpack.c.b16 %v666, %v665
      %v742 = vpack.c.b16 %v668, %v667
      %v743 = vpack.c.b16 %v670, %v669
      %v744 = vpack.c.b16 %v672, %v671
      %817 = vmatprep.subr.bf16.mxu0 0
      %818 = vmatpush1.bf16.msra.mxu0 %v673
      %819 = vmatprep.subr.bf16.mxu0 0
      %820 = vmatpush1.bf16.msra.mxu0 %v674
      %821 = vmatprep.subr.bf16.mxu0 0
      %822 = vmatpush1.bf16.msra.mxu0 %v675
      %823 = vmatprep.subr.bf16.mxu0 0
      %824 = vmatpush1.bf16.msra.mxu0 %v676
      %825 = vmatprep.subr.bf16.mxu0 0
      %826 = vmatpush1.bf16.msra.mxu0 %v677
      %827 = vmatprep.subr.bf16.mxu0 0
      %828 = vmatpush1.bf16.msra.mxu0 %v678
      %829 = vmatprep.subr.bf16.mxu0 0
      %830 = vmatpush1.bf16.msra.mxu0 %v679
      %831 = vmatprep.subr.bf16.mxu0 0
      %832 = vmatpush1.bf16.msra.mxu0 %v680
      %833 = vmatprep.subr.bf16.mxu0 0
      %834 = vmatpush1.bf16.msra.mxu0 %v681
      %835 = vmatprep.subr.bf16.mxu0 0
      %836 = vmatpush1.bf16.msra.mxu0 %v682
      %837 = vmatprep.subr.bf16.mxu0 0
      %838 = vmatpush1.bf16.msra.mxu0 %v683
      %839 = vmatprep.subr.bf16.mxu0 0
      %840 = vmatpush1.bf16.msra.mxu0 %v684
      %841 = vmatprep.subr.bf16.mxu0 0
      %842 = vmatpush1.bf16.msra.mxu0 %v685
      %843 = vmatprep.subr.bf16.mxu0 0
      %844 = vmatpush1.bf16.msra.mxu0 %v686
      %845 = vmatprep.subr.bf16.mxu0 0
      %846 = vmatpush1.bf16.msra.mxu0 %v687
      %847 = vmatprep.subr.bf16.mxu0 0
      %848 = vmatpush1.bf16.msra.mxu0 %v688
      %849 = vmatprep.mubr.bf16.mxu0 %v368
      %850 = vmatmul.mubr.bf16.gmra.mrb[0].mxu0 %v367
      %v851 = vpop.f32.mrb[0].mxu0
      %v852 = vadd.f32 %v337, %v851
      %v853 = vpop.f32.mrb[0].mxu0
      %v854 = vpop.f32.mrb[0].mxu0
      %v855 = vadd.f32 %v337, %v854
      %v856 = vpop.f32.mrb[0].mxu0
      %857 = vdwg.mxu0
      %858 = vmatprep.subr.bf16.mxu0 0
      %859 = vmatpush1.bf16.msra.mxu0 %v689
      %860 = vmatprep.subr.bf16.mxu0 0
      %861 = vmatpush1.bf16.msra.mxu0 %v690
      %862 = vmatprep.subr.bf16.mxu0 0
      %863 = vmatpush1.bf16.msra.mxu0 %v691
      %864 = vmatprep.subr.bf16.mxu0 0
      %865 = vmatpush1.bf16.msra.mxu0 %v692
      %866 = vmatprep.subr.bf16.mxu0 0
      %867 = vmatpush1.bf16.msra.mxu0 %v693
      %868 = vmatprep.subr.bf16.mxu0 0
      %869 = vmatpush1.bf16.msra.mxu0 %v694
      %870 = vmatprep.subr.bf16.mxu0 0
      %871 = vmatpush1.bf16.msra.mxu0 %v695
      %872 = vmatprep.subr.bf16.mxu0 0
      %873 = vmatpush1.bf16.msra.mxu0 %v696
      %874 = vmatprep.subr.bf16.mxu0 0
      %875 = vmatpush1.bf16.msra.mxu0 %v697
      %876 = vmatprep.subr.bf16.mxu0 0
      %877 = vmatpush1.bf16.msra.mxu0 %v698
      %878 = vmatprep.subr.bf16.mxu0 0
      %879 = vmatpush1.bf16.msra.mxu0 %v699
      %880 = vmatprep.subr.bf16.mxu0 0
      %881 = vmatpush1.bf16.msra.mxu0 %v700
      %882 = vmatprep.subr.bf16.mxu0 0
      %883 = vmatpush1.bf16.msra.mxu0 %v701
      %884 = vmatprep.subr.bf16.mxu0 0
      %885 = vmatpush1.bf16.msra.mxu0 %v702
      %886 = vmatprep.subr.bf16.mxu0 0
      %887 = vmatpush1.bf16.msra.mxu0 %v703
      %888 = vmatprep.subr.bf16.mxu0 0
      %889 = vmatpush1.bf16.msra.mxu0 %v704
      %890 = vmatprep.mubr.bf16.mxu0 %v370
      %891 = vmatmul.mubr.bf16.gmra.mrb[0].mxu0 %v369
      %v892 = vpop.f32.mrb[0].mxu0
      %v893 = vadd.f32 %v852, %v892
      %v894 = vpop.f32.mrb[0].mxu0
      %v895 = vpop.f32.mrb[0].mxu0
      %v896 = vadd.f32 %v855, %v895
      %v897 = vpop.f32.mrb[0].mxu0
      %898 = vdwg.mxu0
      %899 = vmatprep.subr.bf16.mxu0 0
      %900 = vmatpush1.bf16.msra.mxu0 %v705
      %901 = vmatprep.subr.bf16.mxu0 0
      %902 = vmatpush1.bf16.msra.mxu0 %v706
      %903 = vmatprep.subr.bf16.mxu0 0
      %904 = vmatpush1.bf16.msra.mxu0 %v707
      %905 = vmatprep.subr.bf16.mxu0 0
      %906 = vmatpush1.bf16.msra.mxu0 %v708
      %907 = vmatprep.subr.bf16.mxu0 0
      %908 = vmatpush1.bf16.msra.mxu0 %v709
      %909 = vmatprep.subr.bf16.mxu0 0
      %910 = vmatpush1.bf16.msra.mxu0 %v710
      %911 = vmatprep.subr.bf16.mxu0 0
      %912 = vmatpush1.bf16.msra.mxu0 %v711
      %913 = vmatprep.subr.bf16.mxu0 0
      %914 = vmatpush1.bf16.msra.mxu0 %v712
      %915 = vmatprep.subr.bf16.mxu0 0
      %916 = vmatpush1.bf16.msra.mxu0 %v713
      %917 = vmatprep.subr.bf16.mxu0 0
      %918 = vmatpush1.bf16.msra.mxu0 %v714
      %919 = vmatprep.subr.bf16.mxu0 0
      %920 = vmatpush1.bf16.msra.mxu0 %v715
      %921 = vmatprep.subr.bf16.mxu0 0
      %922 = vmatpush1.bf16.msra.mxu0 %v716
      %923 = vmatprep.subr.bf16.mxu0 0
      %924 = vmatpush1.bf16.msra.mxu0 %v717
      %925 = vmatprep.subr.bf16.mxu0 0
      %926 = vmatpush1.bf16.msra.mxu0 %v718
      %927 = vmatprep.subr.bf16.mxu0 0
      %928 = vmatpush1.bf16.msra.mxu0 %v719
      %929 = vmatprep.subr.bf16.mxu0 0
      %930 = vmatpush1.bf16.msra.mxu0 %v720
      %931 = vmatprep.mubr.bf16.mxu0 %v372
      %932 = vmatmul.mubr.bf16.gmra.mrb[0].mxu0 %v371
      %v933 = vpop.f32.mrb[0].mxu0
      %v934 = vadd.f32 %v893, %v933
      %v935 = vpop.f32.mrb[0].mxu0
      %v936 = vpop.f32.mrb[0].mxu0
      %v937 = vadd.f32 %v896, %v936
      %v938 = vpop.f32.mrb[0].mxu0
      %939 = vdwg.mxu0
      %940 = vmatprep.subr.bf16.mxu0 0
      %941 = vmatpush1.bf16.msra.mxu0 %v721
      %942 = vmatprep.subr.bf16.mxu0 0
      %943 = vmatpush1.bf16.msra.mxu0 %v722
      %944 = vmatprep.subr.bf16.mxu0 0
      %945 = vmatpush1.bf16.msra.mxu0 %v723
      %946 = vmatprep.subr.bf16.mxu0 0
      %947 = vmatpush1.bf16.msra.mxu0 %v724
      %948 = vmatprep.subr.bf16.mxu0 0
      %949 = vmatpush1.bf16.msra.mxu0 %v725
      %950 = vmatprep.subr.bf16.mxu0 0
      %951 = vmatpush1.bf16.msra.mxu0 %v726
      %952 = vmatprep.subr.bf16.mxu0 0
      %953 = vmatpush1.bf16.msra.mxu0 %v727
      %954 = vmatprep.subr.bf16.mxu0 0
      %955 = vmatpush1.bf16.msra.mxu0 %v728
      %956 = vmatprep.subr.bf16.mxu0 0
      %957 = vmatpush1.bf16.msra.mxu0 %v729
      %958 = vmatprep.subr.bf16.mxu0 0
      %959 = vmatpush1.bf16.msra.mxu0 %v730
      %960 = vmatprep.subr.bf16.mxu0 0
      %961 = vmatpush1.bf16.msra.mxu0 %v731
      %962 = vmatprep.subr.bf16.mxu0 0
      %963 = vmatpush1.bf16.msra.mxu0 %v732
      %964 = vmatprep.subr.bf16.mxu0 0
      %965 = vmatpush1.bf16.msra.mxu0 %v733
      %966 = vmatprep.subr.bf16.mxu0 0
      %967 = vmatpush1.bf16.msra.mxu0 %v734
      %968 = vmatprep.subr.bf16.mxu0 0
      %969 = vmatpush1.bf16.msra.mxu0 %v735
      %970 = vmatprep.subr.bf16.mxu0 0
      %971 = vmatpush1.bf16.msra.mxu0 %v736
      %972 = vmatprep.mubr.bf16.mxu0 %v374
      %973 = vmatmul.mubr.bf16.gmra.mrb[0].mxu0 %v373
      %v974 = vpop.f32.mrb[0].mxu0
      %v975 = vadd.f32 %v934, %v974
      %v976 = vpop.f32.mrb[0].mxu0
      %v977 = vpop.f32.mrb[0].mxu0
      %v978 = vadd.f32 %v937, %v977
      %v979 = vpop.f32.mrb[0].mxu0
      %980 = vdwg.mxu0
      %981 = vmatprep.subr.bf16.mxu0 0
      %982 = vmatpush1.bf16.msra.mxu0 %v737
      %983 = vmatprep.subr.bf16.mxu0 0
      %984 = vmatpush1.bf16.msra.mxu0 %v738
      %985 = vmatprep.subr.bf16.mxu0 0
      %986 = vmatpush1.bf16.msra.mxu0 %v739
      %987 = vmatprep.subr.bf16.mxu0 0
      %988 = vmatpush1.bf16.msra.mxu0 %v740
      %989 = vmatprep.subr.bf16.mxu0 0
      %990 = vmatpush1.bf16.msra.mxu0 %v741
      %991 = vmatprep.subr.bf16.mxu0 0
      %992 = vmatpush1.bf16.msra.mxu0 %v742
      %993 = vmatprep.subr.bf16.mxu0 0
      %994 = vmatpush1.bf16.msra.mxu0 %v743
      %995 = vmatprep.subr.bf16.mxu0 0
      %996 = vmatpush1.bf16.msra.mxu0 %v744
      %997 = vmatprep.subr.bf16.mxu0 0
      %998 = vmatpush1.bf16.msra.mxu0 0
      %999 = vmatprep.subr.bf16.mxu0 0
      %1000 = vmatpush1.bf16.msra.mxu0 0
      %1001 = vmatprep.subr.bf16.mxu0 0
      %1002 = vmatpush1.bf16.msra.mxu0 0
      %1003 = vmatprep.subr.bf16.mxu0 0
      %1004 = vmatpush1.bf16.msra.mxu0 0
      %1005 = vmatprep.subr.bf16.mxu0 0
      %1006 = vmatpush1.bf16.msra.mxu0 0
      %1007 = vmatprep.subr.bf16.mxu0 0
      %1008 = vmatpush1.bf16.msra.mxu0 0
      %1009 = vmatprep.subr.bf16.mxu0 0
      %1010 = vmatpush1.bf16.msra.mxu0 0
      %1011 = vmatprep.subr.bf16.mxu0 0
      %1012 = vmatpush1.bf16.msra.mxu0 0
      %1013 = vmatprep.mubr.bf16.mxu0 0
      %1014 = vmatmul.mubr.bf16.gmra.mrb[0].mxu0 %v375
      %v1015 = vpop.f32.mrb[0].mxu0
      %v1016 = vadd.f32 %v975, %v1015
      %v1017 = vpop.f32.mrb[0].mxu0
      %v1018 = vpop.f32.mrb[0].mxu0
      %v1019 = vadd.f32 %v978, %v1018
      %v1020 = vpop.f32.mrb[0].mxu0
      %1021 = vdwg.mxu0
      %v1022 = vmax.f32 %v1016, 0.0
      %v1023 = vmax.f32 %v1019, 0.0
      %1024 = vst [vmem:[%s175] sm:$0xff] %v1022
      %1025 = vst [vmem:[%s175 + $0x8] sm:$0xff] %v1023
      %s1026 = smul.u32 2, %s14
      %p1027 = scmp.lt.s32.totalorder %s1026, 3
      %s1028 = scalar_select %p1027, %s1026, 3
      %s1029 = smul.addr %s1028, 8
      %s1030 = scalar_lea.vmem %s3, %s1029
      // Predicated region
      $region33: #{conv_module_forward.7} parent=31 // pred_check
        %p1031 = pneg %p100
      $region34: #{conv_module_forward.7} parent=31 // pred_check_branch
        %1033 = sbr.rel (%p1031) target = $region36
      $region35: #{conv_module_forward.7} parent=31 // pred_region
        %s1034 = smul.u32 2, %s14
      $region36: #{conv_module_forward.7} parent=31 // pred_fallthru
        _
    $region32: #{conv_module_forward.7} parent=5 // pred_fallthru
      _
    %p1035 = scmp.le.s32.totalorder 2, %s9
    // Predicated region
    $region37: #{conv_module_forward.7} parent=5 // pred_check
      %p1036 = pneg %p1035
    $region38: #{conv_module_forward.7} parent=5 // pred_check_branch
      %1038 = sbr.rel (%p1036) target = $region40
    $region39: #{conv_module_forward.7} parent=5 // pred_region
      %s1039 = ssub.s32 %s9, 2
      // Predicated region
      $region41: #{conv_module_forward.7} parent=39 // pred_check
        %p1040 = pneg %p106
      $region42: #{conv_module_forward.7} parent=39 // pred_check_branch
        %1042 = sbr.rel (%p1040) target = $region44
      $region43: #{conv_module_forward.7} parent=39 // pred_region
        %s1043 = smul.u32 2, %s15
        %p1044 = scmp.lt.s32.totalorder %s1043, 3
        %s1045 = scalar_select %p1044, %s1043, 3
        %s1046 = smul.addr %s1045, 8
        %s1047 = scalar_lea.vmem %s3, %s1046
      $region44: #{conv_module_forward.7} parent=39 // pred_fallthru
        _
    $region40: #{conv_module_forward.7} parent=5 // pred_fallthru
      _
  $region6: #{conv_module_forward.7} parent=0 // loop_footer
    %s13 = sadd.s32 1, %s9
  $region7: #{conv_module_forward.7} parent=0 // loop_footer_branch
    %8 = sbr.rel target = $region3
  $region8: #{conv_module_forward.7} parent=0 // loop_exit
    _

</llo_original>
